<compile_context>
chip_gen: v7x
topology: tpu7x:2x2x1
jax: 0.10.0
libtpu: 0.0.40
codegen_flags: <defaults>
</compile_context>

<pallas_src>
import jax
import jax.numpy as jnp
from jax.experimental import pallas as pl
from jax.experimental.pallas import tpu as pltpu


# conv1 tap pieces (u = W-parity slab, dh = h4 offset, sh = w2 shift).
_CONV1_PIECES = ((0, 0, 0), (0, 1, 0), (0, 2, 0),
                 (0, 0, 1), (0, 1, 1), (0, 2, 1),
                 (1, 0, 0), (1, 1, 0), (1, 2, 0))


# ----------------------------------------------------------------------------
# Fused kernel: per grid step = one sample, full trunk + tail, 4 MXU dots.
# ----------------------------------------------------------------------------
def _cnn_fused_kernel(xs_ref, w1_ref, b1_ref, w2_ref, b2_ref, w3_ref, b3_ref,
                      wt_ref, bl_ref, out_ref,
                      l1_ref, a1_ref, l2_ref, a2_ref, l3_ref):
    f32 = jnp.float32
    bf16 = jnp.bfloat16
    hid = out_ref.shape[2]

    # The l1/l2/l3 staging buffers use 16-row (one bf16 sublane tile) groups;
    # rows >= 10 / 9 / 7 of each group are never written.  They do flow through
    # the matmuls, but land in output rows that no later stage ever reads, so
    # stale VMEM contents cannot affect results.

    # ------------- conv1: 8x8 stride 4 (2x2 s1 over s2d-by-4 input) ----------
    # Single dot (160, 9*128) x (9*128, 128); the 4 output column groups are
    # (row-parity rh, col-parity rw) so out1 lands directly in s2d-by-2 form:
    # a1[h2*16 + w2, (rh*2 + rw)*32 + co] = conv1[2*h2+rh, 2*w2+rw, co].
    for h2 in range(10):
        pieces = [xs_ref[0, u, 2 * h2 + dh][sh:sh + 10]
                  for (u, dh, sh) in _CONV1_PIECES]           # 9 x (10, 128)
        l1_ref[h2 * 16:h2 * 16 + 10, :] = jnp.concatenate(pieces, axis=-1)
    v1 = jnp.dot(l1_ref[...], w1_ref[...],
                 preferred_element_type=f32) + b1_ref[...]    # (160, 128)
    a1_ref[...] = jnp.maximum(v1, 0.0).astype(bf16)

    # ------------- conv2: 4x4 stride 2 (2x2 s1 over 128-ch s2d) --------------
    # Single dot (144, 512) x (512, 128); weight columns 64..127 are zero so
    # a2 lanes 64..127 are exactly 0 (keeps conv3 taps 128-lane aligned).
    for oh2 in range(9):
        pieces = [a1_ref[(oh2 + p) * 16 + q:(oh2 + p) * 16 + q + 9, :]
                  for p in range(2) for q in range(2)]        # 4 x (9, 128)
        l2_ref[oh2 * 16:oh2 * 16 + 9, :] = jnp.concatenate(pieces, axis=-1)
    v2 = jnp.dot(l2_ref[...], w2_ref[...],
                 preferred_element_type=f32) + b2_ref[...]    # (144, 128)
    a2_ref[...] = jnp.maximum(v2, 0.0).astype(bf16)

    # ------------- conv3: 3x3 stride 1 ---------------------------------------
    # Single dot (112, 9*128) x (9*128, 128); weight columns 32..127 are zero.
    for oh3 in range(7):
        pieces = [a2_ref[(oh3 + i) * 16 + j:(oh3 + i) * 16 + j + 7, :]
                  for i in range(3) for j in range(3)]        # 9 x (7, 128)
        l3_ref[oh3 * 16:oh3 * 16 + 7, :] = jnp.concatenate(pieces, axis=-1)
    v3 = jnp.dot(l3_ref[...], w3_ref[...],
                 preferred_element_type=f32) + b3_ref[...]    # (112, 128)
    v3 = jnp.maximum(v3, 0.0).astype(bf16)                    # lanes 32.. == 0

    # ------------- linear tail (one dot) --------------------------------------
    # out3[ow, oh*128 + c] = conv3[oh, ow, c] (c < 32, rest exact zeros); the
    # block weight wt[(oh,c), ow*hid + h] makes this a single K=896 dot, then
    # the per-ow diagonal blocks are summed with 7 cheap VPU adds.
    out3 = jnp.concatenate([v3[oh * 16:oh * 16 + 7, :] for oh in range(7)],
                           axis=-1)                           # (7, 896)
    t = jnp.dot(out3, wt_ref[...], preferred_element_type=f32)  # (7, 7*hid)
    acc = bl_ref[...]                                         # (1, hid)
    for ow in range(7):
        acc = acc + t[ow:ow + 1, ow * hid:(ow + 1) * hid]
    out_ref[0] = jnp.maximum(acc, 0.0)


# ----------------------------------------------------------------------------
# Wrapper-side glue
# ----------------------------------------------------------------------------
def _space_to_depth_obs(obs, k1pad):
    """(B, C, 84, 84) NCHW f32 -> (B, 2, 21, 11, k1pad) bf16.

    Axes: [b, W-parity u, h4, w2, (r, t, ci)] with
      H = 4*h4 + r,   W = 8*w2 + 4*u + t   (W zero-padded 84 -> 88),
    channel axis zero-padded from 16*C to k1pad (128-lane aligned taps)."""
    B, C, H, W = obs.shape
    x = obs.astype(jnp.bfloat16)
    x = jnp.pad(x, ((0, 0), (0, 0), (0, 0), (0, 4)))
    x = x.reshape(B, C, 21, 4, 11, 2, 4)            # [b, ci, h4, r, w2, u, t]
    x = x.transpose(0, 5, 2, 4, 3, 6, 1)            # [b, u, h4, w2, r, t, ci]
    x = x.reshape(B, 2, 21, 11, 16 * C)
    if k1pad > 16 * C:
        x = jnp.pad(x, ((0, 0),) * 4 + ((0, k1pad - 16 * C),))
    return x


def prepare_params(params):
    """One-time repack of torch-layout parameters into kernel layouts."""
    w1, b1 = params["w1"], params["b1"]             # (32, C, 8, 8), (32,)
    w2, b2 = params["w2"], params["b2"]             # (64, 32, 4, 4), (64,)
    w3, b3 = params["w3"], params["b3"]             # (32, 64, 3, 3), (32,)
    wl, bl = params["wl"], params["bl"]             # (H, 1568), (H,)
    C = w1.shape[1]
    hid = wl.shape[0]
    f32, bf16 = jnp.float32, jnp.bfloat16

    k1 = 16 * C
    k1pad = ((k1 + 127) // 128) * 128

    # conv1: block-sparse (9*k1pad, 128).  Tap blocks W1p[p, q, (r, t, ci), co]
    # with kh = 4p + r, kw = 4q + t; output group g = rh*2 + rw uses tap (p,q)
    # against distinct-piece index GROUP_PIECES[g][tap].
    w1p = w1.reshape(32, C, 2, 4, 2, 4)             # [co, ci, p, r, q, t]
    w1p = w1p.transpose(2, 4, 3, 5, 1, 0).reshape(2, 2, k1, 32)
    w1s = jnp.zeros((9 * k1pad, 128), f32)
    taps = [(0, 0), (1, 0), (0, 1), (1, 1)]
    group_pieces = [[0, 1, 6, 7],   # rh=0, rw=0 (even cols)
                    [6, 7, 3, 4],   # rh=0, rw=1 (odd  cols)
                    [1, 2, 7, 8],   # rh=1, rw=0
                    [7, 8, 4, 5]]   # rh=1, rw=1
    for g in range(4):
        for ti, (p, q) in enumerate(taps):
            pc = group_pieces[g][ti]
            w1s = w1s.at[pc * k1pad:pc * k1pad + k1,
                         g * 32:(g + 1) * 32].set(w1p[p, q])
    b1g = jnp.tile(b1, 4).reshape(1, 128)

    # conv2: (p, q)-major blocks of [(rh, rw, co1), co2] -> (512, 64), padded
    # to N=128 with zero columns (keeps activations lane-dense / aligned).
    w2p = w2.reshape(64, 32, 2, 2, 2, 2)            # [co2, co1, p, r, q, t]
    w2cat = w2p.transpose(2, 4, 3, 5, 1, 0).reshape(512, 64)
    w2s = jnp.pad(w2cat, ((0, 0), (0, 64)))
    b2g = jnp.pad(b2, (0, 64)).reshape(1, 128)

    # conv3: (i, j)-major blocks of [co2 (padded to 128), co3 (padded to 128)].
    w3t = w3.transpose(2, 3, 1, 0)                  # [i, j, c2, co3]
    w3t = jnp.pad(w3t, ((0, 0), (0, 0), (0, 64), (0, 96)))
    w3s = w3t.reshape(9 * 128, 128)
    b3g = jnp.pad(b3, (0, 96)).reshape(1, 128)

    # linear tail block weight: WT[oh*128 + c, ow*hid + h] = wl[h, c*49+oh*7+ow]
    wl4 = wl.reshape(hid, 32, 7, 7)                 # [h, c, oh, ow]
    wlt = wl4.transpose(2, 1, 3, 0)                 # [oh, c, ow, h]
    wlt = jnp.pad(wlt, ((0, 0), (0, 96), (0, 0), (0, 0)))
    wts = wlt.reshape(7 * 128, 7 * hid)

    return {
        "w1": w1s.astype(bf16), "b1": b1g.astype(f32),
        "w2": w2s.astype(bf16), "b2": b2g.astype(f32),
        "w3": w3s.astype(bf16), "b3": b3g.astype(f32),
        "wt": wts.astype(bf16), "bl": bl.reshape(1, hid).astype(f32),
    }


def cnn_forward(packed, observations):
    B, C, H, W = observations.shape
    assert (H, W) == (84, 84), "architecture hard-codes 84x84 (32*7*7 flatten)"
    hid = packed["bl"].shape[1]
    k1pad = packed["w1"].shape[0] // 9

    xs = _space_to_depth_obs(observations, k1pad)

    out = pl.pallas_call(
        _cnn_fused_kernel,
        out_shape=jax.ShapeDtypeStruct((B, 1, hid), jnp.float32),
        grid=(B,),
        in_specs=[
            pl.BlockSpec((1, 2, 21, 11, k1pad), lambda b: (b, 0, 0, 0, 0)),
            pl.BlockSpec((9 * k1pad, 128), lambda b: (0, 0)),  # conv1 weight
            pl.BlockSpec((1, 128), lambda b: (0, 0)),          # conv1 bias
            pl.BlockSpec((512, 128), lambda b: (0, 0)),        # conv2 weight
            pl.BlockSpec((1, 128), lambda b: (0, 0)),          # conv2 bias
            pl.BlockSpec((9 * 128, 128), lambda b: (0, 0)),    # conv3 weight
            pl.BlockSpec((1, 128), lambda b: (0, 0)),          # conv3 bias
            pl.BlockSpec((7 * 128, 7 * hid), lambda b: (0, 0)),  # tail weight
            pl.BlockSpec((1, hid), lambda b: (0, 0)),          # tail bias
        ],
        out_specs=pl.BlockSpec((1, 1, hid), lambda b: (b, 0, 0)),
        scratch_shapes=[
            pltpu.VMEM((160, 9 * k1pad), jnp.bfloat16),  # conv1 LHS staging
            pltpu.VMEM((160, 128), jnp.bfloat16),        # conv1 out (s2d-by-2)
            pltpu.VMEM((144, 512), jnp.bfloat16),        # conv2 LHS staging
            pltpu.VMEM((144, 128), jnp.bfloat16),        # conv2 out
            pltpu.VMEM((112, 9 * 128), jnp.bfloat16),    # conv3 LHS staging
        ],
        compiler_params=pltpu.CompilerParams(
            dimension_semantics=("parallel",)),
    )(xs, packed["w1"], packed["b1"], packed["w2"], packed["b2"],
      packed["w3"], packed["b3"], packed["wt"], packed["bl"])
    return out.reshape(B, hid)


# ----------------------------------------------------------------------------
# Parameter init (torch layouts) and pure-JAX references for validation
# ----------------------------------------------------------------------------
def init_params(key, channel_count, hidden_size):
    ks = jax.random.split(key, 8)

    def w(k, shape, fan_in):
        return jax.random.normal(k, shape, jnp.float32) / jnp.sqrt(fan_in)

    return {
        "w1": w(ks[0], (32, channel_count, 8, 8), channel_count * 64),
        "b1": w(ks[1], (32,), channel_count * 64),
        "w2": w(ks[2], (64, 32, 4, 4), 32 * 16),
        "b2": w(ks[3], (64,), 32 * 16),
        "w3": w(ks[4], (32, 64, 3, 3), 64 * 9),
        "b3": w(ks[5], (32,), 64 * 9),
        "wl": w(ks[6], (hidden_size, 32 * 7 * 7), 32 * 7 * 7),
        "bl": w(ks[7], (hidden_size,), 32 * 7 * 7),
    }


def _reference_forward_f32(params, x):
    def conv(h, w, b, s):
        y = jax.lax.conv_general_dilated(
            h, w, window_strides=(s, s), padding="VALID",
            dimension_numbers=("NCHW", "OIHW", "NCHW"))
        return jnp.maximum(y + b[None, :, None, None], 0.0)
    h = conv(x, params["w1"], params["b1"], 4)
    h = conv(h, params["w2"], params["b2"], 2)
    h = conv(h, params["w3"], params["b3"], 1)
    flat = h.reshape(x.shape[0], 32 * 7 * 7)
    return jnp.maximum(flat @ params["wl"].T + params["bl"], 0.0)


def _reference_forward_mixed(params, x):
    # Same rounding points as the kernel: bf16 matmul/conv operands,
    # f32 accumulation + bias + ReLU.
    bf16 = jnp.bfloat16

    def conv(h, w, b, s):
        y = jax.lax.conv_general_dilated(
            h.astype(bf16), w.astype(bf16), window_strides=(s, s),
            padding="VALID", dimension_numbers=("NCHW", "OIHW", "NCHW"),
            preferred_element_type=jnp.float32)
        return jnp.maximum(y + b[None, :, None, None], 0.0)
    h = conv(x, params["w1"], params["b1"], 4)
    h = conv(h, params["w2"], params["b2"], 2)
    h = conv(h, params["w3"], params["b3"], 1)
    flat = h.reshape(x.shape[0], 32 * 7 * 7)
    y = jnp.dot(flat.astype(bf16), params["wl"].T.astype(bf16),
                preferred_element_type=jnp.float32) + params["bl"]
    return jnp.maximum(y, 0.0)


if __name__ == "__main__":
    B, C, H, W = 2, 4, 84, 84      # 84x84 is forced by the 32*7*7 flatten
    hidden_size = 32               # config['energy_hidden_size']

    key = jax.random.PRNGKey(0)
    k_obs, k_par = jax.random.split(key)
    observations = jax.random.normal(k_obs, (B, C, H, W), jnp.float32)
    params = init_params(k_par, C, hidden_size)
    packed = prepare_params(params)            # one-time weight packing

    fwd = jax.jit(cnn_forward)
    hiddens = jax.block_until_ready(fwd(packed, observations))

    assert hiddens.shape == (B, hidden_size), hiddens.shape
    assert bool(jnp.all(jnp.isfinite(hiddens)))

    # Tight check against a reference with identical precision choices
    # (bf16 operands, f32 accumulation).
    ref_mixed = jax.block_until_ready(_reference_forward_mixed(params, observations))
    err_mixed = float(jnp.max(jnp.abs(hiddens - ref_mixed)))
    assert bool(jnp.allclose(hiddens, ref_mixed, rtol=1e-3, atol=1e-3)), err_mixed

    # Loose sanity check against the full-f32 PyTorch-semantics reference
    # (difference is purely the bf16 operand rounding).
    ref_f32 = jax.block_until_ready(_reference_forward_f32(params, observations))
    err_f32 = float(jnp.max(jnp.abs(hiddens - ref_f32)))
    assert bool(jnp.allclose(hiddens, ref_f32, rtol=1e-1, atol=5e-2)), err_f32

    print("KERNEL_OK")
</pallas_src>

<mosaic_0001>
module attributes {stable_mosaic.version = 11 : i64} {
  func.func @_cnn_fused_kernel(%arg0: i32, %arg1: memref<1x2x21x11x128xbf16, #tpu.memory_space<vmem>>, %arg2: memref<1152x128xbf16, #tpu.memory_space<vmem>>, %arg3: memref<1x128xf32, #tpu.memory_space<vmem>>, %arg4: memref<512x128xbf16, #tpu.memory_space<vmem>>, %arg5: memref<1x128xf32, #tpu.memory_space<vmem>>, %arg6: memref<1152x128xbf16, #tpu.memory_space<vmem>>, %arg7: memref<1x128xf32, #tpu.memory_space<vmem>>, %arg8: memref<896x224xbf16, #tpu.memory_space<vmem>>, %arg9: memref<1x32xf32, #tpu.memory_space<vmem>>, %arg10: memref<1x1x32xf32, #tpu.memory_space<vmem>>, %arg11: memref<160x1152xbf16, #tpu.memory_space<vmem>>, %arg12: memref<160x128xbf16, #tpu.memory_space<vmem>>, %arg13: memref<144x512xbf16, #tpu.memory_space<vmem>>, %arg14: memref<144x128xbf16, #tpu.memory_space<vmem>>, %arg15: memref<112x1152xbf16, #tpu.memory_space<vmem>>) attributes {dimension_semantics = [#tpu.dimension_semantics<parallel>], iteration_bounds = array<i64: 2>, scalar_prefetch = 0 : i64, scratch_operands = 5 : i64, tpu.core_type = #tpu.core_type<tc>, window_params = [{transform_indices = @transform_0, window_bounds = array<i64: 1, 2, 21, 11, 128>}, {pipeline_mode = #tpu.pipeline_mode<synchronous>, transform_indices = @transform_1, window_bounds = array<i64: 1152, 128>}, {pipeline_mode = #tpu.pipeline_mode<synchronous>, transform_indices = @transform_2, window_bounds = array<i64: 1, 128>}, {pipeline_mode = #tpu.pipeline_mode<synchronous>, transform_indices = @transform_3, window_bounds = array<i64: 512, 128>}, {pipeline_mode = #tpu.pipeline_mode<synchronous>, transform_indices = @transform_4, window_bounds = array<i64: 1, 128>}, {pipeline_mode = #tpu.pipeline_mode<synchronous>, transform_indices = @transform_5, window_bounds = array<i64: 1152, 128>}, {pipeline_mode = #tpu.pipeline_mode<synchronous>, transform_indices = @transform_6, window_bounds = array<i64: 1, 128>}, {pipeline_mode = #tpu.pipeline_mode<synchronous>, transform_indices = @transform_7, window_bounds = array<i64: 896, 224>}, {pipeline_mode = #tpu.pipeline_mode<synchronous>, transform_indices = @transform_8, window_bounds = array<i64: 1, 32>}, {transform_indices = @transform_9, window_bounds = array<i64: 1, 1, 32>}]} {
    %c0 = arith.constant 0 : index
    %c0_0 = arith.constant 0 : index
    %c0_1 = arith.constant 0 : index
    %c0_2 = arith.constant 0 : index
    %c0_3 = arith.constant 0 : index
    %0 = vector.load %arg1[%c0, %c0_0, %c0_1, %c0_2, %c0_3] : memref<1x2x21x11x128xbf16, #tpu.memory_space<vmem>>, vector<1x1x1x11x128xbf16>
    %1 = vector.shape_cast %0 : vector<1x1x1x11x128xbf16> to vector<11x128xbf16>
    %2 = vector.extract_strided_slice %1 {offsets = [0, 0], sizes = [10, 128], strides = [1, 1]} : vector<11x128xbf16> to vector<10x128xbf16>
    %c0_4 = arith.constant 0 : index
    %c0_5 = arith.constant 0 : index
    %c1 = arith.constant 1 : index
    %c0_6 = arith.constant 0 : index
    %c0_7 = arith.constant 0 : index
    %3 = vector.load %arg1[%c0_4, %c0_5, %c1, %c0_6, %c0_7] : memref<1x2x21x11x128xbf16, #tpu.memory_space<vmem>>, vector<1x1x1x11x128xbf16>
    %4 = vector.shape_cast %3 : vector<1x1x1x11x128xbf16> to vector<11x128xbf16>
    %5 = vector.extract_strided_slice %4 {offsets = [0, 0], sizes = [10, 128], strides = [1, 1]} : vector<11x128xbf16> to vector<10x128xbf16>
    %c0_8 = arith.constant 0 : index
    %c0_9 = arith.constant 0 : index
    %c2 = arith.constant 2 : index
    %c0_10 = arith.constant 0 : index
    %c0_11 = arith.constant 0 : index
    %6 = vector.load %arg1[%c0_8, %c0_9, %c2, %c0_10, %c0_11] : memref<1x2x21x11x128xbf16, #tpu.memory_space<vmem>>, vector<1x1x1x11x128xbf16>
    %7 = vector.shape_cast %6 : vector<1x1x1x11x128xbf16> to vector<11x128xbf16>
    %8 = vector.extract_strided_slice %7 {offsets = [0, 0], sizes = [10, 128], strides = [1, 1]} : vector<11x128xbf16> to vector<10x128xbf16>
    %c0_12 = arith.constant 0 : index
    %c0_13 = arith.constant 0 : index
    %c0_14 = arith.constant 0 : index
    %c0_15 = arith.constant 0 : index
    %c0_16 = arith.constant 0 : index
    %9 = vector.load %arg1[%c0_12, %c0_13, %c0_14, %c0_15, %c0_16] : memref<1x2x21x11x128xbf16, #tpu.memory_space<vmem>>, vector<1x1x1x11x128xbf16>
    %10 = vector.shape_cast %9 : vector<1x1x1x11x128xbf16> to vector<11x128xbf16>
    %11 = vector.extract_strided_slice %10 {offsets = [1, 0], sizes = [10, 128], strides = [1, 1]} : vector<11x128xbf16> to vector<10x128xbf16>
    %c0_17 = arith.constant 0 : index
    %c0_18 = arith.constant 0 : index
    %c1_19 = arith.constant 1 : index
    %c0_20 = arith.constant 0 : index
    %c0_21 = arith.constant 0 : index
    %12 = vector.load %arg1[%c0_17, %c0_18, %c1_19, %c0_20, %c0_21] : memref<1x2x21x11x128xbf16, #tpu.memory_space<vmem>>, vector<1x1x1x11x128xbf16>
    %13 = vector.shape_cast %12 : vector<1x1x1x11x128xbf16> to vector<11x128xbf16>
    %14 = vector.extract_strided_slice %13 {offsets = [1, 0], sizes = [10, 128], strides = [1, 1]} : vector<11x128xbf16> to vector<10x128xbf16>
    %c0_22 = arith.constant 0 : index
    %c0_23 = arith.constant 0 : index
    %c2_24 = arith.constant 2 : index
    %c0_25 = arith.constant 0 : index
    %c0_26 = arith.constant 0 : index
    %15 = vector.load %arg1[%c0_22, %c0_23, %c2_24, %c0_25, %c0_26] : memref<1x2x21x11x128xbf16, #tpu.memory_space<vmem>>, vector<1x1x1x11x128xbf16>
    %16 = vector.shape_cast %15 : vector<1x1x1x11x128xbf16> to vector<11x128xbf16>
    %17 = vector.extract_strided_slice %16 {offsets = [1, 0], sizes = [10, 128], strides = [1, 1]} : vector<11x128xbf16> to vector<10x128xbf16>
    %c0_27 = arith.constant 0 : index
    %c1_28 = arith.constant 1 : index
    %c0_29 = arith.constant 0 : index
    %c0_30 = arith.constant 0 : index
    %c0_31 = arith.constant 0 : index
    %18 = vector.load %arg1[%c0_27, %c1_28, %c0_29, %c0_30, %c0_31] : memref<1x2x21x11x128xbf16, #tpu.memory_space<vmem>>, vector<1x1x1x11x128xbf16>
    %19 = vector.shape_cast %18 : vector<1x1x1x11x128xbf16> to vector<11x128xbf16>
    %20 = vector.extract_strided_slice %19 {offsets = [0, 0], sizes = [10, 128], strides = [1, 1]} : vector<11x128xbf16> to vector<10x128xbf16>
    %c0_32 = arith.constant 0 : index
    %c1_33 = arith.constant 1 : index
    %c1_34 = arith.constant 1 : index
    %c0_35 = arith.constant 0 : index
    %c0_36 = arith.constant 0 : index
    %21 = vector.load %arg1[%c0_32, %c1_33, %c1_34, %c0_35, %c0_36] : memref<1x2x21x11x128xbf16, #tpu.memory_space<vmem>>, vector<1x1x1x11x128xbf16>
    %22 = vector.shape_cast %21 : vector<1x1x1x11x128xbf16> to vector<11x128xbf16>
    %23 = vector.extract_strided_slice %22 {offsets = [0, 0], sizes = [10, 128], strides = [1, 1]} : vector<11x128xbf16> to vector<10x128xbf16>
    %c0_37 = arith.constant 0 : index
    %c1_38 = arith.constant 1 : index
    %c2_39 = arith.constant 2 : index
    %c0_40 = arith.constant 0 : index
    %c0_41 = arith.constant 0 : index
    %24 = vector.load %arg1[%c0_37, %c1_38, %c2_39, %c0_40, %c0_41] : memref<1x2x21x11x128xbf16, #tpu.memory_space<vmem>>, vector<1x1x1x11x128xbf16>
    %25 = vector.shape_cast %24 : vector<1x1x1x11x128xbf16> to vector<11x128xbf16>
    %26 = vector.extract_strided_slice %25 {offsets = [0, 0], sizes = [10, 128], strides = [1, 1]} : vector<11x128xbf16> to vector<10x128xbf16>
    %27 = tpu.concatenate %2, %5, %8, %11, %14, %17, %20, %23, %26 in 1 : vector<10x128xbf16>, vector<10x128xbf16>, vector<10x128xbf16>, vector<10x128xbf16>, vector<10x128xbf16>, vector<10x128xbf16>, vector<10x128xbf16>, vector<10x128xbf16>, vector<10x128xbf16> -> vector<10x1152xbf16>
    %c0_42 = arith.constant 0 : index
    %c0_43 = arith.constant 0 : index
    %28 = vector.load %arg11[%c0_42, %c0_43] : memref<160x1152xbf16, #tpu.memory_space<vmem>>, vector<10x1152xbf16>
    tpu.vector_store %arg11[%c0_42, %c0_43], %27 {strides = array<i32>} : memref<160x1152xbf16, #tpu.memory_space<vmem>>, vector<10x1152xbf16>,
    %c0_44 = arith.constant 0 : index
    %c0_45 = arith.constant 0 : index
    %c2_46 = arith.constant 2 : index
    %c0_47 = arith.constant 0 : index
    %c0_48 = arith.constant 0 : index
    %29 = vector.load %arg1[%c0_44, %c0_45, %c2_46, %c0_47, %c0_48] : memref<1x2x21x11x128xbf16, #tpu.memory_space<vmem>>, vector<1x1x1x11x128xbf16>
    %30 = vector.shape_cast %29 : vector<1x1x1x11x128xbf16> to vector<11x128xbf16>
    %31 = vector.extract_strided_slice %30 {offsets = [0, 0], sizes = [10, 128], strides = [1, 1]} : vector<11x128xbf16> to vector<10x128xbf16>
    %c0_49 = arith.constant 0 : index
    %c0_50 = arith.constant 0 : index
    %c3 = arith.constant 3 : index
    %c0_51 = arith.constant 0 : index
    %c0_52 = arith.constant 0 : index
    %32 = vector.load %arg1[%c0_49, %c0_50, %c3, %c0_51, %c0_52] : memref<1x2x21x11x128xbf16, #tpu.memory_space<vmem>>, vector<1x1x1x11x128xbf16>
    %33 = vector.shape_cast %32 : vector<1x1x1x11x128xbf16> to vector<11x128xbf16>
    %34 = vector.extract_strided_slice %33 {offsets = [0, 0], sizes = [10, 128], strides = [1, 1]} : vector<11x128xbf16> to vector<10x128xbf16>
    %c0_53 = arith.constant 0 : index
    %c0_54 = arith.constant 0 : index
    %c4 = arith.constant 4 : index
    %c0_55 = arith.constant 0 : index
    %c0_56 = arith.constant 0 : index
    %35 = vector.load %arg1[%c0_53, %c0_54, %c4, %c0_55, %c0_56] : memref<1x2x21x11x128xbf16, #tpu.memory_space<vmem>>, vector<1x1x1x11x128xbf16>
    %36 = vector.shape_cast %35 : vector<1x1x1x11x128xbf16> to vector<11x128xbf16>
    %37 = vector.extract_strided_slice %36 {offsets = [0, 0], sizes = [10, 128], strides = [1, 1]} : vector<11x128xbf16> to vector<10x128xbf16>
    %c0_57 = arith.constant 0 : index
    %c0_58 = arith.constant 0 : index
    %c2_59 = arith.constant 2 : index
    %c0_60 = arith.constant 0 : index
    %c0_61 = arith.constant 0 : index
    %38 = vector.load %arg1[%c0_57, %c0_58, %c2_59, %c0_60, %c0_61] : memref<1x2x21x11x128xbf16, #tpu.memory_space<vmem>>, vector<1x1x1x11x128xbf16>
    %39 = vector.shape_cast %38 : vector<1x1x1x11x128xbf16> to vector<11x128xbf16>
    %40 = vector.extract_strided_slice %39 {offsets = [1, 0], sizes = [10, 128], strides = [1, 1]} : vector<11x128xbf16> to vector<10x128xbf16>
    %c0_62 = arith.constant 0 : index
    %c0_63 = arith.constant 0 : index
    %c3_64 = arith.constant 3 : index
    %c0_65 = arith.constant 0 : index
    %c0_66 = arith.constant 0 : index
    %41 = vector.load %arg1[%c0_62, %c0_63, %c3_64, %c0_65, %c0_66] : memref<1x2x21x11x128xbf16, #tpu.memory_space<vmem>>, vector<1x1x1x11x128xbf16>
    %42 = vector.shape_cast %41 : vector<1x1x1x11x128xbf16> to vector<11x128xbf16>
    %43 = vector.extract_strided_slice %42 {offsets = [1, 0], sizes = [10, 128], strides = [1, 1]} : vector<11x128xbf16> to vector<10x128xbf16>
    %c0_67 = arith.constant 0 : index
    %c0_68 = arith.constant 0 : index
    %c4_69 = arith.constant 4 : index
    %c0_70 = arith.constant 0 : index
    %c0_71 = arith.constant 0 : index
    %44 = vector.load %arg1[%c0_67, %c0_68, %c4_69, %c0_70, %c0_71] : memref<1x2x21x11x128xbf16, #tpu.memory_space<vmem>>, vector<1x1x1x11x128xbf16>
    %45 = vector.shape_cast %44 : vector<1x1x1x11x128xbf16> to vector<11x128xbf16>
    %46 = vector.extract_strided_slice %45 {offsets = [1, 0], sizes = [10, 128], strides = [1, 1]} : vector<11x128xbf16> to vector<10x128xbf16>
    %c0_72 = arith.constant 0 : index
    %c1_73 = arith.constant 1 : index
    %c2_74 = arith.constant 2 : index
    %c0_75 = arith.constant 0 : index
    %c0_76 = arith.constant 0 : index
    %47 = vector.load %arg1[%c0_72, %c1_73, %c2_74, %c0_75, %c0_76] : memref<1x2x21x11x128xbf16, #tpu.memory_space<vmem>>, vector<1x1x1x11x128xbf16>
    %48 = vector.shape_cast %47 : vector<1x1x1x11x128xbf16> to vector<11x128xbf16>
    %49 = vector.extract_strided_slice %48 {offsets = [0, 0], sizes = [10, 128], strides = [1, 1]} : vector<11x128xbf16> to vector<10x128xbf16>
    %c0_77 = arith.constant 0 : index
    %c1_78 = arith.constant 1 : index
    %c3_79 = arith.constant 3 : index
    %c0_80 = arith.constant 0 : index
    %c0_81 = arith.constant 0 : index
    %50 = vector.load %arg1[%c0_77, %c1_78, %c3_79, %c0_80, %c0_81] : memref<1x2x21x11x128xbf16, #tpu.memory_space<vmem>>, vector<1x1x1x11x128xbf16>
    %51 = vector.shape_cast %50 : vector<1x1x1x11x128xbf16> to vector<11x128xbf16>
    %52 = vector.extract_strided_slice %51 {offsets = [0, 0], sizes = [10, 128], strides = [1, 1]} : vector<11x128xbf16> to vector<10x128xbf16>
    %c0_82 = arith.constant 0 : index
    %c1_83 = arith.constant 1 : index
    %c4_84 = arith.constant 4 : index
    %c0_85 = arith.constant 0 : index
    %c0_86 = arith.constant 0 : index
    %53 = vector.load %arg1[%c0_82, %c1_83, %c4_84, %c0_85, %c0_86] : memref<1x2x21x11x128xbf16, #tpu.memory_space<vmem>>, vector<1x1x1x11x128xbf16>
    %54 = vector.shape_cast %53 : vector<1x1x1x11x128xbf16> to vector<11x128xbf16>
    %55 = vector.extract_strided_slice %54 {offsets = [0, 0], sizes = [10, 128], strides = [1, 1]} : vector<11x128xbf16> to vector<10x128xbf16>
    %56 = tpu.concatenate %31, %34, %37, %40, %43, %46, %49, %52, %55 in 1 : vector<10x128xbf16>, vector<10x128xbf16>, vector<10x128xbf16>, vector<10x128xbf16>, vector<10x128xbf16>, vector<10x128xbf16>, vector<10x128xbf16>, vector<10x128xbf16>, vector<10x128xbf16> -> vector<10x1152xbf16>
    %c16 = arith.constant 16 : index
    %c0_87 = arith.constant 0 : index
    %57 = vector.load %arg11[%c16, %c0_87] : memref<160x1152xbf16, #tpu.memory_space<vmem>>, vector<10x1152xbf16>
    tpu.vector_store %arg11[%c16, %c0_87], %56 {strides = array<i32>} : memref<160x1152xbf16, #tpu.memory_space<vmem>>, vector<10x1152xbf16>,
    %c0_88 = arith.constant 0 : index
    %c0_89 = arith.constant 0 : index
    %c4_90 = arith.constant 4 : index
    %c0_91 = arith.constant 0 : index
    %c0_92 = arith.constant 0 : index
    %58 = vector.load %arg1[%c0_88, %c0_89, %c4_90, %c0_91, %c0_92] : memref<1x2x21x11x128xbf16, #tpu.memory_space<vmem>>, vector<1x1x1x11x128xbf16>
    %59 = vector.shape_cast %58 : vector<1x1x1x11x128xbf16> to vector<11x128xbf16>
    %60 = vector.extract_strided_slice %59 {offsets = [0, 0], sizes = [10, 128], strides = [1, 1]} : vector<11x128xbf16> to vector<10x128xbf16>
    %c0_93 = arith.constant 0 : index
    %c0_94 = arith.constant 0 : index
    %c5 = arith.constant 5 : index
    %c0_95 = arith.constant 0 : index
    %c0_96 = arith.constant 0 : index
    %61 = vector.load %arg1[%c0_93, %c0_94, %c5, %c0_95, %c0_96] : memref<1x2x21x11x128xbf16, #tpu.memory_space<vmem>>, vector<1x1x1x11x128xbf16>
    %62 = vector.shape_cast %61 : vector<1x1x1x11x128xbf16> to vector<11x128xbf16>
    %63 = vector.extract_strided_slice %62 {offsets = [0, 0], sizes = [10, 128], strides = [1, 1]} : vector<11x128xbf16> to vector<10x128xbf16>
    %c0_97 = arith.constant 0 : index
    %c0_98 = arith.constant 0 : index
    %c6 = arith.constant 6 : index
    %c0_99 = arith.constant 0 : index
    %c0_100 = arith.constant 0 : index
    %64 = vector.load %arg1[%c0_97, %c0_98, %c6, %c0_99, %c0_100] : memref<1x2x21x11x128xbf16, #tpu.memory_space<vmem>>, vector<1x1x1x11x128xbf16>
    %65 = vector.shape_cast %64 : vector<1x1x1x11x128xbf16> to vector<11x128xbf16>
    %66 = vector.extract_strided_slice %65 {offsets = [0, 0], sizes = [10, 128], strides = [1, 1]} : vector<11x128xbf16> to vector<10x128xbf16>
    %c0_101 = arith.constant 0 : index
    %c0_102 = arith.constant 0 : index
    %c4_103 = arith.constant 4 : index
    %c0_104 = arith.constant 0 : index
    %c0_105 = arith.constant 0 : index
    %67 = vector.load %arg1[%c0_101, %c0_102, %c4_103, %c0_104, %c0_105] : memref<1x2x21x11x128xbf16, #tpu.memory_space<vmem>>, vector<1x1x1x11x128xbf16>
    %68 = vector.shape_cast %67 : vector<1x1x1x11x128xbf16> to vector<11x128xbf16>
    %69 = vector.extract_strided_slice %68 {offsets = [1, 0], sizes = [10, 128], strides = [1, 1]} : vector<11x128xbf16> to vector<10x128xbf16>
    %c0_106 = arith.constant 0 : index
    %c0_107 = arith.constant 0 : index
    %c5_108 = arith.constant 5 : index
    %c0_109 = arith.constant 0 : index
    %c0_110 = arith.constant 0 : index
    %70 = vector.load %arg1[%c0_106, %c0_107, %c5_108, %c0_109, %c0_110] : memref<1x2x21x11x128xbf16, #tpu.memory_space<vmem>>, vector<1x1x1x11x128xbf16>
    %71 = vector.shape_cast %70 : vector<1x1x1x11x128xbf16> to vector<11x128xbf16>
    %72 = vector.extract_strided_slice %71 {offsets = [1, 0], sizes = [10, 128], strides = [1, 1]} : vector<11x128xbf16> to vector<10x128xbf16>
    %c0_111 = arith.constant 0 : index
    %c0_112 = arith.constant 0 : index
    %c6_113 = arith.constant 6 : index
    %c0_114 = arith.constant 0 : index
    %c0_115 = arith.constant 0 : index
    %73 = vector.load %arg1[%c0_111, %c0_112, %c6_113, %c0_114, %c0_115] : memref<1x2x21x11x128xbf16, #tpu.memory_space<vmem>>, vector<1x1x1x11x128xbf16>
    %74 = vector.shape_cast %73 : vector<1x1x1x11x128xbf16> to vector<11x128xbf16>
    %75 = vector.extract_strided_slice %74 {offsets = [1, 0], sizes = [10, 128], strides = [1, 1]} : vector<11x128xbf16> to vector<10x128xbf16>
    %c0_116 = arith.constant 0 : index
    %c1_117 = arith.constant 1 : index
    %c4_118 = arith.constant 4 : index
    %c0_119 = arith.constant 0 : index
    %c0_120 = arith.constant 0 : index
    %76 = vector.load %arg1[%c0_116, %c1_117, %c4_118, %c0_119, %c0_120] : memref<1x2x21x11x128xbf16, #tpu.memory_space<vmem>>, vector<1x1x1x11x128xbf16>
    %77 = vector.shape_cast %76 : vector<1x1x1x11x128xbf16> to vector<11x128xbf16>
    %78 = vector.extract_strided_slice %77 {offsets = [0, 0], sizes = [10, 128], strides = [1, 1]} : vector<11x128xbf16> to vector<10x128xbf16>
    %c0_121 = arith.constant 0 : index
    %c1_122 = arith.constant 1 : index
    %c5_123 = arith.constant 5 : index
    %c0_124 = arith.constant 0 : index
    %c0_125 = arith.constant 0 : index
    %79 = vector.load %arg1[%c0_121, %c1_122, %c5_123, %c0_124, %c0_125] : memref<1x2x21x11x128xbf16, #tpu.memory_space<vmem>>, vector<1x1x1x11x128xbf16>
    %80 = vector.shape_cast %79 : vector<1x1x1x11x128xbf16> to vector<11x128xbf16>
    %81 = vector.extract_strided_slice %80 {offsets = [0, 0], sizes = [10, 128], strides = [1, 1]} : vector<11x128xbf16> to vector<10x128xbf16>
    %c0_126 = arith.constant 0 : index
    %c1_127 = arith.constant 1 : index
    %c6_128 = arith.constant 6 : index
    %c0_129 = arith.constant 0 : index
    %c0_130 = arith.constant 0 : index
    %82 = vector.load %arg1[%c0_126, %c1_127, %c6_128, %c0_129, %c0_130] : memref<1x2x21x11x128xbf16, #tpu.memory_space<vmem>>, vector<1x1x1x11x128xbf16>
    %83 = vector.shape_cast %82 : vector<1x1x1x11x128xbf16> to vector<11x128xbf16>
    %84 = vector.extract_strided_slice %83 {offsets = [0, 0], sizes = [10, 128], strides = [1, 1]} : vector<11x128xbf16> to vector<10x128xbf16>
    %85 = tpu.concatenate %60, %63, %66, %69, %72, %75, %78, %81, %84 in 1 : vector<10x128xbf16>, vector<10x128xbf16>, vector<10x128xbf16>, vector<10x128xbf16>, vector<10x128xbf16>, vector<10x128xbf16>, vector<10x128xbf16>, vector<10x128xbf16>, vector<10x128xbf16> -> vector<10x1152xbf16>
    %c32 = arith.constant 32 : index
    %c0_131 = arith.constant 0 : index
    %86 = vector.load %arg11[%c32, %c0_131] : memref<160x1152xbf16, #tpu.memory_space<vmem>>, vector<10x1152xbf16>
    tpu.vector_store %arg11[%c32, %c0_131], %85 {strides = array<i32>} : memref<160x1152xbf16, #tpu.memory_space<vmem>>, vector<10x1152xbf16>,
    %c0_132 = arith.constant 0 : index
    %c0_133 = arith.constant 0 : index
    %c6_134 = arith.constant 6 : index
    %c0_135 = arith.constant 0 : index
    %c0_136 = arith.constant 0 : index
    %87 = vector.load %arg1[%c0_132, %c0_133, %c6_134, %c0_135, %c0_136] : memref<1x2x21x11x128xbf16, #tpu.memory_space<vmem>>, vector<1x1x1x11x128xbf16>
    %88 = vector.shape_cast %87 : vector<1x1x1x11x128xbf16> to vector<11x128xbf16>
    %89 = vector.extract_strided_slice %88 {offsets = [0, 0], sizes = [10, 128], strides = [1, 1]} : vector<11x128xbf16> to vector<10x128xbf16>
    %c0_137 = arith.constant 0 : index
    %c0_138 = arith.constant 0 : index
    %c7 = arith.constant 7 : index
    %c0_139 = arith.constant 0 : index
    %c0_140 = arith.constant 0 : index
    %90 = vector.load %arg1[%c0_137, %c0_138, %c7, %c0_139, %c0_140] : memref<1x2x21x11x128xbf16, #tpu.memory_space<vmem>>, vector<1x1x1x11x128xbf16>
    %91 = vector.shape_cast %90 : vector<1x1x1x11x128xbf16> to vector<11x128xbf16>
    %92 = vector.extract_strided_slice %91 {offsets = [0, 0], sizes = [10, 128], strides = [1, 1]} : vector<11x128xbf16> to vector<10x128xbf16>
    %c0_141 = arith.constant 0 : index
    %c0_142 = arith.constant 0 : index
    %c8 = arith.constant 8 : index
    %c0_143 = arith.constant 0 : index
    %c0_144 = arith.constant 0 : index
    %93 = vector.load %arg1[%c0_141, %c0_142, %c8, %c0_143, %c0_144] : memref<1x2x21x11x128xbf16, #tpu.memory_space<vmem>>, vector<1x1x1x11x128xbf16>
    %94 = vector.shape_cast %93 : vector<1x1x1x11x128xbf16> to vector<11x128xbf16>
    %95 = vector.extract_strided_slice %94 {offsets = [0, 0], sizes = [10, 128], strides = [1, 1]} : vector<11x128xbf16> to vector<10x128xbf16>
    %c0_145 = arith.constant 0 : index
    %c0_146 = arith.constant 0 : index
    %c6_147 = arith.constant 6 : index
    %c0_148 = arith.constant 0 : index
    %c0_149 = arith.constant 0 : index
    %96 = vector.load %arg1[%c0_145, %c0_146, %c6_147, %c0_148, %c0_149] : memref<1x2x21x11x128xbf16, #tpu.memory_space<vmem>>, vector<1x1x1x11x128xbf16>
    %97 = vector.shape_cast %96 : vector<1x1x1x11x128xbf16> to vector<11x128xbf16>
    %98 = vector.extract_strided_slice %97 {offsets = [1, 0], sizes = [10, 128], strides = [1, 1]} : vector<11x128xbf16> to vector<10x128xbf16>
    %c0_150 = arith.constant 0 : index
    %c0_151 = arith.constant 0 : index
    %c7_152 = arith.constant 7 : index
    %c0_153 = arith.constant 0 : index
    %c0_154 = arith.constant 0 : index
    %99 = vector.load %arg1[%c0_150, %c0_151, %c7_152, %c0_153, %c0_154] : memref<1x2x21x11x128xbf16, #tpu.memory_space<vmem>>, vector<1x1x1x11x128xbf16>
    %100 = vector.shape_cast %99 : vector<1x1x1x11x128xbf16> to vector<11x128xbf16>
    %101 = vector.extract_strided_slice %100 {offsets = [1, 0], sizes = [10, 128], strides = [1, 1]} : vector<11x128xbf16> to vector<10x128xbf16>
    %c0_155 = arith.constant 0 : index
    %c0_156 = arith.constant 0 : index
    %c8_157 = arith.constant 8 : index
    %c0_158 = arith.constant 0 : index
    %c0_159 = arith.constant 0 : index
    %102 = vector.load %arg1[%c0_155, %c0_156, %c8_157, %c0_158, %c0_159] : memref<1x2x21x11x128xbf16, #tpu.memory_space<vmem>>, vector<1x1x1x11x128xbf16>
    %103 = vector.shape_cast %102 : vector<1x1x1x11x128xbf16> to vector<11x128xbf16>
    %104 = vector.extract_strided_slice %103 {offsets = [1, 0], sizes = [10, 128], strides = [1, 1]} : vector<11x128xbf16> to vector<10x128xbf16>
    %c0_160 = arith.constant 0 : index
    %c1_161 = arith.constant 1 : index
    %c6_162 = arith.constant 6 : index
    %c0_163 = arith.constant 0 : index
    %c0_164 = arith.constant 0 : index
    %105 = vector.load %arg1[%c0_160, %c1_161, %c6_162, %c0_163, %c0_164] : memref<1x2x21x11x128xbf16, #tpu.memory_space<vmem>>, vector<1x1x1x11x128xbf16>
    %106 = vector.shape_cast %105 : vector<1x1x1x11x128xbf16> to vector<11x128xbf16>
    %107 = vector.extract_strided_slice %106 {offsets = [0, 0], sizes = [10, 128], strides = [1, 1]} : vector<11x128xbf16> to vector<10x128xbf16>
    %c0_165 = arith.constant 0 : index
    %c1_166 = arith.constant 1 : index
    %c7_167 = arith.constant 7 : index
    %c0_168 = arith.constant 0 : index
    %c0_169 = arith.constant 0 : index
    %108 = vector.load %arg1[%c0_165, %c1_166, %c7_167, %c0_168, %c0_169] : memref<1x2x21x11x128xbf16, #tpu.memory_space<vmem>>, vector<1x1x1x11x128xbf16>
    %109 = vector.shape_cast %108 : vector<1x1x1x11x128xbf16> to vector<11x128xbf16>
    %110 = vector.extract_strided_slice %109 {offsets = [0, 0], sizes = [10, 128], strides = [1, 1]} : vector<11x128xbf16> to vector<10x128xbf16>
    %c0_170 = arith.constant 0 : index
    %c1_171 = arith.constant 1 : index
    %c8_172 = arith.constant 8 : index
    %c0_173 = arith.constant 0 : index
    %c0_174 = arith.constant 0 : index
    %111 = vector.load %arg1[%c0_170, %c1_171, %c8_172, %c0_173, %c0_174] : memref<1x2x21x11x128xbf16, #tpu.memory_space<vmem>>, vector<1x1x1x11x128xbf16>
    %112 = vector.shape_cast %111 : vector<1x1x1x11x128xbf16> to vector<11x128xbf16>
    %113 = vector.extract_strided_slice %112 {offsets = [0, 0], sizes = [10, 128], strides = [1, 1]} : vector<11x128xbf16> to vector<10x128xbf16>
    %114 = tpu.concatenate %89, %92, %95, %98, %101, %104, %107, %110, %113 in 1 : vector<10x128xbf16>, vector<10x128xbf16>, vector<10x128xbf16>, vector<10x128xbf16>, vector<10x128xbf16>, vector<10x128xbf16>, vector<10x128xbf16>, vector<10x128xbf16>, vector<10x128xbf16> -> vector<10x1152xbf16>
    %c48 = arith.constant 48 : index
    %c0_175 = arith.constant 0 : index
    %115 = vector.load %arg11[%c48, %c0_175] : memref<160x1152xbf16, #tpu.memory_space<vmem>>, vector<10x1152xbf16>
    tpu.vector_store %arg11[%c48, %c0_175], %114 {strides = array<i32>} : memref<160x1152xbf16, #tpu.memory_space<vmem>>, vector<10x1152xbf16>,
    %c0_176 = arith.constant 0 : index
    %c0_177 = arith.constant 0 : index
    %c8_178 = arith.constant 8 : index
    %c0_179 = arith.constant 0 : index
    %c0_180 = arith.constant 0 : index
    %116 = vector.load %arg1[%c0_176, %c0_177, %c8_178, %c0_179, %c0_180] : memref<1x2x21x11x128xbf16, #tpu.memory_space<vmem>>, vector<1x1x1x11x128xbf16>
    %117 = vector.shape_cast %116 : vector<1x1x1x11x128xbf16> to vector<11x128xbf16>
    %118 = vector.extract_strided_slice %117 {offsets = [0, 0], sizes = [10, 128], strides = [1, 1]} : vector<11x128xbf16> to vector<10x128xbf16>
    %c0_181 = arith.constant 0 : index
    %c0_182 = arith.constant 0 : index
    %c9 = arith.constant 9 : index
    %c0_183 = arith.constant 0 : index
    %c0_184 = arith.constant 0 : index
    %119 = vector.load %arg1[%c0_181, %c0_182, %c9, %c0_183, %c0_184] : memref<1x2x21x11x128xbf16, #tpu.memory_space<vmem>>, vector<1x1x1x11x128xbf16>
    %120 = vector.shape_cast %119 : vector<1x1x1x11x128xbf16> to vector<11x128xbf16>
    %121 = vector.extract_strided_slice %120 {offsets = [0, 0], sizes = [10, 128], strides = [1, 1]} : vector<11x128xbf16> to vector<10x128xbf16>
    %c0_185 = arith.constant 0 : index
    %c0_186 = arith.constant 0 : index
    %c10 = arith.constant 10 : index
    %c0_187 = arith.constant 0 : index
    %c0_188 = arith.constant 0 : index
    %122 = vector.load %arg1[%c0_185, %c0_186, %c10, %c0_187, %c0_188] : memref<1x2x21x11x128xbf16, #tpu.memory_space<vmem>>, vector<1x1x1x11x128xbf16>
    %123 = vector.shape_cast %122 : vector<1x1x1x11x128xbf16> to vector<11x128xbf16>
    %124 = vector.extract_strided_slice %123 {offsets = [0, 0], sizes = [10, 128], strides = [1, 1]} : vector<11x128xbf16> to vector<10x128xbf16>
    %c0_189 = arith.constant 0 : index
    %c0_190 = arith.constant 0 : index
    %c8_191 = arith.constant 8 : index
    %c0_192 = arith.constant 0 : index
    %c0_193 = arith.constant 0 : index
    %125 = vector.load %arg1[%c0_189, %c0_190, %c8_191, %c0_192, %c0_193] : memref<1x2x21x11x128xbf16, #tpu.memory_space<vmem>>, vector<1x1x1x11x128xbf16>
    %126 = vector.shape_cast %125 : vector<1x1x1x11x128xbf16> to vector<11x128xbf16>
    %127 = vector.extract_strided_slice %126 {offsets = [1, 0], sizes = [10, 128], strides = [1, 1]} : vector<11x128xbf16> to vector<10x128xbf16>
    %c0_194 = arith.constant 0 : index
    %c0_195 = arith.constant 0 : index
    %c9_196 = arith.constant 9 : index
    %c0_197 = arith.constant 0 : index
    %c0_198 = arith.constant 0 : index
    %128 = vector.load %arg1[%c0_194, %c0_195, %c9_196, %c0_197, %c0_198] : memref<1x2x21x11x128xbf16, #tpu.memory_space<vmem>>, vector<1x1x1x11x128xbf16>
    %129 = vector.shape_cast %128 : vector<1x1x1x11x128xbf16> to vector<11x128xbf16>
    %130 = vector.extract_strided_slice %129 {offsets = [1, 0], sizes = [10, 128], strides = [1, 1]} : vector<11x128xbf16> to vector<10x128xbf16>
    %c0_199 = arith.constant 0 : index
    %c0_200 = arith.constant 0 : index
    %c10_201 = arith.constant 10 : index
    %c0_202 = arith.constant 0 : index
    %c0_203 = arith.constant 0 : index
    %131 = vector.load %arg1[%c0_199, %c0_200, %c10_201, %c0_202, %c0_203] : memref<1x2x21x11x128xbf16, #tpu.memory_space<vmem>>, vector<1x1x1x11x128xbf16>
    %132 = vector.shape_cast %131 : vector<1x1x1x11x128xbf16> to vector<11x128xbf16>
    %133 = vector.extract_strided_slice %132 {offsets = [1, 0], sizes = [10, 128], strides = [1, 1]} : vector<11x128xbf16> to vector<10x128xbf16>
    %c0_204 = arith.constant 0 : index
    %c1_205 = arith.constant 1 : index
    %c8_206 = arith.constant 8 : index
    %c0_207 = arith.constant 0 : index
    %c0_208 = arith.constant 0 : index
    %134 = vector.load %arg1[%c0_204, %c1_205, %c8_206, %c0_207, %c0_208] : memref<1x2x21x11x128xbf16, #tpu.memory_space<vmem>>, vector<1x1x1x11x128xbf16>
    %135 = vector.shape_cast %134 : vector<1x1x1x11x128xbf16> to vector<11x128xbf16>
    %136 = vector.extract_strided_slice %135 {offsets = [0, 0], sizes = [10, 128], strides = [1, 1]} : vector<11x128xbf16> to vector<10x128xbf16>
    %c0_209 = arith.constant 0 : index
    %c1_210 = arith.constant 1 : index
    %c9_211 = arith.constant 9 : index
    %c0_212 = arith.constant 0 : index
    %c0_213 = arith.constant 0 : index
    %137 = vector.load %arg1[%c0_209, %c1_210, %c9_211, %c0_212, %c0_213] : memref<1x2x21x11x128xbf16, #tpu.memory_space<vmem>>, vector<1x1x1x11x128xbf16>
    %138 = vector.shape_cast %137 : vector<1x1x1x11x128xbf16> to vector<11x128xbf16>
    %139 = vector.extract_strided_slice %138 {offsets = [0, 0], sizes = [10, 128], strides = [1, 1]} : vector<11x128xbf16> to vector<10x128xbf16>
    %c0_214 = arith.constant 0 : index
    %c1_215 = arith.constant 1 : index
    %c10_216 = arith.constant 10 : index
    %c0_217 = arith.constant 0 : index
    %c0_218 = arith.constant 0 : index
    %140 = vector.load %arg1[%c0_214, %c1_215, %c10_216, %c0_217, %c0_218] : memref<1x2x21x11x128xbf16, #tpu.memory_space<vmem>>, vector<1x1x1x11x128xbf16>
    %141 = vector.shape_cast %140 : vector<1x1x1x11x128xbf16> to vector<11x128xbf16>
    %142 = vector.extract_strided_slice %141 {offsets = [0, 0], sizes = [10, 128], strides = [1, 1]} : vector<11x128xbf16> to vector<10x128xbf16>
    %143 = tpu.concatenate %118, %121, %124, %127, %130, %133, %136, %139, %142 in 1 : vector<10x128xbf16>, vector<10x128xbf16>, vector<10x128xbf16>, vector<10x128xbf16>, vector<10x128xbf16>, vector<10x128xbf16>, vector<10x128xbf16>, vector<10x128xbf16>, vector<10x128xbf16> -> vector<10x1152xbf16>
    %c64 = arith.constant 64 : index
    %c0_219 = arith.constant 0 : index
    %144 = vector.load %arg11[%c64, %c0_219] : memref<160x1152xbf16, #tpu.memory_space<vmem>>, vector<10x1152xbf16>
    tpu.vector_store %arg11[%c64, %c0_219], %143 {strides = array<i32>} : memref<160x1152xbf16, #tpu.memory_space<vmem>>, vector<10x1152xbf16>,
    %c0_220 = arith.constant 0 : index
    %c0_221 = arith.constant 0 : index
    %c10_222 = arith.constant 10 : index
    %c0_223 = arith.constant 0 : index
    %c0_224 = arith.constant 0 : index
    %145 = vector.load %arg1[%c0_220, %c0_221, %c10_222, %c0_223, %c0_224] : memref<1x2x21x11x128xbf16, #tpu.memory_space<vmem>>, vector<1x1x1x11x128xbf16>
    %146 = vector.shape_cast %145 : vector<1x1x1x11x128xbf16> to vector<11x128xbf16>
    %147 = vector.extract_strided_slice %146 {offsets = [0, 0], sizes = [10, 128], strides = [1, 1]} : vector<11x128xbf16> to vector<10x128xbf16>
    %c0_225 = arith.constant 0 : index
    %c0_226 = arith.constant 0 : index
    %c11 = arith.constant 11 : index
    %c0_227 = arith.constant 0 : index
    %c0_228 = arith.constant 0 : index
    %148 = vector.load %arg1[%c0_225, %c0_226, %c11, %c0_227, %c0_228] : memref<1x2x21x11x128xbf16, #tpu.memory_space<vmem>>, vector<1x1x1x11x128xbf16>
    %149 = vector.shape_cast %148 : vector<1x1x1x11x128xbf16> to vector<11x128xbf16>
    %150 = vector.extract_strided_slice %149 {offsets = [0, 0], sizes = [10, 128], strides = [1, 1]} : vector<11x128xbf16> to vector<10x128xbf16>
    %c0_229 = arith.constant 0 : index
    %c0_230 = arith.constant 0 : index
    %c12 = arith.constant 12 : index
    %c0_231 = arith.constant 0 : index
    %c0_232 = arith.constant 0 : index
    %151 = vector.load %arg1[%c0_229, %c0_230, %c12, %c0_231, %c0_232] : memref<1x2x21x11x128xbf16, #tpu.memory_space<vmem>>, vector<1x1x1x11x128xbf16>
    %152 = vector.shape_cast %151 : vector<1x1x1x11x128xbf16> to vector<11x128xbf16>
    %153 = vector.extract_strided_slice %152 {offsets = [0, 0], sizes = [10, 128], strides = [1, 1]} : vector<11x128xbf16> to vector<10x128xbf16>
    %c0_233 = arith.constant 0 : index
    %c0_234 = arith.constant 0 : index
    %c10_235 = arith.constant 10 : index
    %c0_236 = arith.constant 0 : index
    %c0_237 = arith.constant 0 : index
    %154 = vector.load %arg1[%c0_233, %c0_234, %c10_235, %c0_236, %c0_237] : memref<1x2x21x11x128xbf16, #tpu.memory_space<vmem>>, vector<1x1x1x11x128xbf16>
    %155 = vector.shape_cast %154 : vector<1x1x1x11x128xbf16> to vector<11x128xbf16>
    %156 = vector.extract_strided_slice %155 {offsets = [1, 0], sizes = [10, 128], strides = [1, 1]} : vector<11x128xbf16> to vector<10x128xbf16>
    %c0_238 = arith.constant 0 : index
    %c0_239 = arith.constant 0 : index
    %c11_240 = arith.constant 11 : index
    %c0_241 = arith.constant 0 : index
    %c0_242 = arith.constant 0 : index
    %157 = vector.load %arg1[%c0_238, %c0_239, %c11_240, %c0_241, %c0_242] : memref<1x2x21x11x128xbf16, #tpu.memory_space<vmem>>, vector<1x1x1x11x128xbf16>
    %158 = vector.shape_cast %157 : vector<1x1x1x11x128xbf16> to vector<11x128xbf16>
    %159 = vector.extract_strided_slice %158 {offsets = [1, 0], sizes = [10, 128], strides = [1, 1]} : vector<11x128xbf16> to vector<10x128xbf16>
    %c0_243 = arith.constant 0 : index
    %c0_244 = arith.constant 0 : index
    %c12_245 = arith.constant 12 : index
    %c0_246 = arith.constant 0 : index
    %c0_247 = arith.constant 0 : index
    %160 = vector.load %arg1[%c0_243, %c0_244, %c12_245, %c0_246, %c0_247] : memref<1x2x21x11x128xbf16, #tpu.memory_space<vmem>>, vector<1x1x1x11x128xbf16>
    %161 = vector.shape_cast %160 : vector<1x1x1x11x128xbf16> to vector<11x128xbf16>
    %162 = vector.extract_strided_slice %161 {offsets = [1, 0], sizes = [10, 128], strides = [1, 1]} : vector<11x128xbf16> to vector<10x128xbf16>
    %c0_248 = arith.constant 0 : index
    %c1_249 = arith.constant 1 : index
    %c10_250 = arith.constant 10 : index
    %c0_251 = arith.constant 0 : index
    %c0_252 = arith.constant 0 : index
    %163 = vector.load %arg1[%c0_248, %c1_249, %c10_250, %c0_251, %c0_252] : memref<1x2x21x11x128xbf16, #tpu.memory_space<vmem>>, vector<1x1x1x11x128xbf16>
    %164 = vector.shape_cast %163 : vector<1x1x1x11x128xbf16> to vector<11x128xbf16>
    %165 = vector.extract_strided_slice %164 {offsets = [0, 0], sizes = [10, 128], strides = [1, 1]} : vector<11x128xbf16> to vector<10x128xbf16>
    %c0_253 = arith.constant 0 : index
    %c1_254 = arith.constant 1 : index
    %c11_255 = arith.constant 11 : index
    %c0_256 = arith.constant 0 : index
    %c0_257 = arith.constant 0 : index
    %166 = vector.load %arg1[%c0_253, %c1_254, %c11_255, %c0_256, %c0_257] : memref<1x2x21x11x128xbf16, #tpu.memory_space<vmem>>, vector<1x1x1x11x128xbf16>
    %167 = vector.shape_cast %166 : vector<1x1x1x11x128xbf16> to vector<11x128xbf16>
    %168 = vector.extract_strided_slice %167 {offsets = [0, 0], sizes = [10, 128], strides = [1, 1]} : vector<11x128xbf16> to vector<10x128xbf16>
    %c0_258 = arith.constant 0 : index
    %c1_259 = arith.constant 1 : index
    %c12_260 = arith.constant 12 : index
    %c0_261 = arith.constant 0 : index
    %c0_262 = arith.constant 0 : index
    %169 = vector.load %arg1[%c0_258, %c1_259, %c12_260, %c0_261, %c0_262] : memref<1x2x21x11x128xbf16, #tpu.memory_space<vmem>>, vector<1x1x1x11x128xbf16>
    %170 = vector.shape_cast %169 : vector<1x1x1x11x128xbf16> to vector<11x128xbf16>
    %171 = vector.extract_strided_slice %170 {offsets = [0, 0], sizes = [10, 128], strides = [1, 1]} : vector<11x128xbf16> to vector<10x128xbf16>
    %172 = tpu.concatenate %147, %150, %153, %156, %159, %162, %165, %168, %171 in 1 : vector<10x128xbf16>, vector<10x128xbf16>, vector<10x128xbf16>, vector<10x128xbf16>, vector<10x128xbf16>, vector<10x128xbf16>, vector<10x128xbf16>, vector<10x128xbf16>, vector<10x128xbf16> -> vector<10x1152xbf16>
    %c80 = arith.constant 80 : index
    %c0_263 = arith.constant 0 : index
    %173 = vector.load %arg11[%c80, %c0_263] : memref<160x1152xbf16, #tpu.memory_space<vmem>>, vector<10x1152xbf16>
    tpu.vector_store %arg11[%c80, %c0_263], %172 {strides = array<i32>} : memref<160x1152xbf16, #tpu.memory_space<vmem>>, vector<10x1152xbf16>,
    %c0_264 = arith.constant 0 : index
    %c0_265 = arith.constant 0 : index
    %c12_266 = arith.constant 12 : index
    %c0_267 = arith.constant 0 : index
    %c0_268 = arith.constant 0 : index
    %174 = vector.load %arg1[%c0_264, %c0_265, %c12_266, %c0_267, %c0_268] : memref<1x2x21x11x128xbf16, #tpu.memory_space<vmem>>, vector<1x1x1x11x128xbf16>
    %175 = vector.shape_cast %174 : vector<1x1x1x11x128xbf16> to vector<11x128xbf16>
    %176 = vector.extract_strided_slice %175 {offsets = [0, 0], sizes = [10, 128], strides = [1, 1]} : vector<11x128xbf16> to vector<10x128xbf16>
    %c0_269 = arith.constant 0 : index
    %c0_270 = arith.constant 0 : index
    %c13 = arith.constant 13 : index
    %c0_271 = arith.constant 0 : index
    %c0_272 = arith.constant 0 : index
    %177 = vector.load %arg1[%c0_269, %c0_270, %c13, %c0_271, %c0_272] : memref<1x2x21x11x128xbf16, #tpu.memory_space<vmem>>, vector<1x1x1x11x128xbf16>
    %178 = vector.shape_cast %177 : vector<1x1x1x11x128xbf16> to vector<11x128xbf16>
    %179 = vector.extract_strided_slice %178 {offsets = [0, 0], sizes = [10, 128], strides = [1, 1]} : vector<11x128xbf16> to vector<10x128xbf16>
    %c0_273 = arith.constant 0 : index
    %c0_274 = arith.constant 0 : index
    %c14 = arith.constant 14 : index
    %c0_275 = arith.constant 0 : index
    %c0_276 = arith.constant 0 : index
    %180 = vector.load %arg1[%c0_273, %c0_274, %c14, %c0_275, %c0_276] : memref<1x2x21x11x128xbf16, #tpu.memory_space<vmem>>, vector<1x1x1x11x128xbf16>
    %181 = vector.shape_cast %180 : vector<1x1x1x11x128xbf16> to vector<11x128xbf16>
    %182 = vector.extract_strided_slice %181 {offsets = [0, 0], sizes = [10, 128], strides = [1, 1]} : vector<11x128xbf16> to vector<10x128xbf16>
    %c0_277 = arith.constant 0 : index
    %c0_278 = arith.constant 0 : index
    %c12_279 = arith.constant 12 : index
    %c0_280 = arith.constant 0 : index
    %c0_281 = arith.constant 0 : index
    %183 = vector.load %arg1[%c0_277, %c0_278, %c12_279, %c0_280, %c0_281] : memref<1x2x21x11x128xbf16, #tpu.memory_space<vmem>>, vector<1x1x1x11x128xbf16>
    %184 = vector.shape_cast %183 : vector<1x1x1x11x128xbf16> to vector<11x128xbf16>
    %185 = vector.extract_strided_slice %184 {offsets = [1, 0], sizes = [10, 128], strides = [1, 1]} : vector<11x128xbf16> to vector<10x128xbf16>
    %c0_282 = arith.constant 0 : index
    %c0_283 = arith.constant 0 : index
    %c13_284 = arith.constant 13 : index
    %c0_285 = arith.constant 0 : index
    %c0_286 = arith.constant 0 : index
    %186 = vector.load %arg1[%c0_282, %c0_283, %c13_284, %c0_285, %c0_286] : memref<1x2x21x11x128xbf16, #tpu.memory_space<vmem>>, vector<1x1x1x11x128xbf16>
    %187 = vector.shape_cast %186 : vector<1x1x1x11x128xbf16> to vector<11x128xbf16>
    %188 = vector.extract_strided_slice %187 {offsets = [1, 0], sizes = [10, 128], strides = [1, 1]} : vector<11x128xbf16> to vector<10x128xbf16>
    %c0_287 = arith.constant 0 : index
    %c0_288 = arith.constant 0 : index
    %c14_289 = arith.constant 14 : index
    %c0_290 = arith.constant 0 : index
    %c0_291 = arith.constant 0 : index
    %189 = vector.load %arg1[%c0_287, %c0_288, %c14_289, %c0_290, %c0_291] : memref<1x2x21x11x128xbf16, #tpu.memory_space<vmem>>, vector<1x1x1x11x128xbf16>
    %190 = vector.shape_cast %189 : vector<1x1x1x11x128xbf16> to vector<11x128xbf16>
    %191 = vector.extract_strided_slice %190 {offsets = [1, 0], sizes = [10, 128], strides = [1, 1]} : vector<11x128xbf16> to vector<10x128xbf16>
    %c0_292 = arith.constant 0 : index
    %c1_293 = arith.constant 1 : index
    %c12_294 = arith.constant 12 : index
    %c0_295 = arith.constant 0 : index
    %c0_296 = arith.constant 0 : index
    %192 = vector.load %arg1[%c0_292, %c1_293, %c12_294, %c0_295, %c0_296] : memref<1x2x21x11x128xbf16, #tpu.memory_space<vmem>>, vector<1x1x1x11x128xbf16>
    %193 = vector.shape_cast %192 : vector<1x1x1x11x128xbf16> to vector<11x128xbf16>
    %194 = vector.extract_strided_slice %193 {offsets = [0, 0], sizes = [10, 128], strides = [1, 1]} : vector<11x128xbf16> to vector<10x128xbf16>
    %c0_297 = arith.constant 0 : index
    %c1_298 = arith.constant 1 : index
    %c13_299 = arith.constant 13 : index
    %c0_300 = arith.constant 0 : index
    %c0_301 = arith.constant 0 : index
    %195 = vector.load %arg1[%c0_297, %c1_298, %c13_299, %c0_300, %c0_301] : memref<1x2x21x11x128xbf16, #tpu.memory_space<vmem>>, vector<1x1x1x11x128xbf16>
    %196 = vector.shape_cast %195 : vector<1x1x1x11x128xbf16> to vector<11x128xbf16>
    %197 = vector.extract_strided_slice %196 {offsets = [0, 0], sizes = [10, 128], strides = [1, 1]} : vector<11x128xbf16> to vector<10x128xbf16>
    %c0_302 = arith.constant 0 : index
    %c1_303 = arith.constant 1 : index
    %c14_304 = arith.constant 14 : index
    %c0_305 = arith.constant 0 : index
    %c0_306 = arith.constant 0 : index
    %198 = vector.load %arg1[%c0_302, %c1_303, %c14_304, %c0_305, %c0_306] : memref<1x2x21x11x128xbf16, #tpu.memory_space<vmem>>, vector<1x1x1x11x128xbf16>
    %199 = vector.shape_cast %198 : vector<1x1x1x11x128xbf16> to vector<11x128xbf16>
    %200 = vector.extract_strided_slice %199 {offsets = [0, 0], sizes = [10, 128], strides = [1, 1]} : vector<11x128xbf16> to vector<10x128xbf16>
    %201 = tpu.concatenate %176, %179, %182, %185, %188, %191, %194, %197, %200 in 1 : vector<10x128xbf16>, vector<10x128xbf16>, vector<10x128xbf16>, vector<10x128xbf16>, vector<10x128xbf16>, vector<10x128xbf16>, vector<10x128xbf16>, vector<10x128xbf16>, vector<10x128xbf16> -> vector<10x1152xbf16>
    %c96 = arith.constant 96 : index
    %c0_307 = arith.constant 0 : index
    %202 = vector.load %arg11[%c96, %c0_307] : memref<160x1152xbf16, #tpu.memory_space<vmem>>, vector<10x1152xbf16>
    tpu.vector_store %arg11[%c96, %c0_307], %201 {strides = array<i32>} : memref<160x1152xbf16, #tpu.memory_space<vmem>>, vector<10x1152xbf16>,
    %c0_308 = arith.constant 0 : index
    %c0_309 = arith.constant 0 : index
    %c14_310 = arith.constant 14 : index
    %c0_311 = arith.constant 0 : index
    %c0_312 = arith.constant 0 : index
    %203 = vector.load %arg1[%c0_308, %c0_309, %c14_310, %c0_311, %c0_312] : memref<1x2x21x11x128xbf16, #tpu.memory_space<vmem>>, vector<1x1x1x11x128xbf16>
    %204 = vector.shape_cast %203 : vector<1x1x1x11x128xbf16> to vector<11x128xbf16>
    %205 = vector.extract_strided_slice %204 {offsets = [0, 0], sizes = [10, 128], strides = [1, 1]} : vector<11x128xbf16> to vector<10x128xbf16>
    %c0_313 = arith.constant 0 : index
    %c0_314 = arith.constant 0 : index
    %c15 = arith.constant 15 : index
    %c0_315 = arith.constant 0 : index
    %c0_316 = arith.constant 0 : index
    %206 = vector.load %arg1[%c0_313, %c0_314, %c15, %c0_315, %c0_316] : memref<1x2x21x11x128xbf16, #tpu.memory_space<vmem>>, vector<1x1x1x11x128xbf16>
    %207 = vector.shape_cast %206 : vector<1x1x1x11x128xbf16> to vector<11x128xbf16>
    %208 = vector.extract_strided_slice %207 {offsets = [0, 0], sizes = [10, 128], strides = [1, 1]} : vector<11x128xbf16> to vector<10x128xbf16>
    %c0_317 = arith.constant 0 : index
    %c0_318 = arith.constant 0 : index
    %c16_319 = arith.constant 16 : index
    %c0_320 = arith.constant 0 : index
    %c0_321 = arith.constant 0 : index
    %209 = vector.load %arg1[%c0_317, %c0_318, %c16_319, %c0_320, %c0_321] : memref<1x2x21x11x128xbf16, #tpu.memory_space<vmem>>, vector<1x1x1x11x128xbf16>
    %210 = vector.shape_cast %209 : vector<1x1x1x11x128xbf16> to vector<11x128xbf16>
    %211 = vector.extract_strided_slice %210 {offsets = [0, 0], sizes = [10, 128], strides = [1, 1]} : vector<11x128xbf16> to vector<10x128xbf16>
    %c0_322 = arith.constant 0 : index
    %c0_323 = arith.constant 0 : index
    %c14_324 = arith.constant 14 : index
    %c0_325 = arith.constant 0 : index
    %c0_326 = arith.constant 0 : index
    %212 = vector.load %arg1[%c0_322, %c0_323, %c14_324, %c0_325, %c0_326] : memref<1x2x21x11x128xbf16, #tpu.memory_space<vmem>>, vector<1x1x1x11x128xbf16>
    %213 = vector.shape_cast %212 : vector<1x1x1x11x128xbf16> to vector<11x128xbf16>
    %214 = vector.extract_strided_slice %213 {offsets = [1, 0], sizes = [10, 128], strides = [1, 1]} : vector<11x128xbf16> to vector<10x128xbf16>
    %c0_327 = arith.constant 0 : index
    %c0_328 = arith.constant 0 : index
    %c15_329 = arith.constant 15 : index
    %c0_330 = arith.constant 0 : index
    %c0_331 = arith.constant 0 : index
    %215 = vector.load %arg1[%c0_327, %c0_328, %c15_329, %c0_330, %c0_331] : memref<1x2x21x11x128xbf16, #tpu.memory_space<vmem>>, vector<1x1x1x11x128xbf16>
    %216 = vector.shape_cast %215 : vector<1x1x1x11x128xbf16> to vector<11x128xbf16>
    %217 = vector.extract_strided_slice %216 {offsets = [1, 0], sizes = [10, 128], strides = [1, 1]} : vector<11x128xbf16> to vector<10x128xbf16>
    %c0_332 = arith.constant 0 : index
    %c0_333 = arith.constant 0 : index
    %c16_334 = arith.constant 16 : index
    %c0_335 = arith.constant 0 : index
    %c0_336 = arith.constant 0 : index
    %218 = vector.load %arg1[%c0_332, %c0_333, %c16_334, %c0_335, %c0_336] : memref<1x2x21x11x128xbf16, #tpu.memory_space<vmem>>, vector<1x1x1x11x128xbf16>
    %219 = vector.shape_cast %218 : vector<1x1x1x11x128xbf16> to vector<11x128xbf16>
    %220 = vector.extract_strided_slice %219 {offsets = [1, 0], sizes = [10, 128], strides = [1, 1]} : vector<11x128xbf16> to vector<10x128xbf16>
    %c0_337 = arith.constant 0 : index
    %c1_338 = arith.constant 1 : index
    %c14_339 = arith.constant 14 : index
    %c0_340 = arith.constant 0 : index
    %c0_341 = arith.constant 0 : index
    %221 = vector.load %arg1[%c0_337, %c1_338, %c14_339, %c0_340, %c0_341] : memref<1x2x21x11x128xbf16, #tpu.memory_space<vmem>>, vector<1x1x1x11x128xbf16>
    %222 = vector.shape_cast %221 : vector<1x1x1x11x128xbf16> to vector<11x128xbf16>
    %223 = vector.extract_strided_slice %222 {offsets = [0, 0], sizes = [10, 128], strides = [1, 1]} : vector<11x128xbf16> to vector<10x128xbf16>
    %c0_342 = arith.constant 0 : index
    %c1_343 = arith.constant 1 : index
    %c15_344 = arith.constant 15 : index
    %c0_345 = arith.constant 0 : index
    %c0_346 = arith.constant 0 : index
    %224 = vector.load %arg1[%c0_342, %c1_343, %c15_344, %c0_345, %c0_346] : memref<1x2x21x11x128xbf16, #tpu.memory_space<vmem>>, vector<1x1x1x11x128xbf16>
    %225 = vector.shape_cast %224 : vector<1x1x1x11x128xbf16> to vector<11x128xbf16>
    %226 = vector.extract_strided_slice %225 {offsets = [0, 0], sizes = [10, 128], strides = [1, 1]} : vector<11x128xbf16> to vector<10x128xbf16>
    %c0_347 = arith.constant 0 : index
    %c1_348 = arith.constant 1 : index
    %c16_349 = arith.constant 16 : index
    %c0_350 = arith.constant 0 : index
    %c0_351 = arith.constant 0 : index
    %227 = vector.load %arg1[%c0_347, %c1_348, %c16_349, %c0_350, %c0_351] : memref<1x2x21x11x128xbf16, #tpu.memory_space<vmem>>, vector<1x1x1x11x128xbf16>
    %228 = vector.shape_cast %227 : vector<1x1x1x11x128xbf16> to vector<11x128xbf16>
    %229 = vector.extract_strided_slice %228 {offsets = [0, 0], sizes = [10, 128], strides = [1, 1]} : vector<11x128xbf16> to vector<10x128xbf16>
    %230 = tpu.concatenate %205, %208, %211, %214, %217, %220, %223, %226, %229 in 1 : vector<10x128xbf16>, vector<10x128xbf16>, vector<10x128xbf16>, vector<10x128xbf16>, vector<10x128xbf16>, vector<10x128xbf16>, vector<10x128xbf16>, vector<10x128xbf16>, vector<10x128xbf16> -> vector<10x1152xbf16>
    %c112 = arith.constant 112 : index
    %c0_352 = arith.constant 0 : index
    %231 = vector.load %arg11[%c112, %c0_352] : memref<160x1152xbf16, #tpu.memory_space<vmem>>, vector<10x1152xbf16>
    tpu.vector_store %arg11[%c112, %c0_352], %230 {strides = array<i32>} : memref<160x1152xbf16, #tpu.memory_space<vmem>>, vector<10x1152xbf16>,
    %c0_353 = arith.constant 0 : index
    %c0_354 = arith.constant 0 : index
    %c16_355 = arith.constant 16 : index
    %c0_356 = arith.constant 0 : index
    %c0_357 = arith.constant 0 : index
    %232 = vector.load %arg1[%c0_353, %c0_354, %c16_355, %c0_356, %c0_357] : memref<1x2x21x11x128xbf16, #tpu.memory_space<vmem>>, vector<1x1x1x11x128xbf16>
    %233 = vector.shape_cast %232 : vector<1x1x1x11x128xbf16> to vector<11x128xbf16>
    %234 = vector.extract_strided_slice %233 {offsets = [0, 0], sizes = [10, 128], strides = [1, 1]} : vector<11x128xbf16> to vector<10x128xbf16>
    %c0_358 = arith.constant 0 : index
    %c0_359 = arith.constant 0 : index
    %c17 = arith.constant 17 : index
    %c0_360 = arith.constant 0 : index
    %c0_361 = arith.constant 0 : index
    %235 = vector.load %arg1[%c0_358, %c0_359, %c17, %c0_360, %c0_361] : memref<1x2x21x11x128xbf16, #tpu.memory_space<vmem>>, vector<1x1x1x11x128xbf16>
    %236 = vector.shape_cast %235 : vector<1x1x1x11x128xbf16> to vector<11x128xbf16>
    %237 = vector.extract_strided_slice %236 {offsets = [0, 0], sizes = [10, 128], strides = [1, 1]} : vector<11x128xbf16> to vector<10x128xbf16>
    %c0_362 = arith.constant 0 : index
    %c0_363 = arith.constant 0 : index
    %c18 = arith.constant 18 : index
    %c0_364 = arith.constant 0 : index
    %c0_365 = arith.constant 0 : index
    %238 = vector.load %arg1[%c0_362, %c0_363, %c18, %c0_364, %c0_365] : memref<1x2x21x11x128xbf16, #tpu.memory_space<vmem>>, vector<1x1x1x11x128xbf16>
    %239 = vector.shape_cast %238 : vector<1x1x1x11x128xbf16> to vector<11x128xbf16>
    %240 = vector.extract_strided_slice %239 {offsets = [0, 0], sizes = [10, 128], strides = [1, 1]} : vector<11x128xbf16> to vector<10x128xbf16>
    %c0_366 = arith.constant 0 : index
    %c0_367 = arith.constant 0 : index
    %c16_368 = arith.constant 16 : index
    %c0_369 = arith.constant 0 : index
    %c0_370 = arith.constant 0 : index
    %241 = vector.load %arg1[%c0_366, %c0_367, %c16_368, %c0_369, %c0_370] : memref<1x2x21x11x128xbf16, #tpu.memory_space<vmem>>, vector<1x1x1x11x128xbf16>
    %242 = vector.shape_cast %241 : vector<1x1x1x11x128xbf16> to vector<11x128xbf16>
    %243 = vector.extract_strided_slice %242 {offsets = [1, 0], sizes = [10, 128], strides = [1, 1]} : vector<11x128xbf16> to vector<10x128xbf16>
    %c0_371 = arith.constant 0 : index
    %c0_372 = arith.constant 0 : index
    %c17_373 = arith.constant 17 : index
    %c0_374 = arith.constant 0 : index
    %c0_375 = arith.constant 0 : index
    %244 = vector.load %arg1[%c0_371, %c0_372, %c17_373, %c0_374, %c0_375] : memref<1x2x21x11x128xbf16, #tpu.memory_space<vmem>>, vector<1x1x1x11x128xbf16>
    %245 = vector.shape_cast %244 : vector<1x1x1x11x128xbf16> to vector<11x128xbf16>
    %246 = vector.extract_strided_slice %245 {offsets = [1, 0], sizes = [10, 128], strides = [1, 1]} : vector<11x128xbf16> to vector<10x128xbf16>
    %c0_376 = arith.constant 0 : index
    %c0_377 = arith.constant 0 : index
    %c18_378 = arith.constant 18 : index
    %c0_379 = arith.constant 0 : index
    %c0_380 = arith.constant 0 : index
    %247 = vector.load %arg1[%c0_376, %c0_377, %c18_378, %c0_379, %c0_380] : memref<1x2x21x11x128xbf16, #tpu.memory_space<vmem>>, vector<1x1x1x11x128xbf16>
    %248 = vector.shape_cast %247 : vector<1x1x1x11x128xbf16> to vector<11x128xbf16>
    %249 = vector.extract_strided_slice %248 {offsets = [1, 0], sizes = [10, 128], strides = [1, 1]} : vector<11x128xbf16> to vector<10x128xbf16>
    %c0_381 = arith.constant 0 : index
    %c1_382 = arith.constant 1 : index
    %c16_383 = arith.constant 16 : index
    %c0_384 = arith.constant 0 : index
    %c0_385 = arith.constant 0 : index
    %250 = vector.load %arg1[%c0_381, %c1_382, %c16_383, %c0_384, %c0_385] : memref<1x2x21x11x128xbf16, #tpu.memory_space<vmem>>, vector<1x1x1x11x128xbf16>
    %251 = vector.shape_cast %250 : vector<1x1x1x11x128xbf16> to vector<11x128xbf16>
    %252 = vector.extract_strided_slice %251 {offsets = [0, 0], sizes = [10, 128], strides = [1, 1]} : vector<11x128xbf16> to vector<10x128xbf16>
    %c0_386 = arith.constant 0 : index
    %c1_387 = arith.constant 1 : index
    %c17_388 = arith.constant 17 : index
    %c0_389 = arith.constant 0 : index
    %c0_390 = arith.constant 0 : index
    %253 = vector.load %arg1[%c0_386, %c1_387, %c17_388, %c0_389, %c0_390] : memref<1x2x21x11x128xbf16, #tpu.memory_space<vmem>>, vector<1x1x1x11x128xbf16>
    %254 = vector.shape_cast %253 : vector<1x1x1x11x128xbf16> to vector<11x128xbf16>
    %255 = vector.extract_strided_slice %254 {offsets = [0, 0], sizes = [10, 128], strides = [1, 1]} : vector<11x128xbf16> to vector<10x128xbf16>
    %c0_391 = arith.constant 0 : index
    %c1_392 = arith.constant 1 : index
    %c18_393 = arith.constant 18 : index
    %c0_394 = arith.constant 0 : index
    %c0_395 = arith.constant 0 : index
    %256 = vector.load %arg1[%c0_391, %c1_392, %c18_393, %c0_394, %c0_395] : memref<1x2x21x11x128xbf16, #tpu.memory_space<vmem>>, vector<1x1x1x11x128xbf16>
    %257 = vector.shape_cast %256 : vector<1x1x1x11x128xbf16> to vector<11x128xbf16>
    %258 = vector.extract_strided_slice %257 {offsets = [0, 0], sizes = [10, 128], strides = [1, 1]} : vector<11x128xbf16> to vector<10x128xbf16>
    %259 = tpu.concatenate %234, %237, %240, %243, %246, %249, %252, %255, %258 in 1 : vector<10x128xbf16>, vector<10x128xbf16>, vector<10x128xbf16>, vector<10x128xbf16>, vector<10x128xbf16>, vector<10x128xbf16>, vector<10x128xbf16>, vector<10x128xbf16>, vector<10x128xbf16> -> vector<10x1152xbf16>
    %c128 = arith.constant 128 : index
    %c0_396 = arith.constant 0 : index
    %260 = vector.load %arg11[%c128, %c0_396] : memref<160x1152xbf16, #tpu.memory_space<vmem>>, vector<10x1152xbf16>
    tpu.vector_store %arg11[%c128, %c0_396], %259 {strides = array<i32>} : memref<160x1152xbf16, #tpu.memory_space<vmem>>, vector<10x1152xbf16>,
    %c0_397 = arith.constant 0 : index
    %c0_398 = arith.constant 0 : index
    %c18_399 = arith.constant 18 : index
    %c0_400 = arith.constant 0 : index
    %c0_401 = arith.constant 0 : index
    %261 = vector.load %arg1[%c0_397, %c0_398, %c18_399, %c0_400, %c0_401] : memref<1x2x21x11x128xbf16, #tpu.memory_space<vmem>>, vector<1x1x1x11x128xbf16>
    %262 = vector.shape_cast %261 : vector<1x1x1x11x128xbf16> to vector<11x128xbf16>
    %263 = vector.extract_strided_slice %262 {offsets = [0, 0], sizes = [10, 128], strides = [1, 1]} : vector<11x128xbf16> to vector<10x128xbf16>
    %c0_402 = arith.constant 0 : index
    %c0_403 = arith.constant 0 : index
    %c19 = arith.constant 19 : index
    %c0_404 = arith.constant 0 : index
    %c0_405 = arith.constant 0 : index
    %264 = vector.load %arg1[%c0_402, %c0_403, %c19, %c0_404, %c0_405] : memref<1x2x21x11x128xbf16, #tpu.memory_space<vmem>>, vector<1x1x1x11x128xbf16>
    %265 = vector.shape_cast %264 : vector<1x1x1x11x128xbf16> to vector<11x128xbf16>
    %266 = vector.extract_strided_slice %265 {offsets = [0, 0], sizes = [10, 128], strides = [1, 1]} : vector<11x128xbf16> to vector<10x128xbf16>
    %c0_406 = arith.constant 0 : index
    %c0_407 = arith.constant 0 : index
    %c20 = arith.constant 20 : index
    %c0_408 = arith.constant 0 : index
    %c0_409 = arith.constant 0 : index
    %267 = vector.load %arg1[%c0_406, %c0_407, %c20, %c0_408, %c0_409] : memref<1x2x21x11x128xbf16, #tpu.memory_space<vmem>>, vector<1x1x1x11x128xbf16>
    %268 = vector.shape_cast %267 : vector<1x1x1x11x128xbf16> to vector<11x128xbf16>
    %269 = vector.extract_strided_slice %268 {offsets = [0, 0], sizes = [10, 128], strides = [1, 1]} : vector<11x128xbf16> to vector<10x128xbf16>
    %c0_410 = arith.constant 0 : index
    %c0_411 = arith.constant 0 : index
    %c18_412 = arith.constant 18 : index
    %c0_413 = arith.constant 0 : index
    %c0_414 = arith.constant 0 : index
    %270 = vector.load %arg1[%c0_410, %c0_411, %c18_412, %c0_413, %c0_414] : memref<1x2x21x11x128xbf16, #tpu.memory_space<vmem>>, vector<1x1x1x11x128xbf16>
    %271 = vector.shape_cast %270 : vector<1x1x1x11x128xbf16> to vector<11x128xbf16>
    %272 = vector.extract_strided_slice %271 {offsets = [1, 0], sizes = [10, 128], strides = [1, 1]} : vector<11x128xbf16> to vector<10x128xbf16>
    %c0_415 = arith.constant 0 : index
    %c0_416 = arith.constant 0 : index
    %c19_417 = arith.constant 19 : index
    %c0_418 = arith.constant 0 : index
    %c0_419 = arith.constant 0 : index
    %273 = vector.load %arg1[%c0_415, %c0_416, %c19_417, %c0_418, %c0_419] : memref<1x2x21x11x128xbf16, #tpu.memory_space<vmem>>, vector<1x1x1x11x128xbf16>
    %274 = vector.shape_cast %273 : vector<1x1x1x11x128xbf16> to vector<11x128xbf16>
    %275 = vector.extract_strided_slice %274 {offsets = [1, 0], sizes = [10, 128], strides = [1, 1]} : vector<11x128xbf16> to vector<10x128xbf16>
    %c0_420 = arith.constant 0 : index
    %c0_421 = arith.constant 0 : index
    %c20_422 = arith.constant 20 : index
    %c0_423 = arith.constant 0 : index
    %c0_424 = arith.constant 0 : index
    %276 = vector.load %arg1[%c0_420, %c0_421, %c20_422, %c0_423, %c0_424] : memref<1x2x21x11x128xbf16, #tpu.memory_space<vmem>>, vector<1x1x1x11x128xbf16>
    %277 = vector.shape_cast %276 : vector<1x1x1x11x128xbf16> to vector<11x128xbf16>
    %278 = vector.extract_strided_slice %277 {offsets = [1, 0], sizes = [10, 128], strides = [1, 1]} : vector<11x128xbf16> to vector<10x128xbf16>
    %c0_425 = arith.constant 0 : index
    %c1_426 = arith.constant 1 : index
    %c18_427 = arith.constant 18 : index
    %c0_428 = arith.constant 0 : index
    %c0_429 = arith.constant 0 : index
    %279 = vector.load %arg1[%c0_425, %c1_426, %c18_427, %c0_428, %c0_429] : memref<1x2x21x11x128xbf16, #tpu.memory_space<vmem>>, vector<1x1x1x11x128xbf16>
    %280 = vector.shape_cast %279 : vector<1x1x1x11x128xbf16> to vector<11x128xbf16>
    %281 = vector.extract_strided_slice %280 {offsets = [0, 0], sizes = [10, 128], strides = [1, 1]} : vector<11x128xbf16> to vector<10x128xbf16>
    %c0_430 = arith.constant 0 : index
    %c1_431 = arith.constant 1 : index
    %c19_432 = arith.constant 19 : index
    %c0_433 = arith.constant 0 : index
    %c0_434 = arith.constant 0 : index
    %282 = vector.load %arg1[%c0_430, %c1_431, %c19_432, %c0_433, %c0_434] : memref<1x2x21x11x128xbf16, #tpu.memory_space<vmem>>, vector<1x1x1x11x128xbf16>
    %283 = vector.shape_cast %282 : vector<1x1x1x11x128xbf16> to vector<11x128xbf16>
    %284 = vector.extract_strided_slice %283 {offsets = [0, 0], sizes = [10, 128], strides = [1, 1]} : vector<11x128xbf16> to vector<10x128xbf16>
    %c0_435 = arith.constant 0 : index
    %c1_436 = arith.constant 1 : index
    %c20_437 = arith.constant 20 : index
    %c0_438 = arith.constant 0 : index
    %c0_439 = arith.constant 0 : index
    %285 = vector.load %arg1[%c0_435, %c1_436, %c20_437, %c0_438, %c0_439] : memref<1x2x21x11x128xbf16, #tpu.memory_space<vmem>>, vector<1x1x1x11x128xbf16>
    %286 = vector.shape_cast %285 : vector<1x1x1x11x128xbf16> to vector<11x128xbf16>
    %287 = vector.extract_strided_slice %286 {offsets = [0, 0], sizes = [10, 128], strides = [1, 1]} : vector<11x128xbf16> to vector<10x128xbf16>
    %288 = tpu.concatenate %263, %266, %269, %272, %275, %278, %281, %284, %287 in 1 : vector<10x128xbf16>, vector<10x128xbf16>, vector<10x128xbf16>, vector<10x128xbf16>, vector<10x128xbf16>, vector<10x128xbf16>, vector<10x128xbf16>, vector<10x128xbf16>, vector<10x128xbf16> -> vector<10x1152xbf16>
    %c144 = arith.constant 144 : index
    %c0_440 = arith.constant 0 : index
    %289 = vector.load %arg11[%c144, %c0_440] : memref<160x1152xbf16, #tpu.memory_space<vmem>>, vector<10x1152xbf16>
    tpu.vector_store %arg11[%c144, %c0_440], %288 {strides = array<i32>} : memref<160x1152xbf16, #tpu.memory_space<vmem>>, vector<10x1152xbf16>,
    %c0_441 = arith.constant 0 : index
    %c0_442 = arith.constant 0 : index
    %290 = vector.load %arg11[%c0_441, %c0_442] : memref<160x1152xbf16, #tpu.memory_space<vmem>>, vector<160x1152xbf16>
    %c0_443 = arith.constant 0 : index
    %c0_444 = arith.constant 0 : index
    %291 = vector.load %arg2[%c0_443, %c0_444] : memref<1152x128xbf16, #tpu.memory_space<vmem>>, vector<1152x128xbf16>
    %cst = arith.constant dense<0.000000e+00> : vector<160x128xf32>
    %292 = tpu.matmul %290, %291, %cst {dimension_numbers = #tpu.dot_dimension_numbers<[1], [0], [0], [1], [0, 0, 1, 1], [], []>} : vector<160x1152xbf16>, vector<1152x128xbf16>, vector<160x128xf32> -> vector<160x128xf32>
    %c0_445 = arith.constant 0 : index
    %c0_446 = arith.constant 0 : index
    %293 = vector.load %arg3[%c0_445, %c0_446] : memref<1x128xf32, #tpu.memory_space<vmem>>, vector<1x128xf32>
    %294 = vector.broadcast %293 : vector<1x128xf32> to vector<160x128xf32>
    %295 = arith.addf %292, %294 : vector<160x128xf32>
    %cst_447 = arith.constant 0.000000e+00 : f32
    %296 = vector.broadcast %cst_447 : f32 to vector<160x128xf32>
    %297 = arith.maximumf %295, %296 : vector<160x128xf32>
    %298 = arith.truncf %297 : vector<160x128xf32> to vector<160x128xbf16>
    %c0_448 = arith.constant 0 : index
    %c0_449 = arith.constant 0 : index
    %299 = vector.load %arg12[%c0_448, %c0_449] : memref<160x128xbf16, #tpu.memory_space<vmem>>, vector<160x128xbf16>
    tpu.vector_store %arg12[%c0_448, %c0_449], %298 {strides = array<i32>} : memref<160x128xbf16, #tpu.memory_space<vmem>>, vector<160x128xbf16>,
    %c0_450 = arith.constant 0 : index
    %c0_451 = arith.constant 0 : index
    %300 = vector.load %arg12[%c0_450, %c0_451] : memref<160x128xbf16, #tpu.memory_space<vmem>>, vector<9x128xbf16>
    %c1_452 = arith.constant 1 : index
    %c0_453 = arith.constant 0 : index
    %301 = vector.load %arg12[%c1_452, %c0_453] : memref<160x128xbf16, #tpu.memory_space<vmem>>, vector<9x128xbf16>
    %c16_454 = arith.constant 16 : index
    %c0_455 = arith.constant 0 : index
    %302 = vector.load %arg12[%c16_454, %c0_455] : memref<160x128xbf16, #tpu.memory_space<vmem>>, vector<9x128xbf16>
    %c17_456 = arith.constant 17 : index
    %c0_457 = arith.constant 0 : index
    %303 = vector.load %arg12[%c17_456, %c0_457] : memref<160x128xbf16, #tpu.memory_space<vmem>>, vector<9x128xbf16>
    %304 = tpu.concatenate %300, %301, %302, %303 in 1 : vector<9x128xbf16>, vector<9x128xbf16>, vector<9x128xbf16>, vector<9x128xbf16> -> vector<9x512xbf16>
    %c0_458 = arith.constant 0 : index
    %c0_459 = arith.constant 0 : index
    %305 = vector.load %arg13[%c0_458, %c0_459] : memref<144x512xbf16, #tpu.memory_space<vmem>>, vector<9x512xbf16>
    tpu.vector_store %arg13[%c0_458, %c0_459], %304 {strides = array<i32>} : memref<144x512xbf16, #tpu.memory_space<vmem>>, vector<9x512xbf16>,
    %c16_460 = arith.constant 16 : index
    %c0_461 = arith.constant 0 : index
    %306 = vector.load %arg12[%c16_460, %c0_461] : memref<160x128xbf16, #tpu.memory_space<vmem>>, vector<9x128xbf16>
    %c17_462 = arith.constant 17 : index
    %c0_463 = arith.constant 0 : index
    %307 = vector.load %arg12[%c17_462, %c0_463] : memref<160x128xbf16, #tpu.memory_space<vmem>>, vector<9x128xbf16>
    %c32_464 = arith.constant 32 : index
    %c0_465 = arith.constant 0 : index
    %308 = vector.load %arg12[%c32_464, %c0_465] : memref<160x128xbf16, #tpu.memory_space<vmem>>, vector<9x128xbf16>
    %c33 = arith.constant 33 : index
    %c0_466 = arith.constant 0 : index
    %309 = vector.load %arg12[%c33, %c0_466] : memref<160x128xbf16, #tpu.memory_space<vmem>>, vector<9x128xbf16>
    %310 = tpu.concatenate %306, %307, %308, %309 in 1 : vector<9x128xbf16>, vector<9x128xbf16>, vector<9x128xbf16>, vector<9x128xbf16> -> vector<9x512xbf16>
    %c16_467 = arith.constant 16 : index
    %c0_468 = arith.constant 0 : index
    %311 = vector.load %arg13[%c16_467, %c0_468] : memref<144x512xbf16, #tpu.memory_space<vmem>>, vector<9x512xbf16>
    tpu.vector_store %arg13[%c16_467, %c0_468], %310 {strides = array<i32>} : memref<144x512xbf16, #tpu.memory_space<vmem>>, vector<9x512xbf16>,
    %c32_469 = arith.constant 32 : index
    %c0_470 = arith.constant 0 : index
    %312 = vector.load %arg12[%c32_469, %c0_470] : memref<160x128xbf16, #tpu.memory_space<vmem>>, vector<9x128xbf16>
    %c33_471 = arith.constant 33 : index
    %c0_472 = arith.constant 0 : index
    %313 = vector.load %arg12[%c33_471, %c0_472] : memref<160x128xbf16, #tpu.memory_space<vmem>>, vector<9x128xbf16>
    %c48_473 = arith.constant 48 : index
    %c0_474 = arith.constant 0 : index
    %314 = vector.load %arg12[%c48_473, %c0_474] : memref<160x128xbf16, #tpu.memory_space<vmem>>, vector<9x128xbf16>
    %c49 = arith.constant 49 : index
    %c0_475 = arith.constant 0 : index
    %315 = vector.load %arg12[%c49, %c0_475] : memref<160x128xbf16, #tpu.memory_space<vmem>>, vector<9x128xbf16>
    %316 = tpu.concatenate %312, %313, %314, %315 in 1 : vector<9x128xbf16>, vector<9x128xbf16>, vector<9x128xbf16>, vector<9x128xbf16> -> vector<9x512xbf16>
    %c32_476 = arith.constant 32 : index
    %c0_477 = arith.constant 0 : index
    %317 = vector.load %arg13[%c32_476, %c0_477] : memref<144x512xbf16, #tpu.memory_space<vmem>>, vector<9x512xbf16>
    tpu.vector_store %arg13[%c32_476, %c0_477], %316 {strides = array<i32>} : memref<144x512xbf16, #tpu.memory_space<vmem>>, vector<9x512xbf16>,
    %c48_478 = arith.constant 48 : index
    %c0_479 = arith.constant 0 : index
    %318 = vector.load %arg12[%c48_478, %c0_479] : memref<160x128xbf16, #tpu.memory_space<vmem>>, vector<9x128xbf16>
    %c49_480 = arith.constant 49 : index
    %c0_481 = arith.constant 0 : index
    %319 = vector.load %arg12[%c49_480, %c0_481] : memref<160x128xbf16, #tpu.memory_space<vmem>>, vector<9x128xbf16>
    %c64_482 = arith.constant 64 : index
    %c0_483 = arith.constant 0 : index
    %320 = vector.load %arg12[%c64_482, %c0_483] : memref<160x128xbf16, #tpu.memory_space<vmem>>, vector<9x128xbf16>
    %c65 = arith.constant 65 : index
    %c0_484 = arith.constant 0 : index
    %321 = vector.load %arg12[%c65, %c0_484] : memref<160x128xbf16, #tpu.memory_space<vmem>>, vector<9x128xbf16>
    %322 = tpu.concatenate %318, %319, %320, %321 in 1 : vector<9x128xbf16>, vector<9x128xbf16>, vector<9x128xbf16>, vector<9x128xbf16> -> vector<9x512xbf16>
    %c48_485 = arith.constant 48 : index
    %c0_486 = arith.constant 0 : index
    %323 = vector.load %arg13[%c48_485, %c0_486] : memref<144x512xbf16, #tpu.memory_space<vmem>>, vector<9x512xbf16>
    tpu.vector_store %arg13[%c48_485, %c0_486], %322 {strides = array<i32>} : memref<144x512xbf16, #tpu.memory_space<vmem>>, vector<9x512xbf16>,
    %c64_487 = arith.constant 64 : index
    %c0_488 = arith.constant 0 : index
    %324 = vector.load %arg12[%c64_487, %c0_488] : memref<160x128xbf16, #tpu.memory_space<vmem>>, vector<9x128xbf16>
    %c65_489 = arith.constant 65 : index
    %c0_490 = arith.constant 0 : index
    %325 = vector.load %arg12[%c65_489, %c0_490] : memref<160x128xbf16, #tpu.memory_space<vmem>>, vector<9x128xbf16>
    %c80_491 = arith.constant 80 : index
    %c0_492 = arith.constant 0 : index
    %326 = vector.load %arg12[%c80_491, %c0_492] : memref<160x128xbf16, #tpu.memory_space<vmem>>, vector<9x128xbf16>
    %c81 = arith.constant 81 : index
    %c0_493 = arith.constant 0 : index
    %327 = vector.load %arg12[%c81, %c0_493] : memref<160x128xbf16, #tpu.memory_space<vmem>>, vector<9x128xbf16>
    %328 = tpu.concatenate %324, %325, %326, %327 in 1 : vector<9x128xbf16>, vector<9x128xbf16>, vector<9x128xbf16>, vector<9x128xbf16> -> vector<9x512xbf16>
    %c64_494 = arith.constant 64 : index
    %c0_495 = arith.constant 0 : index
    %329 = vector.load %arg13[%c64_494, %c0_495] : memref<144x512xbf16, #tpu.memory_space<vmem>>, vector<9x512xbf16>
    tpu.vector_store %arg13[%c64_494, %c0_495], %328 {strides = array<i32>} : memref<144x512xbf16, #tpu.memory_space<vmem>>, vector<9x512xbf16>,
    %c80_496 = arith.constant 80 : index
    %c0_497 = arith.constant 0 : index
    %330 = vector.load %arg12[%c80_496, %c0_497] : memref<160x128xbf16, #tpu.memory_space<vmem>>, vector<9x128xbf16>
    %c81_498 = arith.constant 81 : index
    %c0_499 = arith.constant 0 : index
    %331 = vector.load %arg12[%c81_498, %c0_499] : memref<160x128xbf16, #tpu.memory_space<vmem>>, vector<9x128xbf16>
    %c96_500 = arith.constant 96 : index
    %c0_501 = arith.constant 0 : index
    %332 = vector.load %arg12[%c96_500, %c0_501] : memref<160x128xbf16, #tpu.memory_space<vmem>>, vector<9x128xbf16>
    %c97 = arith.constant 97 : index
    %c0_502 = arith.constant 0 : index
    %333 = vector.load %arg12[%c97, %c0_502] : memref<160x128xbf16, #tpu.memory_space<vmem>>, vector<9x128xbf16>
    %334 = tpu.concatenate %330, %331, %332, %333 in 1 : vector<9x128xbf16>, vector<9x128xbf16>, vector<9x128xbf16>, vector<9x128xbf16> -> vector<9x512xbf16>
    %c80_503 = arith.constant 80 : index
    %c0_504 = arith.constant 0 : index
    %335 = vector.load %arg13[%c80_503, %c0_504] : memref<144x512xbf16, #tpu.memory_space<vmem>>, vector<9x512xbf16>
    tpu.vector_store %arg13[%c80_503, %c0_504], %334 {strides = array<i32>} : memref<144x512xbf16, #tpu.memory_space<vmem>>, vector<9x512xbf16>,
    %c96_505 = arith.constant 96 : index
    %c0_506 = arith.constant 0 : index
    %336 = vector.load %arg12[%c96_505, %c0_506] : memref<160x128xbf16, #tpu.memory_space<vmem>>, vector<9x128xbf16>
    %c97_507 = arith.constant 97 : index
    %c0_508 = arith.constant 0 : index
    %337 = vector.load %arg12[%c97_507, %c0_508] : memref<160x128xbf16, #tpu.memory_space<vmem>>, vector<9x128xbf16>
    %c112_509 = arith.constant 112 : index
    %c0_510 = arith.constant 0 : index
    %338 = vector.load %arg12[%c112_509, %c0_510] : memref<160x128xbf16, #tpu.memory_space<vmem>>, vector<9x128xbf16>
    %c113 = arith.constant 113 : index
    %c0_511 = arith.constant 0 : index
    %339 = vector.load %arg12[%c113, %c0_511] : memref<160x128xbf16, #tpu.memory_space<vmem>>, vector<9x128xbf16>
    %340 = tpu.concatenate %336, %337, %338, %339 in 1 : vector<9x128xbf16>, vector<9x128xbf16>, vector<9x128xbf16>, vector<9x128xbf16> -> vector<9x512xbf16>
    %c96_512 = arith.constant 96 : index
    %c0_513 = arith.constant 0 : index
    %341 = vector.load %arg13[%c96_512, %c0_513] : memref<144x512xbf16, #tpu.memory_space<vmem>>, vector<9x512xbf16>
    tpu.vector_store %arg13[%c96_512, %c0_513], %340 {strides = array<i32>} : memref<144x512xbf16, #tpu.memory_space<vmem>>, vector<9x512xbf16>,
    %c112_514 = arith.constant 112 : index
    %c0_515 = arith.constant 0 : index
    %342 = vector.load %arg12[%c112_514, %c0_515] : memref<160x128xbf16, #tpu.memory_space<vmem>>, vector<9x128xbf16>
    %c113_516 = arith.constant 113 : index
    %c0_517 = arith.constant 0 : index
    %343 = vector.load %arg12[%c113_516, %c0_517] : memref<160x128xbf16, #tpu.memory_space<vmem>>, vector<9x128xbf16>
    %c128_518 = arith.constant 128 : index
    %c0_519 = arith.constant 0 : index
    %344 = vector.load %arg12[%c128_518, %c0_519] : memref<160x128xbf16, #tpu.memory_space<vmem>>, vector<9x128xbf16>
    %c129 = arith.constant 129 : index
    %c0_520 = arith.constant 0 : index
    %345 = vector.load %arg12[%c129, %c0_520] : memref<160x128xbf16, #tpu.memory_space<vmem>>, vector<9x128xbf16>
    %346 = tpu.concatenate %342, %343, %344, %345 in 1 : vector<9x128xbf16>, vector<9x128xbf16>, vector<9x128xbf16>, vector<9x128xbf16> -> vector<9x512xbf16>
    %c112_521 = arith.constant 112 : index
    %c0_522 = arith.constant 0 : index
    %347 = vector.load %arg13[%c112_521, %c0_522] : memref<144x512xbf16, #tpu.memory_space<vmem>>, vector<9x512xbf16>
    tpu.vector_store %arg13[%c112_521, %c0_522], %346 {strides = array<i32>} : memref<144x512xbf16, #tpu.memory_space<vmem>>, vector<9x512xbf16>,
    %c128_523 = arith.constant 128 : index
    %c0_524 = arith.constant 0 : index
    %348 = vector.load %arg12[%c128_523, %c0_524] : memref<160x128xbf16, #tpu.memory_space<vmem>>, vector<9x128xbf16>
    %c129_525 = arith.constant 129 : index
    %c0_526 = arith.constant 0 : index
    %349 = vector.load %arg12[%c129_525, %c0_526] : memref<160x128xbf16, #tpu.memory_space<vmem>>, vector<9x128xbf16>
    %c144_527 = arith.constant 144 : index
    %c0_528 = arith.constant 0 : index
    %350 = vector.load %arg12[%c144_527, %c0_528] : memref<160x128xbf16, #tpu.memory_space<vmem>>, vector<9x128xbf16>
    %c145 = arith.constant 145 : index
    %c0_529 = arith.constant 0 : index
    %351 = vector.load %arg12[%c145, %c0_529] : memref<160x128xbf16, #tpu.memory_space<vmem>>, vector<9x128xbf16>
    %352 = tpu.concatenate %348, %349, %350, %351 in 1 : vector<9x128xbf16>, vector<9x128xbf16>, vector<9x128xbf16>, vector<9x128xbf16> -> vector<9x512xbf16>
    %c128_530 = arith.constant 128 : index
    %c0_531 = arith.constant 0 : index
    %353 = vector.load %arg13[%c128_530, %c0_531] : memref<144x512xbf16, #tpu.memory_space<vmem>>, vector<9x512xbf16>
    tpu.vector_store %arg13[%c128_530, %c0_531], %352 {strides = array<i32>} : memref<144x512xbf16, #tpu.memory_space<vmem>>, vector<9x512xbf16>,
    %c0_532 = arith.constant 0 : index
    %c0_533 = arith.constant 0 : index
    %354 = vector.load %arg13[%c0_532, %c0_533] : memref<144x512xbf16, #tpu.memory_space<vmem>>, vector<144x512xbf16>
    %c0_534 = arith.constant 0 : index
    %c0_535 = arith.constant 0 : index
    %355 = vector.load %arg4[%c0_534, %c0_535] : memref<512x128xbf16, #tpu.memory_space<vmem>>, vector<512x128xbf16>
    %cst_536 = arith.constant dense<0.000000e+00> : vector<144x128xf32>
    %356 = tpu.matmul %354, %355, %cst_536 {dimension_numbers = #tpu.dot_dimension_numbers<[1], [0], [0], [1], [0, 0, 1, 1], [], []>} : vector<144x512xbf16>, vector<512x128xbf16>, vector<144x128xf32> -> vector<144x128xf32>
    %c0_537 = arith.constant 0 : index
    %c0_538 = arith.constant 0 : index
    %357 = vector.load %arg5[%c0_537, %c0_538] : memref<1x128xf32, #tpu.memory_space<vmem>>, vector<1x128xf32>
    %358 = vector.broadcast %357 : vector<1x128xf32> to vector<144x128xf32>
    %359 = arith.addf %356, %358 : vector<144x128xf32>
    %cst_539 = arith.constant 0.000000e+00 : f32
    %360 = vector.broadcast %cst_539 : f32 to vector<144x128xf32>
    %361 = arith.maximumf %359, %360 : vector<144x128xf32>
    %362 = arith.truncf %361 : vector<144x128xf32> to vector<144x128xbf16>
    %c0_540 = arith.constant 0 : index
    %c0_541 = arith.constant 0 : index
    %363 = vector.load %arg14[%c0_540, %c0_541] : memref<144x128xbf16, #tpu.memory_space<vmem>>, vector<144x128xbf16>
    tpu.vector_store %arg14[%c0_540, %c0_541], %362 {strides = array<i32>} : memref<144x128xbf16, #tpu.memory_space<vmem>>, vector<144x128xbf16>,
    %c0_542 = arith.constant 0 : index
    %c0_543 = arith.constant 0 : index
    %364 = vector.load %arg14[%c0_542, %c0_543] : memref<144x128xbf16, #tpu.memory_space<vmem>>, vector<7x128xbf16>
    %c1_544 = arith.constant 1 : index
    %c0_545 = arith.constant 0 : index
    %365 = vector.load %arg14[%c1_544, %c0_545] : memref<144x128xbf16, #tpu.memory_space<vmem>>, vector<7x128xbf16>
    %c2_546 = arith.constant 2 : index
    %c0_547 = arith.constant 0 : index
    %366 = vector.load %arg14[%c2_546, %c0_547] : memref<144x128xbf16, #tpu.memory_space<vmem>>, vector<7x128xbf16>
    %c16_548 = arith.constant 16 : index
    %c0_549 = arith.constant 0 : index
    %367 = vector.load %arg14[%c16_548, %c0_549] : memref<144x128xbf16, #tpu.memory_space<vmem>>, vector<7x128xbf16>
    %c17_550 = arith.constant 17 : index
    %c0_551 = arith.constant 0 : index
    %368 = vector.load %arg14[%c17_550, %c0_551] : memref<144x128xbf16, #tpu.memory_space<vmem>>, vector<7x128xbf16>
    %c18_552 = arith.constant 18 : index
    %c0_553 = arith.constant 0 : index
    %369 = vector.load %arg14[%c18_552, %c0_553] : memref<144x128xbf16, #tpu.memory_space<vmem>>, vector<7x128xbf16>
    %c32_554 = arith.constant 32 : index
    %c0_555 = arith.constant 0 : index
    %370 = vector.load %arg14[%c32_554, %c0_555] : memref<144x128xbf16, #tpu.memory_space<vmem>>, vector<7x128xbf16>
    %c33_556 = arith.constant 33 : index
    %c0_557 = arith.constant 0 : index
    %371 = vector.load %arg14[%c33_556, %c0_557] : memref<144x128xbf16, #tpu.memory_space<vmem>>, vector<7x128xbf16>
    %c34 = arith.constant 34 : index
    %c0_558 = arith.constant 0 : index
    %372 = vector.load %arg14[%c34, %c0_558] : memref<144x128xbf16, #tpu.memory_space<vmem>>, vector<7x128xbf16>
    %373 = tpu.concatenate %364, %365, %366, %367, %368, %369, %370, %371, %372 in 1 : vector<7x128xbf16>, vector<7x128xbf16>, vector<7x128xbf16>, vector<7x128xbf16>, vector<7x128xbf16>, vector<7x128xbf16>, vector<7x128xbf16>, vector<7x128xbf16>, vector<7x128xbf16> -> vector<7x1152xbf16>
    %c0_559 = arith.constant 0 : index
    %c0_560 = arith.constant 0 : index
    %374 = vector.load %arg15[%c0_559, %c0_560] : memref<112x1152xbf16, #tpu.memory_space<vmem>>, vector<7x1152xbf16>
    tpu.vector_store %arg15[%c0_559, %c0_560], %373 {strides = array<i32>} : memref<112x1152xbf16, #tpu.memory_space<vmem>>, vector<7x1152xbf16>,
    %c16_561 = arith.constant 16 : index
    %c0_562 = arith.constant 0 : index
    %375 = vector.load %arg14[%c16_561, %c0_562] : memref<144x128xbf16, #tpu.memory_space<vmem>>, vector<7x128xbf16>
    %c17_563 = arith.constant 17 : index
    %c0_564 = arith.constant 0 : index
    %376 = vector.load %arg14[%c17_563, %c0_564] : memref<144x128xbf16, #tpu.memory_space<vmem>>, vector<7x128xbf16>
    %c18_565 = arith.constant 18 : index
    %c0_566 = arith.constant 0 : index
    %377 = vector.load %arg14[%c18_565, %c0_566] : memref<144x128xbf16, #tpu.memory_space<vmem>>, vector<7x128xbf16>
    %c32_567 = arith.constant 32 : index
    %c0_568 = arith.constant 0 : index
    %378 = vector.load %arg14[%c32_567, %c0_568] : memref<144x128xbf16, #tpu.memory_space<vmem>>, vector<7x128xbf16>
    %c33_569 = arith.constant 33 : index
    %c0_570 = arith.constant 0 : index
    %379 = vector.load %arg14[%c33_569, %c0_570] : memref<144x128xbf16, #tpu.memory_space<vmem>>, vector<7x128xbf16>
    %c34_571 = arith.constant 34 : index
    %c0_572 = arith.constant 0 : index
    %380 = vector.load %arg14[%c34_571, %c0_572] : memref<144x128xbf16, #tpu.memory_space<vmem>>, vector<7x128xbf16>
    %c48_573 = arith.constant 48 : index
    %c0_574 = arith.constant 0 : index
    %381 = vector.load %arg14[%c48_573, %c0_574] : memref<144x128xbf16, #tpu.memory_space<vmem>>, vector<7x128xbf16>
    %c49_575 = arith.constant 49 : index
    %c0_576 = arith.constant 0 : index
    %382 = vector.load %arg14[%c49_575, %c0_576] : memref<144x128xbf16, #tpu.memory_space<vmem>>, vector<7x128xbf16>
    %c50 = arith.constant 50 : index
    %c0_577 = arith.constant 0 : index
    %383 = vector.load %arg14[%c50, %c0_577] : memref<144x128xbf16, #tpu.memory_space<vmem>>, vector<7x128xbf16>
    %384 = tpu.concatenate %375, %376, %377, %378, %379, %380, %381, %382, %383 in 1 : vector<7x128xbf16>, vector<7x128xbf16>, vector<7x128xbf16>, vector<7x128xbf16>, vector<7x128xbf16>, vector<7x128xbf16>, vector<7x128xbf16>, vector<7x128xbf16>, vector<7x128xbf16> -> vector<7x1152xbf16>
    %c16_578 = arith.constant 16 : index
    %c0_579 = arith.constant 0 : index
    %385 = vector.load %arg15[%c16_578, %c0_579] : memref<112x1152xbf16, #tpu.memory_space<vmem>>, vector<7x1152xbf16>
    tpu.vector_store %arg15[%c16_578, %c0_579], %384 {strides = array<i32>} : memref<112x1152xbf16, #tpu.memory_space<vmem>>, vector<7x1152xbf16>,
    %c32_580 = arith.constant 32 : index
    %c0_581 = arith.constant 0 : index
    %386 = vector.load %arg14[%c32_580, %c0_581] : memref<144x128xbf16, #tpu.memory_space<vmem>>, vector<7x128xbf16>
    %c33_582 = arith.constant 33 : index
    %c0_583 = arith.constant 0 : index
    %387 = vector.load %arg14[%c33_582, %c0_583] : memref<144x128xbf16, #tpu.memory_space<vmem>>, vector<7x128xbf16>
    %c34_584 = arith.constant 34 : index
    %c0_585 = arith.constant 0 : index
    %388 = vector.load %arg14[%c34_584, %c0_585] : memref<144x128xbf16, #tpu.memory_space<vmem>>, vector<7x128xbf16>
    %c48_586 = arith.constant 48 : index
    %c0_587 = arith.constant 0 : index
    %389 = vector.load %arg14[%c48_586, %c0_587] : memref<144x128xbf16, #tpu.memory_space<vmem>>, vector<7x128xbf16>
    %c49_588 = arith.constant 49 : index
    %c0_589 = arith.constant 0 : index
    %390 = vector.load %arg14[%c49_588, %c0_589] : memref<144x128xbf16, #tpu.memory_space<vmem>>, vector<7x128xbf16>
    %c50_590 = arith.constant 50 : index
    %c0_591 = arith.constant 0 : index
    %391 = vector.load %arg14[%c50_590, %c0_591] : memref<144x128xbf16, #tpu.memory_space<vmem>>, vector<7x128xbf16>
    %c64_592 = arith.constant 64 : index
    %c0_593 = arith.constant 0 : index
    %392 = vector.load %arg14[%c64_592, %c0_593] : memref<144x128xbf16, #tpu.memory_space<vmem>>, vector<7x128xbf16>
    %c65_594 = arith.constant 65 : index
    %c0_595 = arith.constant 0 : index
    %393 = vector.load %arg14[%c65_594, %c0_595] : memref<144x128xbf16, #tpu.memory_space<vmem>>, vector<7x128xbf16>
    %c66 = arith.constant 66 : index
    %c0_596 = arith.constant 0 : index
    %394 = vector.load %arg14[%c66, %c0_596] : memref<144x128xbf16, #tpu.memory_space<vmem>>, vector<7x128xbf16>
    %395 = tpu.concatenate %386, %387, %388, %389, %390, %391, %392, %393, %394 in 1 : vector<7x128xbf16>, vector<7x128xbf16>, vector<7x128xbf16>, vector<7x128xbf16>, vector<7x128xbf16>, vector<7x128xbf16>, vector<7x128xbf16>, vector<7x128xbf16>, vector<7x128xbf16> -> vector<7x1152xbf16>
    %c32_597 = arith.constant 32 : index
    %c0_598 = arith.constant 0 : index
    %396 = vector.load %arg15[%c32_597, %c0_598] : memref<112x1152xbf16, #tpu.memory_space<vmem>>, vector<7x1152xbf16>
    tpu.vector_store %arg15[%c32_597, %c0_598], %395 {strides = array<i32>} : memref<112x1152xbf16, #tpu.memory_space<vmem>>, vector<7x1152xbf16>,
    %c48_599 = arith.constant 48 : index
    %c0_600 = arith.constant 0 : index
    %397 = vector.load %arg14[%c48_599, %c0_600] : memref<144x128xbf16, #tpu.memory_space<vmem>>, vector<7x128xbf16>
    %c49_601 = arith.constant 49 : index
    %c0_602 = arith.constant 0 : index
    %398 = vector.load %arg14[%c49_601, %c0_602] : memref<144x128xbf16, #tpu.memory_space<vmem>>, vector<7x128xbf16>
    %c50_603 = arith.constant 50 : index
    %c0_604 = arith.constant 0 : index
    %399 = vector.load %arg14[%c50_603, %c0_604] : memref<144x128xbf16, #tpu.memory_space<vmem>>, vector<7x128xbf16>
    %c64_605 = arith.constant 64 : index
    %c0_606 = arith.constant 0 : index
    %400 = vector.load %arg14[%c64_605, %c0_606] : memref<144x128xbf16, #tpu.memory_space<vmem>>, vector<7x128xbf16>
    %c65_607 = arith.constant 65 : index
    %c0_608 = arith.constant 0 : index
    %401 = vector.load %arg14[%c65_607, %c0_608] : memref<144x128xbf16, #tpu.memory_space<vmem>>, vector<7x128xbf16>
    %c66_609 = arith.constant 66 : index
    %c0_610 = arith.constant 0 : index
    %402 = vector.load %arg14[%c66_609, %c0_610] : memref<144x128xbf16, #tpu.memory_space<vmem>>, vector<7x128xbf16>
    %c80_611 = arith.constant 80 : index
    %c0_612 = arith.constant 0 : index
    %403 = vector.load %arg14[%c80_611, %c0_612] : memref<144x128xbf16, #tpu.memory_space<vmem>>, vector<7x128xbf16>
    %c81_613 = arith.constant 81 : index
    %c0_614 = arith.constant 0 : index
    %404 = vector.load %arg14[%c81_613, %c0_614] : memref<144x128xbf16, #tpu.memory_space<vmem>>, vector<7x128xbf16>
    %c82 = arith.constant 82 : index
    %c0_615 = arith.constant 0 : index
    %405 = vector.load %arg14[%c82, %c0_615] : memref<144x128xbf16, #tpu.memory_space<vmem>>, vector<7x128xbf16>
    %406 = tpu.concatenate %397, %398, %399, %400, %401, %402, %403, %404, %405 in 1 : vector<7x128xbf16>, vector<7x128xbf16>, vector<7x128xbf16>, vector<7x128xbf16>, vector<7x128xbf16>, vector<7x128xbf16>, vector<7x128xbf16>, vector<7x128xbf16>, vector<7x128xbf16> -> vector<7x1152xbf16>
    %c48_616 = arith.constant 48 : index
    %c0_617 = arith.constant 0 : index
    %407 = vector.load %arg15[%c48_616, %c0_617] : memref<112x1152xbf16, #tpu.memory_space<vmem>>, vector<7x1152xbf16>
    tpu.vector_store %arg15[%c48_616, %c0_617], %406 {strides = array<i32>} : memref<112x1152xbf16, #tpu.memory_space<vmem>>, vector<7x1152xbf16>,
    %c64_618 = arith.constant 64 : index
    %c0_619 = arith.constant 0 : index
    %408 = vector.load %arg14[%c64_618, %c0_619] : memref<144x128xbf16, #tpu.memory_space<vmem>>, vector<7x128xbf16>
    %c65_620 = arith.constant 65 : index
    %c0_621 = arith.constant 0 : index
    %409 = vector.load %arg14[%c65_620, %c0_621] : memref<144x128xbf16, #tpu.memory_space<vmem>>, vector<7x128xbf16>
    %c66_622 = arith.constant 66 : index
    %c0_623 = arith.constant 0 : index
    %410 = vector.load %arg14[%c66_622, %c0_623] : memref<144x128xbf16, #tpu.memory_space<vmem>>, vector<7x128xbf16>
    %c80_624 = arith.constant 80 : index
    %c0_625 = arith.constant 0 : index
    %411 = vector.load %arg14[%c80_624, %c0_625] : memref<144x128xbf16, #tpu.memory_space<vmem>>, vector<7x128xbf16>
    %c81_626 = arith.constant 81 : index
    %c0_627 = arith.constant 0 : index
    %412 = vector.load %arg14[%c81_626, %c0_627] : memref<144x128xbf16, #tpu.memory_space<vmem>>, vector<7x128xbf16>
    %c82_628 = arith.constant 82 : index
    %c0_629 = arith.constant 0 : index
    %413 = vector.load %arg14[%c82_628, %c0_629] : memref<144x128xbf16, #tpu.memory_space<vmem>>, vector<7x128xbf16>
    %c96_630 = arith.constant 96 : index
    %c0_631 = arith.constant 0 : index
    %414 = vector.load %arg14[%c96_630, %c0_631] : memref<144x128xbf16, #tpu.memory_space<vmem>>, vector<7x128xbf16>
    %c97_632 = arith.constant 97 : index
    %c0_633 = arith.constant 0 : index
    %415 = vector.load %arg14[%c97_632, %c0_633] : memref<144x128xbf16, #tpu.memory_space<vmem>>, vector<7x128xbf16>
    %c98 = arith.constant 98 : index
    %c0_634 = arith.constant 0 : index
    %416 = vector.load %arg14[%c98, %c0_634] : memref<144x128xbf16, #tpu.memory_space<vmem>>, vector<7x128xbf16>
    %417 = tpu.concatenate %408, %409, %410, %411, %412, %413, %414, %415, %416 in 1 : vector<7x128xbf16>, vector<7x128xbf16>, vector<7x128xbf16>, vector<7x128xbf16>, vector<7x128xbf16>, vector<7x128xbf16>, vector<7x128xbf16>, vector<7x128xbf16>, vector<7x128xbf16> -> vector<7x1152xbf16>
    %c64_635 = arith.constant 64 : index
    %c0_636 = arith.constant 0 : index
    %418 = vector.load %arg15[%c64_635, %c0_636] : memref<112x1152xbf16, #tpu.memory_space<vmem>>, vector<7x1152xbf16>
    tpu.vector_store %arg15[%c64_635, %c0_636], %417 {strides = array<i32>} : memref<112x1152xbf16, #tpu.memory_space<vmem>>, vector<7x1152xbf16>,
    %c80_637 = arith.constant 80 : index
    %c0_638 = arith.constant 0 : index
    %419 = vector.load %arg14[%c80_637, %c0_638] : memref<144x128xbf16, #tpu.memory_space<vmem>>, vector<7x128xbf16>
    %c81_639 = arith.constant 81 : index
    %c0_640 = arith.constant 0 : index
    %420 = vector.load %arg14[%c81_639, %c0_640] : memref<144x128xbf16, #tpu.memory_space<vmem>>, vector<7x128xbf16>
    %c82_641 = arith.constant 82 : index
    %c0_642 = arith.constant 0 : index
    %421 = vector.load %arg14[%c82_641, %c0_642] : memref<144x128xbf16, #tpu.memory_space<vmem>>, vector<7x128xbf16>
    %c96_643 = arith.constant 96 : index
    %c0_644 = arith.constant 0 : index
    %422 = vector.load %arg14[%c96_643, %c0_644] : memref<144x128xbf16, #tpu.memory_space<vmem>>, vector<7x128xbf16>
    %c97_645 = arith.constant 97 : index
    %c0_646 = arith.constant 0 : index
    %423 = vector.load %arg14[%c97_645, %c0_646] : memref<144x128xbf16, #tpu.memory_space<vmem>>, vector<7x128xbf16>
    %c98_647 = arith.constant 98 : index
    %c0_648 = arith.constant 0 : index
    %424 = vector.load %arg14[%c98_647, %c0_648] : memref<144x128xbf16, #tpu.memory_space<vmem>>, vector<7x128xbf16>
    %c112_649 = arith.constant 112 : index
    %c0_650 = arith.constant 0 : index
    %425 = vector.load %arg14[%c112_649, %c0_650] : memref<144x128xbf16, #tpu.memory_space<vmem>>, vector<7x128xbf16>
    %c113_651 = arith.constant 113 : index
    %c0_652 = arith.constant 0 : index
    %426 = vector.load %arg14[%c113_651, %c0_652] : memref<144x128xbf16, #tpu.memory_space<vmem>>, vector<7x128xbf16>
    %c114 = arith.constant 114 : index
    %c0_653 = arith.constant 0 : index
    %427 = vector.load %arg14[%c114, %c0_653] : memref<144x128xbf16, #tpu.memory_space<vmem>>, vector<7x128xbf16>
    %428 = tpu.concatenate %419, %420, %421, %422, %423, %424, %425, %426, %427 in 1 : vector<7x128xbf16>, vector<7x128xbf16>, vector<7x128xbf16>, vector<7x128xbf16>, vector<7x128xbf16>, vector<7x128xbf16>, vector<7x128xbf16>, vector<7x128xbf16>, vector<7x128xbf16> -> vector<7x1152xbf16>
    %c80_654 = arith.constant 80 : index
    %c0_655 = arith.constant 0 : index
    %429 = vector.load %arg15[%c80_654, %c0_655] : memref<112x1152xbf16, #tpu.memory_space<vmem>>, vector<7x1152xbf16>
    tpu.vector_store %arg15[%c80_654, %c0_655], %428 {strides = array<i32>} : memref<112x1152xbf16, #tpu.memory_space<vmem>>, vector<7x1152xbf16>,
    %c96_656 = arith.constant 96 : index
    %c0_657 = arith.constant 0 : index
    %430 = vector.load %arg14[%c96_656, %c0_657] : memref<144x128xbf16, #tpu.memory_space<vmem>>, vector<7x128xbf16>
    %c97_658 = arith.constant 97 : index
    %c0_659 = arith.constant 0 : index
    %431 = vector.load %arg14[%c97_658, %c0_659] : memref<144x128xbf16, #tpu.memory_space<vmem>>, vector<7x128xbf16>
    %c98_660 = arith.constant 98 : index
    %c0_661 = arith.constant 0 : index
    %432 = vector.load %arg14[%c98_660, %c0_661] : memref<144x128xbf16, #tpu.memory_space<vmem>>, vector<7x128xbf16>
    %c112_662 = arith.constant 112 : index
    %c0_663 = arith.constant 0 : index
    %433 = vector.load %arg14[%c112_662, %c0_663] : memref<144x128xbf16, #tpu.memory_space<vmem>>, vector<7x128xbf16>
    %c113_664 = arith.constant 113 : index
    %c0_665 = arith.constant 0 : index
    %434 = vector.load %arg14[%c113_664, %c0_665] : memref<144x128xbf16, #tpu.memory_space<vmem>>, vector<7x128xbf16>
    %c114_666 = arith.constant 114 : index
    %c0_667 = arith.constant 0 : index
    %435 = vector.load %arg14[%c114_666, %c0_667] : memref<144x128xbf16, #tpu.memory_space<vmem>>, vector<7x128xbf16>
    %c128_668 = arith.constant 128 : index
    %c0_669 = arith.constant 0 : index
    %436 = vector.load %arg14[%c128_668, %c0_669] : memref<144x128xbf16, #tpu.memory_space<vmem>>, vector<7x128xbf16>
    %c129_670 = arith.constant 129 : index
    %c0_671 = arith.constant 0 : index
    %437 = vector.load %arg14[%c129_670, %c0_671] : memref<144x128xbf16, #tpu.memory_space<vmem>>, vector<7x128xbf16>
    %c130 = arith.constant 130 : index
    %c0_672 = arith.constant 0 : index
    %438 = vector.load %arg14[%c130, %c0_672] : memref<144x128xbf16, #tpu.memory_space<vmem>>, vector<7x128xbf16>
    %439 = tpu.concatenate %430, %431, %432, %433, %434, %435, %436, %437, %438 in 1 : vector<7x128xbf16>, vector<7x128xbf16>, vector<7x128xbf16>, vector<7x128xbf16>, vector<7x128xbf16>, vector<7x128xbf16>, vector<7x128xbf16>, vector<7x128xbf16>, vector<7x128xbf16> -> vector<7x1152xbf16>
    %c96_673 = arith.constant 96 : index
    %c0_674 = arith.constant 0 : index
    %440 = vector.load %arg15[%c96_673, %c0_674] : memref<112x1152xbf16, #tpu.memory_space<vmem>>, vector<7x1152xbf16>
    tpu.vector_store %arg15[%c96_673, %c0_674], %439 {strides = array<i32>} : memref<112x1152xbf16, #tpu.memory_space<vmem>>, vector<7x1152xbf16>,
    %c0_675 = arith.constant 0 : index
    %c0_676 = arith.constant 0 : index
    %441 = vector.load %arg15[%c0_675, %c0_676] : memref<112x1152xbf16, #tpu.memory_space<vmem>>, vector<112x1152xbf16>
    %c0_677 = arith.constant 0 : index
    %c0_678 = arith.constant 0 : index
    %442 = vector.load %arg6[%c0_677, %c0_678] : memref<1152x128xbf16, #tpu.memory_space<vmem>>, vector<1152x128xbf16>
    %cst_679 = arith.constant dense<0.000000e+00> : vector<112x128xf32>
    %443 = tpu.matmul %441, %442, %cst_679 {dimension_numbers = #tpu.dot_dimension_numbers<[1], [0], [0], [1], [0, 0, 1, 1], [], []>} : vector<112x1152xbf16>, vector<1152x128xbf16>, vector<112x128xf32> -> vector<112x128xf32>
    %c0_680 = arith.constant 0 : index
    %c0_681 = arith.constant 0 : index
    %444 = vector.load %arg7[%c0_680, %c0_681] : memref<1x128xf32, #tpu.memory_space<vmem>>, vector<1x128xf32>
    %445 = vector.broadcast %444 : vector<1x128xf32> to vector<112x128xf32>
    %446 = arith.addf %443, %445 : vector<112x128xf32>
    %cst_682 = arith.constant 0.000000e+00 : f32
    %447 = vector.broadcast %cst_682 : f32 to vector<112x128xf32>
    %448 = arith.maximumf %446, %447 : vector<112x128xf32>
    %449 = arith.truncf %448 : vector<112x128xf32> to vector<112x128xbf16>
    %450 = vector.extract_strided_slice %449 {offsets = [0, 0], sizes = [7, 128], strides = [1, 1]} : vector<112x128xbf16> to vector<7x128xbf16>
    %451 = vector.extract_strided_slice %449 {offsets = [16, 0], sizes = [7, 128], strides = [1, 1]} : vector<112x128xbf16> to vector<7x128xbf16>
    %452 = vector.extract_strided_slice %449 {offsets = [32, 0], sizes = [7, 128], strides = [1, 1]} : vector<112x128xbf16> to vector<7x128xbf16>
    %453 = vector.extract_strided_slice %449 {offsets = [48, 0], sizes = [7, 128], strides = [1, 1]} : vector<112x128xbf16> to vector<7x128xbf16>
    %454 = vector.extract_strided_slice %449 {offsets = [64, 0], sizes = [7, 128], strides = [1, 1]} : vector<112x128xbf16> to vector<7x128xbf16>
    %455 = vector.extract_strided_slice %449 {offsets = [80, 0], sizes = [7, 128], strides = [1, 1]} : vector<112x128xbf16> to vector<7x128xbf16>
    %456 = vector.extract_strided_slice %449 {offsets = [96, 0], sizes = [7, 128], strides = [1, 1]} : vector<112x128xbf16> to vector<7x128xbf16>
    %457 = tpu.concatenate %450, %451, %452, %453, %454, %455, %456 in 1 : vector<7x128xbf16>, vector<7x128xbf16>, vector<7x128xbf16>, vector<7x128xbf16>, vector<7x128xbf16>, vector<7x128xbf16>, vector<7x128xbf16> -> vector<7x896xbf16>
    %c0_683 = arith.constant 0 : index
    %c0_684 = arith.constant 0 : index
    %458 = vector.load %arg8[%c0_683, %c0_684] : memref<896x224xbf16, #tpu.memory_space<vmem>>, vector<896x224xbf16>
    %cst_685 = arith.constant dense<0.000000e+00> : vector<7x224xf32>
    %459 = tpu.matmul %457, %458, %cst_685 {dimension_numbers = #tpu.dot_dimension_numbers<[1], [0], [0], [1], [0, 0, 1, 1], [], []>} : vector<7x896xbf16>, vector<896x224xbf16>, vector<7x224xf32> -> vector<7x224xf32>
    %c0_686 = arith.constant 0 : index
    %c0_687 = arith.constant 0 : index
    %460 = vector.load %arg9[%c0_686, %c0_687] : memref<1x32xf32, #tpu.memory_space<vmem>>, vector<1x32xf32>
    %461 = vector.extract_strided_slice %459 {offsets = [0, 0], sizes = [1, 32], strides = [1, 1]} : vector<7x224xf32> to vector<1x32xf32>
    %462 = arith.addf %460, %461 : vector<1x32xf32>
    %463 = vector.extract_strided_slice %459 {offsets = [1, 32], sizes = [1, 32], strides = [1, 1]} : vector<7x224xf32> to vector<1x32xf32>
    %464 = arith.addf %462, %463 : vector<1x32xf32>
    %465 = vector.extract_strided_slice %459 {offsets = [2, 64], sizes = [1, 32], strides = [1, 1]} : vector<7x224xf32> to vector<1x32xf32>
    %466 = arith.addf %464, %465 : vector<1x32xf32>
    %467 = vector.extract_strided_slice %459 {offsets = [3, 96], sizes = [1, 32], strides = [1, 1]} : vector<7x224xf32> to vector<1x32xf32>
    %468 = arith.addf %466, %467 : vector<1x32xf32>
    %469 = vector.extract_strided_slice %459 {offsets = [4, 128], sizes = [1, 32], strides = [1, 1]} : vector<7x224xf32> to vector<1x32xf32>
    %470 = arith.addf %468, %469 : vector<1x32xf32>
    %471 = vector.extract_strided_slice %459 {offsets = [5, 160], sizes = [1, 32], strides = [1, 1]} : vector<7x224xf32> to vector<1x32xf32>
    %472 = arith.addf %470, %471 : vector<1x32xf32>
    %473 = vector.extract_strided_slice %459 {offsets = [6, 192], sizes = [1, 32], strides = [1, 1]} : vector<7x224xf32> to vector<1x32xf32>
    %474 = arith.addf %472, %473 : vector<1x32xf32>
    %cst_688 = arith.constant 0.000000e+00 : f32
    %475 = vector.broadcast %cst_688 : f32 to vector<1x32xf32>
    %476 = arith.maximumf %474, %475 : vector<1x32xf32>
    %c0_689 = arith.constant 0 : index
    %c0_690 = arith.constant 0 : index
    %c0_691 = arith.constant 0 : index
    %477 = vector.load %arg10[%c0_689, %c0_690, %c0_691] : memref<1x1x32xf32, #tpu.memory_space<vmem>>, vector<1x1x32xf32>
    %478 = vector.shape_cast %477 : vector<1x1x32xf32> to vector<1x32xf32>
    %479 = vector.shape_cast %476 : vector<1x32xf32> to vector<1x1x32xf32>
    tpu.vector_store %arg10[%c0_689, %c0_690, %c0_691], %479 {strides = array<i32>} : memref<1x1x32xf32, #tpu.memory_space<vmem>>, vector<1x1x32xf32>,
    return
  }
  func.func @transform_0(%arg0: i32) -> (i32, i32, i32, i32, i32) {
    %c0_i32 = arith.constant 0 : i32
    %c0_i32_0 = arith.constant 0 : i32
    %c0_i32_1 = arith.constant 0 : i32
    %c0_i32_2 = arith.constant 0 : i32
    %c0_i32_3 = arith.constant 0 : i32
    return %arg0, %c0_i32, %c0_i32_0, %c0_i32_1, %c0_i32_2 : i32, i32, i32, i32, i32
  }
  func.func @transform_1(%arg0: i32) -> (i32, i32) {
    %c0_i32 = arith.constant 0 : i32
    %c0_i32_0 = arith.constant 0 : i32
    %c0_i32_1 = arith.constant 0 : i32
    return %c0_i32, %c0_i32_0 : i32, i32
  }
  func.func @transform_2(%arg0: i32) -> (i32, i32) {
    %c0_i32 = arith.constant 0 : i32
    %c0_i32_0 = arith.constant 0 : i32
    %c0_i32_1 = arith.constant 0 : i32
    return %c0_i32, %c0_i32_0 : i32, i32
  }
  func.func @transform_3(%arg0: i32) -> (i32, i32) {
    %c0_i32 = arith.constant 0 : i32
    %c0_i32_0 = arith.constant 0 : i32
    %c0_i32_1 = arith.constant 0 : i32
    return %c0_i32, %c0_i32_0 : i32, i32
  }
  func.func @transform_4(%arg0: i32) -> (i32, i32) {
    %c0_i32 = arith.constant 0 : i32
    %c0_i32_0 = arith.constant 0 : i32
    %c0_i32_1 = arith.constant 0 : i32
    return %c0_i32, %c0_i32_0 : i32, i32
  }
  func.func @transform_5(%arg0: i32) -> (i32, i32) {
    %c0_i32 = arith.constant 0 : i32
    %c0_i32_0 = arith.constant 0 : i32
    %c0_i32_1 = arith.constant 0 : i32
    return %c0_i32, %c0_i32_0 : i32, i32
  }
  func.func @transform_6(%arg0: i32) -> (i32, i32) {
    %c0_i32 = arith.constant 0 : i32
    %c0_i32_0 = arith.constant 0 : i32
    %c0_i32_1 = arith.constant 0 : i32
    return %c0_i32, %c0_i32_0 : i32, i32
  }
  func.func @transform_7(%arg0: i32) -> (i32, i32) {
    %c0_i32 = arith.constant 0 : i32
    %c0_i32_0 = arith.constant 0 : i32
    %c0_i32_1 = arith.constant 0 : i32
    return %c0_i32, %c0_i32_0 : i32, i32
  }
  func.func @transform_8(%arg0: i32) -> (i32, i32) {
    %c0_i32 = arith.constant 0 : i32
    %c0_i32_0 = arith.constant 0 : i32
    %c0_i32_1 = arith.constant 0 : i32
    return %c0_i32, %c0_i32_0 : i32, i32
  }
  func.func @transform_9(%arg0: i32) -> (i32, i32, i32) {
    %c0_i32 = arith.constant 0 : i32
    %c0_i32_0 = arith.constant 0 : i32
    %c0_i32_1 = arith.constant 0 : i32
    return %arg0, %c0_i32, %c0_i32_0 : i32, i32, i32
  }
}

</mosaic_0001>

<llo_original>
// kernel: cnn_forward.1
$region0: #{cnn_forward.1}
  #allocation0 [shape = 'u32[]', space=smem, size = 0x4, offset = 0x4, fixed_abs, tag = 'smem constant byte address 0x4 - core index']
  #allocation1 [shape = 'u32[144,128]{1,0:T(1,128)}', space=vmem, size = 0x12000, scoped, tag = 'internal scratch']
  #allocation2 [shape = 'bf16[160,1152]{1,0:T(16,128)(2,1)}', space=vmem, size = 0x5a000, scoped, tag = 'scratch operand']
  #allocation3 [shape = 'bf16[160,128]{1,0:T(16,128)(2,1)}', space=vmem, size = 0xa000, scoped, tag = 'scratch operand']
  #allocation4 [shape = 'bf16[144,512]{1,0:T(16,128)(2,1)}', space=vmem, size = 0x24000, scoped, tag = 'scratch operand']
  #allocation5 [shape = 'bf16[144,128]{1,0:T(16,128)(2,1)}', space=vmem, size = 0x9000, scoped, tag = 'scratch operand']
  #allocation6 [shape = 'bf16[112,1152]{1,0:T(16,128)(2,1)}', space=vmem, size = 0x3f000, scoped, tag = 'scratch operand']
  %s0 = inlined_call_operand.vmem [shape: bf16[2,2,21,11,128], index: 0, kind: input, shape index: {}]
  %s1 = inlined_call_operand.vmem [shape: bf16[1152,128], index: 1, kind: input, shape index: {}]
  %s2 = inlined_call_operand.vmem [shape: f32[1,128], index: 2, kind: input, shape index: {}]
  %s3 = inlined_call_operand.vmem [shape: bf16[512,128], index: 3, kind: input, shape index: {}]
  %s4 = inlined_call_operand.vmem [shape: f32[1,128], index: 4, kind: input, shape index: {}]
  %s5 = inlined_call_operand.vmem [shape: bf16[1152,128], index: 5, kind: input, shape index: {}]
  %s6 = inlined_call_operand.vmem [shape: f32[1,128], index: 6, kind: input, shape index: {}]
  %s7 = inlined_call_operand.vmem [shape: bf16[896,224], index: 7, kind: input, shape index: {}]
  %s8 = inlined_call_operand.vmem [shape: f32[1,32], index: 8, kind: input, shape index: {}]
  %s9 = inlined_call_operand.hbm [shape: f32[2,1,32], index: 9, kind: output, shape index: {}]
  %s10 = sld [smem:[#allocation0]]
  $region69: #{cnn_forward.1} parent=0
    _
  %s12 = ssub.s32 1, %s10
  %s13 = scalar_select 0, %s12, %s10
  $region1: #{cnn_forward.1} parent=0
    #allocation7 [shape = 'u8[1024]{0}', space=vmem, size = 0x400, scoped, tag = 'output window, operand 0']
    #allocation8 [shape = 's32[2]{0}', space=sflag, size = 0x8, scoped, tag = 'scoped memory for cnn_forward.1']
    %14 = vsyncpa [#allocation8], 0
    %s15 = scalar_lea.sflag [#allocation8], 1
    %16 = vsyncpa %s15, 0
    loop: start=0, step=1, limit=4
    $region2: #{cnn_forward.1} parent=1 // loop_pre_header
      _
    $region3: #{cnn_forward.1} parent=1 // loop_header
      %s18 = sphi 0, %s22
      %p19 = scmp.ge.s32.totalorder %s18, 4
      %s28 = sphi 0, %s30
      %s31 = sphi 0, %s28
      %s32 = sphi 0, %s31
      %s48 = sphi 0, %s32
      %s52 = sphi 0, %s52
      %s54 = sphi 0, %s52
      %s55 = sphi 0, %s54
      %s69 = sphi 0, %s55
      %s73 = sphi 0, %s73
      %s75 = sphi 0, %s73
      %s76 = sphi 0, %s75
      %s90 = sphi 0, %s76
      %s94 = sphi 0, %s94
      %s96 = sphi 0, %s94
      %s97 = sphi 0, %s96
      %s111 = sphi 0, %s97
      %s115 = sphi 0, %s115
      %s117 = sphi 0, %s115
      %s118 = sphi 0, %s117
      %s132 = sphi 0, %s118
      %s136 = sphi 0, %s136
      %s138 = sphi 0, %s136
      %s139 = sphi 0, %s138
      %s153 = sphi 0, %s139
      %s157 = sphi 0, %s157
      %s159 = sphi 0, %s157
      %s160 = sphi 0, %s159
      %s174 = sphi 0, %s160
      %s178 = sphi 0, %s178
      %s180 = sphi 0, %s178
      %s181 = sphi 0, %s180
      %s195 = sphi 0, %s181
      %s199 = sphi 0, %s199
      %s201 = sphi 0, %s199
      %s202 = sphi 0, %s201
      %s216 = sphi 0, %s202
      %s222 = sphi 0, %s224
      %s225 = sphi 0, %s222
      %s226 = sphi 0, %s225
      %s242 = sphi 0, %s226
    $region4: #{cnn_forward.1} parent=1 // loop_header_branch
      %21 = sbr.rel (%p19) target = $region8
    $region5: #{cnn_forward.1} parent=1 // loop_body
      %s23 = ssub.s32 %s18, 1
      %s24 = ssub.s32 %s18, 2
      %s25 = sadd.s32 %s18, 1
      %s26 = ssub.s32 %s18, %s25
      %p27 = scmp.eq.s32.totalorder %s26, 0
      %s29 = sadd.s32 %s28, 1
      %s30 = scalar_select %p27, %s28, %s29
      %p33 = pneg %p27
      %p34 = scmp.eq.s32.totalorder %s18, 1
      %p35 = por %p33, %p34
      %p36 = scmp.ne.s32.totalorder %s28, %s31
      %p37 = scmp.eq.s32.totalorder %s18, 0
      %p38 = por %p36, %p37
      %p39 = scmp.ne.s32.totalorder %s28, %s31
      %p40 = scmp.eq.s32.totalorder %s23, 1
      %p41 = por %p39, %p40
      %p42 = scmp.ne.s32.totalorder %s31, %s32
      %p43 = scmp.eq.s32.totalorder %s23, 0
      %p44 = por %p42, %p43
      %p45 = scmp.ne.s32.totalorder %s31, %s32
      %p46 = scmp.eq.s32.totalorder %s24, 1
      %p47 = por %p45, %p46
      %p49 = scmp.ne.s32.totalorder %s32, %s48
      %p50 = scmp.eq.s32.totalorder %s24, 0
      %p51 = por %p49, %p50
      %s53 = sadd.s32 %s52, 1
      %p56 = scmp.eq.s32.totalorder %s18, 1
      %p57 = scmp.ne.s32.totalorder %s52, %s54
      %p58 = scmp.eq.s32.totalorder %s18, 0
      %p59 = por %p57, %p58
      %p60 = scmp.ne.s32.totalorder %s52, %s54
      %p61 = scmp.eq.s32.totalorder %s23, 1
      %p62 = por %p60, %p61
      %p63 = scmp.ne.s32.totalorder %s54, %s55
      %p64 = scmp.eq.s32.totalorder %s23, 0
      %p65 = por %p63, %p64
      %p66 = scmp.ne.s32.totalorder %s54, %s55
      %p67 = scmp.eq.s32.totalorder %s24, 1
      %p68 = por %p66, %p67
      %p70 = scmp.ne.s32.totalorder %s55, %s69
      %p71 = scmp.eq.s32.totalorder %s24, 0
      %p72 = por %p70, %p71
      %s74 = sadd.s32 %s73, 1
      %p77 = scmp.eq.s32.totalorder %s18, 1
      %p78 = scmp.ne.s32.totalorder %s73, %s75
      %p79 = scmp.eq.s32.totalorder %s18, 0
      %p80 = por %p78, %p79
      %p81 = scmp.ne.s32.totalorder %s73, %s75
      %p82 = scmp.eq.s32.totalorder %s23, 1
      %p83 = por %p81, %p82
      %p84 = scmp.ne.s32.totalorder %s75, %s76
      %p85 = scmp.eq.s32.totalorder %s23, 0
      %p86 = por %p84, %p85
      %p87 = scmp.ne.s32.totalorder %s75, %s76
      %p88 = scmp.eq.s32.totalorder %s24, 1
      %p89 = por %p87, %p88
      %p91 = scmp.ne.s32.totalorder %s76, %s90
      %p92 = scmp.eq.s32.totalorder %s24, 0
      %p93 = por %p91, %p92
      %s95 = sadd.s32 %s94, 1
      %p98 = scmp.eq.s32.totalorder %s18, 1
      %p99 = scmp.ne.s32.totalorder %s94, %s96
      %p100 = scmp.eq.s32.totalorder %s18, 0
      %p101 = por %p99, %p100
      %p102 = scmp.ne.s32.totalorder %s94, %s96
      %p103 = scmp.eq.s32.totalorder %s23, 1
      %p104 = por %p102, %p103
      %p105 = scmp.ne.s32.totalorder %s96, %s97
      %p106 = scmp.eq.s32.totalorder %s23, 0
      %p107 = por %p105, %p106
      %p108 = scmp.ne.s32.totalorder %s96, %s97
      %p109 = scmp.eq.s32.totalorder %s24, 1
      %p110 = por %p108, %p109
      %p112 = scmp.ne.s32.totalorder %s97, %s111
      %p113 = scmp.eq.s32.totalorder %s24, 0
      %p114 = por %p112, %p113
      %s116 = sadd.s32 %s115, 1
      %p119 = scmp.eq.s32.totalorder %s18, 1
      %p120 = scmp.ne.s32.totalorder %s115, %s117
      %p121 = scmp.eq.s32.totalorder %s18, 0
      %p122 = por %p120, %p121
      %p123 = scmp.ne.s32.totalorder %s115, %s117
      %p124 = scmp.eq.s32.totalorder %s23, 1
      %p125 = por %p123, %p124
      %p126 = scmp.ne.s32.totalorder %s117, %s118
      %p127 = scmp.eq.s32.totalorder %s23, 0
      %p128 = por %p126, %p127
      %p129 = scmp.ne.s32.totalorder %s117, %s118
      %p130 = scmp.eq.s32.totalorder %s24, 1
      %p131 = por %p129, %p130
      %p133 = scmp.ne.s32.totalorder %s118, %s132
      %p134 = scmp.eq.s32.totalorder %s24, 0
      %p135 = por %p133, %p134
      %s137 = sadd.s32 %s136, 1
      %p140 = scmp.eq.s32.totalorder %s18, 1
      %p141 = scmp.ne.s32.totalorder %s136, %s138
      %p142 = scmp.eq.s32.totalorder %s18, 0
      %p143 = por %p141, %p142
      %p144 = scmp.ne.s32.totalorder %s136, %s138
      %p145 = scmp.eq.s32.totalorder %s23, 1
      %p146 = por %p144, %p145
      %p147 = scmp.ne.s32.totalorder %s138, %s139
      %p148 = scmp.eq.s32.totalorder %s23, 0
      %p149 = por %p147, %p148
      %p150 = scmp.ne.s32.totalorder %s138, %s139
      %p151 = scmp.eq.s32.totalorder %s24, 1
      %p152 = por %p150, %p151
      %p154 = scmp.ne.s32.totalorder %s139, %s153
      %p155 = scmp.eq.s32.totalorder %s24, 0
      %p156 = por %p154, %p155
      %s158 = sadd.s32 %s157, 1
      %p161 = scmp.eq.s32.totalorder %s18, 1
      %p162 = scmp.ne.s32.totalorder %s157, %s159
      %p163 = scmp.eq.s32.totalorder %s18, 0
      %p164 = por %p162, %p163
      %p165 = scmp.ne.s32.totalorder %s157, %s159
      %p166 = scmp.eq.s32.totalorder %s23, 1
      %p167 = por %p165, %p166
      %p168 = scmp.ne.s32.totalorder %s159, %s160
      %p169 = scmp.eq.s32.totalorder %s23, 0
      %p170 = por %p168, %p169
      %p171 = scmp.ne.s32.totalorder %s159, %s160
      %p172 = scmp.eq.s32.totalorder %s24, 1
      %p173 = por %p171, %p172
      %p175 = scmp.ne.s32.totalorder %s160, %s174
      %p176 = scmp.eq.s32.totalorder %s24, 0
      %p177 = por %p175, %p176
      %s179 = sadd.s32 %s178, 1
      %p182 = scmp.eq.s32.totalorder %s18, 1
      %p183 = scmp.ne.s32.totalorder %s178, %s180
      %p184 = scmp.eq.s32.totalorder %s18, 0
      %p185 = por %p183, %p184
      %p186 = scmp.ne.s32.totalorder %s178, %s180
      %p187 = scmp.eq.s32.totalorder %s23, 1
      %p188 = por %p186, %p187
      %p189 = scmp.ne.s32.totalorder %s180, %s181
      %p190 = scmp.eq.s32.totalorder %s23, 0
      %p191 = por %p189, %p190
      %p192 = scmp.ne.s32.totalorder %s180, %s181
      %p193 = scmp.eq.s32.totalorder %s24, 1
      %p194 = por %p192, %p193
      %p196 = scmp.ne.s32.totalorder %s181, %s195
      %p197 = scmp.eq.s32.totalorder %s24, 0
      %p198 = por %p196, %p197
      %s200 = sadd.s32 %s199, 1
      %p203 = scmp.eq.s32.totalorder %s18, 1
      %p204 = scmp.ne.s32.totalorder %s199, %s201
      %p205 = scmp.eq.s32.totalorder %s18, 0
      %p206 = por %p204, %p205
      %p207 = scmp.ne.s32.totalorder %s199, %s201
      %p208 = scmp.eq.s32.totalorder %s23, 1
      %p209 = por %p207, %p208
      %p210 = scmp.ne.s32.totalorder %s201, %s202
      %p211 = scmp.eq.s32.totalorder %s23, 0
      %p212 = por %p210, %p211
      %p213 = scmp.ne.s32.totalorder %s201, %s202
      %p214 = scmp.eq.s32.totalorder %s24, 1
      %p215 = por %p213, %p214
      %p217 = scmp.ne.s32.totalorder %s202, %s216
      %p218 = scmp.eq.s32.totalorder %s24, 0
      %p219 = por %p217, %p218
      %s220 = ssub.s32 %s18, %s25
      %p221 = scmp.eq.s32.totalorder %s220, 0
      %s223 = sadd.s32 %s222, 1
      %s224 = scalar_select %p221, %s222, %s223
      %p227 = pneg %p221
      %p228 = scmp.eq.s32.totalorder %s18, 1
      %p229 = por %p227, %p228
      %p230 = scmp.ne.s32.totalorder %s222, %s225
      %p231 = scmp.eq.s32.totalorder %s18, 0
      %p232 = por %p230, %p231
      %p233 = scmp.ne.s32.totalorder %s222, %s225
      %p234 = scmp.eq.s32.totalorder %s23, 1
      %p235 = por %p233, %p234
      %p236 = scmp.ne.s32.totalorder %s225, %s226
      %p237 = scmp.eq.s32.totalorder %s23, 0
      %p238 = por %p236, %p237
      %p239 = scmp.ne.s32.totalorder %s225, %s226
      %p240 = scmp.eq.s32.totalorder %s24, 1
      %p241 = por %p239, %p240
      %p243 = scmp.ne.s32.totalorder %s226, %s242
      %p244 = scmp.eq.s32.totalorder %s24, 0
      %p245 = por %p243, %p244
      %p246 = scmp.le.s32.totalorder 1, %s18
      %p247 = scmp.lt.s32.totalorder %s18, 3
      %p248 = pnand %p246, %p247
      %p249 = pneg %p248
      // Predicated region
      $region9: #{cnn_forward.1} parent=5 // pred_check
        _
      $region10: #{cnn_forward.1} parent=5 // pred_check_branch
        %251 = sbr.rel (%p248) target = $region12
      $region11: #{cnn_forward.1} parent=5 // pred_region
        %s252 = ssub.s32 %s18, 1
        // Predicated region
        $region13: #{cnn_forward.1} parent=11 // pred_check
          %p253 = pneg %p65
        $region14: #{cnn_forward.1} parent=11 // pred_check_branch
          %255 = sbr.rel (%p253) target = $region16
        $region15: #{cnn_forward.1} parent=11 // pred_region
          _
        $region16: #{cnn_forward.1} parent=11 // pred_fallthru
          _
        // Predicated region
        $region17: #{cnn_forward.1} parent=11 // pred_check
          %p256 = pneg %p86
        $region18: #{cnn_forward.1} parent=11 // pred_check_branch
          %258 = sbr.rel (%p256) target = $region20
        $region19: #{cnn_forward.1} parent=11 // pred_region
          _
        $region20: #{cnn_forward.1} parent=11 // pred_fallthru
          _
        // Predicated region
        $region21: #{cnn_forward.1} parent=11 // pred_check
          %p259 = pneg %p107
        $region22: #{cnn_forward.1} parent=11 // pred_check_branch
          %261 = sbr.rel (%p259) target = $region24
        $region23: #{cnn_forward.1} parent=11 // pred_region
          _
        $region24: #{cnn_forward.1} parent=11 // pred_fallthru
          _
        // Predicated region
        $region25: #{cnn_forward.1} parent=11 // pred_check
          %p262 = pneg %p128
        $region26: #{cnn_forward.1} parent=11 // pred_check_branch
          %264 = sbr.rel (%p262) target = $region28
        $region27: #{cnn_forward.1} parent=11 // pred_region
          _
        $region28: #{cnn_forward.1} parent=11 // pred_fallthru
          _
        // Predicated region
        $region29: #{cnn_forward.1} parent=11 // pred_check
          %p265 = pneg %p149
        $region30: #{cnn_forward.1} parent=11 // pred_check_branch
          %267 = sbr.rel (%p265) target = $region32
        $region31: #{cnn_forward.1} parent=11 // pred_region
          _
        $region32: #{cnn_forward.1} parent=11 // pred_fallthru
          _
        // Predicated region
        $region33: #{cnn_forward.1} parent=11 // pred_check
          %p268 = pneg %p170
        $region34: #{cnn_forward.1} parent=11 // pred_check_branch
          %270 = sbr.rel (%p268) target = $region36
        $region35: #{cnn_forward.1} parent=11 // pred_region
          _
        $region36: #{cnn_forward.1} parent=11 // pred_fallthru
          _
        // Predicated region
        $region37: #{cnn_forward.1} parent=11 // pred_check
          %p271 = pneg %p191
        $region38: #{cnn_forward.1} parent=11 // pred_check_branch
          %273 = sbr.rel (%p271) target = $region40
        $region39: #{cnn_forward.1} parent=11 // pred_region
          _
        $region40: #{cnn_forward.1} parent=11 // pred_fallthru
          _
        // Predicated region
        $region41: #{cnn_forward.1} parent=11 // pred_check
          %p274 = pneg %p212
        $region42: #{cnn_forward.1} parent=11 // pred_check_branch
          %276 = sbr.rel (%p274) target = $region44
        $region43: #{cnn_forward.1} parent=11 // pred_region
          _
        $region44: #{cnn_forward.1} parent=11 // pred_fallthru
          _
      $region12: #{cnn_forward.1} parent=5 // pred_fallthru
        _
      %p277 = scmp.lt.s32.totalorder %s18, 2
      // Predicated region
      $region45: #{cnn_forward.1} parent=5 // pred_check
        %p278 = pneg %p277
      $region46: #{cnn_forward.1} parent=5 // pred_check_branch
        %280 = sbr.rel (%p278) target = $region48
      $region47: #{cnn_forward.1} parent=5 // pred_region
        // Predicated region
        $region49: #{cnn_forward.1} parent=47 // pred_check
          %p281 = pneg %p38
        $region50: #{cnn_forward.1} parent=47 // pred_check_branch
          %283 = sbr.rel (%p281) target = $region52
        $region51: #{cnn_forward.1} parent=47 // pred_region
          %p284 = scmp.lt.s32.totalorder %s18, 1
          %s285 = scalar_select %p284, %s18, 1
          %s286 = smul.addr %s285, 84
          %s287 = smul.addr %s286, 4
          %s288 = scalar_lea.vmem %s0, %s287
        $region52: #{cnn_forward.1} parent=47 // pred_fallthru
          _
      $region48: #{cnn_forward.1} parent=5 // pred_fallthru
        _
      %p289 = scmp.le.s32.totalorder 1, %s18
      %p290 = scmp.lt.s32.totalorder %s18, 3
      %p291 = pnand %p289, %p290
      %p292 = pneg %p291
      // Predicated region
      $region53: #{cnn_forward.1} parent=5 // pred_check
        _
      $region54: #{cnn_forward.1} parent=5 // pred_check_branch
        %294 = sbr.rel (%p291) target = $region56
      $region55: #{cnn_forward.1} parent=5 // pred_region
        %s295 = ssub.s32 %s18, 1
        %p296 = scmp.lt.s32.totalorder %s23, 1
        %s297 = scalar_select %p296, %s23, 1
        %s298 = smul.addr %s297, 84
        %s299 = smul.addr %s298, 4
        %s300 = scalar_lea.vmem %s0, %s299
        %p301 = pneg %p44
        %p302 = pneg %p41
        %p303 = pneg %p65
        %p304 = pneg %p62
        %p305 = pneg %p86
        %p306 = pneg %p83
        %p307 = pneg %p107
        %p308 = pneg %p104
        %p309 = pneg %p128
        %p310 = pneg %p125
        %p311 = pneg %p149
        %p312 = pneg %p146
        %p313 = pneg %p170
        %p314 = pneg %p167
        %p315 = pneg %p191
        %p316 = pneg %p188
        %p317 = pneg %p212
        %p318 = pneg %p209
        %p319 = pneg %p238
        %p320 = pneg %p235
        %s321 = sand.u32 %s225, 1
        %s322 = scalar_lea.sflag [#allocation8], %s321
        %s323 = sand.u32 %s225, 1
        %s324 = scalar_lea.vmem [#allocation7], %s323
        %p325 = scmp.lt.s32.totalorder %s23, 1
        %s326 = scalar_select %p325, %s23, 1
        %s327 = smul.addr %s326, 84
        %s328 = smul.addr %s327, 4
        %s329 = scalar_lea.vmem %s0, %s328
        %v331 = vld [vmem:[%s329] sm:$0xf]
        %v332 = vld [vmem:[%s329 + $0x4] sm:$0x3]
        %s333 = scalar_lea.vmem %s329, 8
        %v334 = vld [vmem:[%s333] sm:$0xf]
        %v335 = vld [vmem:[%s333 + $0x4] sm:$0x3]
        %s336 = scalar_lea.vmem %s329, 16
        %v337 = vld [vmem:[%s336] sm:$0xf]
        %v338 = vld [vmem:[%s336 + $0x4] sm:$0x3]
        %s339 = scalar_lea.vmem %s329, 168
        %v340 = vld [vmem:[%s339] sm:$0xf]
        %v341 = vld [vmem:[%s339 + $0x4] sm:$0x3]
        %s342 = scalar_lea.vmem %s329, 176
        %v343 = vld [vmem:[%s342] sm:$0xf]
        %v344 = vld [vmem:[%s342 + $0x4] sm:$0x3]
        %s345 = scalar_lea.vmem %s329, 184
        %v346 = vld [vmem:[%s345] sm:$0xf]
        %v347 = vld [vmem:[%s345 + $0x4] sm:$0x3]
        %v350 = vunpack.c.l.b16 %v331
        %v351 = vunpack.c.l.b16 %v332
        %v352 = vpack.c.b16 %v351, %v350
        %v356 = vunpack.c.l.b16 %v334
        %v357 = vunpack.c.l.b16 %v335
        %v358 = vpack.c.b16 %v357, %v356
        %v362 = vunpack.c.l.b16 %v337
        %v363 = vunpack.c.l.b16 %v338
        %v364 = vpack.c.b16 %v363, %v362
        %v367 = vshrl.u32 %v352, 16
        %v369 = vshll.u32 %v352, 16
        %v371 = vrot.slane %v369, 1
        %v372 = vor.u32 %v367, %v371
        %v375 = vshrl.u32 %v358, 16
        %v377 = vshll.u32 %v358, 16
        %v379 = vrot.slane %v377, 1
        %v380 = vor.u32 %v375, %v379
        %v383 = vshrl.u32 %v364, 16
        %v385 = vshll.u32 %v364, 16
        %v387 = vrot.slane %v385, 1
        %v388 = vor.u32 %v383, %v387
        %v392 = vunpack.c.l.b16 %v340
        %v393 = vunpack.c.l.b16 %v341
        %v394 = vpack.c.b16 %v393, %v392
        %v398 = vunpack.c.l.b16 %v343
        %v399 = vunpack.c.l.b16 %v344
        %v400 = vpack.c.b16 %v399, %v398
        %v404 = vunpack.c.l.b16 %v346
        %v405 = vunpack.c.l.b16 %v347
        %v406 = vpack.c.b16 %v405, %v404
        %408 = vst [vmem:[#allocation2] sm:$0x1f] %v352
        %409 = vst [vmem:[#allocation2 + $0x8] sm:$0x1f] %v358
        %410 = vst [vmem:[#allocation2 + $0x10] sm:$0x1f] %v364
        %411 = vst [vmem:[#allocation2 + $0x18] sm:$0x1f] %v372
        %412 = vst [vmem:[#allocation2 + $0x20] sm:$0x1f] %v380
        %413 = vst [vmem:[#allocation2 + $0x28] sm:$0x1f] %v388
        %414 = vst [vmem:[#allocation2 + $0x30] sm:$0x1f] %v394
        %415 = vst [vmem:[#allocation2 + $0x38] sm:$0x1f] %v400
        %416 = vst [vmem:[#allocation2 + $0x40] sm:$0x1f] %v406
        %v417 = vld [vmem:[%s336] sm:$0xf]
        %v418 = vld [vmem:[%s336 + $0x4] sm:$0x3]
        %s419 = scalar_lea.vmem %s329, 24
        %v420 = vld [vmem:[%s419] sm:$0xf]
        %v421 = vld [vmem:[%s419 + $0x4] sm:$0x3]
        %s422 = scalar_lea.vmem %s329, 32
        %v423 = vld [vmem:[%s422] sm:$0xf]
        %v424 = vld [vmem:[%s422 + $0x4] sm:$0x3]
        %v425 = vld [vmem:[%s345] sm:$0xf]
        %v426 = vld [vmem:[%s345 + $0x4] sm:$0x3]
        %s427 = scalar_lea.vmem %s329, 192
        %v428 = vld [vmem:[%s427] sm:$0xf]
        %v429 = vld [vmem:[%s427 + $0x4] sm:$0x3]
        %s430 = scalar_lea.vmem %s329, 200
        %v431 = vld [vmem:[%s430] sm:$0xf]
        %v432 = vld [vmem:[%s430 + $0x4] sm:$0x3]
        %v435 = vunpack.c.l.b16 %v417
        %v436 = vunpack.c.l.b16 %v418
        %v437 = vpack.c.b16 %v436, %v435
        %v441 = vunpack.c.l.b16 %v420
        %v442 = vunpack.c.l.b16 %v421
        %v443 = vpack.c.b16 %v442, %v441
        %v447 = vunpack.c.l.b16 %v423
        %v448 = vunpack.c.l.b16 %v424
        %v449 = vpack.c.b16 %v448, %v447
        %v452 = vshrl.u32 %v437, 16
        %v454 = vshll.u32 %v437, 16
        %v456 = vrot.slane %v454, 1
        %v457 = vor.u32 %v452, %v456
        %v460 = vshrl.u32 %v443, 16
        %v462 = vshll.u32 %v443, 16
        %v464 = vrot.slane %v462, 1
        %v465 = vor.u32 %v460, %v464
        %v468 = vshrl.u32 %v449, 16
        %v470 = vshll.u32 %v449, 16
        %v472 = vrot.slane %v470, 1
        %v473 = vor.u32 %v468, %v472
        %v477 = vunpack.c.l.b16 %v425
        %v478 = vunpack.c.l.b16 %v426
        %v479 = vpack.c.b16 %v478, %v477
        %v483 = vunpack.c.l.b16 %v428
        %v484 = vunpack.c.l.b16 %v429
        %v485 = vpack.c.b16 %v484, %v483
        %v489 = vunpack.c.l.b16 %v431
        %v490 = vunpack.c.l.b16 %v432
        %v491 = vpack.c.b16 %v490, %v489
        %493 = vst [vmem:[#allocation2 + $0x48] sm:$0x1f] %v437
        %494 = vst [vmem:[#allocation2 + $0x50] sm:$0x1f] %v443
        %495 = vst [vmem:[#allocation2 + $0x58] sm:$0x1f] %v449
        %496 = vst [vmem:[#allocation2 + $0x60] sm:$0x1f] %v457
        %497 = vst [vmem:[#allocation2 + $0x68] sm:$0x1f] %v465
        %498 = vst [vmem:[#allocation2 + $0x70] sm:$0x1f] %v473
        %499 = vst [vmem:[#allocation2 + $0x78] sm:$0x1f] %v479
        %500 = vst [vmem:[#allocation2 + $0x80] sm:$0x1f] %v485
        %501 = vst [vmem:[#allocation2 + $0x88] sm:$0x1f] %v491
        %v502 = vld [vmem:[%s422] sm:$0xf]
        %v503 = vld [vmem:[%s422 + $0x4] sm:$0x3]
        %s504 = scalar_lea.vmem %s329, 40
        %v505 = vld [vmem:[%s504] sm:$0xf]
        %v506 = vld [vmem:[%s504 + $0x4] sm:$0x3]
        %s507 = scalar_lea.vmem %s329, 48
        %v508 = vld [vmem:[%s507] sm:$0xf]
        %v509 = vld [vmem:[%s507 + $0x4] sm:$0x3]
        %v510 = vld [vmem:[%s430] sm:$0xf]
        %v511 = vld [vmem:[%s430 + $0x4] sm:$0x3]
        %s512 = scalar_lea.vmem %s329, 208
        %v513 = vld [vmem:[%s512] sm:$0xf]
        %v514 = vld [vmem:[%s512 + $0x4] sm:$0x3]
        %s515 = scalar_lea.vmem %s329, 216
        %v516 = vld [vmem:[%s515] sm:$0xf]
        %v517 = vld [vmem:[%s515 + $0x4] sm:$0x3]
        %v520 = vunpack.c.l.b16 %v502
        %v521 = vunpack.c.l.b16 %v503
        %v522 = vpack.c.b16 %v521, %v520
        %v526 = vunpack.c.l.b16 %v505
        %v527 = vunpack.c.l.b16 %v506
        %v528 = vpack.c.b16 %v527, %v526
        %v532 = vunpack.c.l.b16 %v508
        %v533 = vunpack.c.l.b16 %v509
        %v534 = vpack.c.b16 %v533, %v532
        %v537 = vshrl.u32 %v522, 16
        %v539 = vshll.u32 %v522, 16
        %v541 = vrot.slane %v539, 1
        %v542 = vor.u32 %v537, %v541
        %v545 = vshrl.u32 %v528, 16
        %v547 = vshll.u32 %v528, 16
        %v549 = vrot.slane %v547, 1
        %v550 = vor.u32 %v545, %v549
        %v553 = vshrl.u32 %v534, 16
        %v555 = vshll.u32 %v534, 16
        %v557 = vrot.slane %v555, 1
        %v558 = vor.u32 %v553, %v557
        %v562 = vunpack.c.l.b16 %v510
        %v563 = vunpack.c.l.b16 %v511
        %v564 = vpack.c.b16 %v563, %v562
        %v568 = vunpack.c.l.b16 %v513
        %v569 = vunpack.c.l.b16 %v514
        %v570 = vpack.c.b16 %v569, %v568
        %v574 = vunpack.c.l.b16 %v516
        %v575 = vunpack.c.l.b16 %v517
        %v576 = vpack.c.b16 %v575, %v574
        %578 = vst [vmem:[#allocation2 + $0x90] sm:$0x1f] %v522
        %579 = vst [vmem:[#allocation2 + $0x98] sm:$0x1f] %v528
        %580 = vst [vmem:[#allocation2 + $0xa0] sm:$0x1f] %v534
        %581 = vst [vmem:[#allocation2 + $0xa8] sm:$0x1f] %v542
        %582 = vst [vmem:[#allocation2 + $0xb0] sm:$0x1f] %v550
        %583 = vst [vmem:[#allocation2 + $0xb8] sm:$0x1f] %v558
        %584 = vst [vmem:[#allocation2 + $0xc0] sm:$0x1f] %v564
        %585 = vst [vmem:[#allocation2 + $0xc8] sm:$0x1f] %v570
        %586 = vst [vmem:[#allocation2 + $0xd0] sm:$0x1f] %v576
        %v587 = vld [vmem:[%s507] sm:$0xf]
        %v588 = vld [vmem:[%s507 + $0x4] sm:$0x3]
        %s589 = scalar_lea.vmem %s329, 56
        %v590 = vld [vmem:[%s589] sm:$0xf]
        %v591 = vld [vmem:[%s589 + $0x4] sm:$0x3]
        %s592 = scalar_lea.vmem %s329, 64
        %v593 = vld [vmem:[%s592] sm:$0xf]
        %v594 = vld [vmem:[%s592 + $0x4] sm:$0x3]
        %v595 = vld [vmem:[%s515] sm:$0xf]
        %v596 = vld [vmem:[%s515 + $0x4] sm:$0x3]
        %s597 = scalar_lea.vmem %s329, 224
        %v598 = vld [vmem:[%s597] sm:$0xf]
        %v599 = vld [vmem:[%s597 + $0x4] sm:$0x3]
        %s600 = scalar_lea.vmem %s329, 232
        %v601 = vld [vmem:[%s600] sm:$0xf]
        %v602 = vld [vmem:[%s600 + $0x4] sm:$0x3]
        %v605 = vunpack.c.l.b16 %v587
        %v606 = vunpack.c.l.b16 %v588
        %v607 = vpack.c.b16 %v606, %v605
        %v611 = vunpack.c.l.b16 %v590
        %v612 = vunpack.c.l.b16 %v591
        %v613 = vpack.c.b16 %v612, %v611
        %v617 = vunpack.c.l.b16 %v593
        %v618 = vunpack.c.l.b16 %v594
        %v619 = vpack.c.b16 %v618, %v617
        %v622 = vshrl.u32 %v607, 16
        %v624 = vshll.u32 %v607, 16
        %v626 = vrot.slane %v624, 1
        %v627 = vor.u32 %v622, %v626
        %v630 = vshrl.u32 %v613, 16
        %v632 = vshll.u32 %v613, 16
        %v634 = vrot.slane %v632, 1
        %v635 = vor.u32 %v630, %v634
        %v638 = vshrl.u32 %v619, 16
        %v640 = vshll.u32 %v619, 16
        %v642 = vrot.slane %v640, 1
        %v643 = vor.u32 %v638, %v642
        %v647 = vunpack.c.l.b16 %v595
        %v648 = vunpack.c.l.b16 %v596
        %v649 = vpack.c.b16 %v648, %v647
        %v653 = vunpack.c.l.b16 %v598
        %v654 = vunpack.c.l.b16 %v599
        %v655 = vpack.c.b16 %v654, %v653
        %v659 = vunpack.c.l.b16 %v601
        %v660 = vunpack.c.l.b16 %v602
        %v661 = vpack.c.b16 %v660, %v659
        %663 = vst [vmem:[#allocation2 + $0xd8] sm:$0x1f] %v607
        %664 = vst [vmem:[#allocation2 + $0xe0] sm:$0x1f] %v613
        %665 = vst [vmem:[#allocation2 + $0xe8] sm:$0x1f] %v619
        %666 = vst [vmem:[#allocation2 + $0xf0] sm:$0x1f] %v627
        %667 = vst [vmem:[#allocation2 + $0xf8] sm:$0x1f] %v635
        %668 = vst [vmem:[#allocation2 + $0x100] sm:$0x1f] %v643
        %669 = vst [vmem:[#allocation2 + $0x108] sm:$0x1f] %v649
        %670 = vst [vmem:[#allocation2 + $0x110] sm:$0x1f] %v655
        %671 = vst [vmem:[#allocation2 + $0x118] sm:$0x1f] %v661
        %v672 = vld [vmem:[%s592] sm:$0xf]
        %v673 = vld [vmem:[%s592 + $0x4] sm:$0x3]
        %s674 = scalar_lea.vmem %s329, 72
        %v675 = vld [vmem:[%s674] sm:$0xf]
        %v676 = vld [vmem:[%s674 + $0x4] sm:$0x3]
        %s677 = scalar_lea.vmem %s329, 80
        %v678 = vld [vmem:[%s677] sm:$0xf]
        %v679 = vld [vmem:[%s677 + $0x4] sm:$0x3]
        %v680 = vld [vmem:[%s600] sm:$0xf]
        %v681 = vld [vmem:[%s600 + $0x4] sm:$0x3]
        %s682 = scalar_lea.vmem %s329, 240
        %v683 = vld [vmem:[%s682] sm:$0xf]
        %v684 = vld [vmem:[%s682 + $0x4] sm:$0x3]
        %s685 = scalar_lea.vmem %s329, 248
        %v686 = vld [vmem:[%s685] sm:$0xf]
        %v687 = vld [vmem:[%s685 + $0x4] sm:$0x3]
        %v690 = vunpack.c.l.b16 %v672
        %v691 = vunpack.c.l.b16 %v673
        %v692 = vpack.c.b16 %v691, %v690
        %v696 = vunpack.c.l.b16 %v675
        %v697 = vunpack.c.l.b16 %v676
        %v698 = vpack.c.b16 %v697, %v696
        %v702 = vunpack.c.l.b16 %v678
        %v703 = vunpack.c.l.b16 %v679
        %v704 = vpack.c.b16 %v703, %v702
        %v707 = vshrl.u32 %v692, 16
        %v709 = vshll.u32 %v692, 16
        %v711 = vrot.slane %v709, 1
        %v712 = vor.u32 %v707, %v711
        %v715 = vshrl.u32 %v698, 16
        %v717 = vshll.u32 %v698, 16
        %v719 = vrot.slane %v717, 1
        %v720 = vor.u32 %v715, %v719
        %v723 = vshrl.u32 %v704, 16
        %v725 = vshll.u32 %v704, 16
        %v727 = vrot.slane %v725, 1
        %v728 = vor.u32 %v723, %v727
        %v732 = vunpack.c.l.b16 %v680
        %v733 = vunpack.c.l.b16 %v681
        %v734 = vpack.c.b16 %v733, %v732
        %v738 = vunpack.c.l.b16 %v683
        %v739 = vunpack.c.l.b16 %v684
        %v740 = vpack.c.b16 %v739, %v738
        %v744 = vunpack.c.l.b16 %v686
        %v745 = vunpack.c.l.b16 %v687
        %v746 = vpack.c.b16 %v745, %v744
        %748 = vst [vmem:[#allocation2 + $0x120] sm:$0x1f] %v692
        %749 = vst [vmem:[#allocation2 + $0x128] sm:$0x1f] %v698
        %750 = vst [vmem:[#allocation2 + $0x130] sm:$0x1f] %v704
        %751 = vst [vmem:[#allocation2 + $0x138] sm:$0x1f] %v712
        %752 = vst [vmem:[#allocation2 + $0x140] sm:$0x1f] %v720
        %753 = vst [vmem:[#allocation2 + $0x148] sm:$0x1f] %v728
        %754 = vst [vmem:[#allocation2 + $0x150] sm:$0x1f] %v734
        %755 = vst [vmem:[#allocation2 + $0x158] sm:$0x1f] %v740
        %756 = vst [vmem:[#allocation2 + $0x160] sm:$0x1f] %v746
        %v757 = vld [vmem:[%s677] sm:$0xf]
        %v758 = vld [vmem:[%s677 + $0x4] sm:$0x3]
        %s759 = scalar_lea.vmem %s329, 88
        %v760 = vld [vmem:[%s759] sm:$0xf]
        %v761 = vld [vmem:[%s759 + $0x4] sm:$0x3]
        %s762 = scalar_lea.vmem %s329, 96
        %v763 = vld [vmem:[%s762] sm:$0xf]
        %v764 = vld [vmem:[%s762 + $0x4] sm:$0x3]
        %v765 = vld [vmem:[%s685] sm:$0xf]
        %v766 = vld [vmem:[%s685 + $0x4] sm:$0x3]
        %s767 = scalar_lea.vmem %s329, 256
        %v768 = vld [vmem:[%s767] sm:$0xf]
        %v769 = vld [vmem:[%s767 + $0x4] sm:$0x3]
        %s770 = scalar_lea.vmem %s329, 264
        %v771 = vld [vmem:[%s770] sm:$0xf]
        %v772 = vld [vmem:[%s770 + $0x4] sm:$0x3]
        %v775 = vunpack.c.l.b16 %v757
        %v776 = vunpack.c.l.b16 %v758
        %v777 = vpack.c.b16 %v776, %v775
        %v781 = vunpack.c.l.b16 %v760
        %v782 = vunpack.c.l.b16 %v761
        %v783 = vpack.c.b16 %v782, %v781
        %v787 = vunpack.c.l.b16 %v763
        %v788 = vunpack.c.l.b16 %v764
        %v789 = vpack.c.b16 %v788, %v787
        %v792 = vshrl.u32 %v777, 16
        %v794 = vshll.u32 %v777, 16
        %v796 = vrot.slane %v794, 1
        %v797 = vor.u32 %v792, %v796
        %v800 = vshrl.u32 %v783, 16
        %v802 = vshll.u32 %v783, 16
        %v804 = vrot.slane %v802, 1
        %v805 = vor.u32 %v800, %v804
        %v808 = vshrl.u32 %v789, 16
        %v810 = vshll.u32 %v789, 16
        %v812 = vrot.slane %v810, 1
        %v813 = vor.u32 %v808, %v812
        %v817 = vunpack.c.l.b16 %v765
        %v818 = vunpack.c.l.b16 %v766
        %v819 = vpack.c.b16 %v818, %v817
        %v823 = vunpack.c.l.b16 %v768
        %v824 = vunpack.c.l.b16 %v769
        %v825 = vpack.c.b16 %v824, %v823
        %v829 = vunpack.c.l.b16 %v771
        %v830 = vunpack.c.l.b16 %v772
        %v831 = vpack.c.b16 %v830, %v829
        %833 = vst [vmem:[#allocation2 + $0x168] sm:$0x1f] %v777
        %834 = vst [vmem:[#allocation2 + $0x170] sm:$0x1f] %v783
        %835 = vst [vmem:[#allocation2 + $0x178] sm:$0x1f] %v789
        %836 = vst [vmem:[#allocation2 + $0x180] sm:$0x1f] %v797
        %837 = vst [vmem:[#allocation2 + $0x188] sm:$0x1f] %v805
        %838 = vst [vmem:[#allocation2 + $0x190] sm:$0x1f] %v813
        %839 = vst [vmem:[#allocation2 + $0x198] sm:$0x1f] %v819
        %840 = vst [vmem:[#allocation2 + $0x1a0] sm:$0x1f] %v825
        %841 = vst [vmem:[#allocation2 + $0x1a8] sm:$0x1f] %v831
        %v842 = vld [vmem:[%s762] sm:$0xf]
        %v843 = vld [vmem:[%s762 + $0x4] sm:$0x3]
        %s844 = scalar_lea.vmem %s329, 104
        %v845 = vld [vmem:[%s844] sm:$0xf]
        %v846 = vld [vmem:[%s844 + $0x4] sm:$0x3]
        %s847 = scalar_lea.vmem %s329, 112
        %v848 = vld [vmem:[%s847] sm:$0xf]
        %v849 = vld [vmem:[%s847 + $0x4] sm:$0x3]
        %v850 = vld [vmem:[%s770] sm:$0xf]
        %v851 = vld [vmem:[%s770 + $0x4] sm:$0x3]
        %s852 = scalar_lea.vmem %s329, 272
        %v853 = vld [vmem:[%s852] sm:$0xf]
        %v854 = vld [vmem:[%s852 + $0x4] sm:$0x3]
        %s855 = scalar_lea.vmem %s329, 280
        %v856 = vld [vmem:[%s855] sm:$0xf]
        %v857 = vld [vmem:[%s855 + $0x4] sm:$0x3]
        %v860 = vunpack.c.l.b16 %v842
        %v861 = vunpack.c.l.b16 %v843
        %v862 = vpack.c.b16 %v861, %v860
        %v866 = vunpack.c.l.b16 %v845
        %v867 = vunpack.c.l.b16 %v846
        %v868 = vpack.c.b16 %v867, %v866
        %v872 = vunpack.c.l.b16 %v848
        %v873 = vunpack.c.l.b16 %v849
        %v874 = vpack.c.b16 %v873, %v872
        %v877 = vshrl.u32 %v862, 16
        %v879 = vshll.u32 %v862, 16
        %v881 = vrot.slane %v879, 1
        %v882 = vor.u32 %v877, %v881
        %v885 = vshrl.u32 %v868, 16
        %v887 = vshll.u32 %v868, 16
        %v889 = vrot.slane %v887, 1
        %v890 = vor.u32 %v885, %v889
        %v893 = vshrl.u32 %v874, 16
        %v895 = vshll.u32 %v874, 16
        %v897 = vrot.slane %v895, 1
        %v898 = vor.u32 %v893, %v897
        %v902 = vunpack.c.l.b16 %v850
        %v903 = vunpack.c.l.b16 %v851
        %v904 = vpack.c.b16 %v903, %v902
        %v908 = vunpack.c.l.b16 %v853
        %v909 = vunpack.c.l.b16 %v854
        %v910 = vpack.c.b16 %v909, %v908
        %v914 = vunpack.c.l.b16 %v856
        %v915 = vunpack.c.l.b16 %v857
        %v916 = vpack.c.b16 %v915, %v914
        %918 = vst [vmem:[#allocation2 + $0x1b0] sm:$0x1f] %v862
        %919 = vst [vmem:[#allocation2 + $0x1b8] sm:$0x1f] %v868
        %920 = vst [vmem:[#allocation2 + $0x1c0] sm:$0x1f] %v874
        %921 = vst [vmem:[#allocation2 + $0x1c8] sm:$0x1f] %v882
        %922 = vst [vmem:[#allocation2 + $0x1d0] sm:$0x1f] %v890
        %923 = vst [vmem:[#allocation2 + $0x1d8] sm:$0x1f] %v898
        %924 = vst [vmem:[#allocation2 + $0x1e0] sm:$0x1f] %v904
        %925 = vst [vmem:[#allocation2 + $0x1e8] sm:$0x1f] %v910
        %926 = vst [vmem:[#allocation2 + $0x1f0] sm:$0x1f] %v916
        %v927 = vld [vmem:[%s847] sm:$0xf]
        %v928 = vld [vmem:[%s847 + $0x4] sm:$0x3]
        %s929 = scalar_lea.vmem %s329, 120
        %v930 = vld [vmem:[%s929] sm:$0xf]
        %v931 = vld [vmem:[%s929 + $0x4] sm:$0x3]
        %s932 = scalar_lea.vmem %s329, 128
        %v933 = vld [vmem:[%s932] sm:$0xf]
        %v934 = vld [vmem:[%s932 + $0x4] sm:$0x3]
        %v935 = vld [vmem:[%s855] sm:$0xf]
        %v936 = vld [vmem:[%s855 + $0x4] sm:$0x3]
        %s937 = scalar_lea.vmem %s329, 288
        %v938 = vld [vmem:[%s937] sm:$0xf]
        %v939 = vld [vmem:[%s937 + $0x4] sm:$0x3]
        %s940 = scalar_lea.vmem %s329, 296
        %v941 = vld [vmem:[%s940] sm:$0xf]
        %v942 = vld [vmem:[%s940 + $0x4] sm:$0x3]
        %v945 = vunpack.c.l.b16 %v927
        %v946 = vunpack.c.l.b16 %v928
        %v947 = vpack.c.b16 %v946, %v945
        %v951 = vunpack.c.l.b16 %v930
        %v952 = vunpack.c.l.b16 %v931
        %v953 = vpack.c.b16 %v952, %v951
        %v957 = vunpack.c.l.b16 %v933
        %v958 = vunpack.c.l.b16 %v934
        %v959 = vpack.c.b16 %v958, %v957
        %v962 = vshrl.u32 %v947, 16
        %v964 = vshll.u32 %v947, 16
        %v966 = vrot.slane %v964, 1
        %v967 = vor.u32 %v962, %v966
        %v970 = vshrl.u32 %v953, 16
        %v972 = vshll.u32 %v953, 16
        %v974 = vrot.slane %v972, 1
        %v975 = vor.u32 %v970, %v974
        %v978 = vshrl.u32 %v959, 16
        %v980 = vshll.u32 %v959, 16
        %v982 = vrot.slane %v980, 1
        %v983 = vor.u32 %v978, %v982
        %v987 = vunpack.c.l.b16 %v935
        %v988 = vunpack.c.l.b16 %v936
        %v989 = vpack.c.b16 %v988, %v987
        %v993 = vunpack.c.l.b16 %v938
        %v994 = vunpack.c.l.b16 %v939
        %v995 = vpack.c.b16 %v994, %v993
        %v999 = vunpack.c.l.b16 %v941
        %v1000 = vunpack.c.l.b16 %v942
        %v1001 = vpack.c.b16 %v1000, %v999
        %1003 = vst [vmem:[#allocation2 + $0x1f8] sm:$0x1f] %v947
        %1004 = vst [vmem:[#allocation2 + $0x200] sm:$0x1f] %v953
        %1005 = vst [vmem:[#allocation2 + $0x208] sm:$0x1f] %v959
        %1006 = vst [vmem:[#allocation2 + $0x210] sm:$0x1f] %v967
        %1007 = vst [vmem:[#allocation2 + $0x218] sm:$0x1f] %v975
        %1008 = vst [vmem:[#allocation2 + $0x220] sm:$0x1f] %v983
        %1009 = vst [vmem:[#allocation2 + $0x228] sm:$0x1f] %v989
        %1010 = vst [vmem:[#allocation2 + $0x230] sm:$0x1f] %v995
        %1011 = vst [vmem:[#allocation2 + $0x238] sm:$0x1f] %v1001
        %v1012 = vld [vmem:[%s932] sm:$0xf]
        %v1013 = vld [vmem:[%s932 + $0x4] sm:$0x3]
        %s1014 = scalar_lea.vmem %s329, 136
        %v1015 = vld [vmem:[%s1014] sm:$0xf]
        %v1016 = vld [vmem:[%s1014 + $0x4] sm:$0x3]
        %s1017 = scalar_lea.vmem %s329, 144
        %v1018 = vld [vmem:[%s1017] sm:$0xf]
        %v1019 = vld [vmem:[%s1017 + $0x4] sm:$0x3]
        %v1020 = vld [vmem:[%s940] sm:$0xf]
        %v1021 = vld [vmem:[%s940 + $0x4] sm:$0x3]
        %s1022 = scalar_lea.vmem %s329, 304
        %v1023 = vld [vmem:[%s1022] sm:$0xf]
        %v1024 = vld [vmem:[%s1022 + $0x4] sm:$0x3]
        %s1025 = scalar_lea.vmem %s329, 312
        %v1026 = vld [vmem:[%s1025] sm:$0xf]
        %v1027 = vld [vmem:[%s1025 + $0x4] sm:$0x3]
        %v1030 = vunpack.c.l.b16 %v1012
        %v1031 = vunpack.c.l.b16 %v1013
        %v1032 = vpack.c.b16 %v1031, %v1030
        %v1036 = vunpack.c.l.b16 %v1015
        %v1037 = vunpack.c.l.b16 %v1016
        %v1038 = vpack.c.b16 %v1037, %v1036
        %v1042 = vunpack.c.l.b16 %v1018
        %v1043 = vunpack.c.l.b16 %v1019
        %v1044 = vpack.c.b16 %v1043, %v1042
        %v1047 = vshrl.u32 %v1032, 16
        %v1049 = vshll.u32 %v1032, 16
        %v1051 = vrot.slane %v1049, 1
        %v1052 = vor.u32 %v1047, %v1051
        %v1055 = vshrl.u32 %v1038, 16
        %v1057 = vshll.u32 %v1038, 16
        %v1059 = vrot.slane %v1057, 1
        %v1060 = vor.u32 %v1055, %v1059
        %v1063 = vshrl.u32 %v1044, 16
        %v1065 = vshll.u32 %v1044, 16
        %v1067 = vrot.slane %v1065, 1
        %v1068 = vor.u32 %v1063, %v1067
        %v1072 = vunpack.c.l.b16 %v1020
        %v1073 = vunpack.c.l.b16 %v1021
        %v1074 = vpack.c.b16 %v1073, %v1072
        %v1078 = vunpack.c.l.b16 %v1023
        %v1079 = vunpack.c.l.b16 %v1024
        %v1080 = vpack.c.b16 %v1079, %v1078
        %v1084 = vunpack.c.l.b16 %v1026
        %v1085 = vunpack.c.l.b16 %v1027
        %v1086 = vpack.c.b16 %v1085, %v1084
        %1088 = vst [vmem:[#allocation2 + $0x240] sm:$0x1f] %v1032
        %1089 = vst [vmem:[#allocation2 + $0x248] sm:$0x1f] %v1038
        %1090 = vst [vmem:[#allocation2 + $0x250] sm:$0x1f] %v1044
        %1091 = vst [vmem:[#allocation2 + $0x258] sm:$0x1f] %v1052
        %1092 = vst [vmem:[#allocation2 + $0x260] sm:$0x1f] %v1060
        %1093 = vst [vmem:[#allocation2 + $0x268] sm:$0x1f] %v1068
        %1094 = vst [vmem:[#allocation2 + $0x270] sm:$0x1f] %v1074
        %1095 = vst [vmem:[#allocation2 + $0x278] sm:$0x1f] %v1080
        %1096 = vst [vmem:[#allocation2 + $0x280] sm:$0x1f] %v1086
        %v1097 = vld [vmem:[%s1017] sm:$0xf]
        %v1098 = vld [vmem:[%s1017 + $0x4] sm:$0x3]
        %s1099 = scalar_lea.vmem %s329, 152
        %v1100 = vld [vmem:[%s1099] sm:$0xf]
        %v1101 = vld [vmem:[%s1099 + $0x4] sm:$0x3]
        %s1102 = scalar_lea.vmem %s329, 160
        %v1103 = vld [vmem:[%s1102] sm:$0xf]
        %v1104 = vld [vmem:[%s1102 + $0x4] sm:$0x3]
        %v1105 = vld [vmem:[%s1025] sm:$0xf]
        %v1106 = vld [vmem:[%s1025 + $0x4] sm:$0x3]
        %s1107 = scalar_lea.vmem %s329, 320
        %v1108 = vld [vmem:[%s1107] sm:$0xf]
        %v1109 = vld [vmem:[%s1107 + $0x4] sm:$0x3]
        %s1110 = scalar_lea.vmem %s329, 328
        %v1111 = vld [vmem:[%s1110] sm:$0xf]
        %v1112 = vld [vmem:[%s1110 + $0x4] sm:$0x3]
        %v1115 = vunpack.c.l.b16 %v1097
        %v1116 = vunpack.c.l.b16 %v1098
        %v1117 = vpack.c.b16 %v1116, %v1115
        %v1121 = vunpack.c.l.b16 %v1100
        %v1122 = vunpack.c.l.b16 %v1101
        %v1123 = vpack.c.b16 %v1122, %v1121
        %v1127 = vunpack.c.l.b16 %v1103
        %v1128 = vunpack.c.l.b16 %v1104
        %v1129 = vpack.c.b16 %v1128, %v1127
        %v1132 = vshrl.u32 %v1117, 16
        %v1134 = vshll.u32 %v1117, 16
        %v1136 = vrot.slane %v1134, 1
        %v1137 = vor.u32 %v1132, %v1136
        %v1140 = vshrl.u32 %v1123, 16
        %v1142 = vshll.u32 %v1123, 16
        %v1144 = vrot.slane %v1142, 1
        %v1145 = vor.u32 %v1140, %v1144
        %v1148 = vshrl.u32 %v1129, 16
        %v1150 = vshll.u32 %v1129, 16
        %v1152 = vrot.slane %v1150, 1
        %v1153 = vor.u32 %v1148, %v1152
        %v1157 = vunpack.c.l.b16 %v1105
        %v1158 = vunpack.c.l.b16 %v1106
        %v1159 = vpack.c.b16 %v1158, %v1157
        %v1163 = vunpack.c.l.b16 %v1108
        %v1164 = vunpack.c.l.b16 %v1109
        %v1165 = vpack.c.b16 %v1164, %v1163
        %v1169 = vunpack.c.l.b16 %v1111
        %v1170 = vunpack.c.l.b16 %v1112
        %v1171 = vpack.c.b16 %v1170, %v1169
        %1173 = vst [vmem:[#allocation2 + $0x288] sm:$0x1f] %v1117
        %1174 = vst [vmem:[#allocation2 + $0x290] sm:$0x1f] %v1123
        %1175 = vst [vmem:[#allocation2 + $0x298] sm:$0x1f] %v1129
        %1176 = vst [vmem:[#allocation2 + $0x2a0] sm:$0x1f] %v1137
        %1177 = vst [vmem:[#allocation2 + $0x2a8] sm:$0x1f] %v1145
        %1178 = vst [vmem:[#allocation2 + $0x2b0] sm:$0x1f] %v1153
        %1179 = vst [vmem:[#allocation2 + $0x2b8] sm:$0x1f] %v1159
        %1180 = vst [vmem:[#allocation2 + $0x2c0] sm:$0x1f] %v1165
        %1181 = vst [vmem:[#allocation2 + $0x2c8] sm:$0x1f] %v1171
        %v1182 = vld [vmem:[#allocation2] sm:$0xff]
        %v1183 = vld [vmem:[#allocation2 + $0x8] sm:$0xff]
        %v1184 = vld [vmem:[#allocation2 + $0x10] sm:$0xff]
        %v1185 = vld [vmem:[#allocation2 + $0x18] sm:$0xff]
        %v1186 = vld [vmem:[#allocation2 + $0x20] sm:$0xff]
        %v1187 = vld [vmem:[#allocation2 + $0x28] sm:$0xff]
        %v1188 = vld [vmem:[#allocation2 + $0x30] sm:$0xff]
        %v1189 = vld [vmem:[#allocation2 + $0x38] sm:$0xff]
        %v1190 = vld [vmem:[#allocation2 + $0x40] sm:$0xff]
        %v1191 = vld [vmem:[#allocation2 + $0x48] sm:$0xff]
        %v1192 = vld [vmem:[#allocation2 + $0x50] sm:$0xff]
        %v1193 = vld [vmem:[#allocation2 + $0x58] sm:$0xff]
        %v1194 = vld [vmem:[#allocation2 + $0x60] sm:$0xff]
        %v1195 = vld [vmem:[#allocation2 + $0x68] sm:$0xff]
        %v1196 = vld [vmem:[#allocation2 + $0x70] sm:$0xff]
        %v1197 = vld [vmem:[#allocation2 + $0x78] sm:$0xff]
        %v1198 = vld [vmem:[#allocation2 + $0x80] sm:$0xff]
        %v1199 = vld [vmem:[#allocation2 + $0x88] sm:$0xff]
        %v1200 = vld [vmem:[#allocation2 + $0x90] sm:$0xff]
        %v1201 = vld [vmem:[#allocation2 + $0x98] sm:$0xff]
        %v1202 = vld [vmem:[#allocation2 + $0xa0] sm:$0xff]
        %v1203 = vld [vmem:[#allocation2 + $0xa8] sm:$0xff]
        %v1204 = vld [vmem:[#allocation2 + $0xb0] sm:$0xff]
        %v1205 = vld [vmem:[#allocation2 + $0xb8] sm:$0xff]
        %v1206 = vld [vmem:[#allocation2 + $0xc0] sm:$0xff]
        %v1207 = vld [vmem:[#allocation2 + $0xc8] sm:$0xff]
        %v1208 = vld [vmem:[#allocation2 + $0xd0] sm:$0xff]
        %v1209 = vld [vmem:[#allocation2 + $0xd8] sm:$0xff]
        %v1210 = vld [vmem:[#allocation2 + $0xe0] sm:$0xff]
        %v1211 = vld [vmem:[#allocation2 + $0xe8] sm:$0xff]
        %v1212 = vld [vmem:[#allocation2 + $0xf0] sm:$0xff]
        %v1213 = vld [vmem:[#allocation2 + $0xf8] sm:$0xff]
        %v1214 = vld [vmem:[#allocation2 + $0x100] sm:$0xff]
        %v1215 = vld [vmem:[#allocation2 + $0x108] sm:$0xff]
        %v1216 = vld [vmem:[#allocation2 + $0x110] sm:$0xff]
        %v1217 = vld [vmem:[#allocation2 + $0x118] sm:$0xff]
        %v1218 = vld [vmem:[#allocation2 + $0x120] sm:$0xff]
        %v1219 = vld [vmem:[#allocation2 + $0x128] sm:$0xff]
        %v1220 = vld [vmem:[#allocation2 + $0x130] sm:$0xff]
        %v1221 = vld [vmem:[#allocation2 + $0x138] sm:$0xff]
        %v1222 = vld [vmem:[#allocation2 + $0x140] sm:$0xff]
        %v1223 = vld [vmem:[#allocation2 + $0x148] sm:$0xff]
        %v1224 = vld [vmem:[#allocation2 + $0x150] sm:$0xff]
        %v1225 = vld [vmem:[#allocation2 + $0x158] sm:$0xff]
        %v1226 = vld [vmem:[#allocation2 + $0x160] sm:$0xff]
        %v1227 = vld [vmem:[#allocation2 + $0x168] sm:$0xff]
        %v1228 = vld [vmem:[#allocation2 + $0x170] sm:$0xff]
        %v1229 = vld [vmem:[#allocation2 + $0x178] sm:$0xff]
        %v1230 = vld [vmem:[#allocation2 + $0x180] sm:$0xff]
        %v1231 = vld [vmem:[#allocation2 + $0x188] sm:$0xff]
        %v1232 = vld [vmem:[#allocation2 + $0x190] sm:$0xff]
        %v1233 = vld [vmem:[#allocation2 + $0x198] sm:$0xff]
        %v1234 = vld [vmem:[#allocation2 + $0x1a0] sm:$0xff]
        %v1235 = vld [vmem:[#allocation2 + $0x1a8] sm:$0xff]
        %v1236 = vld [vmem:[#allocation2 + $0x1b0] sm:$0xff]
        %v1237 = vld [vmem:[#allocation2 + $0x1b8] sm:$0xff]
        %v1238 = vld [vmem:[#allocation2 + $0x1c0] sm:$0xff]
        %v1239 = vld [vmem:[#allocation2 + $0x1c8] sm:$0xff]
        %v1240 = vld [vmem:[#allocation2 + $0x1d0] sm:$0xff]
        %v1241 = vld [vmem:[#allocation2 + $0x1d8] sm:$0xff]
        %v1242 = vld [vmem:[#allocation2 + $0x1e0] sm:$0xff]
        %v1243 = vld [vmem:[#allocation2 + $0x1e8] sm:$0xff]
        %v1244 = vld [vmem:[#allocation2 + $0x1f0] sm:$0xff]
        %v1245 = vld [vmem:[#allocation2 + $0x1f8] sm:$0xff]
        %v1246 = vld [vmem:[#allocation2 + $0x200] sm:$0xff]
        %v1247 = vld [vmem:[#allocation2 + $0x208] sm:$0xff]
        %v1248 = vld [vmem:[#allocation2 + $0x210] sm:$0xff]
        %v1249 = vld [vmem:[#allocation2 + $0x218] sm:$0xff]
        %v1250 = vld [vmem:[#allocation2 + $0x220] sm:$0xff]
        %v1251 = vld [vmem:[#allocation2 + $0x228] sm:$0xff]
        %v1252 = vld [vmem:[#allocation2 + $0x230] sm:$0xff]
        %v1253 = vld [vmem:[#allocation2 + $0x238] sm:$0xff]
        %v1254 = vld [vmem:[#allocation2 + $0x240] sm:$0xff]
        %v1255 = vld [vmem:[#allocation2 + $0x248] sm:$0xff]
        %v1256 = vld [vmem:[#allocation2 + $0x250] sm:$0xff]
        %v1257 = vld [vmem:[#allocation2 + $0x258] sm:$0xff]
        %v1258 = vld [vmem:[#allocation2 + $0x260] sm:$0xff]
        %v1259 = vld [vmem:[#allocation2 + $0x268] sm:$0xff]
        %v1260 = vld [vmem:[#allocation2 + $0x270] sm:$0xff]
        %v1261 = vld [vmem:[#allocation2 + $0x278] sm:$0xff]
        %v1262 = vld [vmem:[#allocation2 + $0x280] sm:$0xff]
        %v1263 = vld [vmem:[#allocation2 + $0x288] sm:$0xff]
        %v1264 = vld [vmem:[#allocation2 + $0x290] sm:$0xff]
        %v1265 = vld [vmem:[#allocation2 + $0x298] sm:$0xff]
        %v1266 = vld [vmem:[#allocation2 + $0x2a0] sm:$0xff]
        %v1267 = vld [vmem:[#allocation2 + $0x2a8] sm:$0xff]
        %v1268 = vld [vmem:[#allocation2 + $0x2b0] sm:$0xff]
        %v1269 = vld [vmem:[#allocation2 + $0x2b8] sm:$0xff]
        %v1270 = vld [vmem:[#allocation2 + $0x2c0] sm:$0xff]
        %v1271 = vld [vmem:[#allocation2 + $0x2c8] sm:$0xff]
        %v1272 = vld [vmem:[%s1] sm:$0xf]
        %v1273 = vld [vmem:[%s1 + $0x4] sm:$0xf]
        %v1274 = vld [vmem:[%s1 + $0x8] sm:$0xf]
        %v1275 = vld [vmem:[%s1 + $0xc] sm:$0xf]
        %v1276 = vld [vmem:[%s1 + $0x10] sm:$0xf]
        %v1277 = vld [vmem:[%s1 + $0x14] sm:$0xf]
        %v1278 = vld [vmem:[%s1 + $0x18] sm:$0xf]
        %v1279 = vld [vmem:[%s1 + $0x1c] sm:$0xf]
        %v1280 = vld [vmem:[%s1 + $0x20] sm:$0xf]
        %v1281 = vld [vmem:[%s1 + $0x24] sm:$0xf]
        %v1282 = vld [vmem:[%s1 + $0x28] sm:$0xf]
        %v1283 = vld [vmem:[%s1 + $0x2c] sm:$0xf]
        %v1284 = vld [vmem:[%s1 + $0x30] sm:$0xf]
        %v1285 = vld [vmem:[%s1 + $0x34] sm:$0xf]
        %v1286 = vld [vmem:[%s1 + $0x38] sm:$0xf]
        %v1287 = vld [vmem:[%s1 + $0x3c] sm:$0xf]
        %v1288 = vld [vmem:[%s1 + $0x40] sm:$0xf]
        %v1289 = vld [vmem:[%s1 + $0x44] sm:$0xf]
        %v1290 = vld [vmem:[%s1 + $0x48] sm:$0xf]
        %v1291 = vld [vmem:[%s1 + $0x4c] sm:$0xf]
        %v1292 = vld [vmem:[%s1 + $0x50] sm:$0xf]
        %v1293 = vld [vmem:[%s1 + $0x54] sm:$0xf]
        %v1294 = vld [vmem:[%s1 + $0x58] sm:$0xf]
        %v1295 = vld [vmem:[%s1 + $0x5c] sm:$0xf]
        %v1296 = vld [vmem:[%s1 + $0x60] sm:$0xf]
        %v1297 = vld [vmem:[%s1 + $0x64] sm:$0xf]
        %v1298 = vld [vmem:[%s1 + $0x68] sm:$0xf]
        %v1299 = vld [vmem:[%s1 + $0x6c] sm:$0xf]
        %v1300 = vld [vmem:[%s1 + $0x70] sm:$0xf]
        %v1301 = vld [vmem:[%s1 + $0x74] sm:$0xf]
        %v1302 = vld [vmem:[%s1 + $0x78] sm:$0xf]
        %v1303 = vld [vmem:[%s1 + $0x7c] sm:$0xf]
        %v1304 = vld [vmem:[%s1 + $0x80] sm:$0xf]
        %v1305 = vld [vmem:[%s1 + $0x84] sm:$0xf]
        %v1306 = vld [vmem:[%s1 + $0x88] sm:$0xf]
        %v1307 = vld [vmem:[%s1 + $0x8c] sm:$0xf]
        %v1308 = vld [vmem:[%s1 + $0x90] sm:$0xf]
        %v1309 = vld [vmem:[%s1 + $0x94] sm:$0xf]
        %v1310 = vld [vmem:[%s1 + $0x98] sm:$0xf]
        %v1311 = vld [vmem:[%s1 + $0x9c] sm:$0xf]
        %v1312 = vld [vmem:[%s1 + $0xa0] sm:$0xf]
        %v1313 = vld [vmem:[%s1 + $0xa4] sm:$0xf]
        %v1314 = vld [vmem:[%s1 + $0xa8] sm:$0xf]
        %v1315 = vld [vmem:[%s1 + $0xac] sm:$0xf]
        %v1316 = vld [vmem:[%s1 + $0xb0] sm:$0xf]
        %v1317 = vld [vmem:[%s1 + $0xb4] sm:$0xf]
        %v1318 = vld [vmem:[%s1 + $0xb8] sm:$0xf]
        %v1319 = vld [vmem:[%s1 + $0xbc] sm:$0xf]
        %v1320 = vld [vmem:[%s1 + $0xc0] sm:$0xf]
        %v1321 = vld [vmem:[%s1 + $0xc4] sm:$0xf]
        %v1322 = vld [vmem:[%s1 + $0xc8] sm:$0xf]
        %v1323 = vld [vmem:[%s1 + $0xcc] sm:$0xf]
        %v1324 = vld [vmem:[%s1 + $0xd0] sm:$0xf]
        %v1325 = vld [vmem:[%s1 + $0xd4] sm:$0xf]
        %v1326 = vld [vmem:[%s1 + $0xd8] sm:$0xf]
        %v1327 = vld [vmem:[%s1 + $0xdc] sm:$0xf]
        %v1328 = vld [vmem:[%s1 + $0xe0] sm:$0xf]
        %v1329 = vld [vmem:[%s1 + $0xe4] sm:$0xf]
        %v1330 = vld [vmem:[%s1 + $0xe8] sm:$0xf]
        %v1331 = vld [vmem:[%s1 + $0xec] sm:$0xf]
        %v1332 = vld [vmem:[%s1 + $0xf0] sm:$0xf]
        %v1333 = vld [vmem:[%s1 + $0xf4] sm:$0xf]
        %v1334 = vld [vmem:[%s1 + $0xf8] sm:$0xf]
        %v1335 = vld [vmem:[%s1 + $0xfc] sm:$0xf]
        %v1336 = vld [vmem:[%s1 + $0x100] sm:$0xf]
        %v1337 = vld [vmem:[%s1 + $0x104] sm:$0xf]
        %v1338 = vld [vmem:[%s1 + $0x108] sm:$0xf]
        %v1339 = vld [vmem:[%s1 + $0x10c] sm:$0xf]
        %v1340 = vld [vmem:[%s1 + $0x110] sm:$0xf]
        %v1341 = vld [vmem:[%s1 + $0x114] sm:$0xf]
        %v1342 = vld [vmem:[%s1 + $0x118] sm:$0xf]
        %v1343 = vld [vmem:[%s1 + $0x11c] sm:$0xf]
        %v1344 = vld [vmem:[%s1 + $0x120] sm:$0xf]
        %v1345 = vld [vmem:[%s1 + $0x124] sm:$0xf]
        %v1346 = vld [vmem:[%s1 + $0x128] sm:$0xf]
        %v1347 = vld [vmem:[%s1 + $0x12c] sm:$0xf]
        %v1348 = vld [vmem:[%s1 + $0x130] sm:$0xf]
        %v1349 = vld [vmem:[%s1 + $0x134] sm:$0xf]
        %v1350 = vld [vmem:[%s1 + $0x138] sm:$0xf]
        %v1351 = vld [vmem:[%s1 + $0x13c] sm:$0xf]
        %v1352 = vld [vmem:[%s1 + $0x140] sm:$0xf]
        %v1353 = vld [vmem:[%s1 + $0x144] sm:$0xf]
        %v1354 = vld [vmem:[%s1 + $0x148] sm:$0xf]
        %v1355 = vld [vmem:[%s1 + $0x14c] sm:$0xf]
        %v1356 = vld [vmem:[%s1 + $0x150] sm:$0xf]
        %v1357 = vld [vmem:[%s1 + $0x154] sm:$0xf]
        %v1358 = vld [vmem:[%s1 + $0x158] sm:$0xf]
        %v1359 = vld [vmem:[%s1 + $0x15c] sm:$0xf]
        %v1360 = vld [vmem:[%s1 + $0x160] sm:$0xf]
        %v1361 = vld [vmem:[%s1 + $0x164] sm:$0xf]
        %v1362 = vld [vmem:[%s1 + $0x168] sm:$0xf]
        %v1363 = vld [vmem:[%s1 + $0x16c] sm:$0xf]
        %v1364 = vld [vmem:[%s1 + $0x170] sm:$0xf]
        %v1365 = vld [vmem:[%s1 + $0x174] sm:$0xf]
        %v1366 = vld [vmem:[%s1 + $0x178] sm:$0xf]
        %v1367 = vld [vmem:[%s1 + $0x17c] sm:$0xf]
        %v1368 = vld [vmem:[%s1 + $0x180] sm:$0xf]
        %v1369 = vld [vmem:[%s1 + $0x184] sm:$0xf]
        %v1370 = vld [vmem:[%s1 + $0x188] sm:$0xf]
        %v1371 = vld [vmem:[%s1 + $0x18c] sm:$0xf]
        %v1372 = vld [vmem:[%s1 + $0x190] sm:$0xf]
        %v1373 = vld [vmem:[%s1 + $0x194] sm:$0xf]
        %v1374 = vld [vmem:[%s1 + $0x198] sm:$0xf]
        %v1375 = vld [vmem:[%s1 + $0x19c] sm:$0xf]
        %v1376 = vld [vmem:[%s1 + $0x1a0] sm:$0xf]
        %v1377 = vld [vmem:[%s1 + $0x1a4] sm:$0xf]
        %v1378 = vld [vmem:[%s1 + $0x1a8] sm:$0xf]
        %v1379 = vld [vmem:[%s1 + $0x1ac] sm:$0xf]
        %v1380 = vld [vmem:[%s1 + $0x1b0] sm:$0xf]
        %v1381 = vld [vmem:[%s1 + $0x1b4] sm:$0xf]
        %v1382 = vld [vmem:[%s1 + $0x1b8] sm:$0xf]
        %v1383 = vld [vmem:[%s1 + $0x1bc] sm:$0xf]
        %v1384 = vld [vmem:[%s1 + $0x1c0] sm:$0xf]
        %v1385 = vld [vmem:[%s1 + $0x1c4] sm:$0xf]
        %v1386 = vld [vmem:[%s1 + $0x1c8] sm:$0xf]
        %v1387 = vld [vmem:[%s1 + $0x1cc] sm:$0xf]
        %v1388 = vld [vmem:[%s1 + $0x1d0] sm:$0xf]
        %v1389 = vld [vmem:[%s1 + $0x1d4] sm:$0xf]
        %v1390 = vld [vmem:[%s1 + $0x1d8] sm:$0xf]
        %v1391 = vld [vmem:[%s1 + $0x1dc] sm:$0xf]
        %v1392 = vld [vmem:[%s1 + $0x1e0] sm:$0xf]
        %v1393 = vld [vmem:[%s1 + $0x1e4] sm:$0xf]
        %v1394 = vld [vmem:[%s1 + $0x1e8] sm:$0xf]
        %v1395 = vld [vmem:[%s1 + $0x1ec] sm:$0xf]
        %v1396 = vld [vmem:[%s1 + $0x1f0] sm:$0xf]
        %v1397 = vld [vmem:[%s1 + $0x1f4] sm:$0xf]
        %v1398 = vld [vmem:[%s1 + $0x1f8] sm:$0xf]
        %v1399 = vld [vmem:[%s1 + $0x1fc] sm:$0xf]
        %v1400 = vld [vmem:[%s1 + $0x200] sm:$0xf]
        %v1401 = vld [vmem:[%s1 + $0x204] sm:$0xf]
        %v1402 = vld [vmem:[%s1 + $0x208] sm:$0xf]
        %v1403 = vld [vmem:[%s1 + $0x20c] sm:$0xf]
        %v1404 = vld [vmem:[%s1 + $0x210] sm:$0xf]
        %v1405 = vld [vmem:[%s1 + $0x214] sm:$0xf]
        %v1406 = vld [vmem:[%s1 + $0x218] sm:$0xf]
        %v1407 = vld [vmem:[%s1 + $0x21c] sm:$0xf]
        %v1408 = vld [vmem:[%s1 + $0x220] sm:$0xf]
        %v1409 = vld [vmem:[%s1 + $0x224] sm:$0xf]
        %v1410 = vld [vmem:[%s1 + $0x228] sm:$0xf]
        %v1411 = vld [vmem:[%s1 + $0x22c] sm:$0xf]
        %v1412 = vld [vmem:[%s1 + $0x230] sm:$0xf]
        %v1413 = vld [vmem:[%s1 + $0x234] sm:$0xf]
        %v1414 = vld [vmem:[%s1 + $0x238] sm:$0xf]
        %v1415 = vld [vmem:[%s1 + $0x23c] sm:$0xf]
        %v1416 = vld [vmem:[%s2] sm:$0x1]
        %v1418 = vlaneseq
        %v1419 = vshrl.u32 %v1418, 7
        %v1420 = vsub.s32 0, %v1419
        %v1421 = vrot.slane %v1416, %v1420
        %v1567 = vunpack.c.l.b16 %v1272
        %v1568 = vunpack.c.l.b16 %v1273
        %v1569 = vunpack.c.l.b16 %v1274
        %v1570 = vunpack.c.l.b16 %v1275
        %v1571 = vunpack.c.l.b16 %v1276
        %v1572 = vunpack.c.l.b16 %v1277
        %v1573 = vunpack.c.l.b16 %v1278
        %v1574 = vunpack.c.l.b16 %v1279
        %v1575 = vunpack.c.l.b16 %v1280
        %v1576 = vunpack.c.l.b16 %v1281
        %v1577 = vunpack.c.l.b16 %v1282
        %v1578 = vunpack.c.l.b16 %v1283
        %v1579 = vunpack.c.l.b16 %v1284
        %v1580 = vunpack.c.l.b16 %v1285
        %v1581 = vunpack.c.l.b16 %v1286
        %v1582 = vunpack.c.l.b16 %v1287
        %v1583 = vunpack.c.l.b16 %v1288
        %v1584 = vunpack.c.l.b16 %v1289
        %v1585 = vunpack.c.l.b16 %v1290
        %v1586 = vunpack.c.l.b16 %v1291
        %v1587 = vunpack.c.l.b16 %v1292
        %v1588 = vunpack.c.l.b16 %v1293
        %v1589 = vunpack.c.l.b16 %v1294
        %v1590 = vunpack.c.l.b16 %v1295
        %v1591 = vunpack.c.l.b16 %v1296
        %v1592 = vunpack.c.l.b16 %v1297
        %v1593 = vunpack.c.l.b16 %v1298
        %v1594 = vunpack.c.l.b16 %v1299
        %v1595 = vunpack.c.l.b16 %v1300
        %v1596 = vunpack.c.l.b16 %v1301
        %v1597 = vunpack.c.l.b16 %v1302
        %v1598 = vunpack.c.l.b16 %v1303
        %v1599 = vunpack.c.l.b16 %v1304
        %v1600 = vunpack.c.l.b16 %v1305
        %v1601 = vunpack.c.l.b16 %v1306
        %v1602 = vunpack.c.l.b16 %v1307
        %v1603 = vunpack.c.l.b16 %v1308
        %v1604 = vunpack.c.l.b16 %v1309
        %v1605 = vunpack.c.l.b16 %v1310
        %v1606 = vunpack.c.l.b16 %v1311
        %v1607 = vunpack.c.l.b16 %v1312
        %v1608 = vunpack.c.l.b16 %v1313
        %v1609 = vunpack.c.l.b16 %v1314
        %v1610 = vunpack.c.l.b16 %v1315
        %v1611 = vunpack.c.l.b16 %v1316
        %v1612 = vunpack.c.l.b16 %v1317
        %v1613 = vunpack.c.l.b16 %v1318
        %v1614 = vunpack.c.l.b16 %v1319
        %v1615 = vunpack.c.l.b16 %v1320
        %v1616 = vunpack.c.l.b16 %v1321
        %v1617 = vunpack.c.l.b16 %v1322
        %v1618 = vunpack.c.l.b16 %v1323
        %v1619 = vunpack.c.l.b16 %v1324
        %v1620 = vunpack.c.l.b16 %v1325
        %v1621 = vunpack.c.l.b16 %v1326
        %v1622 = vunpack.c.l.b16 %v1327
        %v1623 = vunpack.c.l.b16 %v1328
        %v1624 = vunpack.c.l.b16 %v1329
        %v1625 = vunpack.c.l.b16 %v1330
        %v1626 = vunpack.c.l.b16 %v1331
        %v1627 = vunpack.c.l.b16 %v1332
        %v1628 = vunpack.c.l.b16 %v1333
        %v1629 = vunpack.c.l.b16 %v1334
        %v1630 = vunpack.c.l.b16 %v1335
        %v1631 = vunpack.c.l.b16 %v1336
        %v1632 = vunpack.c.l.b16 %v1337
        %v1633 = vunpack.c.l.b16 %v1338
        %v1634 = vunpack.c.l.b16 %v1339
        %v1635 = vunpack.c.l.b16 %v1340
        %v1636 = vunpack.c.l.b16 %v1341
        %v1637 = vunpack.c.l.b16 %v1342
        %v1638 = vunpack.c.l.b16 %v1343
        %v1639 = vunpack.c.l.b16 %v1344
        %v1640 = vunpack.c.l.b16 %v1345
        %v1641 = vunpack.c.l.b16 %v1346
        %v1642 = vunpack.c.l.b16 %v1347
        %v1643 = vunpack.c.l.b16 %v1348
        %v1644 = vunpack.c.l.b16 %v1349
        %v1645 = vunpack.c.l.b16 %v1350
        %v1646 = vunpack.c.l.b16 %v1351
        %v1647 = vunpack.c.l.b16 %v1352
        %v1648 = vunpack.c.l.b16 %v1353
        %v1649 = vunpack.c.l.b16 %v1354
        %v1650 = vunpack.c.l.b16 %v1355
        %v1651 = vunpack.c.l.b16 %v1356
        %v1652 = vunpack.c.l.b16 %v1357
        %v1653 = vunpack.c.l.b16 %v1358
        %v1654 = vunpack.c.l.b16 %v1359
        %v1655 = vunpack.c.l.b16 %v1360
        %v1656 = vunpack.c.l.b16 %v1361
        %v1657 = vunpack.c.l.b16 %v1362
        %v1658 = vunpack.c.l.b16 %v1363
        %v1659 = vunpack.c.l.b16 %v1364
        %v1660 = vunpack.c.l.b16 %v1365
        %v1661 = vunpack.c.l.b16 %v1366
        %v1662 = vunpack.c.l.b16 %v1367
        %v1663 = vunpack.c.l.b16 %v1368
        %v1664 = vunpack.c.l.b16 %v1369
        %v1665 = vunpack.c.l.b16 %v1370
        %v1666 = vunpack.c.l.b16 %v1371
        %v1667 = vunpack.c.l.b16 %v1372
        %v1668 = vunpack.c.l.b16 %v1373
        %v1669 = vunpack.c.l.b16 %v1374
        %v1670 = vunpack.c.l.b16 %v1375
        %v1671 = vunpack.c.l.b16 %v1376
        %v1672 = vunpack.c.l.b16 %v1377
        %v1673 = vunpack.c.l.b16 %v1378
        %v1674 = vunpack.c.l.b16 %v1379
        %v1675 = vunpack.c.l.b16 %v1380
        %v1676 = vunpack.c.l.b16 %v1381
        %v1677 = vunpack.c.l.b16 %v1382
        %v1678 = vunpack.c.l.b16 %v1383
        %v1679 = vunpack.c.l.b16 %v1384
        %v1680 = vunpack.c.l.b16 %v1385
        %v1681 = vunpack.c.l.b16 %v1386
        %v1682 = vunpack.c.l.b16 %v1387
        %v1683 = vunpack.c.l.b16 %v1388
        %v1684 = vunpack.c.l.b16 %v1389
        %v1685 = vunpack.c.l.b16 %v1390
        %v1686 = vunpack.c.l.b16 %v1391
        %v1687 = vunpack.c.l.b16 %v1392
        %v1688 = vunpack.c.l.b16 %v1393
        %v1689 = vunpack.c.l.b16 %v1394
        %v1690 = vunpack.c.l.b16 %v1395
        %v1691 = vunpack.c.l.b16 %v1396
        %v1692 = vunpack.c.l.b16 %v1397
        %v1693 = vunpack.c.l.b16 %v1398
        %v1694 = vunpack.c.l.b16 %v1399
        %v1695 = vunpack.c.l.b16 %v1400
        %v1696 = vunpack.c.l.b16 %v1401
        %v1697 = vunpack.c.l.b16 %v1402
        %v1698 = vunpack.c.l.b16 %v1403
        %v1699 = vunpack.c.l.b16 %v1404
        %v1700 = vunpack.c.l.b16 %v1405
        %v1701 = vunpack.c.l.b16 %v1406
        %v1702 = vunpack.c.l.b16 %v1407
        %v1703 = vunpack.c.l.b16 %v1408
        %v1704 = vunpack.c.l.b16 %v1409
        %v1705 = vunpack.c.l.b16 %v1410
        %v1706 = vunpack.c.l.b16 %v1411
        %v1707 = vunpack.c.l.b16 %v1412
        %v1708 = vunpack.c.l.b16 %v1413
        %v1709 = vunpack.c.l.b16 %v1414
        %v1710 = vunpack.c.l.b16 %v1415
        %v1711 = vpack.c.b16 %v1568, %v1567
        %v1712 = vpack.c.b16 %v1570, %v1569
        %v1713 = vpack.c.b16 %v1572, %v1571
        %v1714 = vpack.c.b16 %v1574, %v1573
        %v1715 = vpack.c.b16 %v1576, %v1575
        %v1716 = vpack.c.b16 %v1578, %v1577
        %v1717 = vpack.c.b16 %v1580, %v1579
        %v1718 = vpack.c.b16 %v1582, %v1581
        %v1719 = vpack.c.b16 %v1584, %v1583
        %v1720 = vpack.c.b16 %v1586, %v1585
        %v1721 = vpack.c.b16 %v1588, %v1587
        %v1722 = vpack.c.b16 %v1590, %v1589
        %v1723 = vpack.c.b16 %v1592, %v1591
        %v1724 = vpack.c.b16 %v1594, %v1593
        %v1725 = vpack.c.b16 %v1596, %v1595
        %v1726 = vpack.c.b16 %v1598, %v1597
        %v1727 = vpack.c.b16 %v1600, %v1599
        %v1728 = vpack.c.b16 %v1602, %v1601
        %v1729 = vpack.c.b16 %v1604, %v1603
        %v1730 = vpack.c.b16 %v1606, %v1605
        %v1731 = vpack.c.b16 %v1608, %v1607
        %v1732 = vpack.c.b16 %v1610, %v1609
        %v1733 = vpack.c.b16 %v1612, %v1611
        %v1734 = vpack.c.b16 %v1614, %v1613
        %v1735 = vpack.c.b16 %v1616, %v1615
        %v1736 = vpack.c.b16 %v1618, %v1617
        %v1737 = vpack.c.b16 %v1620, %v1619
        %v1738 = vpack.c.b16 %v1622, %v1621
        %v1739 = vpack.c.b16 %v1624, %v1623
        %v1740 = vpack.c.b16 %v1626, %v1625
        %v1741 = vpack.c.b16 %v1628, %v1627
        %v1742 = vpack.c.b16 %v1630, %v1629
        %v1743 = vpack.c.b16 %v1632, %v1631
        %v1744 = vpack.c.b16 %v1634, %v1633
        %v1745 = vpack.c.b16 %v1636, %v1635
        %v1746 = vpack.c.b16 %v1638, %v1637
        %v1747 = vpack.c.b16 %v1640, %v1639
        %v1748 = vpack.c.b16 %v1642, %v1641
        %v1749 = vpack.c.b16 %v1644, %v1643
        %v1750 = vpack.c.b16 %v1646, %v1645
        %v1751 = vpack.c.b16 %v1648, %v1647
        %v1752 = vpack.c.b16 %v1650, %v1649
        %v1753 = vpack.c.b16 %v1652, %v1651
        %v1754 = vpack.c.b16 %v1654, %v1653
        %v1755 = vpack.c.b16 %v1656, %v1655
        %v1756 = vpack.c.b16 %v1658, %v1657
        %v1757 = vpack.c.b16 %v1660, %v1659
        %v1758 = vpack.c.b16 %v1662, %v1661
        %v1759 = vpack.c.b16 %v1664, %v1663
        %v1760 = vpack.c.b16 %v1666, %v1665
        %v1761 = vpack.c.b16 %v1668, %v1667
        %v1762 = vpack.c.b16 %v1670, %v1669
        %v1763 = vpack.c.b16 %v1672, %v1671
        %v1764 = vpack.c.b16 %v1674, %v1673
        %v1765 = vpack.c.b16 %v1676, %v1675
        %v1766 = vpack.c.b16 %v1678, %v1677
        %v1767 = vpack.c.b16 %v1680, %v1679
        %v1768 = vpack.c.b16 %v1682, %v1681
        %v1769 = vpack.c.b16 %v1684, %v1683
        %v1770 = vpack.c.b16 %v1686, %v1685
        %v1771 = vpack.c.b16 %v1688, %v1687
        %v1772 = vpack.c.b16 %v1690, %v1689
        %v1773 = vpack.c.b16 %v1692, %v1691
        %v1774 = vpack.c.b16 %v1694, %v1693
        %v1775 = vpack.c.b16 %v1696, %v1695
        %v1776 = vpack.c.b16 %v1698, %v1697
        %v1777 = vpack.c.b16 %v1700, %v1699
        %v1778 = vpack.c.b16 %v1702, %v1701
        %v1779 = vpack.c.b16 %v1704, %v1703
        %v1780 = vpack.c.b16 %v1706, %v1705
        %v1781 = vpack.c.b16 %v1708, %v1707
        %v1782 = vpack.c.b16 %v1710, %v1709
        %1855 = vmatprep.subr.bf16.mxu0 0
        %1856 = vmatpush1.bf16.msra.mxu0 %v1711
        %1857 = vmatprep.subr.bf16.mxu0 0
        %1858 = vmatpush1.bf16.msra.mxu0 %v1712
        %1859 = vmatprep.subr.bf16.mxu0 0
        %1860 = vmatpush1.bf16.msra.mxu0 %v1713
        %1861 = vmatprep.subr.bf16.mxu0 0
        %1862 = vmatpush1.bf16.msra.mxu0 %v1714
        %1863 = vmatprep.subr.bf16.mxu0 0
        %1864 = vmatpush1.bf16.msra.mxu0 %v1715
        %1865 = vmatprep.subr.bf16.mxu0 0
        %1866 = vmatpush1.bf16.msra.mxu0 %v1716
        %1867 = vmatprep.subr.bf16.mxu0 0
        %1868 = vmatpush1.bf16.msra.mxu0 %v1717
        %1869 = vmatprep.subr.bf16.mxu0 0
        %1870 = vmatpush1.bf16.msra.mxu0 %v1718
        %1871 = vmatprep.subr.bf16.mxu0 0
        %1872 = vmatpush1.bf16.msra.mxu0 %v1719
        %1873 = vmatprep.subr.bf16.mxu0 0
        %1874 = vmatpush1.bf16.msra.mxu0 %v1720
        %1875 = vmatprep.subr.bf16.mxu0 0
        %1876 = vmatpush1.bf16.msra.mxu0 %v1721
        %1877 = vmatprep.subr.bf16.mxu0 0
        %1878 = vmatpush1.bf16.msra.mxu0 %v1722
        %1879 = vmatprep.subr.bf16.mxu0 0
        %1880 = vmatpush1.bf16.msra.mxu0 %v1723
        %1881 = vmatprep.subr.bf16.mxu0 0
        %1882 = vmatpush1.bf16.msra.mxu0 %v1724
        %1883 = vmatprep.subr.bf16.mxu0 0
        %1884 = vmatpush1.bf16.msra.mxu0 %v1725
        %1885 = vmatprep.subr.bf16.mxu0 0
        %1886 = vmatpush1.bf16.msra.mxu0 %v1726
        %1887 = vmatprep.mubr.bf16.mxu0 %v1183
        %1888 = vmatmul.mubr.bf16.gmra.mrb[0].mxu0 %v1182
        %v1889 = vpop.f32.mrb[0].mxu0
        %v1890 = vadd.f32 %v1421, %v1889
        %v1891 = vpop.f32.mrb[0].mxu0
        %v1892 = vpop.f32.mrb[0].mxu0
        %v1893 = vadd.f32 %v1421, %v1892
        %v1894 = vpop.f32.mrb[0].mxu0
        %1895 = vmatprep.mubr.bf16.mxu0 %v1192
        %1896 = vmatmul.mubr.bf16.gmra.mrb[0].mxu0 %v1191
        %v1897 = vpop.f32.mrb[0].mxu0
        %v1898 = vadd.f32 %v1421, %v1897
        %v1899 = vpop.f32.mrb[0].mxu0
        %v1900 = vpop.f32.mrb[0].mxu0
        %v1901 = vadd.f32 %v1421, %v1900
        %v1902 = vpop.f32.mrb[0].mxu0
        %1903 = vmatprep.mubr.bf16.mxu0 %v1201
        %1904 = vmatmul.mubr.bf16.gmra.mrb[0].mxu0 %v1200
        %v1905 = vpop.f32.mrb[0].mxu0
        %v1906 = vadd.f32 %v1421, %v1905
        %v1907 = vpop.f32.mrb[0].mxu0
        %v1908 = vpop.f32.mrb[0].mxu0
        %v1909 = vadd.f32 %v1421, %v1908
        %v1910 = vpop.f32.mrb[0].mxu0
        %1911 = vmatprep.mubr.bf16.mxu0 %v1210
        %1912 = vmatmul.mubr.bf16.gmra.mrb[0].mxu0 %v1209
        %v1913 = vpop.f32.mrb[0].mxu0
        %v1914 = vadd.f32 %v1421, %v1913
        %v1915 = vpop.f32.mrb[0].mxu0
        %v1916 = vpop.f32.mrb[0].mxu0
        %v1917 = vadd.f32 %v1421, %v1916
        %v1918 = vpop.f32.mrb[0].mxu0
        %1919 = vmatprep.mubr.bf16.mxu0 %v1219
        %1920 = vmatmul.mubr.bf16.gmra.mrb[0].mxu0 %v1218
        %v1921 = vpop.f32.mrb[0].mxu0
        %v1922 = vadd.f32 %v1421, %v1921
        %v1923 = vpop.f32.mrb[0].mxu0
        %v1924 = vpop.f32.mrb[0].mxu0
        %v1925 = vadd.f32 %v1421, %v1924
        %v1926 = vpop.f32.mrb[0].mxu0
        %1927 = vmatprep.mubr.bf16.mxu0 %v1228
        %1928 = vmatmul.mubr.bf16.gmra.mrb[0].mxu0 %v1227
        %v1929 = vpop.f32.mrb[0].mxu0
        %v1930 = vadd.f32 %v1421, %v1929
        %v1931 = vpop.f32.mrb[0].mxu0
        %v1932 = vpop.f32.mrb[0].mxu0
        %v1933 = vadd.f32 %v1421, %v1932
        %v1934 = vpop.f32.mrb[0].mxu0
        %1935 = vmatprep.mubr.bf16.mxu0 %v1237
        %1936 = vmatmul.mubr.bf16.gmra.mrb[0].mxu0 %v1236
        %v1937 = vpop.f32.mrb[0].mxu0
        %v1938 = vadd.f32 %v1421, %v1937
        %v1939 = vpop.f32.mrb[0].mxu0
        %v1940 = vpop.f32.mrb[0].mxu0
        %v1941 = vadd.f32 %v1421, %v1940
        %v1942 = vpop.f32.mrb[0].mxu0
        %1943 = vmatprep.mubr.bf16.mxu0 %v1246
        %1944 = vmatmul.mubr.bf16.gmra.mrb[0].mxu0 %v1245
        %v1945 = vpop.f32.mrb[0].mxu0
        %v1946 = vadd.f32 %v1421, %v1945
        %v1947 = vpop.f32.mrb[0].mxu0
        %v1948 = vpop.f32.mrb[0].mxu0
        %v1949 = vadd.f32 %v1421, %v1948
        %v1950 = vpop.f32.mrb[0].mxu0
        %1951 = vmatprep.mubr.bf16.mxu0 %v1255
        %1952 = vmatmul.mubr.bf16.gmra.mrb[0].mxu0 %v1254
        %v1953 = vpop.f32.mrb[0].mxu0
        %v1954 = vadd.f32 %v1421, %v1953
        %v1955 = vpop.f32.mrb[0].mxu0
        %v1956 = vpop.f32.mrb[0].mxu0
        %v1957 = vadd.f32 %v1421, %v1956
        %v1958 = vpop.f32.mrb[0].mxu0
        %1959 = vmatprep.mubr.bf16.mxu0 %v1264
        %1960 = vmatmul.mubr.bf16.gmra.mrb[0].mxu0 %v1263
        %v1961 = vpop.f32.mrb[0].mxu0
        %v1962 = vadd.f32 %v1421, %v1961
        %v1963 = vpop.f32.mrb[0].mxu0
        %v1964 = vpop.f32.mrb[0].mxu0
        %v1965 = vadd.f32 %v1421, %v1964
        %v1966 = vpop.f32.mrb[0].mxu0
        %1967 = vdwg.mxu0
        %1968 = vmatprep.subr.bf16.mxu0 0
        %1969 = vmatpush1.bf16.msra.mxu0 %v1727
        %1970 = vmatprep.subr.bf16.mxu0 0
        %1971 = vmatpush1.bf16.msra.mxu0 %v1728
        %1972 = vmatprep.subr.bf16.mxu0 0
        %1973 = vmatpush1.bf16.msra.mxu0 %v1729
        %1974 = vmatprep.subr.bf16.mxu0 0
        %1975 = vmatpush1.bf16.msra.mxu0 %v1730
        %1976 = vmatprep.subr.bf16.mxu0 0
        %1977 = vmatpush1.bf16.msra.mxu0 %v1731
        %1978 = vmatprep.subr.bf16.mxu0 0
        %1979 = vmatpush1.bf16.msra.mxu0 %v1732
        %1980 = vmatprep.subr.bf16.mxu0 0
        %1981 = vmatpush1.bf16.msra.mxu0 %v1733
        %1982 = vmatprep.subr.bf16.mxu0 0
        %1983 = vmatpush1.bf16.msra.mxu0 %v1734
        %1984 = vmatprep.subr.bf16.mxu0 0
        %1985 = vmatpush1.bf16.msra.mxu0 %v1735
        %1986 = vmatprep.subr.bf16.mxu0 0
        %1987 = vmatpush1.bf16.msra.mxu0 %v1736
        %1988 = vmatprep.subr.bf16.mxu0 0
        %1989 = vmatpush1.bf16.msra.mxu0 %v1737
        %1990 = vmatprep.subr.bf16.mxu0 0
        %1991 = vmatpush1.bf16.msra.mxu0 %v1738
        %1992 = vmatprep.subr.bf16.mxu0 0
        %1993 = vmatpush1.bf16.msra.mxu0 %v1739
        %1994 = vmatprep.subr.bf16.mxu0 0
        %1995 = vmatpush1.bf16.msra.mxu0 %v1740
        %1996 = vmatprep.subr.bf16.mxu0 0
        %1997 = vmatpush1.bf16.msra.mxu0 %v1741
        %1998 = vmatprep.subr.bf16.mxu0 0
        %1999 = vmatpush1.bf16.msra.mxu0 %v1742
        %2000 = vmatprep.mubr.bf16.mxu0 %v1185
        %2001 = vmatmul.mubr.bf16.gmra.mrb[0].mxu0 %v1184
        %v2002 = vpop.f32.mrb[0].mxu0
        %v2003 = vadd.f32 %v1890, %v2002
        %v2004 = vpop.f32.mrb[0].mxu0
        %v2005 = vpop.f32.mrb[0].mxu0
        %v2006 = vadd.f32 %v1893, %v2005
        %v2007 = vpop.f32.mrb[0].mxu0
        %2008 = vmatprep.mubr.bf16.mxu0 %v1194
        %2009 = vmatmul.mubr.bf16.gmra.mrb[0].mxu0 %v1193
        %v2010 = vpop.f32.mrb[0].mxu0
        %v2011 = vadd.f32 %v1898, %v2010
        %v2012 = vpop.f32.mrb[0].mxu0
        %v2013 = vpop.f32.mrb[0].mxu0
        %v2014 = vadd.f32 %v1901, %v2013
        %v2015 = vpop.f32.mrb[0].mxu0
        %2016 = vmatprep.mubr.bf16.mxu0 %v1203
        %2017 = vmatmul.mubr.bf16.gmra.mrb[0].mxu0 %v1202
        %v2018 = vpop.f32.mrb[0].mxu0
        %v2019 = vadd.f32 %v1906, %v2018
        %v2020 = vpop.f32.mrb[0].mxu0
        %v2021 = vpop.f32.mrb[0].mxu0
        %v2022 = vadd.f32 %v1909, %v2021
        %v2023 = vpop.f32.mrb[0].mxu0
        %2024 = vmatprep.mubr.bf16.mxu0 %v1212
        %2025 = vmatmul.mubr.bf16.gmra.mrb[0].mxu0 %v1211
        %v2026 = vpop.f32.mrb[0].mxu0
        %v2027 = vadd.f32 %v1914, %v2026
        %v2028 = vpop.f32.mrb[0].mxu0
        %v2029 = vpop.f32.mrb[0].mxu0
        %v2030 = vadd.f32 %v1917, %v2029
        %v2031 = vpop.f32.mrb[0].mxu0
        %2032 = vmatprep.mubr.bf16.mxu0 %v1221
        %2033 = vmatmul.mubr.bf16.gmra.mrb[0].mxu0 %v1220
        %v2034 = vpop.f32.mrb[0].mxu0
        %v2035 = vadd.f32 %v1922, %v2034
        %v2036 = vpop.f32.mrb[0].mxu0
        %v2037 = vpop.f32.mrb[0].mxu0
        %v2038 = vadd.f32 %v1925, %v2037
        %v2039 = vpop.f32.mrb[0].mxu0
        %2040 = vmatprep.mubr.bf16.mxu0 %v1230
        %2041 = vmatmul.mubr.bf16.gmra.mrb[0].mxu0 %v1229
        %v2042 = vpop.f32.mrb[0].mxu0
        %v2043 = vadd.f32 %v1930, %v2042
        %v2044 = vpop.f32.mrb[0].mxu0
        %v2045 = vpop.f32.mrb[0].mxu0
        %v2046 = vadd.f32 %v1933, %v2045
        %v2047 = vpop.f32.mrb[0].mxu0
        %2048 = vmatprep.mubr.bf16.mxu0 %v1239
        %2049 = vmatmul.mubr.bf16.gmra.mrb[0].mxu0 %v1238
        %v2050 = vpop.f32.mrb[0].mxu0
        %v2051 = vadd.f32 %v1938, %v2050
        %v2052 = vpop.f32.mrb[0].mxu0
        %v2053 = vpop.f32.mrb[0].mxu0
        %v2054 = vadd.f32 %v1941, %v2053
        %v2055 = vpop.f32.mrb[0].mxu0
        %2056 = vmatprep.mubr.bf16.mxu0 %v1248
        %2057 = vmatmul.mubr.bf16.gmra.mrb[0].mxu0 %v1247
        %v2058 = vpop.f32.mrb[0].mxu0
        %v2059 = vadd.f32 %v1946, %v2058
        %v2060 = vpop.f32.mrb[0].mxu0
        %v2061 = vpop.f32.mrb[0].mxu0
        %v2062 = vadd.f32 %v1949, %v2061
        %v2063 = vpop.f32.mrb[0].mxu0
        %2064 = vmatprep.mubr.bf16.mxu0 %v1257
        %2065 = vmatmul.mubr.bf16.gmra.mrb[0].mxu0 %v1256
        %v2066 = vpop.f32.mrb[0].mxu0
        %v2067 = vadd.f32 %v1954, %v2066
        %v2068 = vpop.f32.mrb[0].mxu0
        %v2069 = vpop.f32.mrb[0].mxu0
        %v2070 = vadd.f32 %v1957, %v2069
        %v2071 = vpop.f32.mrb[0].mxu0
        %2072 = vmatprep.mubr.bf16.mxu0 %v1266
        %2073 = vmatmul.mubr.bf16.gmra.mrb[0].mxu0 %v1265
        %v2074 = vpop.f32.mrb[0].mxu0
        %v2075 = vadd.f32 %v1962, %v2074
        %v2076 = vpop.f32.mrb[0].mxu0
        %v2077 = vpop.f32.mrb[0].mxu0
        %v2078 = vadd.f32 %v1965, %v2077
        %v2079 = vpop.f32.mrb[0].mxu0
        %2080 = vdwg.mxu0
        %2081 = vmatprep.subr.bf16.mxu0 0
        %2082 = vmatpush1.bf16.msra.mxu0 %v1743
        %2083 = vmatprep.subr.bf16.mxu0 0
        %2084 = vmatpush1.bf16.msra.mxu0 %v1744
        %2085 = vmatprep.subr.bf16.mxu0 0
        %2086 = vmatpush1.bf16.msra.mxu0 %v1745
        %2087 = vmatprep.subr.bf16.mxu0 0
        %2088 = vmatpush1.bf16.msra.mxu0 %v1746
        %2089 = vmatprep.subr.bf16.mxu0 0
        %2090 = vmatpush1.bf16.msra.mxu0 %v1747
        %2091 = vmatprep.subr.bf16.mxu0 0
        %2092 = vmatpush1.bf16.msra.mxu0 %v1748
        %2093 = vmatprep.subr.bf16.mxu0 0
        %2094 = vmatpush1.bf16.msra.mxu0 %v1749
        %2095 = vmatprep.subr.bf16.mxu0 0
        %2096 = vmatpush1.bf16.msra.mxu0 %v1750
        %2097 = vmatprep.subr.bf16.mxu0 0
        %2098 = vmatpush1.bf16.msra.mxu0 %v1751
        %2099 = vmatprep.subr.bf16.mxu0 0
        %2100 = vmatpush1.bf16.msra.mxu0 %v1752
        %2101 = vmatprep.subr.bf16.mxu0 0
        %2102 = vmatpush1.bf16.msra.mxu0 %v1753
        %2103 = vmatprep.subr.bf16.mxu0 0
        %2104 = vmatpush1.bf16.msra.mxu0 %v1754
        %2105 = vmatprep.subr.bf16.mxu0 0
        %2106 = vmatpush1.bf16.msra.mxu0 %v1755
        %2107 = vmatprep.subr.bf16.mxu0 0
        %2108 = vmatpush1.bf16.msra.mxu0 %v1756
        %2109 = vmatprep.subr.bf16.mxu0 0
        %2110 = vmatpush1.bf16.msra.mxu0 %v1757
        %2111 = vmatprep.subr.bf16.mxu0 0
        %2112 = vmatpush1.bf16.msra.mxu0 %v1758
        %2113 = vmatprep.mubr.bf16.mxu0 %v1187
        %2114 = vmatmul.mubr.bf16.gmra.mrb[0].mxu0 %v1186
        %v2115 = vpop.f32.mrb[0].mxu0
        %v2116 = vadd.f32 %v2003, %v2115
        %v2117 = vpop.f32.mrb[0].mxu0
        %v2118 = vpop.f32.mrb[0].mxu0
        %v2119 = vadd.f32 %v2006, %v2118
        %v2120 = vpop.f32.mrb[0].mxu0
        %2121 = vmatprep.mubr.bf16.mxu0 %v1196
        %2122 = vmatmul.mubr.bf16.gmra.mrb[0].mxu0 %v1195
        %v2123 = vpop.f32.mrb[0].mxu0
        %v2124 = vadd.f32 %v2011, %v2123
        %v2125 = vpop.f32.mrb[0].mxu0
        %v2126 = vpop.f32.mrb[0].mxu0
        %v2127 = vadd.f32 %v2014, %v2126
        %v2128 = vpop.f32.mrb[0].mxu0
        %2129 = vmatprep.mubr.bf16.mxu0 %v1205
        %2130 = vmatmul.mubr.bf16.gmra.mrb[0].mxu0 %v1204
        %v2131 = vpop.f32.mrb[0].mxu0
        %v2132 = vadd.f32 %v2019, %v2131
        %v2133 = vpop.f32.mrb[0].mxu0
        %v2134 = vpop.f32.mrb[0].mxu0
        %v2135 = vadd.f32 %v2022, %v2134
        %v2136 = vpop.f32.mrb[0].mxu0
        %2137 = vmatprep.mubr.bf16.mxu0 %v1214
        %2138 = vmatmul.mubr.bf16.gmra.mrb[0].mxu0 %v1213
        %v2139 = vpop.f32.mrb[0].mxu0
        %v2140 = vadd.f32 %v2027, %v2139
        %v2141 = vpop.f32.mrb[0].mxu0
        %v2142 = vpop.f32.mrb[0].mxu0
        %v2143 = vadd.f32 %v2030, %v2142
        %v2144 = vpop.f32.mrb[0].mxu0
        %2145 = vmatprep.mubr.bf16.mxu0 %v1223
        %2146 = vmatmul.mubr.bf16.gmra.mrb[0].mxu0 %v1222
        %v2147 = vpop.f32.mrb[0].mxu0
        %v2148 = vadd.f32 %v2035, %v2147
        %v2149 = vpop.f32.mrb[0].mxu0
        %v2150 = vpop.f32.mrb[0].mxu0
        %v2151 = vadd.f32 %v2038, %v2150
        %v2152 = vpop.f32.mrb[0].mxu0
        %2153 = vmatprep.mubr.bf16.mxu0 %v1232
        %2154 = vmatmul.mubr.bf16.gmra.mrb[0].mxu0 %v1231
        %v2155 = vpop.f32.mrb[0].mxu0
        %v2156 = vadd.f32 %v2043, %v2155
        %v2157 = vpop.f32.mrb[0].mxu0
        %v2158 = vpop.f32.mrb[0].mxu0
        %v2159 = vadd.f32 %v2046, %v2158
        %v2160 = vpop.f32.mrb[0].mxu0
        %2161 = vmatprep.mubr.bf16.mxu0 %v1241
        %2162 = vmatmul.mubr.bf16.gmra.mrb[0].mxu0 %v1240
        %v2163 = vpop.f32.mrb[0].mxu0
        %v2164 = vadd.f32 %v2051, %v2163
        %v2165 = vpop.f32.mrb[0].mxu0
        %v2166 = vpop.f32.mrb[0].mxu0
        %v2167 = vadd.f32 %v2054, %v2166
        %v2168 = vpop.f32.mrb[0].mxu0
        %2169 = vmatprep.mubr.bf16.mxu0 %v1250
        %2170 = vmatmul.mubr.bf16.gmra.mrb[0].mxu0 %v1249
        %v2171 = vpop.f32.mrb[0].mxu0
        %v2172 = vadd.f32 %v2059, %v2171
        %v2173 = vpop.f32.mrb[0].mxu0
        %v2174 = vpop.f32.mrb[0].mxu0
        %v2175 = vadd.f32 %v2062, %v2174
        %v2176 = vpop.f32.mrb[0].mxu0
        %2177 = vmatprep.mubr.bf16.mxu0 %v1259
        %2178 = vmatmul.mubr.bf16.gmra.mrb[0].mxu0 %v1258
        %v2179 = vpop.f32.mrb[0].mxu0
        %v2180 = vadd.f32 %v2067, %v2179
        %v2181 = vpop.f32.mrb[0].mxu0
        %v2182 = vpop.f32.mrb[0].mxu0
        %v2183 = vadd.f32 %v2070, %v2182
        %v2184 = vpop.f32.mrb[0].mxu0
        %2185 = vmatprep.mubr.bf16.mxu0 %v1268
        %2186 = vmatmul.mubr.bf16.gmra.mrb[0].mxu0 %v1267
        %v2187 = vpop.f32.mrb[0].mxu0
        %v2188 = vadd.f32 %v2075, %v2187
        %v2189 = vpop.f32.mrb[0].mxu0
        %v2190 = vpop.f32.mrb[0].mxu0
        %v2191 = vadd.f32 %v2078, %v2190
        %v2192 = vpop.f32.mrb[0].mxu0
        %2193 = vdwg.mxu0
        %2194 = vmatprep.subr.bf16.mxu0 0
        %2195 = vmatpush1.bf16.msra.mxu0 %v1759
        %2196 = vmatprep.subr.bf16.mxu0 0
        %2197 = vmatpush1.bf16.msra.mxu0 %v1760
        %2198 = vmatprep.subr.bf16.mxu0 0
        %2199 = vmatpush1.bf16.msra.mxu0 %v1761
        %2200 = vmatprep.subr.bf16.mxu0 0
        %2201 = vmatpush1.bf16.msra.mxu0 %v1762
        %2202 = vmatprep.subr.bf16.mxu0 0
        %2203 = vmatpush1.bf16.msra.mxu0 %v1763
        %2204 = vmatprep.subr.bf16.mxu0 0
        %2205 = vmatpush1.bf16.msra.mxu0 %v1764
        %2206 = vmatprep.subr.bf16.mxu0 0
        %2207 = vmatpush1.bf16.msra.mxu0 %v1765
        %2208 = vmatprep.subr.bf16.mxu0 0
        %2209 = vmatpush1.bf16.msra.mxu0 %v1766
        %2210 = vmatprep.subr.bf16.mxu0 0
        %2211 = vmatpush1.bf16.msra.mxu0 %v1767
        %2212 = vmatprep.subr.bf16.mxu0 0
        %2213 = vmatpush1.bf16.msra.mxu0 %v1768
        %2214 = vmatprep.subr.bf16.mxu0 0
        %2215 = vmatpush1.bf16.msra.mxu0 %v1769
        %2216 = vmatprep.subr.bf16.mxu0 0
        %2217 = vmatpush1.bf16.msra.mxu0 %v1770
        %2218 = vmatprep.subr.bf16.mxu0 0
        %2219 = vmatpush1.bf16.msra.mxu0 %v1771
        %2220 = vmatprep.subr.bf16.mxu0 0
        %2221 = vmatpush1.bf16.msra.mxu0 %v1772
        %2222 = vmatprep.subr.bf16.mxu0 0
        %2223 = vmatpush1.bf16.msra.mxu0 %v1773
        %2224 = vmatprep.subr.bf16.mxu0 0
        %2225 = vmatpush1.bf16.msra.mxu0 %v1774
        %2226 = vmatprep.mubr.bf16.mxu0 %v1189
        %2227 = vmatmul.mubr.bf16.gmra.mrb[0].mxu0 %v1188
        %v2228 = vpop.f32.mrb[0].mxu0
        %v2229 = vadd.f32 %v2116, %v2228
        %v2230 = vpop.f32.mrb[0].mxu0
        %v2231 = vpop.f32.mrb[0].mxu0
        %v2232 = vadd.f32 %v2119, %v2231
        %v2233 = vpop.f32.mrb[0].mxu0
        %2234 = vmatprep.mubr.bf16.mxu0 %v1198
        %2235 = vmatmul.mubr.bf16.gmra.mrb[0].mxu0 %v1197
        %v2236 = vpop.f32.mrb[0].mxu0
        %v2237 = vadd.f32 %v2124, %v2236
        %v2238 = vpop.f32.mrb[0].mxu0
        %v2239 = vpop.f32.mrb[0].mxu0
        %v2240 = vadd.f32 %v2127, %v2239
        %v2241 = vpop.f32.mrb[0].mxu0
        %2242 = vmatprep.mubr.bf16.mxu0 %v1207
        %2243 = vmatmul.mubr.bf16.gmra.mrb[0].mxu0 %v1206
        %v2244 = vpop.f32.mrb[0].mxu0
        %v2245 = vadd.f32 %v2132, %v2244
        %v2246 = vpop.f32.mrb[0].mxu0
        %v2247 = vpop.f32.mrb[0].mxu0
        %v2248 = vadd.f32 %v2135, %v2247
        %v2249 = vpop.f32.mrb[0].mxu0
        %2250 = vmatprep.mubr.bf16.mxu0 %v1216
        %2251 = vmatmul.mubr.bf16.gmra.mrb[0].mxu0 %v1215
        %v2252 = vpop.f32.mrb[0].mxu0
        %v2253 = vadd.f32 %v2140, %v2252
        %v2254 = vpop.f32.mrb[0].mxu0
        %v2255 = vpop.f32.mrb[0].mxu0
        %v2256 = vadd.f32 %v2143, %v2255
        %v2257 = vpop.f32.mrb[0].mxu0
        %2258 = vmatprep.mubr.bf16.mxu0 %v1225
        %2259 = vmatmul.mubr.bf16.gmra.mrb[0].mxu0 %v1224
        %v2260 = vpop.f32.mrb[0].mxu0
        %v2261 = vadd.f32 %v2148, %v2260
        %v2262 = vpop.f32.mrb[0].mxu0
        %v2263 = vpop.f32.mrb[0].mxu0
        %v2264 = vadd.f32 %v2151, %v2263
        %v2265 = vpop.f32.mrb[0].mxu0
        %2266 = vmatprep.mubr.bf16.mxu0 %v1234
        %2267 = vmatmul.mubr.bf16.gmra.mrb[0].mxu0 %v1233
        %v2268 = vpop.f32.mrb[0].mxu0
        %v2269 = vadd.f32 %v2156, %v2268
        %v2270 = vpop.f32.mrb[0].mxu0
        %v2271 = vpop.f32.mrb[0].mxu0
        %v2272 = vadd.f32 %v2159, %v2271
        %v2273 = vpop.f32.mrb[0].mxu0
        %2274 = vmatprep.mubr.bf16.mxu0 %v1243
        %2275 = vmatmul.mubr.bf16.gmra.mrb[0].mxu0 %v1242
        %v2276 = vpop.f32.mrb[0].mxu0
        %v2277 = vadd.f32 %v2164, %v2276
        %v2278 = vpop.f32.mrb[0].mxu0
        %v2279 = vpop.f32.mrb[0].mxu0
        %v2280 = vadd.f32 %v2167, %v2279
        %v2281 = vpop.f32.mrb[0].mxu0
        %2282 = vmatprep.mubr.bf16.mxu0 %v1252
        %2283 = vmatmul.mubr.bf16.gmra.mrb[0].mxu0 %v1251
        %v2284 = vpop.f32.mrb[0].mxu0
        %v2285 = vadd.f32 %v2172, %v2284
        %v2286 = vpop.f32.mrb[0].mxu0
        %v2287 = vpop.f32.mrb[0].mxu0
        %v2288 = vadd.f32 %v2175, %v2287
        %v2289 = vpop.f32.mrb[0].mxu0
        %2290 = vmatprep.mubr.bf16.mxu0 %v1261
        %2291 = vmatmul.mubr.bf16.gmra.mrb[0].mxu0 %v1260
        %v2292 = vpop.f32.mrb[0].mxu0
        %v2293 = vadd.f32 %v2180, %v2292
        %v2294 = vpop.f32.mrb[0].mxu0
        %v2295 = vpop.f32.mrb[0].mxu0
        %v2296 = vadd.f32 %v2183, %v2295
        %v2297 = vpop.f32.mrb[0].mxu0
        %2298 = vmatprep.mubr.bf16.mxu0 %v1270
        %2299 = vmatmul.mubr.bf16.gmra.mrb[0].mxu0 %v1269
        %v2300 = vpop.f32.mrb[0].mxu0
        %v2301 = vadd.f32 %v2188, %v2300
        %v2302 = vpop.f32.mrb[0].mxu0
        %v2303 = vpop.f32.mrb[0].mxu0
        %v2304 = vadd.f32 %v2191, %v2303
        %v2305 = vpop.f32.mrb[0].mxu0
        %2306 = vdwg.mxu0
        %2307 = vmatprep.subr.bf16.mxu0 0
        %2308 = vmatpush1.bf16.msra.mxu0 %v1775
        %2309 = vmatprep.subr.bf16.mxu0 0
        %2310 = vmatpush1.bf16.msra.mxu0 %v1776
        %2311 = vmatprep.subr.bf16.mxu0 0
        %2312 = vmatpush1.bf16.msra.mxu0 %v1777
        %2313 = vmatprep.subr.bf16.mxu0 0
        %2314 = vmatpush1.bf16.msra.mxu0 %v1778
        %2315 = vmatprep.subr.bf16.mxu0 0
        %2316 = vmatpush1.bf16.msra.mxu0 %v1779
        %2317 = vmatprep.subr.bf16.mxu0 0
        %2318 = vmatpush1.bf16.msra.mxu0 %v1780
        %2319 = vmatprep.subr.bf16.mxu0 0
        %2320 = vmatpush1.bf16.msra.mxu0 %v1781
        %2321 = vmatprep.subr.bf16.mxu0 0
        %2322 = vmatpush1.bf16.msra.mxu0 %v1782
        %2323 = vmatprep.subr.bf16.mxu0 0
        %2324 = vmatpush1.bf16.msra.mxu0 0
        %2325 = vmatprep.subr.bf16.mxu0 0
        %2326 = vmatpush1.bf16.msra.mxu0 0
        %2327 = vmatprep.subr.bf16.mxu0 0
        %2328 = vmatpush1.bf16.msra.mxu0 0
        %2329 = vmatprep.subr.bf16.mxu0 0
        %2330 = vmatpush1.bf16.msra.mxu0 0
        %2331 = vmatprep.subr.bf16.mxu0 0
        %2332 = vmatpush1.bf16.msra.mxu0 0
        %2333 = vmatprep.subr.bf16.mxu0 0
        %2334 = vmatpush1.bf16.msra.mxu0 0
        %2335 = vmatprep.subr.bf16.mxu0 0
        %2336 = vmatpush1.bf16.msra.mxu0 0
        %2337 = vmatprep.subr.bf16.mxu0 0
        %2338 = vmatpush1.bf16.msra.mxu0 0
        %2339 = vmatprep.mubr.bf16.mxu0 0
        %2340 = vmatmul.mubr.bf16.gmra.mrb[0].mxu0 %v1190
        %v2341 = vpop.f32.mrb[0].mxu0
        %v2342 = vadd.f32 %v2229, %v2341
        %v2343 = vpop.f32.mrb[0].mxu0
        %v2344 = vpop.f32.mrb[0].mxu0
        %v2345 = vadd.f32 %v2232, %v2344
        %v2346 = vpop.f32.mrb[0].mxu0
        %2347 = vmatprep.mubr.bf16.mxu0 0
        %2348 = vmatmul.mubr.bf16.gmra.mrb[0].mxu0 %v1199
        %v2349 = vpop.f32.mrb[0].mxu0
        %v2350 = vadd.f32 %v2237, %v2349
        %v2351 = vpop.f32.mrb[0].mxu0
        %v2352 = vpop.f32.mrb[0].mxu0
        %v2353 = vadd.f32 %v2240, %v2352
        %v2354 = vpop.f32.mrb[0].mxu0
        %2355 = vmatprep.mubr.bf16.mxu0 0
        %2356 = vmatmul.mubr.bf16.gmra.mrb[0].mxu0 %v1208
        %v2357 = vpop.f32.mrb[0].mxu0
        %v2358 = vadd.f32 %v2245, %v2357
        %v2359 = vpop.f32.mrb[0].mxu0
        %v2360 = vpop.f32.mrb[0].mxu0
        %v2361 = vadd.f32 %v2248, %v2360
        %v2362 = vpop.f32.mrb[0].mxu0
        %2363 = vmatprep.mubr.bf16.mxu0 0
        %2364 = vmatmul.mubr.bf16.gmra.mrb[0].mxu0 %v1217
        %v2365 = vpop.f32.mrb[0].mxu0
        %v2366 = vadd.f32 %v2253, %v2365
        %v2367 = vpop.f32.mrb[0].mxu0
        %v2368 = vpop.f32.mrb[0].mxu0
        %v2369 = vadd.f32 %v2256, %v2368
        %v2370 = vpop.f32.mrb[0].mxu0
        %2371 = vmatprep.mubr.bf16.mxu0 0
        %2372 = vmatmul.mubr.bf16.gmra.mrb[0].mxu0 %v1226
        %v2373 = vpop.f32.mrb[0].mxu0
        %v2374 = vadd.f32 %v2261, %v2373
        %v2375 = vpop.f32.mrb[0].mxu0
        %v2376 = vpop.f32.mrb[0].mxu0
        %v2377 = vadd.f32 %v2264, %v2376
        %v2378 = vpop.f32.mrb[0].mxu0
        %2379 = vmatprep.mubr.bf16.mxu0 0
        %2380 = vmatmul.mubr.bf16.gmra.mrb[0].mxu0 %v1235
        %v2381 = vpop.f32.mrb[0].mxu0
        %v2382 = vadd.f32 %v2269, %v2381
        %v2383 = vpop.f32.mrb[0].mxu0
        %v2384 = vpop.f32.mrb[0].mxu0
        %v2385 = vadd.f32 %v2272, %v2384
        %v2386 = vpop.f32.mrb[0].mxu0
        %2387 = vmatprep.mubr.bf16.mxu0 0
        %2388 = vmatmul.mubr.bf16.gmra.mrb[0].mxu0 %v1244
        %v2389 = vpop.f32.mrb[0].mxu0
        %v2390 = vadd.f32 %v2277, %v2389
        %v2391 = vpop.f32.mrb[0].mxu0
        %v2392 = vpop.f32.mrb[0].mxu0
        %v2393 = vadd.f32 %v2280, %v2392
        %v2394 = vpop.f32.mrb[0].mxu0
        %2395 = vmatprep.mubr.bf16.mxu0 0
        %2396 = vmatmul.mubr.bf16.gmra.mrb[0].mxu0 %v1253
        %v2397 = vpop.f32.mrb[0].mxu0
        %v2398 = vadd.f32 %v2285, %v2397
        %v2399 = vpop.f32.mrb[0].mxu0
        %v2400 = vpop.f32.mrb[0].mxu0
        %v2401 = vadd.f32 %v2288, %v2400
        %v2402 = vpop.f32.mrb[0].mxu0
        %2403 = vmatprep.mubr.bf16.mxu0 0
        %2404 = vmatmul.mubr.bf16.gmra.mrb[0].mxu0 %v1262
        %v2405 = vpop.f32.mrb[0].mxu0
        %v2406 = vadd.f32 %v2293, %v2405
        %v2407 = vpop.f32.mrb[0].mxu0
        %v2408 = vpop.f32.mrb[0].mxu0
        %v2409 = vadd.f32 %v2296, %v2408
        %v2410 = vpop.f32.mrb[0].mxu0
        %2411 = vmatprep.mubr.bf16.mxu0 0
        %2412 = vmatmul.mubr.bf16.gmra.mrb[0].mxu0 %v1271
        %v2413 = vpop.f32.mrb[0].mxu0
        %v2414 = vadd.f32 %v2301, %v2413
        %v2415 = vpop.f32.mrb[0].mxu0
        %v2416 = vpop.f32.mrb[0].mxu0
        %v2417 = vadd.f32 %v2304, %v2416
        %v2418 = vpop.f32.mrb[0].mxu0
        %2419 = vdwg.mxu0
        %v2420 = vmax.f32 %v2342, 0.0
        %v2421 = vmax.f32 %v2345, 0.0
        %v2422 = vmax.f32 %v2350, 0.0
        %v2423 = vmax.f32 %v2353, 0.0
        %v2424 = vmax.f32 %v2358, 0.0
        %v2425 = vmax.f32 %v2361, 0.0
        %v2426 = vmax.f32 %v2366, 0.0
        %v2427 = vmax.f32 %v2369, 0.0
        %v2428 = vmax.f32 %v2374, 0.0
        %v2429 = vmax.f32 %v2377, 0.0
        %v2430 = vmax.f32 %v2382, 0.0
        %v2431 = vmax.f32 %v2385, 0.0
        %v2432 = vmax.f32 %v2390, 0.0
        %v2433 = vmax.f32 %v2393, 0.0
        %v2434 = vmax.f32 %v2398, 0.0
        %v2435 = vmax.f32 %v2401, 0.0
        %v2436 = vmax.f32 %v2406, 0.0
        %v2437 = vmax.f32 %v2409, 0.0
        %v2438 = vmax.f32 %v2414, 0.0
        %v2439 = vmax.f32 %v2417, 0.0
        %v2440 = vpack.c.bf16 %v2421, %v2420
        %v2441 = vpack.c.bf16 %v2423, %v2422
        %v2442 = vpack.c.bf16 %v2425, %v2424
        %v2443 = vpack.c.bf16 %v2427, %v2426
        %v2444 = vpack.c.bf16 %v2429, %v2428
        %v2445 = vpack.c.bf16 %v2431, %v2430
        %v2446 = vpack.c.bf16 %v2433, %v2432
        %v2447 = vpack.c.bf16 %v2435, %v2434
        %v2448 = vpack.c.bf16 %v2437, %v2436
        %v2449 = vpack.c.bf16 %v2439, %v2438
        %2450 = vst [vmem:[#allocation3] sm:$0xff] %v2440
        %2451 = vst [vmem:[#allocation3 + $0x8] sm:$0xff] %v2441
        %2452 = vst [vmem:[#allocation3 + $0x10] sm:$0xff] %v2442
        %2453 = vst [vmem:[#allocation3 + $0x18] sm:$0xff] %v2443
        %2454 = vst [vmem:[#allocation3 + $0x20] sm:$0xff] %v2444
        %2455 = vst [vmem:[#allocation3 + $0x28] sm:$0xff] %v2445
        %2456 = vst [vmem:[#allocation3 + $0x30] sm:$0xff] %v2446
        %2457 = vst [vmem:[#allocation3 + $0x38] sm:$0xff] %v2447
        %2458 = vst [vmem:[#allocation3 + $0x40] sm:$0xff] %v2448
        %2459 = vst [vmem:[#allocation3 + $0x48] sm:$0xff] %v2449
        %v2460 = vld [vmem:[#allocation3] sm:$0x1f]
        %v2461 = vld [vmem:[#allocation3 + $0x8] sm:$0x1f]
        %v2463 = vshrl.u32 %v2460, 16
        %v2465 = vshll.u32 %v2460, 16
        %v2467 = vrot.slane %v2465, 1
        %v2468 = vor.u32 %v2463, %v2467
        %v2471 = vshrl.u32 %v2461, 16
        %v2473 = vshll.u32 %v2461, 16
        %v2475 = vrot.slane %v2473, 1
        %v2476 = vor.u32 %v2471, %v2475
        %vm2478 = vcmask 1044480
        %vm2479 = vsmask.f32 4352
        %vm2480 = vmand %vm2478, %vm2479
        %v2481 = vld [vmem:[#allocation4] sm:$0x1f]
        %v2482 = vsel %vm2480, %v2460, %v2481
        %2483 = vst [vmem:[#allocation4] sm:$0x1f] %v2482
        %v2484 = vld [vmem:[#allocation4 + $0x8] sm:$0x1f]
        %v2485 = vsel %vm2480, %v2468, %v2484
        %2486 = vst [vmem:[#allocation4 + $0x8] sm:$0x1f] %v2485
        %v2487 = vld [vmem:[#allocation4 + $0x10] sm:$0x1f]
        %v2488 = vsel %vm2480, %v2461, %v2487
        %2489 = vst [vmem:[#allocation4 + $0x10] sm:$0x1f] %v2488
        %v2490 = vld [vmem:[#allocation4 + $0x18] sm:$0x1f]
        %v2491 = vsel %vm2480, %v2476, %v2490
        %2492 = vst [vmem:[#allocation4 + $0x18] sm:$0x1f] %v2491
        %v2493 = vld [vmem:[#allocation3 + $0x8] sm:$0x1f]
        %v2494 = vld [vmem:[#allocation3 + $0x10] sm:$0x1f]
        %v2496 = vshrl.u32 %v2493, 16
        %v2498 = vshll.u32 %v2493, 16
        %v2500 = vrot.slane %v2498, 1
        %v2501 = vor.u32 %v2496, %v2500
        %v2504 = vshrl.u32 %v2494, 16
        %v2506 = vshll.u32 %v2494, 16
        %v2508 = vrot.slane %v2506, 1
        %v2509 = vor.u32 %v2504, %v2508
        %v2511 = vld [vmem:[#allocation4 + $0x20] sm:$0x1f]
        %v2512 = vsel %vm2480, %v2493, %v2511
        %2513 = vst [vmem:[#allocation4 + $0x20] sm:$0x1f] %v2512
        %v2514 = vld [vmem:[#allocation4 + $0x28] sm:$0x1f]
        %v2515 = vsel %vm2480, %v2501, %v2514
        %2516 = vst [vmem:[#allocation4 + $0x28] sm:$0x1f] %v2515
        %v2517 = vld [vmem:[#allocation4 + $0x30] sm:$0x1f]
        %v2518 = vsel %vm2480, %v2494, %v2517
        %2519 = vst [vmem:[#allocation4 + $0x30] sm:$0x1f] %v2518
        %v2520 = vld [vmem:[#allocation4 + $0x38] sm:$0x1f]
        %v2521 = vsel %vm2480, %v2509, %v2520
        %2522 = vst [vmem:[#allocation4 + $0x38] sm:$0x1f] %v2521
        %v2523 = vld [vmem:[#allocation3 + $0x10] sm:$0x1f]
        %v2524 = vld [vmem:[#allocation3 + $0x18] sm:$0x1f]
        %v2526 = vshrl.u32 %v2523, 16
        %v2528 = vshll.u32 %v2523, 16
        %v2530 = vrot.slane %v2528, 1
        %v2531 = vor.u32 %v2526, %v2530
        %v2534 = vshrl.u32 %v2524, 16
        %v2536 = vshll.u32 %v2524, 16
        %v2538 = vrot.slane %v2536, 1
        %v2539 = vor.u32 %v2534, %v2538
        %v2541 = vld [vmem:[#allocation4 + $0x40] sm:$0x1f]
        %v2542 = vsel %vm2480, %v2523, %v2541
        %2543 = vst [vmem:[#allocation4 + $0x40] sm:$0x1f] %v2542
        %v2544 = vld [vmem:[#allocation4 + $0x48] sm:$0x1f]
        %v2545 = vsel %vm2480, %v2531, %v2544
        %2546 = vst [vmem:[#allocation4 + $0x48] sm:$0x1f] %v2545
        %v2547 = vld [vmem:[#allocation4 + $0x50] sm:$0x1f]
        %v2548 = vsel %vm2480, %v2524, %v2547
        %2549 = vst [vmem:[#allocation4 + $0x50] sm:$0x1f] %v2548
        %v2550 = vld [vmem:[#allocation4 + $0x58] sm:$0x1f]
        %v2551 = vsel %vm2480, %v2539, %v2550
        %2552 = vst [vmem:[#allocation4 + $0x58] sm:$0x1f] %v2551
        %v2553 = vld [vmem:[#allocation3 + $0x18] sm:$0x1f]
        %v2554 = vld [vmem:[#allocation3 + $0x20] sm:$0x1f]
        %v2556 = vshrl.u32 %v2553, 16
        %v2558 = vshll.u32 %v2553, 16
        %v2560 = vrot.slane %v2558, 1
        %v2561 = vor.u32 %v2556, %v2560
        %v2564 = vshrl.u32 %v2554, 16
        %v2566 = vshll.u32 %v2554, 16
        %v2568 = vrot.slane %v2566, 1
        %v2569 = vor.u32 %v2564, %v2568
        %v2571 = vld [vmem:[#allocation4 + $0x60] sm:$0x1f]
        %v2572 = vsel %vm2480, %v2553, %v2571
        %2573 = vst [vmem:[#allocation4 + $0x60] sm:$0x1f] %v2572
        %v2574 = vld [vmem:[#allocation4 + $0x68] sm:$0x1f]
        %v2575 = vsel %vm2480, %v2561, %v2574
        %2576 = vst [vmem:[#allocation4 + $0x68] sm:$0x1f] %v2575
        %v2577 = vld [vmem:[#allocation4 + $0x70] sm:$0x1f]
        %v2578 = vsel %vm2480, %v2554, %v2577
        %2579 = vst [vmem:[#allocation4 + $0x70] sm:$0x1f] %v2578
        %v2580 = vld [vmem:[#allocation4 + $0x78] sm:$0x1f]
        %v2581 = vsel %vm2480, %v2569, %v2580
        %2582 = vst [vmem:[#allocation4 + $0x78] sm:$0x1f] %v2581
        %v2583 = vld [vmem:[#allocation3 + $0x20] sm:$0x1f]
        %v2584 = vld [vmem:[#allocation3 + $0x28] sm:$0x1f]
        %v2586 = vshrl.u32 %v2583, 16
        %v2588 = vshll.u32 %v2583, 16
        %v2590 = vrot.slane %v2588, 1
        %v2591 = vor.u32 %v2586, %v2590
        %v2594 = vshrl.u32 %v2584, 16
        %v2596 = vshll.u32 %v2584, 16
        %v2598 = vrot.slane %v2596, 1
        %v2599 = vor.u32 %v2594, %v2598
        %v2601 = vld [vmem:[#allocation4 + $0x80] sm:$0x1f]
        %v2602 = vsel %vm2480, %v2583, %v2601
        %2603 = vst [vmem:[#allocation4 + $0x80] sm:$0x1f] %v2602
        %v2604 = vld [vmem:[#allocation4 + $0x88] sm:$0x1f]
        %v2605 = vsel %vm2480, %v2591, %v2604
        %2606 = vst [vmem:[#allocation4 + $0x88] sm:$0x1f] %v2605
        %v2607 = vld [vmem:[#allocation4 + $0x90] sm:$0x1f]
        %v2608 = vsel %vm2480, %v2584, %v2607
        %2609 = vst [vmem:[#allocation4 + $0x90] sm:$0x1f] %v2608
        %v2610 = vld [vmem:[#allocation4 + $0x98] sm:$0x1f]
        %v2611 = vsel %vm2480, %v2599, %v2610
        %2612 = vst [vmem:[#allocation4 + $0x98] sm:$0x1f] %v2611
        %v2613 = vld [vmem:[#allocation3 + $0x28] sm:$0x1f]
        %v2614 = vld [vmem:[#allocation3 + $0x30] sm:$0x1f]
        %v2616 = vshrl.u32 %v2613, 16
        %v2618 = vshll.u32 %v2613, 16
        %v2620 = vrot.slane %v2618, 1
        %v2621 = vor.u32 %v2616, %v2620
        %v2624 = vshrl.u32 %v2614, 16
        %v2626 = vshll.u32 %v2614, 16
        %v2628 = vrot.slane %v2626, 1
        %v2629 = vor.u32 %v2624, %v2628
        %v2631 = vld [vmem:[#allocation4 + $0xa0] sm:$0x1f]
        %v2632 = vsel %vm2480, %v2613, %v2631
        %2633 = vst [vmem:[#allocation4 + $0xa0] sm:$0x1f] %v2632
        %v2634 = vld [vmem:[#allocation4 + $0xa8] sm:$0x1f]
        %v2635 = vsel %vm2480, %v2621, %v2634
        %2636 = vst [vmem:[#allocation4 + $0xa8] sm:$0x1f] %v2635
        %v2637 = vld [vmem:[#allocation4 + $0xb0] sm:$0x1f]
        %v2638 = vsel %vm2480, %v2614, %v2637
        %2639 = vst [vmem:[#allocation4 + $0xb0] sm:$0x1f] %v2638
        %v2640 = vld [vmem:[#allocation4 + $0xb8] sm:$0x1f]
        %v2641 = vsel %vm2480, %v2629, %v2640
        %2642 = vst [vmem:[#allocation4 + $0xb8] sm:$0x1f] %v2641
        %v2643 = vld [vmem:[#allocation3 + $0x30] sm:$0x1f]
        %v2644 = vld [vmem:[#allocation3 + $0x38] sm:$0x1f]
        %v2646 = vshrl.u32 %v2643, 16
        %v2648 = vshll.u32 %v2643, 16
        %v2650 = vrot.slane %v2648, 1
        %v2651 = vor.u32 %v2646, %v2650
        %v2654 = vshrl.u32 %v2644, 16
        %v2656 = vshll.u32 %v2644, 16
        %v2658 = vrot.slane %v2656, 1
        %v2659 = vor.u32 %v2654, %v2658
        %v2661 = vld [vmem:[#allocation4 + $0xc0] sm:$0x1f]
        %v2662 = vsel %vm2480, %v2643, %v2661
        %2663 = vst [vmem:[#allocation4 + $0xc0] sm:$0x1f] %v2662
        %v2664 = vld [vmem:[#allocation4 + $0xc8] sm:$0x1f]
        %v2665 = vsel %vm2480, %v2651, %v2664
        %2666 = vst [vmem:[#allocation4 + $0xc8] sm:$0x1f] %v2665
        %v2667 = vld [vmem:[#allocation4 + $0xd0] sm:$0x1f]
        %v2668 = vsel %vm2480, %v2644, %v2667
        %2669 = vst [vmem:[#allocation4 + $0xd0] sm:$0x1f] %v2668
        %v2670 = vld [vmem:[#allocation4 + $0xd8] sm:$0x1f]
        %v2671 = vsel %vm2480, %v2659, %v2670
        %2672 = vst [vmem:[#allocation4 + $0xd8] sm:$0x1f] %v2671
        %v2673 = vld [vmem:[#allocation3 + $0x38] sm:$0x1f]
        %v2674 = vld [vmem:[#allocation3 + $0x40] sm:$0x1f]
        %v2676 = vshrl.u32 %v2673, 16
        %v2678 = vshll.u32 %v2673, 16
        %v2680 = vrot.slane %v2678, 1
        %v2681 = vor.u32 %v2676, %v2680
        %v2684 = vshrl.u32 %v2674, 16
        %v2686 = vshll.u32 %v2674, 16
        %v2688 = vrot.slane %v2686, 1
        %v2689 = vor.u32 %v2684, %v2688
        %v2691 = vld [vmem:[#allocation4 + $0xe0] sm:$0x1f]
        %v2692 = vsel %vm2480, %v2673, %v2691
        %2693 = vst [vmem:[#allocation4 + $0xe0] sm:$0x1f] %v2692
        %v2694 = vld [vmem:[#allocation4 + $0xe8] sm:$0x1f]
        %v2695 = vsel %vm2480, %v2681, %v2694
        %2696 = vst [vmem:[#allocation4 + $0xe8] sm:$0x1f] %v2695
        %v2697 = vld [vmem:[#allocation4 + $0xf0] sm:$0x1f]
        %v2698 = vsel %vm2480, %v2674, %v2697
        %2699 = vst [vmem:[#allocation4 + $0xf0] sm:$0x1f] %v2698
        %v2700 = vld [vmem:[#allocation4 + $0xf8] sm:$0x1f]
        %v2701 = vsel %vm2480, %v2689, %v2700
        %2702 = vst [vmem:[#allocation4 + $0xf8] sm:$0x1f] %v2701
        %v2703 = vld [vmem:[#allocation3 + $0x40] sm:$0x1f]
        %v2704 = vld [vmem:[#allocation3 + $0x48] sm:$0x1f]
        %v2706 = vshrl.u32 %v2703, 16
        %v2708 = vshll.u32 %v2703, 16
        %v2710 = vrot.slane %v2708, 1
        %v2711 = vor.u32 %v2706, %v2710
        %v2714 = vshrl.u32 %v2704, 16
        %v2716 = vshll.u32 %v2704, 16
        %v2718 = vrot.slane %v2716, 1
        %v2719 = vor.u32 %v2714, %v2718
        %v2721 = vld [vmem:[#allocation4 + $0x100] sm:$0x1f]
        %v2722 = vsel %vm2480, %v2703, %v2721
        %2723 = vst [vmem:[#allocation4 + $0x100] sm:$0x1f] %v2722
        %v2724 = vld [vmem:[#allocation4 + $0x108] sm:$0x1f]
        %v2725 = vsel %vm2480, %v2711, %v2724
        %2726 = vst [vmem:[#allocation4 + $0x108] sm:$0x1f] %v2725
        %v2727 = vld [vmem:[#allocation4 + $0x110] sm:$0x1f]
        %v2728 = vsel %vm2480, %v2704, %v2727
        %2729 = vst [vmem:[#allocation4 + $0x110] sm:$0x1f] %v2728
        %v2730 = vld [vmem:[#allocation4 + $0x118] sm:$0x1f]
        %v2731 = vsel %vm2480, %v2719, %v2730
        %2732 = vst [vmem:[#allocation4 + $0x118] sm:$0x1f] %v2731
        %v2733 = vld [vmem:[#allocation4] sm:$0xff]
        %v2734 = vld [vmem:[#allocation4 + $0x8] sm:$0xff]
        %v2735 = vld [vmem:[#allocation4 + $0x10] sm:$0xff]
        %v2736 = vld [vmem:[#allocation4 + $0x18] sm:$0xff]
        %v2737 = vld [vmem:[#allocation4 + $0x20] sm:$0xff]
        %v2738 = vld [vmem:[#allocation4 + $0x28] sm:$0xff]
        %v2739 = vld [vmem:[#allocation4 + $0x30] sm:$0xff]
        %v2740 = vld [vmem:[#allocation4 + $0x38] sm:$0xff]
        %v2741 = vld [vmem:[#allocation4 + $0x40] sm:$0xff]
        %v2742 = vld [vmem:[#allocation4 + $0x48] sm:$0xff]
        %v2743 = vld [vmem:[#allocation4 + $0x50] sm:$0xff]
        %v2744 = vld [vmem:[#allocation4 + $0x58] sm:$0xff]
        %v2745 = vld [vmem:[#allocation4 + $0x60] sm:$0xff]
        %v2746 = vld [vmem:[#allocation4 + $0x68] sm:$0xff]
        %v2747 = vld [vmem:[#allocation4 + $0x70] sm:$0xff]
        %v2748 = vld [vmem:[#allocation4 + $0x78] sm:$0xff]
        %v2749 = vld [vmem:[#allocation4 + $0x80] sm:$0xff]
        %v2750 = vld [vmem:[#allocation4 + $0x88] sm:$0xff]
        %v2751 = vld [vmem:[#allocation4 + $0x90] sm:$0xff]
        %v2752 = vld [vmem:[#allocation4 + $0x98] sm:$0xff]
        %v2753 = vld [vmem:[#allocation4 + $0xa0] sm:$0xff]
        %v2754 = vld [vmem:[#allocation4 + $0xa8] sm:$0xff]
        %v2755 = vld [vmem:[#allocation4 + $0xb0] sm:$0xff]
        %v2756 = vld [vmem:[#allocation4 + $0xb8] sm:$0xff]
        %v2757 = vld [vmem:[#allocation4 + $0xc0] sm:$0xff]
        %v2758 = vld [vmem:[#allocation4 + $0xc8] sm:$0xff]
        %v2759 = vld [vmem:[#allocation4 + $0xd0] sm:$0xff]
        %v2760 = vld [vmem:[#allocation4 + $0xd8] sm:$0xff]
        %v2761 = vld [vmem:[#allocation4 + $0xe0] sm:$0xff]
        %v2762 = vld [vmem:[#allocation4 + $0xe8] sm:$0xff]
        %v2763 = vld [vmem:[#allocation4 + $0xf0] sm:$0xff]
        %v2764 = vld [vmem:[#allocation4 + $0xf8] sm:$0xff]
        %v2765 = vld [vmem:[#allocation4 + $0x100] sm:$0xff]
        %v2766 = vld [vmem:[#allocation4 + $0x108] sm:$0xff]
        %v2767 = vld [vmem:[#allocation4 + $0x110] sm:$0xff]
        %v2768 = vld [vmem:[#allocation4 + $0x118] sm:$0xff]
        %v2769 = vld [vmem:[%s3] sm:$0xf]
        %v2770 = vld [vmem:[%s3 + $0x4] sm:$0xf]
        %v2771 = vld [vmem:[%s3 + $0x8] sm:$0xf]
        %v2772 = vld [vmem:[%s3 + $0xc] sm:$0xf]
        %v2773 = vld [vmem:[%s3 + $0x10] sm:$0xf]
        %v2774 = vld [vmem:[%s3 + $0x14] sm:$0xf]
        %v2775 = vld [vmem:[%s3 + $0x18] sm:$0xf]
        %v2776 = vld [vmem:[%s3 + $0x1c] sm:$0xf]
        %v2777 = vld [vmem:[%s3 + $0x20] sm:$0xf]
        %v2778 = vld [vmem:[%s3 + $0x24] sm:$0xf]
        %v2779 = vld [vmem:[%s3 + $0x28] sm:$0xf]
        %v2780 = vld [vmem:[%s3 + $0x2c] sm:$0xf]
        %v2781 = vld [vmem:[%s3 + $0x30] sm:$0xf]
        %v2782 = vld [vmem:[%s3 + $0x34] sm:$0xf]
        %v2783 = vld [vmem:[%s3 + $0x38] sm:$0xf]
        %v2784 = vld [vmem:[%s3 + $0x3c] sm:$0xf]
        %v2785 = vld [vmem:[%s3 + $0x40] sm:$0xf]
        %v2786 = vld [vmem:[%s3 + $0x44] sm:$0xf]
        %v2787 = vld [vmem:[%s3 + $0x48] sm:$0xf]
        %v2788 = vld [vmem:[%s3 + $0x4c] sm:$0xf]
        %v2789 = vld [vmem:[%s3 + $0x50] sm:$0xf]
        %v2790 = vld [vmem:[%s3 + $0x54] sm:$0xf]
        %v2791 = vld [vmem:[%s3 + $0x58] sm:$0xf]
        %v2792 = vld [vmem:[%s3 + $0x5c] sm:$0xf]
        %v2793 = vld [vmem:[%s3 + $0x60] sm:$0xf]
        %v2794 = vld [vmem:[%s3 + $0x64] sm:$0xf]
        %v2795 = vld [vmem:[%s3 + $0x68] sm:$0xf]
        %v2796 = vld [vmem:[%s3 + $0x6c] sm:$0xf]
        %v2797 = vld [vmem:[%s3 + $0x70] sm:$0xf]
        %v2798 = vld [vmem:[%s3 + $0x74] sm:$0xf]
        %v2799 = vld [vmem:[%s3 + $0x78] sm:$0xf]
        %v2800 = vld [vmem:[%s3 + $0x7c] sm:$0xf]
        %v2801 = vld [vmem:[%s3 + $0x80] sm:$0xf]
        %v2802 = vld [vmem:[%s3 + $0x84] sm:$0xf]
        %v2803 = vld [vmem:[%s3 + $0x88] sm:$0xf]
        %v2804 = vld [vmem:[%s3 + $0x8c] sm:$0xf]
        %v2805 = vld [vmem:[%s3 + $0x90] sm:$0xf]
        %v2806 = vld [vmem:[%s3 + $0x94] sm:$0xf]
        %v2807 = vld [vmem:[%s3 + $0x98] sm:$0xf]
        %v2808 = vld [vmem:[%s3 + $0x9c] sm:$0xf]
        %v2809 = vld [vmem:[%s3 + $0xa0] sm:$0xf]
        %v2810 = vld [vmem:[%s3 + $0xa4] sm:$0xf]
        %v2811 = vld [vmem:[%s3 + $0xa8] sm:$0xf]
        %v2812 = vld [vmem:[%s3 + $0xac] sm:$0xf]
        %v2813 = vld [vmem:[%s3 + $0xb0] sm:$0xf]
        %v2814 = vld [vmem:[%s3 + $0xb4] sm:$0xf]
        %v2815 = vld [vmem:[%s3 + $0xb8] sm:$0xf]
        %v2816 = vld [vmem:[%s3 + $0xbc] sm:$0xf]
        %v2817 = vld [vmem:[%s3 + $0xc0] sm:$0xf]
        %v2818 = vld [vmem:[%s3 + $0xc4] sm:$0xf]
        %v2819 = vld [vmem:[%s3 + $0xc8] sm:$0xf]
        %v2820 = vld [vmem:[%s3 + $0xcc] sm:$0xf]
        %v2821 = vld [vmem:[%s3 + $0xd0] sm:$0xf]
        %v2822 = vld [vmem:[%s3 + $0xd4] sm:$0xf]
        %v2823 = vld [vmem:[%s3 + $0xd8] sm:$0xf]
        %v2824 = vld [vmem:[%s3 + $0xdc] sm:$0xf]
        %v2825 = vld [vmem:[%s3 + $0xe0] sm:$0xf]
        %v2826 = vld [vmem:[%s3 + $0xe4] sm:$0xf]
        %v2827 = vld [vmem:[%s3 + $0xe8] sm:$0xf]
        %v2828 = vld [vmem:[%s3 + $0xec] sm:$0xf]
        %v2829 = vld [vmem:[%s3 + $0xf0] sm:$0xf]
        %v2830 = vld [vmem:[%s3 + $0xf4] sm:$0xf]
        %v2831 = vld [vmem:[%s3 + $0xf8] sm:$0xf]
        %v2832 = vld [vmem:[%s3 + $0xfc] sm:$0xf]
        %v2833 = vld [vmem:[%s4] sm:$0x1]
        %v2835 = vlaneseq
        %v2836 = vshrl.u32 %v2835, 7
        %v2837 = vsub.s32 0, %v2836
        %v2838 = vrot.slane %v2833, %v2837
        %v2904 = vunpack.c.l.b16 %v2769
        %v2905 = vunpack.c.l.b16 %v2770
        %v2906 = vunpack.c.l.b16 %v2771
        %v2907 = vunpack.c.l.b16 %v2772
        %v2908 = vunpack.c.l.b16 %v2773
        %v2909 = vunpack.c.l.b16 %v2774
        %v2910 = vunpack.c.l.b16 %v2775
        %v2911 = vunpack.c.l.b16 %v2776
        %v2912 = vunpack.c.l.b16 %v2777
        %v2913 = vunpack.c.l.b16 %v2778
        %v2914 = vunpack.c.l.b16 %v2779
        %v2915 = vunpack.c.l.b16 %v2780
        %v2916 = vunpack.c.l.b16 %v2781
        %v2917 = vunpack.c.l.b16 %v2782
        %v2918 = vunpack.c.l.b16 %v2783
        %v2919 = vunpack.c.l.b16 %v2784
        %v2920 = vunpack.c.l.b16 %v2785
        %v2921 = vunpack.c.l.b16 %v2786
        %v2922 = vunpack.c.l.b16 %v2787
        %v2923 = vunpack.c.l.b16 %v2788
        %v2924 = vunpack.c.l.b16 %v2789
        %v2925 = vunpack.c.l.b16 %v2790
        %v2926 = vunpack.c.l.b16 %v2791
        %v2927 = vunpack.c.l.b16 %v2792
        %v2928 = vunpack.c.l.b16 %v2793
        %v2929 = vunpack.c.l.b16 %v2794
        %v2930 = vunpack.c.l.b16 %v2795
        %v2931 = vunpack.c.l.b16 %v2796
        %v2932 = vunpack.c.l.b16 %v2797
        %v2933 = vunpack.c.l.b16 %v2798
        %v2934 = vunpack.c.l.b16 %v2799
        %v2935 = vunpack.c.l.b16 %v2800
        %v2936 = vunpack.c.l.b16 %v2801
        %v2937 = vunpack.c.l.b16 %v2802
        %v2938 = vunpack.c.l.b16 %v2803
        %v2939 = vunpack.c.l.b16 %v2804
        %v2940 = vunpack.c.l.b16 %v2805
        %v2941 = vunpack.c.l.b16 %v2806
        %v2942 = vunpack.c.l.b16 %v2807
        %v2943 = vunpack.c.l.b16 %v2808
        %v2944 = vunpack.c.l.b16 %v2809
        %v2945 = vunpack.c.l.b16 %v2810
        %v2946 = vunpack.c.l.b16 %v2811
        %v2947 = vunpack.c.l.b16 %v2812
        %v2948 = vunpack.c.l.b16 %v2813
        %v2949 = vunpack.c.l.b16 %v2814
        %v2950 = vunpack.c.l.b16 %v2815
        %v2951 = vunpack.c.l.b16 %v2816
        %v2952 = vunpack.c.l.b16 %v2817
        %v2953 = vunpack.c.l.b16 %v2818
        %v2954 = vunpack.c.l.b16 %v2819
        %v2955 = vunpack.c.l.b16 %v2820
        %v2956 = vunpack.c.l.b16 %v2821
        %v2957 = vunpack.c.l.b16 %v2822
        %v2958 = vunpack.c.l.b16 %v2823
        %v2959 = vunpack.c.l.b16 %v2824
        %v2960 = vunpack.c.l.b16 %v2825
        %v2961 = vunpack.c.l.b16 %v2826
        %v2962 = vunpack.c.l.b16 %v2827
        %v2963 = vunpack.c.l.b16 %v2828
        %v2964 = vunpack.c.l.b16 %v2829
        %v2965 = vunpack.c.l.b16 %v2830
        %v2966 = vunpack.c.l.b16 %v2831
        %v2967 = vunpack.c.l.b16 %v2832
        %v2968 = vpack.c.b16 %v2905, %v2904
        %v2969 = vpack.c.b16 %v2907, %v2906
        %v2970 = vpack.c.b16 %v2909, %v2908
        %v2971 = vpack.c.b16 %v2911, %v2910
        %v2972 = vpack.c.b16 %v2913, %v2912
        %v2973 = vpack.c.b16 %v2915, %v2914
        %v2974 = vpack.c.b16 %v2917, %v2916
        %v2975 = vpack.c.b16 %v2919, %v2918
        %v2976 = vpack.c.b16 %v2921, %v2920
        %v2977 = vpack.c.b16 %v2923, %v2922
        %v2978 = vpack.c.b16 %v2925, %v2924
        %v2979 = vpack.c.b16 %v2927, %v2926
        %v2980 = vpack.c.b16 %v2929, %v2928
        %v2981 = vpack.c.b16 %v2931, %v2930
        %v2982 = vpack.c.b16 %v2933, %v2932
        %v2983 = vpack.c.b16 %v2935, %v2934
        %v2984 = vpack.c.b16 %v2937, %v2936
        %v2985 = vpack.c.b16 %v2939, %v2938
        %v2986 = vpack.c.b16 %v2941, %v2940
        %v2987 = vpack.c.b16 %v2943, %v2942
        %v2988 = vpack.c.b16 %v2945, %v2944
        %v2989 = vpack.c.b16 %v2947, %v2946
        %v2990 = vpack.c.b16 %v2949, %v2948
        %v2991 = vpack.c.b16 %v2951, %v2950
        %v2992 = vpack.c.b16 %v2953, %v2952
        %v2993 = vpack.c.b16 %v2955, %v2954
        %v2994 = vpack.c.b16 %v2957, %v2956
        %v2995 = vpack.c.b16 %v2959, %v2958
        %v2996 = vpack.c.b16 %v2961, %v2960
        %v2997 = vpack.c.b16 %v2963, %v2962
        %v2998 = vpack.c.b16 %v2965, %v2964
        %v2999 = vpack.c.b16 %v2967, %v2966
        %3032 = vmatprep.subr.bf16.mxu0 0
        %3033 = vmatpush1.bf16.msra.mxu0 %v2968
        %3034 = vmatprep.subr.bf16.mxu0 0
        %3035 = vmatpush1.bf16.msra.mxu0 %v2969
        %3036 = vmatprep.subr.bf16.mxu0 0
        %3037 = vmatpush1.bf16.msra.mxu0 %v2970
        %3038 = vmatprep.subr.bf16.mxu0 0
        %3039 = vmatpush1.bf16.msra.mxu0 %v2971
        %3040 = vmatprep.subr.bf16.mxu0 0
        %3041 = vmatpush1.bf16.msra.mxu0 %v2972
        %3042 = vmatprep.subr.bf16.mxu0 0
        %3043 = vmatpush1.bf16.msra.mxu0 %v2973
        %3044 = vmatprep.subr.bf16.mxu0 0
        %3045 = vmatpush1.bf16.msra.mxu0 %v2974
        %3046 = vmatprep.subr.bf16.mxu0 0
        %3047 = vmatpush1.bf16.msra.mxu0 %v2975
        %3048 = vmatprep.subr.bf16.mxu0 0
        %3049 = vmatpush1.bf16.msra.mxu0 %v2976
        %3050 = vmatprep.subr.bf16.mxu0 0
        %3051 = vmatpush1.bf16.msra.mxu0 %v2977
        %3052 = vmatprep.subr.bf16.mxu0 0
        %3053 = vmatpush1.bf16.msra.mxu0 %v2978
        %3054 = vmatprep.subr.bf16.mxu0 0
        %3055 = vmatpush1.bf16.msra.mxu0 %v2979
        %3056 = vmatprep.subr.bf16.mxu0 0
        %3057 = vmatpush1.bf16.msra.mxu0 %v2980
        %3058 = vmatprep.subr.bf16.mxu0 0
        %3059 = vmatpush1.bf16.msra.mxu0 %v2981
        %3060 = vmatprep.subr.bf16.mxu0 0
        %3061 = vmatpush1.bf16.msra.mxu0 %v2982
        %3062 = vmatprep.subr.bf16.mxu0 0
        %3063 = vmatpush1.bf16.msra.mxu0 %v2983
        %3064 = vmatprep.mubr.bf16.mxu0 %v2734
        %3065 = vmatmul.mubr.bf16.gmra.mrb[0].mxu0 %v2733
        %v3066 = vpop.f32.mrb[0].mxu0
        %v3067 = vadd.f32 %v2838, %v3066
        %v3068 = vpop.f32.mrb[0].mxu0
        %v3069 = vpop.f32.mrb[0].mxu0
        %v3070 = vadd.f32 %v2838, %v3069
        %v3071 = vpop.f32.mrb[0].mxu0
        %3072 = vmatprep.mubr.bf16.mxu0 %v2738
        %3073 = vmatmul.mubr.bf16.gmra.mrb[0].mxu0 %v2737
        %v3074 = vpop.f32.mrb[0].mxu0
        %v3075 = vadd.f32 %v2838, %v3074
        %v3076 = vpop.f32.mrb[0].mxu0
        %v3077 = vpop.f32.mrb[0].mxu0
        %v3078 = vadd.f32 %v2838, %v3077
        %v3079 = vpop.f32.mrb[0].mxu0
        %3080 = vmatprep.mubr.bf16.mxu0 %v2742
        %3081 = vmatmul.mubr.bf16.gmra.mrb[0].mxu0 %v2741
        %v3082 = vpop.f32.mrb[0].mxu0
        %v3083 = vadd.f32 %v2838, %v3082
        %v3084 = vpop.f32.mrb[0].mxu0
        %v3085 = vpop.f32.mrb[0].mxu0
        %v3086 = vadd.f32 %v2838, %v3085
        %v3087 = vpop.f32.mrb[0].mxu0
        %3088 = vmatprep.mubr.bf16.mxu0 %v2746
        %3089 = vmatmul.mubr.bf16.gmra.mrb[0].mxu0 %v2745
        %v3090 = vpop.f32.mrb[0].mxu0
        %v3091 = vadd.f32 %v2838, %v3090
        %v3092 = vpop.f32.mrb[0].mxu0
        %v3093 = vpop.f32.mrb[0].mxu0
        %v3094 = vadd.f32 %v2838, %v3093
        %v3095 = vpop.f32.mrb[0].mxu0
        %3096 = vmatprep.mubr.bf16.mxu0 %v2750
        %3097 = vmatmul.mubr.bf16.gmra.mrb[0].mxu0 %v2749
        %v3098 = vpop.f32.mrb[0].mxu0
        %v3099 = vadd.f32 %v2838, %v3098
        %v3100 = vpop.f32.mrb[0].mxu0
        %v3101 = vpop.f32.mrb[0].mxu0
        %v3102 = vadd.f32 %v2838, %v3101
        %v3103 = vpop.f32.mrb[0].mxu0
        %3104 = vmatprep.mubr.bf16.mxu0 %v2754
        %3105 = vmatmul.mubr.bf16.gmra.mrb[0].mxu0 %v2753
        %v3106 = vpop.f32.mrb[0].mxu0
        %v3107 = vadd.f32 %v2838, %v3106
        %v3108 = vpop.f32.mrb[0].mxu0
        %v3109 = vpop.f32.mrb[0].mxu0
        %v3110 = vadd.f32 %v2838, %v3109
        %v3111 = vpop.f32.mrb[0].mxu0
        %3112 = vmatprep.mubr.bf16.mxu0 %v2758
        %3113 = vmatmul.mubr.bf16.gmra.mrb[0].mxu0 %v2757
        %v3114 = vpop.f32.mrb[0].mxu0
        %v3115 = vadd.f32 %v2838, %v3114
        %v3116 = vpop.f32.mrb[0].mxu0
        %v3117 = vpop.f32.mrb[0].mxu0
        %v3118 = vadd.f32 %v2838, %v3117
        %v3119 = vpop.f32.mrb[0].mxu0
        %3120 = vmatprep.mubr.bf16.mxu0 %v2762
        %3121 = vmatmul.mubr.bf16.gmra.mrb[0].mxu0 %v2761
        %v3122 = vpop.f32.mrb[0].mxu0
        %v3123 = vadd.f32 %v2838, %v3122
        %v3124 = vpop.f32.mrb[0].mxu0
        %v3125 = vpop.f32.mrb[0].mxu0
        %v3126 = vadd.f32 %v2838, %v3125
        %v3127 = vpop.f32.mrb[0].mxu0
        %3128 = vmatprep.mubr.bf16.mxu0 %v2766
        %3129 = vmatmul.mubr.bf16.gmra.mrb[0].mxu0 %v2765
        %v3130 = vpop.f32.mrb[0].mxu0
        %v3131 = vadd.f32 %v2838, %v3130
        %v3132 = vpop.f32.mrb[0].mxu0
        %v3133 = vpop.f32.mrb[0].mxu0
        %v3134 = vadd.f32 %v2838, %v3133
        %v3135 = vpop.f32.mrb[0].mxu0
        %3136 = vdwg.mxu0
        %3137 = vmatprep.subr.bf16.mxu0 0
        %3138 = vmatpush1.bf16.msra.mxu0 %v2984
        %3139 = vmatprep.subr.bf16.mxu0 0
        %3140 = vmatpush1.bf16.msra.mxu0 %v2985
        %3141 = vmatprep.subr.bf16.mxu0 0
        %3142 = vmatpush1.bf16.msra.mxu0 %v2986
        %3143 = vmatprep.subr.bf16.mxu0 0
        %3144 = vmatpush1.bf16.msra.mxu0 %v2987
        %3145 = vmatprep.subr.bf16.mxu0 0
        %3146 = vmatpush1.bf16.msra.mxu0 %v2988
        %3147 = vmatprep.subr.bf16.mxu0 0
        %3148 = vmatpush1.bf16.msra.mxu0 %v2989
        %3149 = vmatprep.subr.bf16.mxu0 0
        %3150 = vmatpush1.bf16.msra.mxu0 %v2990
        %3151 = vmatprep.subr.bf16.mxu0 0
        %3152 = vmatpush1.bf16.msra.mxu0 %v2991
        %3153 = vmatprep.subr.bf16.mxu0 0
        %3154 = vmatpush1.bf16.msra.mxu0 %v2992
        %3155 = vmatprep.subr.bf16.mxu0 0
        %3156 = vmatpush1.bf16.msra.mxu0 %v2993
        %3157 = vmatprep.subr.bf16.mxu0 0
        %3158 = vmatpush1.bf16.msra.mxu0 %v2994
        %3159 = vmatprep.subr.bf16.mxu0 0
        %3160 = vmatpush1.bf16.msra.mxu0 %v2995
        %3161 = vmatprep.subr.bf16.mxu0 0
        %3162 = vmatpush1.bf16.msra.mxu0 %v2996
        %3163 = vmatprep.subr.bf16.mxu0 0
        %3164 = vmatpush1.bf16.msra.mxu0 %v2997
        %3165 = vmatprep.subr.bf16.mxu0 0
        %3166 = vmatpush1.bf16.msra.mxu0 %v2998
        %3167 = vmatprep.subr.bf16.mxu0 0
        %3168 = vmatpush1.bf16.msra.mxu0 %v2999
        %3169 = vmatprep.mubr.bf16.mxu0 %v2736
        %3170 = vmatmul.mubr.bf16.gmra.mrb[0].mxu0 %v2735
        %v3171 = vpop.f32.mrb[0].mxu0
        %v3172 = vadd.f32 %v3067, %v3171
        %v3173 = vpop.f32.mrb[0].mxu0
        %v3174 = vpop.f32.mrb[0].mxu0
        %v3175 = vadd.f32 %v3070, %v3174
        %v3176 = vpop.f32.mrb[0].mxu0
        %3177 = vmatprep.mubr.bf16.mxu0 %v2740
        %3178 = vmatmul.mubr.bf16.gmra.mrb[0].mxu0 %v2739
        %v3179 = vpop.f32.mrb[0].mxu0
        %v3180 = vadd.f32 %v3075, %v3179
        %v3181 = vpop.f32.mrb[0].mxu0
        %v3182 = vpop.f32.mrb[0].mxu0
        %v3183 = vadd.f32 %v3078, %v3182
        %v3184 = vpop.f32.mrb[0].mxu0
        %3185 = vmatprep.mubr.bf16.mxu0 %v2744
        %3186 = vmatmul.mubr.bf16.gmra.mrb[0].mxu0 %v2743
        %v3187 = vpop.f32.mrb[0].mxu0
        %v3188 = vadd.f32 %v3083, %v3187
        %v3189 = vpop.f32.mrb[0].mxu0
        %v3190 = vpop.f32.mrb[0].mxu0
        %v3191 = vadd.f32 %v3086, %v3190
        %v3192 = vpop.f32.mrb[0].mxu0
        %3193 = vmatprep.mubr.bf16.mxu0 %v2748
        %3194 = vmatmul.mubr.bf16.gmra.mrb[0].mxu0 %v2747
        %v3195 = vpop.f32.mrb[0].mxu0
        %v3196 = vadd.f32 %v3091, %v3195
        %v3197 = vpop.f32.mrb[0].mxu0
        %v3198 = vpop.f32.mrb[0].mxu0
        %v3199 = vadd.f32 %v3094, %v3198
        %v3200 = vpop.f32.mrb[0].mxu0
        %3201 = vmatprep.mubr.bf16.mxu0 %v2752
        %3202 = vmatmul.mubr.bf16.gmra.mrb[0].mxu0 %v2751
        %v3203 = vpop.f32.mrb[0].mxu0
        %v3204 = vadd.f32 %v3099, %v3203
        %v3205 = vpop.f32.mrb[0].mxu0
        %v3206 = vpop.f32.mrb[0].mxu0
        %v3207 = vadd.f32 %v3102, %v3206
        %v3208 = vpop.f32.mrb[0].mxu0
        %3209 = vmatprep.mubr.bf16.mxu0 %v2756
        %3210 = vmatmul.mubr.bf16.gmra.mrb[0].mxu0 %v2755
        %v3211 = vpop.f32.mrb[0].mxu0
        %v3212 = vadd.f32 %v3107, %v3211
        %v3213 = vpop.f32.mrb[0].mxu0
        %v3214 = vpop.f32.mrb[0].mxu0
        %v3215 = vadd.f32 %v3110, %v3214
        %v3216 = vpop.f32.mrb[0].mxu0
        %3217 = vmatprep.mubr.bf16.mxu0 %v2760
        %3218 = vmatmul.mubr.bf16.gmra.mrb[0].mxu0 %v2759
        %v3219 = vpop.f32.mrb[0].mxu0
        %v3220 = vadd.f32 %v3115, %v3219
        %v3221 = vpop.f32.mrb[0].mxu0
        %v3222 = vpop.f32.mrb[0].mxu0
        %v3223 = vadd.f32 %v3118, %v3222
        %v3224 = vpop.f32.mrb[0].mxu0
        %3225 = vmatprep.mubr.bf16.mxu0 %v2764
        %3226 = vmatmul.mubr.bf16.gmra.mrb[0].mxu0 %v2763
        %v3227 = vpop.f32.mrb[0].mxu0
        %v3228 = vadd.f32 %v3123, %v3227
        %v3229 = vpop.f32.mrb[0].mxu0
        %v3230 = vpop.f32.mrb[0].mxu0
        %v3231 = vadd.f32 %v3126, %v3230
        %v3232 = vpop.f32.mrb[0].mxu0
        %3233 = vmatprep.mubr.bf16.mxu0 %v2768
        %3234 = vmatmul.mubr.bf16.gmra.mrb[0].mxu0 %v2767
        %v3235 = vpop.f32.mrb[0].mxu0
        %v3236 = vadd.f32 %v3131, %v3235
        %v3237 = vpop.f32.mrb[0].mxu0
        %v3238 = vpop.f32.mrb[0].mxu0
        %v3239 = vadd.f32 %v3134, %v3238
        %v3240 = vpop.f32.mrb[0].mxu0
        %3241 = vdwg.mxu0
        %v3242 = vmax.f32 %v3172, 0.0
        %v3243 = vmax.f32 %v3175, 0.0
        %v3244 = vmax.f32 %v3180, 0.0
        %v3245 = vmax.f32 %v3183, 0.0
        %v3246 = vmax.f32 %v3188, 0.0
        %v3247 = vmax.f32 %v3191, 0.0
        %v3248 = vmax.f32 %v3196, 0.0
        %v3249 = vmax.f32 %v3199, 0.0
        %v3250 = vmax.f32 %v3204, 0.0
        %v3251 = vmax.f32 %v3207, 0.0
        %v3252 = vmax.f32 %v3212, 0.0
        %v3253 = vmax.f32 %v3215, 0.0
        %v3254 = vmax.f32 %v3220, 0.0
        %v3255 = vmax.f32 %v3223, 0.0
        %v3256 = vmax.f32 %v3228, 0.0
        %v3257 = vmax.f32 %v3231, 0.0
        %v3258 = vmax.f32 %v3236, 0.0
        %v3259 = vmax.f32 %v3239, 0.0
        %v3260 = vpack.c.bf16 %v3243, %v3242
        %v3261 = vpack.c.bf16 %v3245, %v3244
        %v3262 = vpack.c.bf16 %v3247, %v3246
        %v3263 = vpack.c.bf16 %v3249, %v3248
        %v3264 = vpack.c.bf16 %v3251, %v3250
        %v3265 = vpack.c.bf16 %v3253, %v3252
        %v3266 = vpack.c.bf16 %v3255, %v3254
        %v3267 = vpack.c.bf16 %v3257, %v3256
        %v3268 = vpack.c.bf16 %v3259, %v3258
        %3269 = vst [vmem:[#allocation5] sm:$0xff] %v3260
        %3270 = vst [vmem:[#allocation5 + $0x8] sm:$0xff] %v3261
        %3271 = vst [vmem:[#allocation5 + $0x10] sm:$0xff] %v3262
        %3272 = vst [vmem:[#allocation5 + $0x18] sm:$0xff] %v3263
        %3273 = vst [vmem:[#allocation5 + $0x20] sm:$0xff] %v3264
        %3274 = vst [vmem:[#allocation5 + $0x28] sm:$0xff] %v3265
        %3275 = vst [vmem:[#allocation5 + $0x30] sm:$0xff] %v3266
        %3276 = vst [vmem:[#allocation5 + $0x38] sm:$0xff] %v3267
        %3277 = vst [vmem:[#allocation5 + $0x40] sm:$0xff] %v3268
        %v3278 = vld [vmem:[#allocation5] sm:$0xf]
        %v3279 = vld [vmem:[#allocation5] sm:$0x1e]
        %v3280 = vld [vmem:[#allocation5 + $0x8] sm:$0xf]
        %v3281 = vld [vmem:[#allocation5 + $0x8] sm:$0x1e]
        %v3282 = vld [vmem:[#allocation5 + $0x10] sm:$0xf]
        %v3283 = vld [vmem:[#allocation5 + $0x10] sm:$0x1e]
        %v3285 = vshrl.u32 %v3278, 16
        %v3287 = vshll.u32 %v3278, 16
        %v3289 = vrot.slane %v3287, 1
        %v3290 = vor.u32 %v3285, %v3289
        %v3293 = vrot.slane %v3279, 1
        %v3296 = vshrl.u32 %v3280, 16
        %v3298 = vshll.u32 %v3280, 16
        %v3300 = vrot.slane %v3298, 1
        %v3301 = vor.u32 %v3296, %v3300
        %v3304 = vrot.slane %v3281, 1
        %v3307 = vshrl.u32 %v3282, 16
        %v3309 = vshll.u32 %v3282, 16
        %v3311 = vrot.slane %v3309, 1
        %v3312 = vor.u32 %v3307, %v3311
        %v3315 = vrot.slane %v3283, 1
        %vm3317 = vcmask 1043456
        %vm3318 = vsmask.f32 3328
        %vm3319 = vmand %vm3317, %vm3318
        %v3320 = vld [vmem:[#allocation6] sm:$0xf]
        %v3321 = vsel %vm3319, %v3278, %v3320
        %3322 = vst [vmem:[#allocation6] sm:$0xf] %v3321
        %v3323 = vld [vmem:[#allocation6 + $0x8] sm:$0xf]
        %v3324 = vsel %vm3319, %v3290, %v3323
        %3325 = vst [vmem:[#allocation6 + $0x8] sm:$0xf] %v3324
        %v3326 = vld [vmem:[#allocation6 + $0x10] sm:$0xf]
        %v3327 = vsel %vm3319, %v3293, %v3326
        %3328 = vst [vmem:[#allocation6 + $0x10] sm:$0xf] %v3327
        %v3329 = vld [vmem:[#allocation6 + $0x18] sm:$0xf]
        %v3330 = vsel %vm3319, %v3280, %v3329
        %3331 = vst [vmem:[#allocation6 + $0x18] sm:$0xf] %v3330
        %v3332 = vld [vmem:[#allocation6 + $0x20] sm:$0xf]
        %v3333 = vsel %vm3319, %v3301, %v3332
        %3334 = vst [vmem:[#allocation6 + $0x20] sm:$0xf] %v3333
        %v3335 = vld [vmem:[#allocation6 + $0x28] sm:$0xf]
        %v3336 = vsel %vm3319, %v3304, %v3335
        %3337 = vst [vmem:[#allocation6 + $0x28] sm:$0xf] %v3336
        %v3338 = vld [vmem:[#allocation6 + $0x30] sm:$0xf]
        %v3339 = vsel %vm3319, %v3282, %v3338
        %3340 = vst [vmem:[#allocation6 + $0x30] sm:$0xf] %v3339
        %v3341 = vld [vmem:[#allocation6 + $0x38] sm:$0xf]
        %v3342 = vsel %vm3319, %v3312, %v3341
        %3343 = vst [vmem:[#allocation6 + $0x38] sm:$0xf] %v3342
        %v3344 = vld [vmem:[#allocation6 + $0x40] sm:$0xf]
        %v3345 = vsel %vm3319, %v3315, %v3344
        %3346 = vst [vmem:[#allocation6 + $0x40] sm:$0xf] %v3345
        %v3347 = vld [vmem:[#allocation5 + $0x8] sm:$0xf]
        %v3348 = vld [vmem:[#allocation5 + $0x8] sm:$0x1e]
        %v3349 = vld [vmem:[#allocation5 + $0x10] sm:$0xf]
        %v3350 = vld [vmem:[#allocation5 + $0x10] sm:$0x1e]
        %v3351 = vld [vmem:[#allocation5 + $0x18] sm:$0xf]
        %v3352 = vld [vmem:[#allocation5 + $0x18] sm:$0x1e]
        %v3354 = vshrl.u32 %v3347, 16
        %v3356 = vshll.u32 %v3347, 16
        %v3358 = vrot.slane %v3356, 1
        %v3359 = vor.u32 %v3354, %v3358
        %v3362 = vrot.slane %v3348, 1
        %v3365 = vshrl.u32 %v3349, 16
        %v3367 = vshll.u32 %v3349, 16
        %v3369 = vrot.slane %v3367, 1
        %v3370 = vor.u32 %v3365, %v3369
        %v3373 = vrot.slane %v3350, 1
        %v3376 = vshrl.u32 %v3351, 16
        %v3378 = vshll.u32 %v3351, 16
        %v3380 = vrot.slane %v3378, 1
        %v3381 = vor.u32 %v3376, %v3380
        %v3384 = vrot.slane %v3352, 1
        %v3386 = vld [vmem:[#allocation6 + $0x48] sm:$0xf]
        %v3387 = vsel %vm3319, %v3347, %v3386
        %3388 = vst [vmem:[#allocation6 + $0x48] sm:$0xf] %v3387
        %v3389 = vld [vmem:[#allocation6 + $0x50] sm:$0xf]
        %v3390 = vsel %vm3319, %v3359, %v3389
        %3391 = vst [vmem:[#allocation6 + $0x50] sm:$0xf] %v3390
        %v3392 = vld [vmem:[#allocation6 + $0x58] sm:$0xf]
        %v3393 = vsel %vm3319, %v3362, %v3392
        %3394 = vst [vmem:[#allocation6 + $0x58] sm:$0xf] %v3393
        %v3395 = vld [vmem:[#allocation6 + $0x60] sm:$0xf]
        %v3396 = vsel %vm3319, %v3349, %v3395
        %3397 = vst [vmem:[#allocation6 + $0x60] sm:$0xf] %v3396
        %v3398 = vld [vmem:[#allocation6 + $0x68] sm:$0xf]
        %v3399 = vsel %vm3319, %v3370, %v3398
        %3400 = vst [vmem:[#allocation6 + $0x68] sm:$0xf] %v3399
        %v3401 = vld [vmem:[#allocation6 + $0x70] sm:$0xf]
        %v3402 = vsel %vm3319, %v3373, %v3401
        %3403 = vst [vmem:[#allocation6 + $0x70] sm:$0xf] %v3402
        %v3404 = vld [vmem:[#allocation6 + $0x78] sm:$0xf]
        %v3405 = vsel %vm3319, %v3351, %v3404
        %3406 = vst [vmem:[#allocation6 + $0x78] sm:$0xf] %v3405
        %v3407 = vld [vmem:[#allocation6 + $0x80] sm:$0xf]
        %v3408 = vsel %vm3319, %v3381, %v3407
        %3409 = vst [vmem:[#allocation6 + $0x80] sm:$0xf] %v3408
        %v3410 = vld [vmem:[#allocation6 + $0x88] sm:$0xf]
        %v3411 = vsel %vm3319, %v3384, %v3410
        %3412 = vst [vmem:[#allocation6 + $0x88] sm:$0xf] %v3411
        %v3413 = vld [vmem:[#allocation5 + $0x10] sm:$0xf]
        %v3414 = vld [vmem:[#allocation5 + $0x10] sm:$0x1e]
        %v3415 = vld [vmem:[#allocation5 + $0x18] sm:$0xf]
        %v3416 = vld [vmem:[#allocation5 + $0x18] sm:$0x1e]
        %v3417 = vld [vmem:[#allocation5 + $0x20] sm:$0xf]
        %v3418 = vld [vmem:[#allocation5 + $0x20] sm:$0x1e]
        %v3420 = vshrl.u32 %v3413, 16
        %v3422 = vshll.u32 %v3413, 16
        %v3424 = vrot.slane %v3422, 1
        %v3425 = vor.u32 %v3420, %v3424
        %v3428 = vrot.slane %v3414, 1
        %v3431 = vshrl.u32 %v3415, 16
        %v3433 = vshll.u32 %v3415, 16
        %v3435 = vrot.slane %v3433, 1
        %v3436 = vor.u32 %v3431, %v3435
        %v3439 = vrot.slane %v3416, 1
        %v3442 = vshrl.u32 %v3417, 16
        %v3444 = vshll.u32 %v3417, 16
        %v3446 = vrot.slane %v3444, 1
        %v3447 = vor.u32 %v3442, %v3446
        %v3450 = vrot.slane %v3418, 1
        %v3452 = vld [vmem:[#allocation6 + $0x90] sm:$0xf]
        %v3453 = vsel %vm3319, %v3413, %v3452
        %3454 = vst [vmem:[#allocation6 + $0x90] sm:$0xf] %v3453
        %v3455 = vld [vmem:[#allocation6 + $0x98] sm:$0xf]
        %v3456 = vsel %vm3319, %v3425, %v3455
        %3457 = vst [vmem:[#allocation6 + $0x98] sm:$0xf] %v3456
        %v3458 = vld [vmem:[#allocation6 + $0xa0] sm:$0xf]
        %v3459 = vsel %vm3319, %v3428, %v3458
        %3460 = vst [vmem:[#allocation6 + $0xa0] sm:$0xf] %v3459
        %v3461 = vld [vmem:[#allocation6 + $0xa8] sm:$0xf]
        %v3462 = vsel %vm3319, %v3415, %v3461
        %3463 = vst [vmem:[#allocation6 + $0xa8] sm:$0xf] %v3462
        %v3464 = vld [vmem:[#allocation6 + $0xb0] sm:$0xf]
        %v3465 = vsel %vm3319, %v3436, %v3464
        %3466 = vst [vmem:[#allocation6 + $0xb0] sm:$0xf] %v3465
        %v3467 = vld [vmem:[#allocation6 + $0xb8] sm:$0xf]
        %v3468 = vsel %vm3319, %v3439, %v3467
        %3469 = vst [vmem:[#allocation6 + $0xb8] sm:$0xf] %v3468
        %v3470 = vld [vmem:[#allocation6 + $0xc0] sm:$0xf]
        %v3471 = vsel %vm3319, %v3417, %v3470
        %3472 = vst [vmem:[#allocation6 + $0xc0] sm:$0xf] %v3471
        %v3473 = vld [vmem:[#allocation6 + $0xc8] sm:$0xf]
        %v3474 = vsel %vm3319, %v3447, %v3473
        %3475 = vst [vmem:[#allocation6 + $0xc8] sm:$0xf] %v3474
        %v3476 = vld [vmem:[#allocation6 + $0xd0] sm:$0xf]
        %v3477 = vsel %vm3319, %v3450, %v3476
        %3478 = vst [vmem:[#allocation6 + $0xd0] sm:$0xf] %v3477
        %v3479 = vld [vmem:[#allocation5 + $0x18] sm:$0xf]
        %v3480 = vld [vmem:[#allocation5 + $0x18] sm:$0x1e]
        %v3481 = vld [vmem:[#allocation5 + $0x20] sm:$0xf]
        %v3482 = vld [vmem:[#allocation5 + $0x20] sm:$0x1e]
        %v3483 = vld [vmem:[#allocation5 + $0x28] sm:$0xf]
        %v3484 = vld [vmem:[#allocation5 + $0x28] sm:$0x1e]
        %v3486 = vshrl.u32 %v3479, 16
        %v3488 = vshll.u32 %v3479, 16
        %v3490 = vrot.slane %v3488, 1
        %v3491 = vor.u32 %v3486, %v3490
        %v3494 = vrot.slane %v3480, 1
        %v3497 = vshrl.u32 %v3481, 16
        %v3499 = vshll.u32 %v3481, 16
        %v3501 = vrot.slane %v3499, 1
        %v3502 = vor.u32 %v3497, %v3501
        %v3505 = vrot.slane %v3482, 1
        %v3508 = vshrl.u32 %v3483, 16
        %v3510 = vshll.u32 %v3483, 16
        %v3512 = vrot.slane %v3510, 1
        %v3513 = vor.u32 %v3508, %v3512
        %v3516 = vrot.slane %v3484, 1
        %v3518 = vld [vmem:[#allocation6 + $0xd8] sm:$0xf]
        %v3519 = vsel %vm3319, %v3479, %v3518
        %3520 = vst [vmem:[#allocation6 + $0xd8] sm:$0xf] %v3519
        %v3521 = vld [vmem:[#allocation6 + $0xe0] sm:$0xf]
        %v3522 = vsel %vm3319, %v3491, %v3521
        %3523 = vst [vmem:[#allocation6 + $0xe0] sm:$0xf] %v3522
        %v3524 = vld [vmem:[#allocation6 + $0xe8] sm:$0xf]
        %v3525 = vsel %vm3319, %v3494, %v3524
        %3526 = vst [vmem:[#allocation6 + $0xe8] sm:$0xf] %v3525
        %v3527 = vld [vmem:[#allocation6 + $0xf0] sm:$0xf]
        %v3528 = vsel %vm3319, %v3481, %v3527
        %3529 = vst [vmem:[#allocation6 + $0xf0] sm:$0xf] %v3528
        %v3530 = vld [vmem:[#allocation6 + $0xf8] sm:$0xf]
        %v3531 = vsel %vm3319, %v3502, %v3530
        %3532 = vst [vmem:[#allocation6 + $0xf8] sm:$0xf] %v3531
        %v3533 = vld [vmem:[#allocation6 + $0x100] sm:$0xf]
        %v3534 = vsel %vm3319, %v3505, %v3533
        %3535 = vst [vmem:[#allocation6 + $0x100] sm:$0xf] %v3534
        %v3536 = vld [vmem:[#allocation6 + $0x108] sm:$0xf]
        %v3537 = vsel %vm3319, %v3483, %v3536
        %3538 = vst [vmem:[#allocation6 + $0x108] sm:$0xf] %v3537
        %v3539 = vld [vmem:[#allocation6 + $0x110] sm:$0xf]
        %v3540 = vsel %vm3319, %v3513, %v3539
        %3541 = vst [vmem:[#allocation6 + $0x110] sm:$0xf] %v3540
        %v3542 = vld [vmem:[#allocation6 + $0x118] sm:$0xf]
        %v3543 = vsel %vm3319, %v3516, %v3542
        %3544 = vst [vmem:[#allocation6 + $0x118] sm:$0xf] %v3543
        %v3545 = vld [vmem:[#allocation5 + $0x20] sm:$0xf]
        %v3546 = vld [vmem:[#allocation5 + $0x20] sm:$0x1e]
        %v3547 = vld [vmem:[#allocation5 + $0x28] sm:$0xf]
        %v3548 = vld [vmem:[#allocation5 + $0x28] sm:$0x1e]
        %v3549 = vld [vmem:[#allocation5 + $0x30] sm:$0xf]
        %v3550 = vld [vmem:[#allocation5 + $0x30] sm:$0x1e]
        %v3552 = vshrl.u32 %v3545, 16
        %v3554 = vshll.u32 %v3545, 16
        %v3556 = vrot.slane %v3554, 1
        %v3557 = vor.u32 %v3552, %v3556
        %v3560 = vrot.slane %v3546, 1
        %v3563 = vshrl.u32 %v3547, 16
        %v3565 = vshll.u32 %v3547, 16
        %v3567 = vrot.slane %v3565, 1
        %v3568 = vor.u32 %v3563, %v3567
        %v3571 = vrot.slane %v3548, 1
        %v3574 = vshrl.u32 %v3549, 16
        %v3576 = vshll.u32 %v3549, 16
        %v3578 = vrot.slane %v3576, 1
        %v3579 = vor.u32 %v3574, %v3578
        %v3582 = vrot.slane %v3550, 1
        %v3584 = vld [vmem:[#allocation6 + $0x120] sm:$0xf]
        %v3585 = vsel %vm3319, %v3545, %v3584
        %3586 = vst [vmem:[#allocation6 + $0x120] sm:$0xf] %v3585
        %v3587 = vld [vmem:[#allocation6 + $0x128] sm:$0xf]
        %v3588 = vsel %vm3319, %v3557, %v3587
        %3589 = vst [vmem:[#allocation6 + $0x128] sm:$0xf] %v3588
        %v3590 = vld [vmem:[#allocation6 + $0x130] sm:$0xf]
        %v3591 = vsel %vm3319, %v3560, %v3590
        %3592 = vst [vmem:[#allocation6 + $0x130] sm:$0xf] %v3591
        %v3593 = vld [vmem:[#allocation6 + $0x138] sm:$0xf]
        %v3594 = vsel %vm3319, %v3547, %v3593
        %3595 = vst [vmem:[#allocation6 + $0x138] sm:$0xf] %v3594
        %v3596 = vld [vmem:[#allocation6 + $0x140] sm:$0xf]
        %v3597 = vsel %vm3319, %v3568, %v3596
        %3598 = vst [vmem:[#allocation6 + $0x140] sm:$0xf] %v3597
        %v3599 = vld [vmem:[#allocation6 + $0x148] sm:$0xf]
        %v3600 = vsel %vm3319, %v3571, %v3599
        %3601 = vst [vmem:[#allocation6 + $0x148] sm:$0xf] %v3600
        %v3602 = vld [vmem:[#allocation6 + $0x150] sm:$0xf]
        %v3603 = vsel %vm3319, %v3549, %v3602
        %3604 = vst [vmem:[#allocation6 + $0x150] sm:$0xf] %v3603
        %v3605 = vld [vmem:[#allocation6 + $0x158] sm:$0xf]
        %v3606 = vsel %vm3319, %v3579, %v3605
        %3607 = vst [vmem:[#allocation6 + $0x158] sm:$0xf] %v3606
        %v3608 = vld [vmem:[#allocation6 + $0x160] sm:$0xf]
        %v3609 = vsel %vm3319, %v3582, %v3608
        %3610 = vst [vmem:[#allocation6 + $0x160] sm:$0xf] %v3609
        %v3611 = vld [vmem:[#allocation5 + $0x28] sm:$0xf]
        %v3612 = vld [vmem:[#allocation5 + $0x28] sm:$0x1e]
        %v3613 = vld [vmem:[#allocation5 + $0x30] sm:$0xf]
        %v3614 = vld [vmem:[#allocation5 + $0x30] sm:$0x1e]
        %v3615 = vld [vmem:[#allocation5 + $0x38] sm:$0xf]
        %v3616 = vld [vmem:[#allocation5 + $0x38] sm:$0x1e]
        %v3618 = vshrl.u32 %v3611, 16
        %v3620 = vshll.u32 %v3611, 16
        %v3622 = vrot.slane %v3620, 1
        %v3623 = vor.u32 %v3618, %v3622
        %v3626 = vrot.slane %v3612, 1
        %v3629 = vshrl.u32 %v3613, 16
        %v3631 = vshll.u32 %v3613, 16
        %v3633 = vrot.slane %v3631, 1
        %v3634 = vor.u32 %v3629, %v3633
        %v3637 = vrot.slane %v3614, 1
        %v3640 = vshrl.u32 %v3615, 16
        %v3642 = vshll.u32 %v3615, 16
        %v3644 = vrot.slane %v3642, 1
        %v3645 = vor.u32 %v3640, %v3644
        %v3648 = vrot.slane %v3616, 1
        %v3650 = vld [vmem:[#allocation6 + $0x168] sm:$0xf]
        %v3651 = vsel %vm3319, %v3611, %v3650
        %3652 = vst [vmem:[#allocation6 + $0x168] sm:$0xf] %v3651
        %v3653 = vld [vmem:[#allocation6 + $0x170] sm:$0xf]
        %v3654 = vsel %vm3319, %v3623, %v3653
        %3655 = vst [vmem:[#allocation6 + $0x170] sm:$0xf] %v3654
        %v3656 = vld [vmem:[#allocation6 + $0x178] sm:$0xf]
        %v3657 = vsel %vm3319, %v3626, %v3656
        %3658 = vst [vmem:[#allocation6 + $0x178] sm:$0xf] %v3657
        %v3659 = vld [vmem:[#allocation6 + $0x180] sm:$0xf]
        %v3660 = vsel %vm3319, %v3613, %v3659
        %3661 = vst [vmem:[#allocation6 + $0x180] sm:$0xf] %v3660
        %v3662 = vld [vmem:[#allocation6 + $0x188] sm:$0xf]
        %v3663 = vsel %vm3319, %v3634, %v3662
        %3664 = vst [vmem:[#allocation6 + $0x188] sm:$0xf] %v3663
        %v3665 = vld [vmem:[#allocation6 + $0x190] sm:$0xf]
        %v3666 = vsel %vm3319, %v3637, %v3665
        %3667 = vst [vmem:[#allocation6 + $0x190] sm:$0xf] %v3666
        %v3668 = vld [vmem:[#allocation6 + $0x198] sm:$0xf]
        %v3669 = vsel %vm3319, %v3615, %v3668
        %3670 = vst [vmem:[#allocation6 + $0x198] sm:$0xf] %v3669
        %v3671 = vld [vmem:[#allocation6 + $0x1a0] sm:$0xf]
        %v3672 = vsel %vm3319, %v3645, %v3671
        %3673 = vst [vmem:[#allocation6 + $0x1a0] sm:$0xf] %v3672
        %v3674 = vld [vmem:[#allocation6 + $0x1a8] sm:$0xf]
        %v3675 = vsel %vm3319, %v3648, %v3674
        %3676 = vst [vmem:[#allocation6 + $0x1a8] sm:$0xf] %v3675
        %v3677 = vld [vmem:[#allocation5 + $0x30] sm:$0xf]
        %v3678 = vld [vmem:[#allocation5 + $0x30] sm:$0x1e]
        %v3679 = vld [vmem:[#allocation5 + $0x38] sm:$0xf]
        %v3680 = vld [vmem:[#allocation5 + $0x38] sm:$0x1e]
        %v3681 = vld [vmem:[#allocation5 + $0x40] sm:$0xf]
        %v3682 = vld [vmem:[#allocation5 + $0x40] sm:$0x1e]
        %v3684 = vshrl.u32 %v3677, 16
        %v3686 = vshll.u32 %v3677, 16
        %v3688 = vrot.slane %v3686, 1
        %v3689 = vor.u32 %v3684, %v3688
        %v3692 = vrot.slane %v3678, 1
        %v3695 = vshrl.u32 %v3679, 16
        %v3697 = vshll.u32 %v3679, 16
        %v3699 = vrot.slane %v3697, 1
        %v3700 = vor.u32 %v3695, %v3699
        %v3703 = vrot.slane %v3680, 1
        %v3706 = vshrl.u32 %v3681, 16
        %v3708 = vshll.u32 %v3681, 16
        %v3710 = vrot.slane %v3708, 1
        %v3711 = vor.u32 %v3706, %v3710
        %v3714 = vrot.slane %v3682, 1
        %v3716 = vld [vmem:[#allocation6 + $0x1b0] sm:$0xf]
        %v3717 = vsel %vm3319, %v3677, %v3716
        %3718 = vst [vmem:[#allocation6 + $0x1b0] sm:$0xf] %v3717
        %v3719 = vld [vmem:[#allocation6 + $0x1b8] sm:$0xf]
        %v3720 = vsel %vm3319, %v3689, %v3719
        %3721 = vst [vmem:[#allocation6 + $0x1b8] sm:$0xf] %v3720
        %v3722 = vld [vmem:[#allocation6 + $0x1c0] sm:$0xf]
        %v3723 = vsel %vm3319, %v3692, %v3722
        %3724 = vst [vmem:[#allocation6 + $0x1c0] sm:$0xf] %v3723
        %v3725 = vld [vmem:[#allocation6 + $0x1c8] sm:$0xf]
        %v3726 = vsel %vm3319, %v3679, %v3725
        %3727 = vst [vmem:[#allocation6 + $0x1c8] sm:$0xf] %v3726
        %v3728 = vld [vmem:[#allocation6 + $0x1d0] sm:$0xf]
        %v3729 = vsel %vm3319, %v3700, %v3728
        %3730 = vst [vmem:[#allocation6 + $0x1d0] sm:$0xf] %v3729
        %v3731 = vld [vmem:[#allocation6 + $0x1d8] sm:$0xf]
        %v3732 = vsel %vm3319, %v3703, %v3731
        %3733 = vst [vmem:[#allocation6 + $0x1d8] sm:$0xf] %v3732
        %v3734 = vld [vmem:[#allocation6 + $0x1e0] sm:$0xf]
        %v3735 = vsel %vm3319, %v3681, %v3734
        %3736 = vst [vmem:[#allocation6 + $0x1e0] sm:$0xf] %v3735
        %v3737 = vld [vmem:[#allocation6 + $0x1e8] sm:$0xf]
        %v3738 = vsel %vm3319, %v3711, %v3737
        %3739 = vst [vmem:[#allocation6 + $0x1e8] sm:$0xf] %v3738
        %v3740 = vld [vmem:[#allocation6 + $0x1f0] sm:$0xf]
        %v3741 = vsel %vm3319, %v3714, %v3740
        %3742 = vst [vmem:[#allocation6 + $0x1f0] sm:$0xf] %v3741
        %v3743 = vld [vmem:[#allocation6] sm:$0xff]
        %v3744 = vld [vmem:[#allocation6 + $0x8] sm:$0xff]
        %v3745 = vld [vmem:[#allocation6 + $0x10] sm:$0xff]
        %v3746 = vld [vmem:[#allocation6 + $0x18] sm:$0xff]
        %v3747 = vld [vmem:[#allocation6 + $0x20] sm:$0xff]
        %v3748 = vld [vmem:[#allocation6 + $0x28] sm:$0xff]
        %v3749 = vld [vmem:[#allocation6 + $0x30] sm:$0xff]
        %v3750 = vld [vmem:[#allocation6 + $0x38] sm:$0xff]
        %v3751 = vld [vmem:[#allocation6 + $0x40] sm:$0xff]
        %v3752 = vld [vmem:[#allocation6 + $0x48] sm:$0xff]
        %v3753 = vld [vmem:[#allocation6 + $0x50] sm:$0xff]
        %v3754 = vld [vmem:[#allocation6 + $0x58] sm:$0xff]
        %v3755 = vld [vmem:[#allocation6 + $0x60] sm:$0xff]
        %v3756 = vld [vmem:[#allocation6 + $0x68] sm:$0xff]
        %v3757 = vld [vmem:[#allocation6 + $0x70] sm:$0xff]
        %v3758 = vld [vmem:[#allocation6 + $0x78] sm:$0xff]
        %v3759 = vld [vmem:[#allocation6 + $0x80] sm:$0xff]
        %v3760 = vld [vmem:[#allocation6 + $0x88] sm:$0xff]
        %v3761 = vld [vmem:[#allocation6 + $0x90] sm:$0xff]
        %v3762 = vld [vmem:[#allocation6 + $0x98] sm:$0xff]
        %v3763 = vld [vmem:[#allocation6 + $0xa0] sm:$0xff]
        %v3764 = vld [vmem:[#allocation6 + $0xa8] sm:$0xff]
        %v3765 = vld [vmem:[#allocation6 + $0xb0] sm:$0xff]
        %v3766 = vld [vmem:[#allocation6 + $0xb8] sm:$0xff]
        %v3767 = vld [vmem:[#allocation6 + $0xc0] sm:$0xff]
        %v3768 = vld [vmem:[#allocation6 + $0xc8] sm:$0xff]
        %v3769 = vld [vmem:[#allocation6 + $0xd0] sm:$0xff]
        %v3770 = vld [vmem:[#allocation6 + $0xd8] sm:$0xff]
        %v3771 = vld [vmem:[#allocation6 + $0xe0] sm:$0xff]
        %v3772 = vld [vmem:[#allocation6 + $0xe8] sm:$0xff]
        %v3773 = vld [vmem:[#allocation6 + $0xf0] sm:$0xff]
        %v3774 = vld [vmem:[#allocation6 + $0xf8] sm:$0xff]
        %v3775 = vld [vmem:[#allocation6 + $0x100] sm:$0xff]
        %v3776 = vld [vmem:[#allocation6 + $0x108] sm:$0xff]
        %v3777 = vld [vmem:[#allocation6 + $0x110] sm:$0xff]
        %v3778 = vld [vmem:[#allocation6 + $0x118] sm:$0xff]
        %v3779 = vld [vmem:[#allocation6 + $0x120] sm:$0xff]
        %v3780 = vld [vmem:[#allocation6 + $0x128] sm:$0xff]
        %v3781 = vld [vmem:[#allocation6 + $0x130] sm:$0xff]
        %v3782 = vld [vmem:[#allocation6 + $0x138] sm:$0xff]
        %v3783 = vld [vmem:[#allocation6 + $0x140] sm:$0xff]
        %v3784 = vld [vmem:[#allocation6 + $0x148] sm:$0xff]
        %v3785 = vld [vmem:[#allocation6 + $0x150] sm:$0xff]
        %v3786 = vld [vmem:[#allocation6 + $0x158] sm:$0xff]
        %v3787 = vld [vmem:[#allocation6 + $0x160] sm:$0xff]
        %v3788 = vld [vmem:[#allocation6 + $0x168] sm:$0xff]
        %v3789 = vld [vmem:[#allocation6 + $0x170] sm:$0xff]
        %v3790 = vld [vmem:[#allocation6 + $0x178] sm:$0xff]
        %v3791 = vld [vmem:[#allocation6 + $0x180] sm:$0xff]
        %v3792 = vld [vmem:[#allocation6 + $0x188] sm:$0xff]
        %v3793 = vld [vmem:[#allocation6 + $0x190] sm:$0xff]
        %v3794 = vld [vmem:[#allocation6 + $0x198] sm:$0xff]
        %v3795 = vld [vmem:[#allocation6 + $0x1a0] sm:$0xff]
        %v3796 = vld [vmem:[#allocation6 + $0x1a8] sm:$0xff]
        %v3797 = vld [vmem:[#allocation6 + $0x1b0] sm:$0xff]
        %v3798 = vld [vmem:[#allocation6 + $0x1b8] sm:$0xff]
        %v3799 = vld [vmem:[#allocation6 + $0x1c0] sm:$0xff]
        %v3800 = vld [vmem:[#allocation6 + $0x1c8] sm:$0xff]
        %v3801 = vld [vmem:[#allocation6 + $0x1d0] sm:$0xff]
        %v3802 = vld [vmem:[#allocation6 + $0x1d8] sm:$0xff]
        %v3803 = vld [vmem:[#allocation6 + $0x1e0] sm:$0xff]
        %v3804 = vld [vmem:[#allocation6 + $0x1e8] sm:$0xff]
        %v3805 = vld [vmem:[#allocation6 + $0x1f0] sm:$0xff]
        %v3806 = vld [vmem:[%s5] sm:$0xf]
        %v3807 = vld [vmem:[%s5 + $0x4] sm:$0xf]
        %v3808 = vld [vmem:[%s5 + $0x8] sm:$0xf]
        %v3809 = vld [vmem:[%s5 + $0xc] sm:$0xf]
        %v3810 = vld [vmem:[%s5 + $0x10] sm:$0xf]
        %v3811 = vld [vmem:[%s5 + $0x14] sm:$0xf]
        %v3812 = vld [vmem:[%s5 + $0x18] sm:$0xf]
        %v3813 = vld [vmem:[%s5 + $0x1c] sm:$0xf]
        %v3814 = vld [vmem:[%s5 + $0x20] sm:$0xf]
        %v3815 = vld [vmem:[%s5 + $0x24] sm:$0xf]
        %v3816 = vld [vmem:[%s5 + $0x28] sm:$0xf]
        %v3817 = vld [vmem:[%s5 + $0x2c] sm:$0xf]
        %v3818 = vld [vmem:[%s5 + $0x30] sm:$0xf]
        %v3819 = vld [vmem:[%s5 + $0x34] sm:$0xf]
        %v3820 = vld [vmem:[%s5 + $0x38] sm:$0xf]
        %v3821 = vld [vmem:[%s5 + $0x3c] sm:$0xf]
        %v3822 = vld [vmem:[%s5 + $0x40] sm:$0xf]
        %v3823 = vld [vmem:[%s5 + $0x44] sm:$0xf]
        %v3824 = vld [vmem:[%s5 + $0x48] sm:$0xf]
        %v3825 = vld [vmem:[%s5 + $0x4c] sm:$0xf]
        %v3826 = vld [vmem:[%s5 + $0x50] sm:$0xf]
        %v3827 = vld [vmem:[%s5 + $0x54] sm:$0xf]
        %v3828 = vld [vmem:[%s5 + $0x58] sm:$0xf]
        %v3829 = vld [vmem:[%s5 + $0x5c] sm:$0xf]
        %v3830 = vld [vmem:[%s5 + $0x60] sm:$0xf]
        %v3831 = vld [vmem:[%s5 + $0x64] sm:$0xf]
        %v3832 = vld [vmem:[%s5 + $0x68] sm:$0xf]
        %v3833 = vld [vmem:[%s5 + $0x6c] sm:$0xf]
        %v3834 = vld [vmem:[%s5 + $0x70] sm:$0xf]
        %v3835 = vld [vmem:[%s5 + $0x74] sm:$0xf]
        %v3836 = vld [vmem:[%s5 + $0x78] sm:$0xf]
        %v3837 = vld [vmem:[%s5 + $0x7c] sm:$0xf]
        %v3838 = vld [vmem:[%s5 + $0x80] sm:$0xf]
        %v3839 = vld [vmem:[%s5 + $0x84] sm:$0xf]
        %v3840 = vld [vmem:[%s5 + $0x88] sm:$0xf]
        %v3841 = vld [vmem:[%s5 + $0x8c] sm:$0xf]
        %v3842 = vld [vmem:[%s5 + $0x90] sm:$0xf]
        %v3843 = vld [vmem:[%s5 + $0x94] sm:$0xf]
        %v3844 = vld [vmem:[%s5 + $0x98] sm:$0xf]
        %v3845 = vld [vmem:[%s5 + $0x9c] sm:$0xf]
        %v3846 = vld [vmem:[%s5 + $0xa0] sm:$0xf]
        %v3847 = vld [vmem:[%s5 + $0xa4] sm:$0xf]
        %v3848 = vld [vmem:[%s5 + $0xa8] sm:$0xf]
        %v3849 = vld [vmem:[%s5 + $0xac] sm:$0xf]
        %v3850 = vld [vmem:[%s5 + $0xb0] sm:$0xf]
        %v3851 = vld [vmem:[%s5 + $0xb4] sm:$0xf]
        %v3852 = vld [vmem:[%s5 + $0xb8] sm:$0xf]
        %v3853 = vld [vmem:[%s5 + $0xbc] sm:$0xf]
        %v3854 = vld [vmem:[%s5 + $0xc0] sm:$0xf]
        %v3855 = vld [vmem:[%s5 + $0xc4] sm:$0xf]
        %v3856 = vld [vmem:[%s5 + $0xc8] sm:$0xf]
        %v3857 = vld [vmem:[%s5 + $0xcc] sm:$0xf]
        %v3858 = vld [vmem:[%s5 + $0xd0] sm:$0xf]
        %v3859 = vld [vmem:[%s5 + $0xd4] sm:$0xf]
        %v3860 = vld [vmem:[%s5 + $0xd8] sm:$0xf]
        %v3861 = vld [vmem:[%s5 + $0xdc] sm:$0xf]
        %v3862 = vld [vmem:[%s5 + $0xe0] sm:$0xf]
        %v3863 = vld [vmem:[%s5 + $0xe4] sm:$0xf]
        %v3864 = vld [vmem:[%s5 + $0xe8] sm:$0xf]
        %v3865 = vld [vmem:[%s5 + $0xec] sm:$0xf]
        %v3866 = vld [vmem:[%s5 + $0xf0] sm:$0xf]
        %v3867 = vld [vmem:[%s5 + $0xf4] sm:$0xf]
        %v3868 = vld [vmem:[%s5 + $0xf8] sm:$0xf]
        %v3869 = vld [vmem:[%s5 + $0xfc] sm:$0xf]
        %v3870 = vld [vmem:[%s5 + $0x100] sm:$0xf]
        %v3871 = vld [vmem:[%s5 + $0x104] sm:$0xf]
        %v3872 = vld [vmem:[%s5 + $0x108] sm:$0xf]
        %v3873 = vld [vmem:[%s5 + $0x10c] sm:$0xf]
        %v3874 = vld [vmem:[%s5 + $0x110] sm:$0xf]
        %v3875 = vld [vmem:[%s5 + $0x114] sm:$0xf]
        %v3876 = vld [vmem:[%s5 + $0x118] sm:$0xf]
        %v3877 = vld [vmem:[%s5 + $0x11c] sm:$0xf]
        %v3878 = vld [vmem:[%s5 + $0x120] sm:$0xf]
        %v3879 = vld [vmem:[%s5 + $0x124] sm:$0xf]
        %v3880 = vld [vmem:[%s5 + $0x128] sm:$0xf]
        %v3881 = vld [vmem:[%s5 + $0x12c] sm:$0xf]
        %v3882 = vld [vmem:[%s5 + $0x130] sm:$0xf]
        %v3883 = vld [vmem:[%s5 + $0x134] sm:$0xf]
        %v3884 = vld [vmem:[%s5 + $0x138] sm:$0xf]
        %v3885 = vld [vmem:[%s5 + $0x13c] sm:$0xf]
        %v3886 = vld [vmem:[%s5 + $0x140] sm:$0xf]
        %v3887 = vld [vmem:[%s5 + $0x144] sm:$0xf]
        %v3888 = vld [vmem:[%s5 + $0x148] sm:$0xf]
        %v3889 = vld [vmem:[%s5 + $0x14c] sm:$0xf]
        %v3890 = vld [vmem:[%s5 + $0x150] sm:$0xf]
        %v3891 = vld [vmem:[%s5 + $0x154] sm:$0xf]
        %v3892 = vld [vmem:[%s5 + $0x158] sm:$0xf]
        %v3893 = vld [vmem:[%s5 + $0x15c] sm:$0xf]
        %v3894 = vld [vmem:[%s5 + $0x160] sm:$0xf]
        %v3895 = vld [vmem:[%s5 + $0x164] sm:$0xf]
        %v3896 = vld [vmem:[%s5 + $0x168] sm:$0xf]
        %v3897 = vld [vmem:[%s5 + $0x16c] sm:$0xf]
        %v3898 = vld [vmem:[%s5 + $0x170] sm:$0xf]
        %v3899 = vld [vmem:[%s5 + $0x174] sm:$0xf]
        %v3900 = vld [vmem:[%s5 + $0x178] sm:$0xf]
        %v3901 = vld [vmem:[%s5 + $0x17c] sm:$0xf]
        %v3902 = vld [vmem:[%s5 + $0x180] sm:$0xf]
        %v3903 = vld [vmem:[%s5 + $0x184] sm:$0xf]
        %v3904 = vld [vmem:[%s5 + $0x188] sm:$0xf]
        %v3905 = vld [vmem:[%s5 + $0x18c] sm:$0xf]
        %v3906 = vld [vmem:[%s5 + $0x190] sm:$0xf]
        %v3907 = vld [vmem:[%s5 + $0x194] sm:$0xf]
        %v3908 = vld [vmem:[%s5 + $0x198] sm:$0xf]
        %v3909 = vld [vmem:[%s5 + $0x19c] sm:$0xf]
        %v3910 = vld [vmem:[%s5 + $0x1a0] sm:$0xf]
        %v3911 = vld [vmem:[%s5 + $0x1a4] sm:$0xf]
        %v3912 = vld [vmem:[%s5 + $0x1a8] sm:$0xf]
        %v3913 = vld [vmem:[%s5 + $0x1ac] sm:$0xf]
        %v3914 = vld [vmem:[%s5 + $0x1b0] sm:$0xf]
        %v3915 = vld [vmem:[%s5 + $0x1b4] sm:$0xf]
        %v3916 = vld [vmem:[%s5 + $0x1b8] sm:$0xf]
        %v3917 = vld [vmem:[%s5 + $0x1bc] sm:$0xf]
        %v3918 = vld [vmem:[%s5 + $0x1c0] sm:$0xf]
        %v3919 = vld [vmem:[%s5 + $0x1c4] sm:$0xf]
        %v3920 = vld [vmem:[%s5 + $0x1c8] sm:$0xf]
        %v3921 = vld [vmem:[%s5 + $0x1cc] sm:$0xf]
        %v3922 = vld [vmem:[%s5 + $0x1d0] sm:$0xf]
        %v3923 = vld [vmem:[%s5 + $0x1d4] sm:$0xf]
        %v3924 = vld [vmem:[%s5 + $0x1d8] sm:$0xf]
        %v3925 = vld [vmem:[%s5 + $0x1dc] sm:$0xf]
        %v3926 = vld [vmem:[%s5 + $0x1e0] sm:$0xf]
        %v3927 = vld [vmem:[%s5 + $0x1e4] sm:$0xf]
        %v3928 = vld [vmem:[%s5 + $0x1e8] sm:$0xf]
        %v3929 = vld [vmem:[%s5 + $0x1ec] sm:$0xf]
        %v3930 = vld [vmem:[%s5 + $0x1f0] sm:$0xf]
        %v3931 = vld [vmem:[%s5 + $0x1f4] sm:$0xf]
        %v3932 = vld [vmem:[%s5 + $0x1f8] sm:$0xf]
        %v3933 = vld [vmem:[%s5 + $0x1fc] sm:$0xf]
        %v3934 = vld [vmem:[%s5 + $0x200] sm:$0xf]
        %v3935 = vld [vmem:[%s5 + $0x204] sm:$0xf]
        %v3936 = vld [vmem:[%s5 + $0x208] sm:$0xf]
        %v3937 = vld [vmem:[%s5 + $0x20c] sm:$0xf]
        %v3938 = vld [vmem:[%s5 + $0x210] sm:$0xf]
        %v3939 = vld [vmem:[%s5 + $0x214] sm:$0xf]
        %v3940 = vld [vmem:[%s5 + $0x218] sm:$0xf]
        %v3941 = vld [vmem:[%s5 + $0x21c] sm:$0xf]
        %v3942 = vld [vmem:[%s5 + $0x220] sm:$0xf]
        %v3943 = vld [vmem:[%s5 + $0x224] sm:$0xf]
        %v3944 = vld [vmem:[%s5 + $0x228] sm:$0xf]
        %v3945 = vld [vmem:[%s5 + $0x22c] sm:$0xf]
        %v3946 = vld [vmem:[%s5 + $0x230] sm:$0xf]
        %v3947 = vld [vmem:[%s5 + $0x234] sm:$0xf]
        %v3948 = vld [vmem:[%s5 + $0x238] sm:$0xf]
        %v3949 = vld [vmem:[%s5 + $0x23c] sm:$0xf]
        %v3950 = vld [vmem:[%s6] sm:$0x1]
        %v3952 = vlaneseq
        %v3953 = vshrl.u32 %v3952, 7
        %v3954 = vsub.s32 0, %v3953
        %v3955 = vrot.slane %v3950, %v3954
        %v4101 = vunpack.c.l.b16 %v3806
        %v4102 = vunpack.c.l.b16 %v3807
        %v4103 = vunpack.c.l.b16 %v3808
        %v4104 = vunpack.c.l.b16 %v3809
        %v4105 = vunpack.c.l.b16 %v3810
        %v4106 = vunpack.c.l.b16 %v3811
        %v4107 = vunpack.c.l.b16 %v3812
        %v4108 = vunpack.c.l.b16 %v3813
        %v4109 = vunpack.c.l.b16 %v3814
        %v4110 = vunpack.c.l.b16 %v3815
        %v4111 = vunpack.c.l.b16 %v3816
        %v4112 = vunpack.c.l.b16 %v3817
        %v4113 = vunpack.c.l.b16 %v3818
        %v4114 = vunpack.c.l.b16 %v3819
        %v4115 = vunpack.c.l.b16 %v3820
        %v4116 = vunpack.c.l.b16 %v3821
        %v4117 = vunpack.c.l.b16 %v3822
        %v4118 = vunpack.c.l.b16 %v3823
        %v4119 = vunpack.c.l.b16 %v3824
        %v4120 = vunpack.c.l.b16 %v3825
        %v4121 = vunpack.c.l.b16 %v3826
        %v4122 = vunpack.c.l.b16 %v3827
        %v4123 = vunpack.c.l.b16 %v3828
        %v4124 = vunpack.c.l.b16 %v3829
        %v4125 = vunpack.c.l.b16 %v3830
        %v4126 = vunpack.c.l.b16 %v3831
        %v4127 = vunpack.c.l.b16 %v3832
        %v4128 = vunpack.c.l.b16 %v3833
        %v4129 = vunpack.c.l.b16 %v3834
        %v4130 = vunpack.c.l.b16 %v3835
        %v4131 = vunpack.c.l.b16 %v3836
        %v4132 = vunpack.c.l.b16 %v3837
        %v4133 = vunpack.c.l.b16 %v3838
        %v4134 = vunpack.c.l.b16 %v3839
        %v4135 = vunpack.c.l.b16 %v3840
        %v4136 = vunpack.c.l.b16 %v3841
        %v4137 = vunpack.c.l.b16 %v3842
        %v4138 = vunpack.c.l.b16 %v3843
        %v4139 = vunpack.c.l.b16 %v3844
        %v4140 = vunpack.c.l.b16 %v3845
        %v4141 = vunpack.c.l.b16 %v3846
        %v4142 = vunpack.c.l.b16 %v3847
        %v4143 = vunpack.c.l.b16 %v3848
        %v4144 = vunpack.c.l.b16 %v3849
        %v4145 = vunpack.c.l.b16 %v3850
        %v4146 = vunpack.c.l.b16 %v3851
        %v4147 = vunpack.c.l.b16 %v3852
        %v4148 = vunpack.c.l.b16 %v3853
        %v4149 = vunpack.c.l.b16 %v3854
        %v4150 = vunpack.c.l.b16 %v3855
        %v4151 = vunpack.c.l.b16 %v3856
        %v4152 = vunpack.c.l.b16 %v3857
        %v4153 = vunpack.c.l.b16 %v3858
        %v4154 = vunpack.c.l.b16 %v3859
        %v4155 = vunpack.c.l.b16 %v3860
        %v4156 = vunpack.c.l.b16 %v3861
        %v4157 = vunpack.c.l.b16 %v3862
        %v4158 = vunpack.c.l.b16 %v3863
        %v4159 = vunpack.c.l.b16 %v3864
        %v4160 = vunpack.c.l.b16 %v3865
        %v4161 = vunpack.c.l.b16 %v3866
        %v4162 = vunpack.c.l.b16 %v3867
        %v4163 = vunpack.c.l.b16 %v3868
        %v4164 = vunpack.c.l.b16 %v3869
        %v4165 = vunpack.c.l.b16 %v3870
        %v4166 = vunpack.c.l.b16 %v3871
        %v4167 = vunpack.c.l.b16 %v3872
        %v4168 = vunpack.c.l.b16 %v3873
        %v4169 = vunpack.c.l.b16 %v3874
        %v4170 = vunpack.c.l.b16 %v3875
        %v4171 = vunpack.c.l.b16 %v3876
        %v4172 = vunpack.c.l.b16 %v3877
        %v4173 = vunpack.c.l.b16 %v3878
        %v4174 = vunpack.c.l.b16 %v3879
        %v4175 = vunpack.c.l.b16 %v3880
        %v4176 = vunpack.c.l.b16 %v3881
        %v4177 = vunpack.c.l.b16 %v3882
        %v4178 = vunpack.c.l.b16 %v3883
        %v4179 = vunpack.c.l.b16 %v3884
        %v4180 = vunpack.c.l.b16 %v3885
        %v4181 = vunpack.c.l.b16 %v3886
        %v4182 = vunpack.c.l.b16 %v3887
        %v4183 = vunpack.c.l.b16 %v3888
        %v4184 = vunpack.c.l.b16 %v3889
        %v4185 = vunpack.c.l.b16 %v3890
        %v4186 = vunpack.c.l.b16 %v3891
        %v4187 = vunpack.c.l.b16 %v3892
        %v4188 = vunpack.c.l.b16 %v3893
        %v4189 = vunpack.c.l.b16 %v3894
        %v4190 = vunpack.c.l.b16 %v3895
        %v4191 = vunpack.c.l.b16 %v3896
        %v4192 = vunpack.c.l.b16 %v3897
        %v4193 = vunpack.c.l.b16 %v3898
        %v4194 = vunpack.c.l.b16 %v3899
        %v4195 = vunpack.c.l.b16 %v3900
        %v4196 = vunpack.c.l.b16 %v3901
        %v4197 = vunpack.c.l.b16 %v3902
        %v4198 = vunpack.c.l.b16 %v3903
        %v4199 = vunpack.c.l.b16 %v3904
        %v4200 = vunpack.c.l.b16 %v3905
        %v4201 = vunpack.c.l.b16 %v3906
        %v4202 = vunpack.c.l.b16 %v3907
        %v4203 = vunpack.c.l.b16 %v3908
        %v4204 = vunpack.c.l.b16 %v3909
        %v4205 = vunpack.c.l.b16 %v3910
        %v4206 = vunpack.c.l.b16 %v3911
        %v4207 = vunpack.c.l.b16 %v3912
        %v4208 = vunpack.c.l.b16 %v3913
        %v4209 = vunpack.c.l.b16 %v3914
        %v4210 = vunpack.c.l.b16 %v3915
        %v4211 = vunpack.c.l.b16 %v3916
        %v4212 = vunpack.c.l.b16 %v3917
        %v4213 = vunpack.c.l.b16 %v3918
        %v4214 = vunpack.c.l.b16 %v3919
        %v4215 = vunpack.c.l.b16 %v3920
        %v4216 = vunpack.c.l.b16 %v3921
        %v4217 = vunpack.c.l.b16 %v3922
        %v4218 = vunpack.c.l.b16 %v3923
        %v4219 = vunpack.c.l.b16 %v3924
        %v4220 = vunpack.c.l.b16 %v3925
        %v4221 = vunpack.c.l.b16 %v3926
        %v4222 = vunpack.c.l.b16 %v3927
        %v4223 = vunpack.c.l.b16 %v3928
        %v4224 = vunpack.c.l.b16 %v3929
        %v4225 = vunpack.c.l.b16 %v3930
        %v4226 = vunpack.c.l.b16 %v3931
        %v4227 = vunpack.c.l.b16 %v3932
        %v4228 = vunpack.c.l.b16 %v3933
        %v4229 = vunpack.c.l.b16 %v3934
        %v4230 = vunpack.c.l.b16 %v3935
        %v4231 = vunpack.c.l.b16 %v3936
        %v4232 = vunpack.c.l.b16 %v3937
        %v4233 = vunpack.c.l.b16 %v3938
        %v4234 = vunpack.c.l.b16 %v3939
        %v4235 = vunpack.c.l.b16 %v3940
        %v4236 = vunpack.c.l.b16 %v3941
        %v4237 = vunpack.c.l.b16 %v3942
        %v4238 = vunpack.c.l.b16 %v3943
        %v4239 = vunpack.c.l.b16 %v3944
        %v4240 = vunpack.c.l.b16 %v3945
        %v4241 = vunpack.c.l.b16 %v3946
        %v4242 = vunpack.c.l.b16 %v3947
        %v4243 = vunpack.c.l.b16 %v3948
        %v4244 = vunpack.c.l.b16 %v3949
        %v4245 = vpack.c.b16 %v4102, %v4101
        %v4246 = vpack.c.b16 %v4104, %v4103
        %v4247 = vpack.c.b16 %v4106, %v4105
        %v4248 = vpack.c.b16 %v4108, %v4107
        %v4249 = vpack.c.b16 %v4110, %v4109
        %v4250 = vpack.c.b16 %v4112, %v4111
        %v4251 = vpack.c.b16 %v4114, %v4113
        %v4252 = vpack.c.b16 %v4116, %v4115
        %v4253 = vpack.c.b16 %v4118, %v4117
        %v4254 = vpack.c.b16 %v4120, %v4119
        %v4255 = vpack.c.b16 %v4122, %v4121
        %v4256 = vpack.c.b16 %v4124, %v4123
        %v4257 = vpack.c.b16 %v4126, %v4125
        %v4258 = vpack.c.b16 %v4128, %v4127
        %v4259 = vpack.c.b16 %v4130, %v4129
        %v4260 = vpack.c.b16 %v4132, %v4131
        %v4261 = vpack.c.b16 %v4134, %v4133
        %v4262 = vpack.c.b16 %v4136, %v4135
        %v4263 = vpack.c.b16 %v4138, %v4137
        %v4264 = vpack.c.b16 %v4140, %v4139
        %v4265 = vpack.c.b16 %v4142, %v4141
        %v4266 = vpack.c.b16 %v4144, %v4143
        %v4267 = vpack.c.b16 %v4146, %v4145
        %v4268 = vpack.c.b16 %v4148, %v4147
        %v4269 = vpack.c.b16 %v4150, %v4149
        %v4270 = vpack.c.b16 %v4152, %v4151
        %v4271 = vpack.c.b16 %v4154, %v4153
        %v4272 = vpack.c.b16 %v4156, %v4155
        %v4273 = vpack.c.b16 %v4158, %v4157
        %v4274 = vpack.c.b16 %v4160, %v4159
        %v4275 = vpack.c.b16 %v4162, %v4161
        %v4276 = vpack.c.b16 %v4164, %v4163
        %v4277 = vpack.c.b16 %v4166, %v4165
        %v4278 = vpack.c.b16 %v4168, %v4167
        %v4279 = vpack.c.b16 %v4170, %v4169
        %v4280 = vpack.c.b16 %v4172, %v4171
        %v4281 = vpack.c.b16 %v4174, %v4173
        %v4282 = vpack.c.b16 %v4176, %v4175
        %v4283 = vpack.c.b16 %v4178, %v4177
        %v4284 = vpack.c.b16 %v4180, %v4179
        %v4285 = vpack.c.b16 %v4182, %v4181
        %v4286 = vpack.c.b16 %v4184, %v4183
        %v4287 = vpack.c.b16 %v4186, %v4185
        %v4288 = vpack.c.b16 %v4188, %v4187
        %v4289 = vpack.c.b16 %v4190, %v4189
        %v4290 = vpack.c.b16 %v4192, %v4191
        %v4291 = vpack.c.b16 %v4194, %v4193
        %v4292 = vpack.c.b16 %v4196, %v4195
        %v4293 = vpack.c.b16 %v4198, %v4197
        %v4294 = vpack.c.b16 %v4200, %v4199
        %v4295 = vpack.c.b16 %v4202, %v4201
        %v4296 = vpack.c.b16 %v4204, %v4203
        %v4297 = vpack.c.b16 %v4206, %v4205
        %v4298 = vpack.c.b16 %v4208, %v4207
        %v4299 = vpack.c.b16 %v4210, %v4209
        %v4300 = vpack.c.b16 %v4212, %v4211
        %v4301 = vpack.c.b16 %v4214, %v4213
        %v4302 = vpack.c.b16 %v4216, %v4215
        %v4303 = vpack.c.b16 %v4218, %v4217
        %v4304 = vpack.c.b16 %v4220, %v4219
        %v4305 = vpack.c.b16 %v4222, %v4221
        %v4306 = vpack.c.b16 %v4224, %v4223
        %v4307 = vpack.c.b16 %v4226, %v4225
        %v4308 = vpack.c.b16 %v4228, %v4227
        %v4309 = vpack.c.b16 %v4230, %v4229
        %v4310 = vpack.c.b16 %v4232, %v4231
        %v4311 = vpack.c.b16 %v4234, %v4233
        %v4312 = vpack.c.b16 %v4236, %v4235
        %v4313 = vpack.c.b16 %v4238, %v4237
        %v4314 = vpack.c.b16 %v4240, %v4239
        %v4315 = vpack.c.b16 %v4242, %v4241
        %v4316 = vpack.c.b16 %v4244, %v4243
        %4389 = vmatprep.subr.bf16.mxu0 0
        %4390 = vmatpush1.bf16.msra.mxu0 %v4245
        %4391 = vmatprep.subr.bf16.mxu0 0
        %4392 = vmatpush1.bf16.msra.mxu0 %v4246
        %4393 = vmatprep.subr.bf16.mxu0 0
        %4394 = vmatpush1.bf16.msra.mxu0 %v4247
        %4395 = vmatprep.subr.bf16.mxu0 0
        %4396 = vmatpush1.bf16.msra.mxu0 %v4248
        %4397 = vmatprep.subr.bf16.mxu0 0
        %4398 = vmatpush1.bf16.msra.mxu0 %v4249
        %4399 = vmatprep.subr.bf16.mxu0 0
        %4400 = vmatpush1.bf16.msra.mxu0 %v4250
        %4401 = vmatprep.subr.bf16.mxu0 0
        %4402 = vmatpush1.bf16.msra.mxu0 %v4251
        %4403 = vmatprep.subr.bf16.mxu0 0
        %4404 = vmatpush1.bf16.msra.mxu0 %v4252
        %4405 = vmatprep.subr.bf16.mxu0 0
        %4406 = vmatpush1.bf16.msra.mxu0 %v4253
        %4407 = vmatprep.subr.bf16.mxu0 0
        %4408 = vmatpush1.bf16.msra.mxu0 %v4254
        %4409 = vmatprep.subr.bf16.mxu0 0
        %4410 = vmatpush1.bf16.msra.mxu0 %v4255
        %4411 = vmatprep.subr.bf16.mxu0 0
        %4412 = vmatpush1.bf16.msra.mxu0 %v4256
        %4413 = vmatprep.subr.bf16.mxu0 0
        %4414 = vmatpush1.bf16.msra.mxu0 %v4257
        %4415 = vmatprep.subr.bf16.mxu0 0
        %4416 = vmatpush1.bf16.msra.mxu0 %v4258
        %4417 = vmatprep.subr.bf16.mxu0 0
        %4418 = vmatpush1.bf16.msra.mxu0 %v4259
        %4419 = vmatprep.subr.bf16.mxu0 0
        %4420 = vmatpush1.bf16.msra.mxu0 %v4260
        %4421 = vmatprep.mubr.bf16.mxu0 %v3744
        %4422 = vmatmul.mubr.bf16.gmra.mrb[0].mxu0 %v3743
        %v4423 = vpop.f32.mrb[0].mxu0
        %v4424 = vadd.f32 %v3955, %v4423
        %v4425 = vpop.f32.mrb[0].mxu0
        %v4426 = vpop.f32.mrb[0].mxu0
        %v4427 = vadd.f32 %v3955, %v4426
        %v4428 = vpop.f32.mrb[0].mxu0
        %4429 = vmatprep.mubr.bf16.mxu0 %v3753
        %4430 = vmatmul.mubr.bf16.gmra.mrb[0].mxu0 %v3752
        %v4431 = vpop.f32.mrb[0].mxu0
        %v4432 = vadd.f32 %v3955, %v4431
        %v4433 = vpop.f32.mrb[0].mxu0
        %v4434 = vpop.f32.mrb[0].mxu0
        %v4435 = vadd.f32 %v3955, %v4434
        %v4436 = vpop.f32.mrb[0].mxu0
        %4437 = vmatprep.mubr.bf16.mxu0 %v3762
        %4438 = vmatmul.mubr.bf16.gmra.mrb[0].mxu0 %v3761
        %v4439 = vpop.f32.mrb[0].mxu0
        %v4440 = vadd.f32 %v3955, %v4439
        %v4441 = vpop.f32.mrb[0].mxu0
        %v4442 = vpop.f32.mrb[0].mxu0
        %v4443 = vadd.f32 %v3955, %v4442
        %v4444 = vpop.f32.mrb[0].mxu0
        %4445 = vmatprep.mubr.bf16.mxu0 %v3771
        %4446 = vmatmul.mubr.bf16.gmra.mrb[0].mxu0 %v3770
        %v4447 = vpop.f32.mrb[0].mxu0
        %v4448 = vadd.f32 %v3955, %v4447
        %v4449 = vpop.f32.mrb[0].mxu0
        %v4450 = vpop.f32.mrb[0].mxu0
        %v4451 = vadd.f32 %v3955, %v4450
        %v4452 = vpop.f32.mrb[0].mxu0
        %4453 = vmatprep.mubr.bf16.mxu0 %v3780
        %4454 = vmatmul.mubr.bf16.gmra.mrb[0].mxu0 %v3779
        %v4455 = vpop.f32.mrb[0].mxu0
        %v4456 = vadd.f32 %v3955, %v4455
        %v4457 = vpop.f32.mrb[0].mxu0
        %v4458 = vpop.f32.mrb[0].mxu0
        %v4459 = vadd.f32 %v3955, %v4458
        %v4460 = vpop.f32.mrb[0].mxu0
        %4461 = vmatprep.mubr.bf16.mxu0 %v3789
        %4462 = vmatmul.mubr.bf16.gmra.mrb[0].mxu0 %v3788
        %v4463 = vpop.f32.mrb[0].mxu0
        %v4464 = vadd.f32 %v3955, %v4463
        %v4465 = vpop.f32.mrb[0].mxu0
        %v4466 = vpop.f32.mrb[0].mxu0
        %v4467 = vadd.f32 %v3955, %v4466
        %v4468 = vpop.f32.mrb[0].mxu0
        %4469 = vmatprep.mubr.bf16.mxu0 %v3798
        %4470 = vmatmul.mubr.bf16.gmra.mrb[0].mxu0 %v3797
        %v4471 = vpop.f32.mrb[0].mxu0
        %v4472 = vadd.f32 %v3955, %v4471
        %v4473 = vpop.f32.mrb[0].mxu0
        %v4474 = vpop.f32.mrb[0].mxu0
        %v4475 = vadd.f32 %v3955, %v4474
        %v4476 = vpop.f32.mrb[0].mxu0
        %4477 = vdwg.mxu0
        %4478 = vmatprep.subr.bf16.mxu0 0
        %4479 = vmatpush1.bf16.msra.mxu0 %v4261
        %4480 = vmatprep.subr.bf16.mxu0 0
        %4481 = vmatpush1.bf16.msra.mxu0 %v4262
        %4482 = vmatprep.subr.bf16.mxu0 0
        %4483 = vmatpush1.bf16.msra.mxu0 %v4263
        %4484 = vmatprep.subr.bf16.mxu0 0
        %4485 = vmatpush1.bf16.msra.mxu0 %v4264
        %4486 = vmatprep.subr.bf16.mxu0 0
        %4487 = vmatpush1.bf16.msra.mxu0 %v4265
        %4488 = vmatprep.subr.bf16.mxu0 0
        %4489 = vmatpush1.bf16.msra.mxu0 %v4266
        %4490 = vmatprep.subr.bf16.mxu0 0
        %4491 = vmatpush1.bf16.msra.mxu0 %v4267
        %4492 = vmatprep.subr.bf16.mxu0 0
        %4493 = vmatpush1.bf16.msra.mxu0 %v4268
        %4494 = vmatprep.subr.bf16.mxu0 0
        %4495 = vmatpush1.bf16.msra.mxu0 %v4269
        %4496 = vmatprep.subr.bf16.mxu0 0
        %4497 = vmatpush1.bf16.msra.mxu0 %v4270
        %4498 = vmatprep.subr.bf16.mxu0 0
        %4499 = vmatpush1.bf16.msra.mxu0 %v4271
        %4500 = vmatprep.subr.bf16.mxu0 0
        %4501 = vmatpush1.bf16.msra.mxu0 %v4272
        %4502 = vmatprep.subr.bf16.mxu0 0
        %4503 = vmatpush1.bf16.msra.mxu0 %v4273
        %4504 = vmatprep.subr.bf16.mxu0 0
        %4505 = vmatpush1.bf16.msra.mxu0 %v4274
        %4506 = vmatprep.subr.bf16.mxu0 0
        %4507 = vmatpush1.bf16.msra.mxu0 %v4275
        %4508 = vmatprep.subr.bf16.mxu0 0
        %4509 = vmatpush1.bf16.msra.mxu0 %v4276
        %4510 = vmatprep.mubr.bf16.mxu0 %v3746
        %4511 = vmatmul.mubr.bf16.gmra.mrb[0].mxu0 %v3745
        %v4512 = vpop.f32.mrb[0].mxu0
        %v4513 = vadd.f32 %v4424, %v4512
        %v4514 = vpop.f32.mrb[0].mxu0
        %v4515 = vpop.f32.mrb[0].mxu0
        %v4516 = vadd.f32 %v4427, %v4515
        %v4517 = vpop.f32.mrb[0].mxu0
        %4518 = vmatprep.mubr.bf16.mxu0 %v3755
        %4519 = vmatmul.mubr.bf16.gmra.mrb[0].mxu0 %v3754
        %v4520 = vpop.f32.mrb[0].mxu0
        %v4521 = vadd.f32 %v4432, %v4520
        %v4522 = vpop.f32.mrb[0].mxu0
        %v4523 = vpop.f32.mrb[0].mxu0
        %v4524 = vadd.f32 %v4435, %v4523
        %v4525 = vpop.f32.mrb[0].mxu0
        %4526 = vmatprep.mubr.bf16.mxu0 %v3764
        %4527 = vmatmul.mubr.bf16.gmra.mrb[0].mxu0 %v3763
        %v4528 = vpop.f32.mrb[0].mxu0
        %v4529 = vadd.f32 %v4440, %v4528
        %v4530 = vpop.f32.mrb[0].mxu0
        %v4531 = vpop.f32.mrb[0].mxu0
        %v4532 = vadd.f32 %v4443, %v4531
        %v4533 = vpop.f32.mrb[0].mxu0
        %4534 = vmatprep.mubr.bf16.mxu0 %v3773
        %4535 = vmatmul.mubr.bf16.gmra.mrb[0].mxu0 %v3772
        %v4536 = vpop.f32.mrb[0].mxu0
        %v4537 = vadd.f32 %v4448, %v4536
        %v4538 = vpop.f32.mrb[0].mxu0
        %v4539 = vpop.f32.mrb[0].mxu0
        %v4540 = vadd.f32 %v4451, %v4539
        %v4541 = vpop.f32.mrb[0].mxu0
        %4542 = vmatprep.mubr.bf16.mxu0 %v3782
        %4543 = vmatmul.mubr.bf16.gmra.mrb[0].mxu0 %v3781
        %v4544 = vpop.f32.mrb[0].mxu0
        %v4545 = vadd.f32 %v4456, %v4544
        %v4546 = vpop.f32.mrb[0].mxu0
        %v4547 = vpop.f32.mrb[0].mxu0
        %v4548 = vadd.f32 %v4459, %v4547
        %v4549 = vpop.f32.mrb[0].mxu0
        %4550 = vmatprep.mubr.bf16.mxu0 %v3791
        %4551 = vmatmul.mubr.bf16.gmra.mrb[0].mxu0 %v3790
        %v4552 = vpop.f32.mrb[0].mxu0
        %v4553 = vadd.f32 %v4464, %v4552
        %v4554 = vpop.f32.mrb[0].mxu0
        %v4555 = vpop.f32.mrb[0].mxu0
        %v4556 = vadd.f32 %v4467, %v4555
        %v4557 = vpop.f32.mrb[0].mxu0
        %4558 = vmatprep.mubr.bf16.mxu0 %v3800
        %4559 = vmatmul.mubr.bf16.gmra.mrb[0].mxu0 %v3799
        %v4560 = vpop.f32.mrb[0].mxu0
        %v4561 = vadd.f32 %v4472, %v4560
        %v4562 = vpop.f32.mrb[0].mxu0
        %v4563 = vpop.f32.mrb[0].mxu0
        %v4564 = vadd.f32 %v4475, %v4563
        %v4565 = vpop.f32.mrb[0].mxu0
        %4566 = vdwg.mxu0
        %4567 = vmatprep.subr.bf16.mxu0 0
        %4568 = vmatpush1.bf16.msra.mxu0 %v4277
        %4569 = vmatprep.subr.bf16.mxu0 0
        %4570 = vmatpush1.bf16.msra.mxu0 %v4278
        %4571 = vmatprep.subr.bf16.mxu0 0
        %4572 = vmatpush1.bf16.msra.mxu0 %v4279
        %4573 = vmatprep.subr.bf16.mxu0 0
        %4574 = vmatpush1.bf16.msra.mxu0 %v4280
        %4575 = vmatprep.subr.bf16.mxu0 0
        %4576 = vmatpush1.bf16.msra.mxu0 %v4281
        %4577 = vmatprep.subr.bf16.mxu0 0
        %4578 = vmatpush1.bf16.msra.mxu0 %v4282
        %4579 = vmatprep.subr.bf16.mxu0 0
        %4580 = vmatpush1.bf16.msra.mxu0 %v4283
        %4581 = vmatprep.subr.bf16.mxu0 0
        %4582 = vmatpush1.bf16.msra.mxu0 %v4284
        %4583 = vmatprep.subr.bf16.mxu0 0
        %4584 = vmatpush1.bf16.msra.mxu0 %v4285
        %4585 = vmatprep.subr.bf16.mxu0 0
        %4586 = vmatpush1.bf16.msra.mxu0 %v4286
        %4587 = vmatprep.subr.bf16.mxu0 0
        %4588 = vmatpush1.bf16.msra.mxu0 %v4287
        %4589 = vmatprep.subr.bf16.mxu0 0
        %4590 = vmatpush1.bf16.msra.mxu0 %v4288
        %4591 = vmatprep.subr.bf16.mxu0 0
        %4592 = vmatpush1.bf16.msra.mxu0 %v4289
        %4593 = vmatprep.subr.bf16.mxu0 0
        %4594 = vmatpush1.bf16.msra.mxu0 %v4290
        %4595 = vmatprep.subr.bf16.mxu0 0
        %4596 = vmatpush1.bf16.msra.mxu0 %v4291
        %4597 = vmatprep.subr.bf16.mxu0 0
        %4598 = vmatpush1.bf16.msra.mxu0 %v4292
        %4599 = vmatprep.mubr.bf16.mxu0 %v3748
        %4600 = vmatmul.mubr.bf16.gmra.mrb[0].mxu0 %v3747
        %v4601 = vpop.f32.mrb[0].mxu0
        %v4602 = vadd.f32 %v4513, %v4601
        %v4603 = vpop.f32.mrb[0].mxu0
        %v4604 = vpop.f32.mrb[0].mxu0
        %v4605 = vadd.f32 %v4516, %v4604
        %v4606 = vpop.f32.mrb[0].mxu0
        %4607 = vmatprep.mubr.bf16.mxu0 %v3757
        %4608 = vmatmul.mubr.bf16.gmra.mrb[0].mxu0 %v3756
        %v4609 = vpop.f32.mrb[0].mxu0
        %v4610 = vadd.f32 %v4521, %v4609
        %v4611 = vpop.f32.mrb[0].mxu0
        %v4612 = vpop.f32.mrb[0].mxu0
        %v4613 = vadd.f32 %v4524, %v4612
        %v4614 = vpop.f32.mrb[0].mxu0
        %4615 = vmatprep.mubr.bf16.mxu0 %v3766
        %4616 = vmatmul.mubr.bf16.gmra.mrb[0].mxu0 %v3765
        %v4617 = vpop.f32.mrb[0].mxu0
        %v4618 = vadd.f32 %v4529, %v4617
        %v4619 = vpop.f32.mrb[0].mxu0
        %v4620 = vpop.f32.mrb[0].mxu0
        %v4621 = vadd.f32 %v4532, %v4620
        %v4622 = vpop.f32.mrb[0].mxu0
        %4623 = vmatprep.mubr.bf16.mxu0 %v3775
        %4624 = vmatmul.mubr.bf16.gmra.mrb[0].mxu0 %v3774
        %v4625 = vpop.f32.mrb[0].mxu0
        %v4626 = vadd.f32 %v4537, %v4625
        %v4627 = vpop.f32.mrb[0].mxu0
        %v4628 = vpop.f32.mrb[0].mxu0
        %v4629 = vadd.f32 %v4540, %v4628
        %v4630 = vpop.f32.mrb[0].mxu0
        %4631 = vmatprep.mubr.bf16.mxu0 %v3784
        %4632 = vmatmul.mubr.bf16.gmra.mrb[0].mxu0 %v3783
        %v4633 = vpop.f32.mrb[0].mxu0
        %v4634 = vadd.f32 %v4545, %v4633
        %v4635 = vpop.f32.mrb[0].mxu0
        %v4636 = vpop.f32.mrb[0].mxu0
        %v4637 = vadd.f32 %v4548, %v4636
        %v4638 = vpop.f32.mrb[0].mxu0
        %4639 = vmatprep.mubr.bf16.mxu0 %v3793
        %4640 = vmatmul.mubr.bf16.gmra.mrb[0].mxu0 %v3792
        %v4641 = vpop.f32.mrb[0].mxu0
        %v4642 = vadd.f32 %v4553, %v4641
        %v4643 = vpop.f32.mrb[0].mxu0
        %v4644 = vpop.f32.mrb[0].mxu0
        %v4645 = vadd.f32 %v4556, %v4644
        %v4646 = vpop.f32.mrb[0].mxu0
        %4647 = vmatprep.mubr.bf16.mxu0 %v3802
        %4648 = vmatmul.mubr.bf16.gmra.mrb[0].mxu0 %v3801
        %v4649 = vpop.f32.mrb[0].mxu0
        %v4650 = vadd.f32 %v4561, %v4649
        %v4651 = vpop.f32.mrb[0].mxu0
        %v4652 = vpop.f32.mrb[0].mxu0
        %v4653 = vadd.f32 %v4564, %v4652
        %v4654 = vpop.f32.mrb[0].mxu0
        %4655 = vdwg.mxu0
        %4656 = vmatprep.subr.bf16.mxu0 0
        %4657 = vmatpush1.bf16.msra.mxu0 %v4293
        %4658 = vmatprep.subr.bf16.mxu0 0
        %4659 = vmatpush1.bf16.msra.mxu0 %v4294
        %4660 = vmatprep.subr.bf16.mxu0 0
        %4661 = vmatpush1.bf16.msra.mxu0 %v4295
        %4662 = vmatprep.subr.bf16.mxu0 0
        %4663 = vmatpush1.bf16.msra.mxu0 %v4296
        %4664 = vmatprep.subr.bf16.mxu0 0
        %4665 = vmatpush1.bf16.msra.mxu0 %v4297
        %4666 = vmatprep.subr.bf16.mxu0 0
        %4667 = vmatpush1.bf16.msra.mxu0 %v4298
        %4668 = vmatprep.subr.bf16.mxu0 0
        %4669 = vmatpush1.bf16.msra.mxu0 %v4299
        %4670 = vmatprep.subr.bf16.mxu0 0
        %4671 = vmatpush1.bf16.msra.mxu0 %v4300
        %4672 = vmatprep.subr.bf16.mxu0 0
        %4673 = vmatpush1.bf16.msra.mxu0 %v4301
        %4674 = vmatprep.subr.bf16.mxu0 0
        %4675 = vmatpush1.bf16.msra.mxu0 %v4302
        %4676 = vmatprep.subr.bf16.mxu0 0
        %4677 = vmatpush1.bf16.msra.mxu0 %v4303
        %4678 = vmatprep.subr.bf16.mxu0 0
        %4679 = vmatpush1.bf16.msra.mxu0 %v4304
        %4680 = vmatprep.subr.bf16.mxu0 0
        %4681 = vmatpush1.bf16.msra.mxu0 %v4305
        %4682 = vmatprep.subr.bf16.mxu0 0
        %4683 = vmatpush1.bf16.msra.mxu0 %v4306
        %4684 = vmatprep.subr.bf16.mxu0 0
        %4685 = vmatpush1.bf16.msra.mxu0 %v4307
        %4686 = vmatprep.subr.bf16.mxu0 0
        %4687 = vmatpush1.bf16.msra.mxu0 %v4308
        %4688 = vmatprep.mubr.bf16.mxu0 %v3750
        %4689 = vmatmul.mubr.bf16.gmra.mrb[0].mxu0 %v3749
        %v4690 = vpop.f32.mrb[0].mxu0
        %v4691 = vadd.f32 %v4602, %v4690
        %v4692 = vpop.f32.mrb[0].mxu0
        %v4693 = vpop.f32.mrb[0].mxu0
        %v4694 = vadd.f32 %v4605, %v4693
        %v4695 = vpop.f32.mrb[0].mxu0
        %4696 = vmatprep.mubr.bf16.mxu0 %v3759
        %4697 = vmatmul.mubr.bf16.gmra.mrb[0].mxu0 %v3758
        %v4698 = vpop.f32.mrb[0].mxu0
        %v4699 = vadd.f32 %v4610, %v4698
        %v4700 = vpop.f32.mrb[0].mxu0
        %v4701 = vpop.f32.mrb[0].mxu0
        %v4702 = vadd.f32 %v4613, %v4701
        %v4703 = vpop.f32.mrb[0].mxu0
        %4704 = vmatprep.mubr.bf16.mxu0 %v3768
        %4705 = vmatmul.mubr.bf16.gmra.mrb[0].mxu0 %v3767
        %v4706 = vpop.f32.mrb[0].mxu0
        %v4707 = vadd.f32 %v4618, %v4706
        %v4708 = vpop.f32.mrb[0].mxu0
        %v4709 = vpop.f32.mrb[0].mxu0
        %v4710 = vadd.f32 %v4621, %v4709
        %v4711 = vpop.f32.mrb[0].mxu0
        %4712 = vmatprep.mubr.bf16.mxu0 %v3777
        %4713 = vmatmul.mubr.bf16.gmra.mrb[0].mxu0 %v3776
        %v4714 = vpop.f32.mrb[0].mxu0
        %v4715 = vadd.f32 %v4626, %v4714
        %v4716 = vpop.f32.mrb[0].mxu0
        %v4717 = vpop.f32.mrb[0].mxu0
        %v4718 = vadd.f32 %v4629, %v4717
        %v4719 = vpop.f32.mrb[0].mxu0
        %4720 = vmatprep.mubr.bf16.mxu0 %v3786
        %4721 = vmatmul.mubr.bf16.gmra.mrb[0].mxu0 %v3785
        %v4722 = vpop.f32.mrb[0].mxu0
        %v4723 = vadd.f32 %v4634, %v4722
        %v4724 = vpop.f32.mrb[0].mxu0
        %v4725 = vpop.f32.mrb[0].mxu0
        %v4726 = vadd.f32 %v4637, %v4725
        %v4727 = vpop.f32.mrb[0].mxu0
        %4728 = vmatprep.mubr.bf16.mxu0 %v3795
        %4729 = vmatmul.mubr.bf16.gmra.mrb[0].mxu0 %v3794
        %v4730 = vpop.f32.mrb[0].mxu0
        %v4731 = vadd.f32 %v4642, %v4730
        %v4732 = vpop.f32.mrb[0].mxu0
        %v4733 = vpop.f32.mrb[0].mxu0
        %v4734 = vadd.f32 %v4645, %v4733
        %v4735 = vpop.f32.mrb[0].mxu0
        %4736 = vmatprep.mubr.bf16.mxu0 %v3804
        %4737 = vmatmul.mubr.bf16.gmra.mrb[0].mxu0 %v3803
        %v4738 = vpop.f32.mrb[0].mxu0
        %v4739 = vadd.f32 %v4650, %v4738
        %v4740 = vpop.f32.mrb[0].mxu0
        %v4741 = vpop.f32.mrb[0].mxu0
        %v4742 = vadd.f32 %v4653, %v4741
        %v4743 = vpop.f32.mrb[0].mxu0
        %4744 = vdwg.mxu0
        %4745 = vmatprep.subr.bf16.mxu0 0
        %4746 = vmatpush1.bf16.msra.mxu0 %v4309
        %4747 = vmatprep.subr.bf16.mxu0 0
        %4748 = vmatpush1.bf16.msra.mxu0 %v4310
        %4749 = vmatprep.subr.bf16.mxu0 0
        %4750 = vmatpush1.bf16.msra.mxu0 %v4311
        %4751 = vmatprep.subr.bf16.mxu0 0
        %4752 = vmatpush1.bf16.msra.mxu0 %v4312
        %4753 = vmatprep.subr.bf16.mxu0 0
        %4754 = vmatpush1.bf16.msra.mxu0 %v4313
        %4755 = vmatprep.subr.bf16.mxu0 0
        %4756 = vmatpush1.bf16.msra.mxu0 %v4314
        %4757 = vmatprep.subr.bf16.mxu0 0
        %4758 = vmatpush1.bf16.msra.mxu0 %v4315
        %4759 = vmatprep.subr.bf16.mxu0 0
        %4760 = vmatpush1.bf16.msra.mxu0 %v4316
        %4761 = vmatprep.subr.bf16.mxu0 0
        %4762 = vmatpush1.bf16.msra.mxu0 0
        %4763 = vmatprep.subr.bf16.mxu0 0
        %4764 = vmatpush1.bf16.msra.mxu0 0
        %4765 = vmatprep.subr.bf16.mxu0 0
        %4766 = vmatpush1.bf16.msra.mxu0 0
        %4767 = vmatprep.subr.bf16.mxu0 0
        %4768 = vmatpush1.bf16.msra.mxu0 0
        %4769 = vmatprep.subr.bf16.mxu0 0
        %4770 = vmatpush1.bf16.msra.mxu0 0
        %4771 = vmatprep.subr.bf16.mxu0 0
        %4772 = vmatpush1.bf16.msra.mxu0 0
        %4773 = vmatprep.subr.bf16.mxu0 0
        %4774 = vmatpush1.bf16.msra.mxu0 0
        %4775 = vmatprep.subr.bf16.mxu0 0
        %4776 = vmatpush1.bf16.msra.mxu0 0
        %4777 = vmatprep.mubr.bf16.mxu0 0
        %4778 = vmatmul.mubr.bf16.gmra.mrb[0].mxu0 %v3751
        %v4779 = vpop.f32.mrb[0].mxu0
        %v4780 = vadd.f32 %v4691, %v4779
        %v4781 = vpop.f32.mrb[0].mxu0
        %v4782 = vpop.f32.mrb[0].mxu0
        %v4783 = vadd.f32 %v4694, %v4782
        %v4784 = vpop.f32.mrb[0].mxu0
        %4785 = vmatprep.mubr.bf16.mxu0 0
        %4786 = vmatmul.mubr.bf16.gmra.mrb[0].mxu0 %v3760
        %v4787 = vpop.f32.mrb[0].mxu0
        %v4788 = vadd.f32 %v4699, %v4787
        %v4789 = vpop.f32.mrb[0].mxu0
        %v4790 = vpop.f32.mrb[0].mxu0
        %v4791 = vadd.f32 %v4702, %v4790
        %v4792 = vpop.f32.mrb[0].mxu0
        %4793 = vmatprep.mubr.bf16.mxu0 0
        %4794 = vmatmul.mubr.bf16.gmra.mrb[0].mxu0 %v3769
        %v4795 = vpop.f32.mrb[0].mxu0
        %v4796 = vadd.f32 %v4707, %v4795
        %v4797 = vpop.f32.mrb[0].mxu0
        %v4798 = vpop.f32.mrb[0].mxu0
        %v4799 = vadd.f32 %v4710, %v4798
        %v4800 = vpop.f32.mrb[0].mxu0
        %4801 = vmatprep.mubr.bf16.mxu0 0
        %4802 = vmatmul.mubr.bf16.gmra.mrb[0].mxu0 %v3778
        %v4803 = vpop.f32.mrb[0].mxu0
        %v4804 = vadd.f32 %v4715, %v4803
        %v4805 = vpop.f32.mrb[0].mxu0
        %v4806 = vpop.f32.mrb[0].mxu0
        %v4807 = vadd.f32 %v4718, %v4806
        %v4808 = vpop.f32.mrb[0].mxu0
        %4809 = vmatprep.mubr.bf16.mxu0 0
        %4810 = vmatmul.mubr.bf16.gmra.mrb[0].mxu0 %v3787
        %v4811 = vpop.f32.mrb[0].mxu0
        %v4812 = vadd.f32 %v4723, %v4811
        %v4813 = vpop.f32.mrb[0].mxu0
        %v4814 = vpop.f32.mrb[0].mxu0
        %v4815 = vadd.f32 %v4726, %v4814
        %v4816 = vpop.f32.mrb[0].mxu0
        %4817 = vmatprep.mubr.bf16.mxu0 0
        %4818 = vmatmul.mubr.bf16.gmra.mrb[0].mxu0 %v3796
        %v4819 = vpop.f32.mrb[0].mxu0
        %v4820 = vadd.f32 %v4731, %v4819
        %v4821 = vpop.f32.mrb[0].mxu0
        %v4822 = vpop.f32.mrb[0].mxu0
        %v4823 = vadd.f32 %v4734, %v4822
        %v4824 = vpop.f32.mrb[0].mxu0
        %4825 = vmatprep.mubr.bf16.mxu0 0
        %4826 = vmatmul.mubr.bf16.gmra.mrb[0].mxu0 %v3805
        %v4827 = vpop.f32.mrb[0].mxu0
        %v4828 = vadd.f32 %v4739, %v4827
        %v4829 = vpop.f32.mrb[0].mxu0
        %v4830 = vpop.f32.mrb[0].mxu0
        %v4831 = vadd.f32 %v4742, %v4830
        %v4832 = vpop.f32.mrb[0].mxu0
        %4833 = vdwg.mxu0
        %v4834 = vmax.f32 %v4780, 0.0
        %v4835 = vmax.f32 %v4783, 0.0
        %v4836 = vmax.f32 %v4788, 0.0
        %v4837 = vmax.f32 %v4791, 0.0
        %v4838 = vmax.f32 %v4796, 0.0
        %v4839 = vmax.f32 %v4799, 0.0
        %v4840 = vmax.f32 %v4804, 0.0
        %v4841 = vmax.f32 %v4807, 0.0
        %v4842 = vmax.f32 %v4812, 0.0
        %v4843 = vmax.f32 %v4815, 0.0
        %v4844 = vmax.f32 %v4820, 0.0
        %v4845 = vmax.f32 %v4823, 0.0
        %v4846 = vmax.f32 %v4828, 0.0
        %v4847 = vmax.f32 %v4831, 0.0
        %v4848 = vpack.c.bf16 %v4835, %v4834
        %v4849 = vpack.c.bf16 %v4837, %v4836
        %v4850 = vpack.c.bf16 %v4839, %v4838
        %v4851 = vpack.c.bf16 %v4841, %v4840
        %v4852 = vpack.c.bf16 %v4843, %v4842
        %v4853 = vpack.c.bf16 %v4845, %v4844
        %v4854 = vpack.c.bf16 %v4847, %v4846
        %v4855 = vld [vmem:[%s7] sm:$0xff]
        %v4856 = vld [vmem:[%s7 + $0x8] sm:$0xff]
        %v4857 = vld [vmem:[%s7 + $0x10] sm:$0xff]
        %v4858 = vld [vmem:[%s7 + $0x18] sm:$0xff]
        %v4859 = vld [vmem:[%s7 + $0x20] sm:$0xff]
        %v4860 = vld [vmem:[%s7 + $0x28] sm:$0xff]
        %v4861 = vld [vmem:[%s7 + $0x30] sm:$0xff]
        %v4862 = vld [vmem:[%s7 + $0x38] sm:$0xff]
        %v4863 = vld [vmem:[%s7 + $0x40] sm:$0xff]
        %v4864 = vld [vmem:[%s7 + $0x48] sm:$0xff]
        %v4865 = vld [vmem:[%s7 + $0x50] sm:$0xff]
        %v4866 = vld [vmem:[%s7 + $0x58] sm:$0xff]
        %v4867 = vld [vmem:[%s7 + $0x60] sm:$0xff]
        %v4868 = vld [vmem:[%s7 + $0x68] sm:$0xff]
        %v4869 = vld [vmem:[%s7 + $0x70] sm:$0xff]
        %v4870 = vld [vmem:[%s7 + $0x78] sm:$0xff]
        %v4871 = vld [vmem:[%s7 + $0x80] sm:$0xff]
        %v4872 = vld [vmem:[%s7 + $0x88] sm:$0xff]
        %v4873 = vld [vmem:[%s7 + $0x90] sm:$0xff]
        %v4874 = vld [vmem:[%s7 + $0x98] sm:$0xff]
        %v4875 = vld [vmem:[%s7 + $0xa0] sm:$0xff]
        %v4876 = vld [vmem:[%s7 + $0xa8] sm:$0xff]
        %v4877 = vld [vmem:[%s7 + $0xb0] sm:$0xff]
        %v4878 = vld [vmem:[%s7 + $0xb8] sm:$0xff]
        %v4879 = vld [vmem:[%s7 + $0xc0] sm:$0xff]
        %v4880 = vld [vmem:[%s7 + $0xc8] sm:$0xff]
        %v4881 = vld [vmem:[%s7 + $0xd0] sm:$0xff]
        %v4882 = vld [vmem:[%s7 + $0xd8] sm:$0xff]
        %v4883 = vld [vmem:[%s7 + $0xe0] sm:$0xff]
        %v4884 = vld [vmem:[%s7 + $0xe8] sm:$0xff]
        %v4885 = vld [vmem:[%s7 + $0xf0] sm:$0xff]
        %v4886 = vld [vmem:[%s7 + $0xf8] sm:$0xff]
        %v4887 = vld [vmem:[%s7 + $0x100] sm:$0xff]
        %v4888 = vld [vmem:[%s7 + $0x108] sm:$0xff]
        %v4889 = vld [vmem:[%s7 + $0x110] sm:$0xff]
        %v4890 = vld [vmem:[%s7 + $0x118] sm:$0xff]
        %v4891 = vld [vmem:[%s7 + $0x120] sm:$0xff]
        %v4892 = vld [vmem:[%s7 + $0x128] sm:$0xff]
        %v4893 = vld [vmem:[%s7 + $0x130] sm:$0xff]
        %v4894 = vld [vmem:[%s7 + $0x138] sm:$0xff]
        %v4895 = vld [vmem:[%s7 + $0x140] sm:$0xff]
        %v4896 = vld [vmem:[%s7 + $0x148] sm:$0xff]
        %v4897 = vld [vmem:[%s7 + $0x150] sm:$0xff]
        %v4898 = vld [vmem:[%s7 + $0x158] sm:$0xff]
        %v4899 = vld [vmem:[%s7 + $0x160] sm:$0xff]
        %v4900 = vld [vmem:[%s7 + $0x168] sm:$0xff]
        %v4901 = vld [vmem:[%s7 + $0x170] sm:$0xff]
        %v4902 = vld [vmem:[%s7 + $0x178] sm:$0xff]
        %v4903 = vld [vmem:[%s7 + $0x180] sm:$0xff]
        %v4904 = vld [vmem:[%s7 + $0x188] sm:$0xff]
        %v4905 = vld [vmem:[%s7 + $0x190] sm:$0xff]
        %v4906 = vld [vmem:[%s7 + $0x198] sm:$0xff]
        %v4907 = vld [vmem:[%s7 + $0x1a0] sm:$0xff]
        %v4908 = vld [vmem:[%s7 + $0x1a8] sm:$0xff]
        %v4909 = vld [vmem:[%s7 + $0x1b0] sm:$0xff]
        %v4910 = vld [vmem:[%s7 + $0x1b8] sm:$0xff]
        %v4911 = vld [vmem:[%s7 + $0x1c0] sm:$0xff]
        %v4912 = vld [vmem:[%s7 + $0x1c8] sm:$0xff]
        %v4913 = vld [vmem:[%s7 + $0x1d0] sm:$0xff]
        %v4914 = vld [vmem:[%s7 + $0x1d8] sm:$0xff]
        %v4915 = vld [vmem:[%s7 + $0x1e0] sm:$0xff]
        %v4916 = vld [vmem:[%s7 + $0x1e8] sm:$0xff]
        %v4917 = vld [vmem:[%s7 + $0x1f0] sm:$0xff]
        %v4918 = vld [vmem:[%s7 + $0x1f8] sm:$0xff]
        %v4919 = vld [vmem:[%s7 + $0x200] sm:$0xff]
        %v4920 = vld [vmem:[%s7 + $0x208] sm:$0xff]
        %v4921 = vld [vmem:[%s7 + $0x210] sm:$0xff]
        %v4922 = vld [vmem:[%s7 + $0x218] sm:$0xff]
        %v4923 = vld [vmem:[%s7 + $0x220] sm:$0xff]
        %v4924 = vld [vmem:[%s7 + $0x228] sm:$0xff]
        %v4925 = vld [vmem:[%s7 + $0x230] sm:$0xff]
        %v4926 = vld [vmem:[%s7 + $0x238] sm:$0xff]
        %v4927 = vld [vmem:[%s7 + $0x240] sm:$0xff]
        %v4928 = vld [vmem:[%s7 + $0x248] sm:$0xff]
        %v4929 = vld [vmem:[%s7 + $0x250] sm:$0xff]
        %v4930 = vld [vmem:[%s7 + $0x258] sm:$0xff]
        %v4931 = vld [vmem:[%s7 + $0x260] sm:$0xff]
        %v4932 = vld [vmem:[%s7 + $0x268] sm:$0xff]
        %v4933 = vld [vmem:[%s7 + $0x270] sm:$0xff]
        %v4934 = vld [vmem:[%s7 + $0x278] sm:$0xff]
        %v4935 = vld [vmem:[%s7 + $0x280] sm:$0xff]
        %v4936 = vld [vmem:[%s7 + $0x288] sm:$0xff]
        %v4937 = vld [vmem:[%s7 + $0x290] sm:$0xff]
        %v4938 = vld [vmem:[%s7 + $0x298] sm:$0xff]
        %v4939 = vld [vmem:[%s7 + $0x2a0] sm:$0xff]
        %v4940 = vld [vmem:[%s7 + $0x2a8] sm:$0xff]
        %v4941 = vld [vmem:[%s7 + $0x2b0] sm:$0xff]
        %v4942 = vld [vmem:[%s7 + $0x2b8] sm:$0xff]
        %v4943 = vld [vmem:[%s7 + $0x2c0] sm:$0xff]
        %v4944 = vld [vmem:[%s7 + $0x2c8] sm:$0xff]
        %v4945 = vld [vmem:[%s7 + $0x2d0] sm:$0xff]
        %v4946 = vld [vmem:[%s7 + $0x2d8] sm:$0xff]
        %v4947 = vld [vmem:[%s7 + $0x2e0] sm:$0xff]
        %v4948 = vld [vmem:[%s7 + $0x2e8] sm:$0xff]
        %v4949 = vld [vmem:[%s7 + $0x2f0] sm:$0xff]
        %v4950 = vld [vmem:[%s7 + $0x2f8] sm:$0xff]
        %v4951 = vld [vmem:[%s7 + $0x300] sm:$0xff]
        %v4952 = vld [vmem:[%s7 + $0x308] sm:$0xff]
        %v4953 = vld [vmem:[%s7 + $0x310] sm:$0xff]
        %v4954 = vld [vmem:[%s7 + $0x318] sm:$0xff]
        %v4955 = vld [vmem:[%s7 + $0x320] sm:$0xff]
        %v4956 = vld [vmem:[%s7 + $0x328] sm:$0xff]
        %v4957 = vld [vmem:[%s7 + $0x330] sm:$0xff]
        %v4958 = vld [vmem:[%s7 + $0x338] sm:$0xff]
        %v4959 = vld [vmem:[%s7 + $0x340] sm:$0xff]
        %v4960 = vld [vmem:[%s7 + $0x348] sm:$0xff]
        %v4961 = vld [vmem:[%s7 + $0x350] sm:$0xff]
        %v4962 = vld [vmem:[%s7 + $0x358] sm:$0xff]
        %v4963 = vld [vmem:[%s7 + $0x360] sm:$0xff]
        %v4964 = vld [vmem:[%s7 + $0x368] sm:$0xff]
        %v4965 = vld [vmem:[%s7 + $0x370] sm:$0xff]
        %v4966 = vld [vmem:[%s7 + $0x378] sm:$0xff]
        %v5079 = vunpack.c.l.b16 %v4855
        %v5080 = vunpack.c.h.b16 %v4855
        %v5081 = vunpack.c.l.b16 %v4856
        %v5082 = vunpack.c.h.b16 %v4856
        %v5083 = vunpack.c.l.b16 %v4857
        %v5084 = vunpack.c.h.b16 %v4857
        %v5085 = vunpack.c.l.b16 %v4858
        %v5086 = vunpack.c.h.b16 %v4858
        %v5087 = vunpack.c.l.b16 %v4859
        %v5088 = vunpack.c.h.b16 %v4859
        %v5089 = vunpack.c.l.b16 %v4860
        %v5090 = vunpack.c.h.b16 %v4860
        %v5091 = vunpack.c.l.b16 %v4861
        %v5092 = vunpack.c.h.b16 %v4861
        %v5093 = vunpack.c.l.b16 %v4862
        %v5094 = vunpack.c.h.b16 %v4862
        %v5095 = vunpack.c.l.b16 %v4863
        %v5096 = vunpack.c.h.b16 %v4863
        %v5097 = vunpack.c.l.b16 %v4864
        %v5098 = vunpack.c.h.b16 %v4864
        %v5099 = vunpack.c.l.b16 %v4865
        %v5100 = vunpack.c.h.b16 %v4865
        %v5101 = vunpack.c.l.b16 %v4866
        %v5102 = vunpack.c.h.b16 %v4866
        %v5103 = vunpack.c.l.b16 %v4867
        %v5104 = vunpack.c.h.b16 %v4867
        %v5105 = vunpack.c.l.b16 %v4868
        %v5106 = vunpack.c.h.b16 %v4868
        %v5107 = vunpack.c.l.b16 %v4869
        %v5108 = vunpack.c.h.b16 %v4869
        %v5109 = vunpack.c.l.b16 %v4870
        %v5110 = vunpack.c.h.b16 %v4870
        %v5111 = vunpack.c.l.b16 %v4871
        %v5112 = vunpack.c.h.b16 %v4871
        %v5113 = vunpack.c.l.b16 %v4872
        %v5114 = vunpack.c.h.b16 %v4872
        %v5115 = vunpack.c.l.b16 %v4873
        %v5116 = vunpack.c.h.b16 %v4873
        %v5117 = vunpack.c.l.b16 %v4874
        %v5118 = vunpack.c.h.b16 %v4874
        %v5119 = vunpack.c.l.b16 %v4875
        %v5120 = vunpack.c.h.b16 %v4875
        %v5121 = vunpack.c.l.b16 %v4876
        %v5122 = vunpack.c.h.b16 %v4876
        %v5123 = vunpack.c.l.b16 %v4877
        %v5124 = vunpack.c.h.b16 %v4877
        %v5125 = vunpack.c.l.b16 %v4878
        %v5126 = vunpack.c.h.b16 %v4878
        %v5127 = vunpack.c.l.b16 %v4879
        %v5128 = vunpack.c.h.b16 %v4879
        %v5129 = vunpack.c.l.b16 %v4880
        %v5130 = vunpack.c.h.b16 %v4880
        %v5131 = vunpack.c.l.b16 %v4881
        %v5132 = vunpack.c.h.b16 %v4881
        %v5133 = vunpack.c.l.b16 %v4882
        %v5134 = vunpack.c.h.b16 %v4882
        %v5135 = vunpack.c.l.b16 %v4883
        %v5136 = vunpack.c.h.b16 %v4883
        %v5137 = vunpack.c.l.b16 %v4884
        %v5138 = vunpack.c.h.b16 %v4884
        %v5139 = vunpack.c.l.b16 %v4885
        %v5140 = vunpack.c.h.b16 %v4885
        %v5141 = vunpack.c.l.b16 %v4886
        %v5142 = vunpack.c.h.b16 %v4886
        %v5143 = vunpack.c.l.b16 %v4887
        %v5144 = vunpack.c.h.b16 %v4887
        %v5145 = vunpack.c.l.b16 %v4888
        %v5146 = vunpack.c.h.b16 %v4888
        %v5147 = vunpack.c.l.b16 %v4889
        %v5148 = vunpack.c.h.b16 %v4889
        %v5149 = vunpack.c.l.b16 %v4890
        %v5150 = vunpack.c.h.b16 %v4890
        %v5151 = vunpack.c.l.b16 %v4891
        %v5152 = vunpack.c.h.b16 %v4891
        %v5153 = vunpack.c.l.b16 %v4892
        %v5154 = vunpack.c.h.b16 %v4892
        %v5155 = vunpack.c.l.b16 %v4893
        %v5156 = vunpack.c.h.b16 %v4893
        %v5157 = vunpack.c.l.b16 %v4894
        %v5158 = vunpack.c.h.b16 %v4894
        %v5159 = vunpack.c.l.b16 %v4895
        %v5160 = vunpack.c.h.b16 %v4895
        %v5161 = vunpack.c.l.b16 %v4896
        %v5162 = vunpack.c.h.b16 %v4896
        %v5163 = vunpack.c.l.b16 %v4897
        %v5164 = vunpack.c.h.b16 %v4897
        %v5165 = vunpack.c.l.b16 %v4898
        %v5166 = vunpack.c.h.b16 %v4898
        %v5167 = vunpack.c.l.b16 %v4899
        %v5168 = vunpack.c.h.b16 %v4899
        %v5169 = vunpack.c.l.b16 %v4900
        %v5170 = vunpack.c.h.b16 %v4900
        %v5171 = vunpack.c.l.b16 %v4901
        %v5172 = vunpack.c.h.b16 %v4901
        %v5173 = vunpack.c.l.b16 %v4902
        %v5174 = vunpack.c.h.b16 %v4902
        %v5175 = vunpack.c.l.b16 %v4903
        %v5176 = vunpack.c.h.b16 %v4903
        %v5177 = vunpack.c.l.b16 %v4904
        %v5178 = vunpack.c.h.b16 %v4904
        %v5179 = vunpack.c.l.b16 %v4905
        %v5180 = vunpack.c.h.b16 %v4905
        %v5181 = vunpack.c.l.b16 %v4906
        %v5182 = vunpack.c.h.b16 %v4906
        %v5183 = vunpack.c.l.b16 %v4907
        %v5184 = vunpack.c.h.b16 %v4907
        %v5185 = vunpack.c.l.b16 %v4908
        %v5186 = vunpack.c.h.b16 %v4908
        %v5187 = vunpack.c.l.b16 %v4909
        %v5188 = vunpack.c.h.b16 %v4909
        %v5189 = vunpack.c.l.b16 %v4910
        %v5190 = vunpack.c.h.b16 %v4910
        %v5191 = vunpack.c.l.b16 %v4911
        %v5192 = vunpack.c.h.b16 %v4911
        %v5193 = vunpack.c.l.b16 %v4912
        %v5194 = vunpack.c.h.b16 %v4912
        %v5195 = vunpack.c.l.b16 %v4913
        %v5196 = vunpack.c.h.b16 %v4913
        %v5197 = vunpack.c.l.b16 %v4914
        %v5198 = vunpack.c.h.b16 %v4914
        %v5199 = vunpack.c.l.b16 %v4915
        %v5200 = vunpack.c.h.b16 %v4915
        %v5201 = vunpack.c.l.b16 %v4916
        %v5202 = vunpack.c.h.b16 %v4916
        %v5203 = vunpack.c.l.b16 %v4917
        %v5204 = vunpack.c.h.b16 %v4917
        %v5205 = vunpack.c.l.b16 %v4918
        %v5206 = vunpack.c.h.b16 %v4918
        %v5207 = vunpack.c.l.b16 %v4919
        %v5208 = vunpack.c.h.b16 %v4919
        %v5209 = vunpack.c.l.b16 %v4920
        %v5210 = vunpack.c.h.b16 %v4920
        %v5211 = vunpack.c.l.b16 %v4921
        %v5212 = vunpack.c.h.b16 %v4921
        %v5213 = vunpack.c.l.b16 %v4922
        %v5214 = vunpack.c.h.b16 %v4922
        %v5215 = vunpack.c.l.b16 %v4923
        %v5216 = vunpack.c.h.b16 %v4923
        %v5217 = vunpack.c.l.b16 %v4924
        %v5218 = vunpack.c.h.b16 %v4924
        %v5219 = vunpack.c.l.b16 %v4925
        %v5220 = vunpack.c.h.b16 %v4925
        %v5221 = vunpack.c.l.b16 %v4926
        %v5222 = vunpack.c.h.b16 %v4926
        %v5223 = vunpack.c.l.b16 %v4927
        %v5224 = vunpack.c.h.b16 %v4927
        %v5225 = vunpack.c.l.b16 %v4928
        %v5226 = vunpack.c.h.b16 %v4928
        %v5227 = vunpack.c.l.b16 %v4929
        %v5228 = vunpack.c.h.b16 %v4929
        %v5229 = vunpack.c.l.b16 %v4930
        %v5230 = vunpack.c.h.b16 %v4930
        %v5231 = vunpack.c.l.b16 %v4931
        %v5232 = vunpack.c.h.b16 %v4931
        %v5233 = vunpack.c.l.b16 %v4932
        %v5234 = vunpack.c.h.b16 %v4932
        %v5235 = vunpack.c.l.b16 %v4933
        %v5236 = vunpack.c.h.b16 %v4933
        %v5237 = vunpack.c.l.b16 %v4934
        %v5238 = vunpack.c.h.b16 %v4934
        %v5239 = vunpack.c.l.b16 %v4935
        %v5240 = vunpack.c.h.b16 %v4935
        %v5241 = vunpack.c.l.b16 %v4936
        %v5242 = vunpack.c.h.b16 %v4936
        %v5243 = vunpack.c.l.b16 %v4937
        %v5244 = vunpack.c.h.b16 %v4937
        %v5245 = vunpack.c.l.b16 %v4938
        %v5246 = vunpack.c.h.b16 %v4938
        %v5247 = vunpack.c.l.b16 %v4939
        %v5248 = vunpack.c.h.b16 %v4939
        %v5249 = vunpack.c.l.b16 %v4940
        %v5250 = vunpack.c.h.b16 %v4940
        %v5251 = vunpack.c.l.b16 %v4941
        %v5252 = vunpack.c.h.b16 %v4941
        %v5253 = vunpack.c.l.b16 %v4942
        %v5254 = vunpack.c.h.b16 %v4942
        %v5255 = vunpack.c.l.b16 %v4943
        %v5256 = vunpack.c.h.b16 %v4943
        %v5257 = vunpack.c.l.b16 %v4944
        %v5258 = vunpack.c.h.b16 %v4944
        %v5259 = vunpack.c.l.b16 %v4945
        %v5260 = vunpack.c.h.b16 %v4945
        %v5261 = vunpack.c.l.b16 %v4946
        %v5262 = vunpack.c.h.b16 %v4946
        %v5263 = vunpack.c.l.b16 %v4947
        %v5264 = vunpack.c.h.b16 %v4947
        %v5265 = vunpack.c.l.b16 %v4948
        %v5266 = vunpack.c.h.b16 %v4948
        %v5267 = vunpack.c.l.b16 %v4949
        %v5268 = vunpack.c.h.b16 %v4949
        %v5269 = vunpack.c.l.b16 %v4950
        %v5270 = vunpack.c.h.b16 %v4950
        %v5271 = vunpack.c.l.b16 %v4951
        %v5272 = vunpack.c.h.b16 %v4951
        %v5273 = vunpack.c.l.b16 %v4952
        %v5274 = vunpack.c.h.b16 %v4952
        %v5275 = vunpack.c.l.b16 %v4953
        %v5276 = vunpack.c.h.b16 %v4953
        %v5277 = vunpack.c.l.b16 %v4954
        %v5278 = vunpack.c.h.b16 %v4954
        %v5279 = vunpack.c.l.b16 %v4955
        %v5280 = vunpack.c.h.b16 %v4955
        %v5281 = vunpack.c.l.b16 %v4956
        %v5282 = vunpack.c.h.b16 %v4956
        %v5283 = vunpack.c.l.b16 %v4957
        %v5284 = vunpack.c.h.b16 %v4957
        %v5285 = vunpack.c.l.b16 %v4958
        %v5286 = vunpack.c.h.b16 %v4958
        %v5287 = vunpack.c.l.b16 %v4959
        %v5288 = vunpack.c.h.b16 %v4959
        %v5289 = vunpack.c.l.b16 %v4960
        %v5290 = vunpack.c.h.b16 %v4960
        %v5291 = vunpack.c.l.b16 %v4961
        %v5292 = vunpack.c.h.b16 %v4961
        %v5293 = vunpack.c.l.b16 %v4962
        %v5294 = vunpack.c.h.b16 %v4962
        %v5295 = vunpack.c.l.b16 %v4963
        %v5296 = vunpack.c.h.b16 %v4963
        %v5297 = vunpack.c.l.b16 %v4964
        %v5298 = vunpack.c.h.b16 %v4964
        %v5299 = vunpack.c.l.b16 %v4965
        %v5300 = vunpack.c.h.b16 %v4965
        %v5301 = vunpack.c.l.b16 %v4966
        %v5302 = vunpack.c.h.b16 %v4966
        %v5303 = vpack.c.b16 %v5081, %v5079
        %v5304 = vpack.c.b16 %v5082, %v5080
        %v5305 = vpack.c.b16 %v5085, %v5083
        %v5306 = vpack.c.b16 %v5086, %v5084
        %v5307 = vpack.c.b16 %v5089, %v5087
        %v5308 = vpack.c.b16 %v5090, %v5088
        %v5309 = vpack.c.b16 %v5093, %v5091
        %v5310 = vpack.c.b16 %v5094, %v5092
        %v5311 = vpack.c.b16 %v5097, %v5095
        %v5312 = vpack.c.b16 %v5098, %v5096
        %v5313 = vpack.c.b16 %v5101, %v5099
        %v5314 = vpack.c.b16 %v5102, %v5100
        %v5315 = vpack.c.b16 %v5105, %v5103
        %v5316 = vpack.c.b16 %v5106, %v5104
        %v5317 = vpack.c.b16 %v5109, %v5107
        %v5318 = vpack.c.b16 %v5110, %v5108
        %v5319 = vpack.c.b16 %v5113, %v5111
        %v5320 = vpack.c.b16 %v5114, %v5112
        %v5321 = vpack.c.b16 %v5117, %v5115
        %v5322 = vpack.c.b16 %v5118, %v5116
        %v5323 = vpack.c.b16 %v5121, %v5119
        %v5324 = vpack.c.b16 %v5122, %v5120
        %v5325 = vpack.c.b16 %v5125, %v5123
        %v5326 = vpack.c.b16 %v5126, %v5124
        %v5327 = vpack.c.b16 %v5129, %v5127
        %v5328 = vpack.c.b16 %v5130, %v5128
        %v5329 = vpack.c.b16 %v5133, %v5131
        %v5330 = vpack.c.b16 %v5134, %v5132
        %v5331 = vpack.c.b16 %v5137, %v5135
        %v5332 = vpack.c.b16 %v5138, %v5136
        %v5333 = vpack.c.b16 %v5141, %v5139
        %v5334 = vpack.c.b16 %v5142, %v5140
        %v5335 = vpack.c.b16 %v5145, %v5143
        %v5336 = vpack.c.b16 %v5146, %v5144
        %v5337 = vpack.c.b16 %v5149, %v5147
        %v5338 = vpack.c.b16 %v5150, %v5148
        %v5339 = vpack.c.b16 %v5153, %v5151
        %v5340 = vpack.c.b16 %v5154, %v5152
        %v5341 = vpack.c.b16 %v5157, %v5155
        %v5342 = vpack.c.b16 %v5158, %v5156
        %v5343 = vpack.c.b16 %v5161, %v5159
        %v5344 = vpack.c.b16 %v5162, %v5160
        %v5345 = vpack.c.b16 %v5165, %v5163
        %v5346 = vpack.c.b16 %v5166, %v5164
        %v5347 = vpack.c.b16 %v5169, %v5167
        %v5348 = vpack.c.b16 %v5170, %v5168
        %v5349 = vpack.c.b16 %v5173, %v5171
        %v5350 = vpack.c.b16 %v5174, %v5172
        %v5351 = vpack.c.b16 %v5177, %v5175
        %v5352 = vpack.c.b16 %v5178, %v5176
        %v5353 = vpack.c.b16 %v5181, %v5179
        %v5354 = vpack.c.b16 %v5182, %v5180
        %v5355 = vpack.c.b16 %v5185, %v5183
        %v5356 = vpack.c.b16 %v5186, %v5184
        %v5357 = vpack.c.b16 %v5189, %v5187
        %v5358 = vpack.c.b16 %v5190, %v5188
        %v5359 = vpack.c.b16 %v5193, %v5191
        %v5360 = vpack.c.b16 %v5194, %v5192
        %v5361 = vpack.c.b16 %v5197, %v5195
        %v5362 = vpack.c.b16 %v5198, %v5196
        %v5363 = vpack.c.b16 %v5201, %v5199
        %v5364 = vpack.c.b16 %v5202, %v5200
        %v5365 = vpack.c.b16 %v5205, %v5203
        %v5366 = vpack.c.b16 %v5206, %v5204
        %v5367 = vpack.c.b16 %v5209, %v5207
        %v5368 = vpack.c.b16 %v5210, %v5208
        %v5369 = vpack.c.b16 %v5213, %v5211
        %v5370 = vpack.c.b16 %v5214, %v5212
        %v5371 = vpack.c.b16 %v5217, %v5215
        %v5372 = vpack.c.b16 %v5218, %v5216
        %v5373 = vpack.c.b16 %v5221, %v5219
        %v5374 = vpack.c.b16 %v5222, %v5220
        %v5375 = vpack.c.b16 %v5225, %v5223
        %v5376 = vpack.c.b16 %v5226, %v5224
        %v5377 = vpack.c.b16 %v5229, %v5227
        %v5378 = vpack.c.b16 %v5230, %v5228
        %v5379 = vpack.c.b16 %v5233, %v5231
        %v5380 = vpack.c.b16 %v5234, %v5232
        %v5381 = vpack.c.b16 %v5237, %v5235
        %v5382 = vpack.c.b16 %v5238, %v5236
        %v5383 = vpack.c.b16 %v5241, %v5239
        %v5384 = vpack.c.b16 %v5242, %v5240
        %v5385 = vpack.c.b16 %v5245, %v5243
        %v5386 = vpack.c.b16 %v5246, %v5244
        %v5387 = vpack.c.b16 %v5249, %v5247
        %v5388 = vpack.c.b16 %v5250, %v5248
        %v5389 = vpack.c.b16 %v5253, %v5251
        %v5390 = vpack.c.b16 %v5254, %v5252
        %v5391 = vpack.c.b16 %v5257, %v5255
        %v5392 = vpack.c.b16 %v5258, %v5256
        %v5393 = vpack.c.b16 %v5261, %v5259
        %v5394 = vpack.c.b16 %v5262, %v5260
        %v5395 = vpack.c.b16 %v5265, %v5263
        %v5396 = vpack.c.b16 %v5266, %v5264
        %v5397 = vpack.c.b16 %v5269, %v5267
        %v5398 = vpack.c.b16 %v5270, %v5268
        %v5399 = vpack.c.b16 %v5273, %v5271
        %v5400 = vpack.c.b16 %v5274, %v5272
        %v5401 = vpack.c.b16 %v5277, %v5275
        %v5402 = vpack.c.b16 %v5278, %v5276
        %v5403 = vpack.c.b16 %v5281, %v5279
        %v5404 = vpack.c.b16 %v5282, %v5280
        %v5405 = vpack.c.b16 %v5285, %v5283
        %v5406 = vpack.c.b16 %v5286, %v5284
        %v5407 = vpack.c.b16 %v5289, %v5287
        %v5408 = vpack.c.b16 %v5290, %v5288
        %v5409 = vpack.c.b16 %v5293, %v5291
        %v5410 = vpack.c.b16 %v5294, %v5292
        %v5411 = vpack.c.b16 %v5297, %v5295
        %v5412 = vpack.c.b16 %v5298, %v5296
        %v5413 = vpack.c.b16 %v5301, %v5299
        %v5414 = vpack.c.b16 %v5302, %v5300
        %5527 = vmatprep.subr.bf16.mxu0 %v5304
        %5528 = vmatpush1.bf16.msra.mxu0 %v5303
        %5529 = vmatprep.subr.bf16.mxu0 %v5306
        %5530 = vmatpush1.bf16.msra.mxu0 %v5305
        %5531 = vmatprep.subr.bf16.mxu0 %v5308
        %5532 = vmatpush1.bf16.msra.mxu0 %v5307
        %5533 = vmatprep.subr.bf16.mxu0 %v5310
        %5534 = vmatpush1.bf16.msra.mxu0 %v5309
        %5535 = vmatprep.subr.bf16.mxu0 %v5312
        %5536 = vmatpush1.bf16.msra.mxu0 %v5311
        %5537 = vmatprep.subr.bf16.mxu0 %v5314
        %5538 = vmatpush1.bf16.msra.mxu0 %v5313
        %5539 = vmatprep.subr.bf16.mxu0 %v5316
        %5540 = vmatpush1.bf16.msra.mxu0 %v5315
        %5541 = vmatprep.subr.bf16.mxu0 %v5318
        %5542 = vmatpush1.bf16.msra.mxu0 %v5317
        %5543 = vmatprep.subr.bf16.mxu0 %v5320
        %5544 = vmatpush1.bf16.msra.mxu0 %v5319
        %5545 = vmatprep.subr.bf16.mxu0 %v5322
        %5546 = vmatpush1.bf16.msra.mxu0 %v5321
        %5547 = vmatprep.subr.bf16.mxu0 %v5324
        %5548 = vmatpush1.bf16.msra.mxu0 %v5323
        %5549 = vmatprep.subr.bf16.mxu0 %v5326
        %5550 = vmatpush1.bf16.msra.mxu0 %v5325
        %5551 = vmatprep.subr.bf16.mxu0 %v5328
        %5552 = vmatpush1.bf16.msra.mxu0 %v5327
        %5553 = vmatprep.subr.bf16.mxu0 %v5330
        %5554 = vmatpush1.bf16.msra.mxu0 %v5329
        %5555 = vmatprep.subr.bf16.mxu0 %v5332
        %5556 = vmatpush1.bf16.msra.mxu0 %v5331
        %5557 = vmatprep.subr.bf16.mxu0 %v5334
        %5558 = vmatpush1.bf16.msra.mxu0 %v5333
        %5559 = vmatprep.mubr.bf16.mxu0 %v4849
        %5560 = vmatmul.mubr.bf16.gmra.mrb[0].mxu0 %v4848
        %v5561 = vpop.f32.mrb[0].mxu0
        %v5562 = vadd.f32 0.0, %v5561
        %v5563 = vpop.f32.mrb[0].mxu0
        %v5564 = vadd.f32 0.0, %v5563
        %v5565 = vpop.f32.mrb[0].mxu0
        %v5566 = vpop.f32.mrb[0].mxu0
        %5567 = vdwg.mxu0
        %5568 = vmatprep.subr.bf16.mxu0 %v5336
        %5569 = vmatpush1.bf16.msra.mxu0 %v5335
        %5570 = vmatprep.subr.bf16.mxu0 %v5338
        %5571 = vmatpush1.bf16.msra.mxu0 %v5337
        %5572 = vmatprep.subr.bf16.mxu0 %v5340
        %5573 = vmatpush1.bf16.msra.mxu0 %v5339
        %5574 = vmatprep.subr.bf16.mxu0 %v5342
        %5575 = vmatpush1.bf16.msra.mxu0 %v5341
        %5576 = vmatprep.subr.bf16.mxu0 %v5344
        %5577 = vmatpush1.bf16.msra.mxu0 %v5343
        %5578 = vmatprep.subr.bf16.mxu0 %v5346
        %5579 = vmatpush1.bf16.msra.mxu0 %v5345
        %5580 = vmatprep.subr.bf16.mxu0 %v5348
        %5581 = vmatpush1.bf16.msra.mxu0 %v5347
        %5582 = vmatprep.subr.bf16.mxu0 %v5350
        %5583 = vmatpush1.bf16.msra.mxu0 %v5349
        %5584 = vmatprep.subr.bf16.mxu0 %v5352
        %5585 = vmatpush1.bf16.msra.mxu0 %v5351
        %5586 = vmatprep.subr.bf16.mxu0 %v5354
        %5587 = vmatpush1.bf16.msra.mxu0 %v5353
        %5588 = vmatprep.subr.bf16.mxu0 %v5356
        %5589 = vmatpush1.bf16.msra.mxu0 %v5355
        %5590 = vmatprep.subr.bf16.mxu0 %v5358
        %5591 = vmatpush1.bf16.msra.mxu0 %v5357
        %5592 = vmatprep.subr.bf16.mxu0 %v5360
        %5593 = vmatpush1.bf16.msra.mxu0 %v5359
        %5594 = vmatprep.subr.bf16.mxu0 %v5362
        %5595 = vmatpush1.bf16.msra.mxu0 %v5361
        %5596 = vmatprep.subr.bf16.mxu0 %v5364
        %5597 = vmatpush1.bf16.msra.mxu0 %v5363
        %5598 = vmatprep.subr.bf16.mxu0 %v5366
        %5599 = vmatpush1.bf16.msra.mxu0 %v5365
        %5600 = vmatprep.mubr.bf16.mxu0 %v4851
        %5601 = vmatmul.mubr.bf16.gmra.mrb[0].mxu0 %v4850
        %v5602 = vpop.f32.mrb[0].mxu0
        %v5603 = vadd.f32 %v5562, %v5602
        %v5604 = vpop.f32.mrb[0].mxu0
        %v5605 = vadd.f32 %v5564, %v5604
        %v5606 = vpop.f32.mrb[0].mxu0
        %v5607 = vpop.f32.mrb[0].mxu0
        %5608 = vdwg.mxu0
        %5609 = vmatprep.subr.bf16.mxu0 %v5368
        %5610 = vmatpush1.bf16.msra.mxu0 %v5367
        %5611 = vmatprep.subr.bf16.mxu0 %v5370
        %5612 = vmatpush1.bf16.msra.mxu0 %v5369
        %5613 = vmatprep.subr.bf16.mxu0 %v5372
        %5614 = vmatpush1.bf16.msra.mxu0 %v5371
        %5615 = vmatprep.subr.bf16.mxu0 %v5374
        %5616 = vmatpush1.bf16.msra.mxu0 %v5373
        %5617 = vmatprep.subr.bf16.mxu0 %v5376
        %5618 = vmatpush1.bf16.msra.mxu0 %v5375
        %5619 = vmatprep.subr.bf16.mxu0 %v5378
        %5620 = vmatpush1.bf16.msra.mxu0 %v5377
        %5621 = vmatprep.subr.bf16.mxu0 %v5380
        %5622 = vmatpush1.bf16.msra.mxu0 %v5379
        %5623 = vmatprep.subr.bf16.mxu0 %v5382
        %5624 = vmatpush1.bf16.msra.mxu0 %v5381
        %5625 = vmatprep.subr.bf16.mxu0 %v5384
        %5626 = vmatpush1.bf16.msra.mxu0 %v5383
        %5627 = vmatprep.subr.bf16.mxu0 %v5386
        %5628 = vmatpush1.bf16.msra.mxu0 %v5385
        %5629 = vmatprep.subr.bf16.mxu0 %v5388
        %5630 = vmatpush1.bf16.msra.mxu0 %v5387
        %5631 = vmatprep.subr.bf16.mxu0 %v5390
        %5632 = vmatpush1.bf16.msra.mxu0 %v5389
        %5633 = vmatprep.subr.bf16.mxu0 %v5392
        %5634 = vmatpush1.bf16.msra.mxu0 %v5391
        %5635 = vmatprep.subr.bf16.mxu0 %v5394
        %5636 = vmatpush1.bf16.msra.mxu0 %v5393
        %5637 = vmatprep.subr.bf16.mxu0 %v5396
        %5638 = vmatpush1.bf16.msra.mxu0 %v5395
        %5639 = vmatprep.subr.bf16.mxu0 %v5398
        %5640 = vmatpush1.bf16.msra.mxu0 %v5397
        %5641 = vmatprep.mubr.bf16.mxu0 %v4853
        %5642 = vmatmul.mubr.bf16.gmra.mrb[0].mxu0 %v4852
        %v5643 = vpop.f32.mrb[0].mxu0
        %v5644 = vadd.f32 %v5603, %v5643
        %v5645 = vpop.f32.mrb[0].mxu0
        %v5646 = vadd.f32 %v5605, %v5645
        %v5647 = vpop.f32.mrb[0].mxu0
        %v5648 = vpop.f32.mrb[0].mxu0
        %5649 = vdwg.mxu0
        %5650 = vmatprep.subr.bf16.mxu0 %v5400
        %5651 = vmatpush1.bf16.msra.mxu0 %v5399
        %5652 = vmatprep.subr.bf16.mxu0 %v5402
        %5653 = vmatpush1.bf16.msra.mxu0 %v5401
        %5654 = vmatprep.subr.bf16.mxu0 %v5404
        %5655 = vmatpush1.bf16.msra.mxu0 %v5403
        %5656 = vmatprep.subr.bf16.mxu0 %v5406
        %5657 = vmatpush1.bf16.msra.mxu0 %v5405
        %5658 = vmatprep.subr.bf16.mxu0 %v5408
        %5659 = vmatpush1.bf16.msra.mxu0 %v5407
        %5660 = vmatprep.subr.bf16.mxu0 %v5410
        %5661 = vmatpush1.bf16.msra.mxu0 %v5409
        %5662 = vmatprep.subr.bf16.mxu0 %v5412
        %5663 = vmatpush1.bf16.msra.mxu0 %v5411
        %5664 = vmatprep.subr.bf16.mxu0 %v5414
        %5665 = vmatpush1.bf16.msra.mxu0 %v5413
        %5666 = vmatprep.subr.bf16.mxu0 0
        %5667 = vmatpush1.bf16.msra.mxu0 0
        %5668 = vmatprep.subr.bf16.mxu0 0
        %5669 = vmatpush1.bf16.msra.mxu0 0
        %5670 = vmatprep.subr.bf16.mxu0 0
        %5671 = vmatpush1.bf16.msra.mxu0 0
        %5672 = vmatprep.subr.bf16.mxu0 0
        %5673 = vmatpush1.bf16.msra.mxu0 0
        %5674 = vmatprep.subr.bf16.mxu0 0
        %5675 = vmatpush1.bf16.msra.mxu0 0
        %5676 = vmatprep.subr.bf16.mxu0 0
        %5677 = vmatpush1.bf16.msra.mxu0 0
        %5678 = vmatprep.subr.bf16.mxu0 0
        %5679 = vmatpush1.bf16.msra.mxu0 0
        %5680 = vmatprep.subr.bf16.mxu0 0
        %5681 = vmatpush1.bf16.msra.mxu0 0
        %5682 = vmatprep.mubr.bf16.mxu0 0
        %5683 = vmatmul.mubr.bf16.gmra.mrb[0].mxu0 %v4854
        %v5684 = vpop.f32.mrb[0].mxu0
        %v5685 = vadd.f32 %v5644, %v5684
        %v5686 = vpop.f32.mrb[0].mxu0
        %v5687 = vadd.f32 %v5646, %v5686
        %v5688 = vpop.f32.mrb[0].mxu0
        %v5689 = vpop.f32.mrb[0].mxu0
        %5690 = vdwg.mxu0
        %v5691 = vld [vmem:[%s8] sm:$0x1]
        %v5692 = vadd.f32 %v5691, %v5685
        %v5695 = vunpack.c.l.s4 1966171168
        %v5696 = vunpack.c.0.s8 %v5695
        %v5697 = vlaneseq
        %v5698 = vshrl.u32 %v5697, 7
        %v5699 = vsub.s32 %v5696, %v5698
        %v5700 = vrot.slane %v5685, %v5699
        %v5701 = vcombine.high %v5700, %v5700
        %v5703 = vunpack.c.l.s4 1966171168
        %v5704 = vunpack.c.0.s8 %v5703
        %v5705 = vlaneseq
        %v5706 = vshrl.u32 %v5705, 7
        %v5707 = vsub.s32 %v5704, %v5706
        %v5708 = vrot.slane %v5700, %v5707
        %v5710 = vunpack.c.l.s4 1966171168
        %v5711 = vunpack.c.0.s8 %v5710
        %v5712 = vlaneseq
        %v5713 = vshrl.u32 %v5712, 7
        %v5714 = vsub.s32 %v5711, %v5713
        %v5715 = vrot.slane %v5701, %v5714
        %5716 = vrot.lane.b32.xlu0 %v5715, 96
        %v5717 = vpop.permute.xlu0 %5716
        %v5719 = vadd.f32 %v5692, %v5717
        %v5720 = vcombine.high %v5708, %v5708
        %5721 = vrot.lane.b32.xlu0 %v5720, 64
        %v5722 = vpop.permute.xlu0 %5721
        %v5724 = vadd.f32 %v5719, %v5722
        %v5725 = vcombine.high %v5715, %v5715
        %5726 = vrot.lane.b32.xlu0 %v5725, 32
        %v5727 = vpop.permute.xlu0 %5726
        %v5729 = vadd.f32 %v5724, %v5727
        %v5731 = vcombine.high %v5687, %v5687
        %v5733 = vunpack.c.l.s4 1966171168
        %v5734 = vunpack.c.0.s8 %v5733
        %v5735 = vlaneseq
        %v5736 = vshrl.u32 %v5735, 7
        %v5737 = vsub.s32 %v5734, %v5736
        %v5738 = vrot.slane %v5731, %v5737
        %v5740 = vunpack.c.l.s4 1966171168
        %v5741 = vunpack.c.0.s8 %v5740
        %v5742 = vlaneseq
        %v5743 = vshrl.u32 %v5742, 7
        %v5744 = vsub.s32 %v5741, %v5743
        %v5745 = vrot.slane %v5738, %v5744
        %v5747 = vadd.f32 %v5729, %v5745
        %v5748 = vcombine.high %v5738, %v5738
        %v5750 = vunpack.c.l.s4 1966171168
        %v5751 = vunpack.c.0.s8 %v5750
        %v5752 = vlaneseq
        %v5753 = vshrl.u32 %v5752, 7
        %v5754 = vsub.s32 %v5751, %v5753
        %v5755 = vrot.slane %v5748, %v5754
        %5756 = vrot.lane.b32.xlu0 %v5755, 96
        %v5757 = vpop.permute.xlu0 %5756
        %v5759 = vadd.f32 %v5747, %v5757
        %v5760 = vcombine.high %v5745, %v5745
        %5761 = vrot.lane.b32.xlu0 %v5760, 64
        %v5762 = vpop.permute.xlu0 %5761
        %v5764 = vadd.f32 %v5759, %v5762
        %v5765 = vmax.f32 %v5764, 0.0
        %vm5766 = vcmask 253952
        %5767 = vst.msk [vmem:[%s324] sm:$0x1] %vm5766, %v5765
        %s5768 = sand.u32 %s225, 1
        %s5769 = scalar_lea.sflag [#allocation8], %s5768
        %s5770 = sand.u32 %s225, 1
        %s5771 = scalar_lea.vmem [#allocation7], %s5770
        // Predicated region
        $region57: #{cnn_forward.1} parent=55 // pred_check
          %p5772 = pneg %p235
        $region58: #{cnn_forward.1} parent=55 // pred_check_branch
          %5774 = sbr.rel (%p5772) target = $region60
        $region59: #{cnn_forward.1} parent=55 // pred_region
          %s5776 = ssub.s32 16, 16
          %5777 = vsyncadd %s5769, %s5776
          %s5778 = smul.addr %s23, 16
          %s5779 = scalar_lea.hbm %s9, %s5778
          %s5781 = sshll.u32 %s5771, 4
          %s5782 = int_to_ptr.vmem [resolvable:$true] %s5781
          %5784 = dma.vmem_to_hbm [thread:$0]  %s5782, 16, %s5779, %s5769
        $region60: #{cnn_forward.1} parent=55 // pred_fallthru
          _
      $region56: #{cnn_forward.1} parent=5 // pred_fallthru
        _
      %p5785 = scmp.le.s32.totalorder 2, %s18
      // Predicated region
      $region61: #{cnn_forward.1} parent=5 // pred_check
        %p5786 = pneg %p5785
      $region62: #{cnn_forward.1} parent=5 // pred_check_branch
        %5788 = sbr.rel (%p5786) target = $region64
      $region63: #{cnn_forward.1} parent=5 // pred_region
        %s5789 = ssub.s32 %s18, 2
        // Predicated region
        $region65: #{cnn_forward.1} parent=63 // pred_check
          %p5790 = pneg %p241
        $region66: #{cnn_forward.1} parent=63 // pred_check_branch
          %5792 = sbr.rel (%p5790) target = $region68
        $region67: #{cnn_forward.1} parent=63 // pred_region
          %s5793 = sand.u32 %s226, 1
          %s5794 = scalar_lea.sflag [#allocation8], %s5793
          %s5795 = sand.u32 %s226, 1
          %s5796 = scalar_lea.vmem [#allocation7], %s5795
          %5797 = dma.done %s5794, 16
        $region68: #{cnn_forward.1} parent=63 // pred_fallthru
          _
      $region64: #{cnn_forward.1} parent=5 // pred_fallthru
        _
    $region6: #{cnn_forward.1} parent=1 // loop_footer
      %s22 = sadd.s32 1, %s18
    $region7: #{cnn_forward.1} parent=1 // loop_footer_branch
      %17 = sbr.rel target = $region3
    $region8: #{cnn_forward.1} parent=1 // loop_exit
      _
    %5798 = vsyncpa [#allocation8], 1
    %s5799 = scalar_lea.sflag [#allocation8], 1
    %5800 = vsyncpa %s5799, 1

</llo_original>
